<compile_context>
chip_gen: v5e
topology: v5e:2x2
jax: 0.10.0
libtpu: 0.0.40
codegen_flags: <defaults>
</compile_context>

<pallas_src>
import functools

import jax
import jax.numpy as jnp
from jax.experimental import pallas as pl
from jax.experimental.pallas import tpu as pltpu

EPS = 1e-5                       # nn.BatchNorm2d default eps
_VMEM_LIMIT = 32 * 1024 * 1024   # safe on v5e (128M), v6e (128M) and v7x (64M physical)


def _round_up(x, m):
    return (x + m - 1) // m * m


def _row_tile(h, cap=8):
    """Largest divisor of h that is <= cap (output-row tile for image kernels)."""
    for d in range(min(cap, h), 0, -1):
        if h % d == 0:
            return d
    return 1


# ----------------------------- fused (affine+relu) matmul -----------------------------

def _fused_matmul_kernel(*refs, in_affine, in_relu, out_affine, out_relu):
    it = iter(refs)
    x_ref = next(it)
    w_ref = next(it)
    isc = ish = osc = osh = None
    if in_affine:
        isc = next(it); ish = next(it)
    if out_affine:
        osc = next(it); osh = next(it)
    o_ref = next(it)

    x = x_ref[...].astype(jnp.float32)          # BN affine / ReLU in f32 (v5e: no bf16 VPU)
    if in_affine:
        x = x * isc[...] + ish[...]
    if in_relu:
        x = jnp.maximum(x, 0.0)
    acc = jnp.dot(x.astype(jnp.bfloat16), w_ref[...],
                  preferred_element_type=jnp.float32)   # bf16 MXU, f32 accumulate
    if out_affine:
        acc = acc * osc[...] + osh[...]
    if out_relu:
        acc = jnp.maximum(acc, 0.0)
    o_ref[...] = acc.astype(o_ref.dtype)


def fused_matmul(x, w, *, in_scale=None, in_shift=None, in_relu=False,
                 out_scale=None, out_shift=None, out_relu=False,
                 out_dtype=jnp.float32, tile_m=512):
    """out = epilogue(prologue(x) @ w); prologue = optional per-K affine + relu,
    epilogue = optional per-N affine + relu (used for fused BN / bias)."""
    M, K = x.shape
    Kw, N = w.shape
    assert Kw == K
    in_affine = in_scale is not None
    out_affine = out_scale is not None

    tm = min(tile_m, _round_up(M, 8))
    grid = (pl.cdiv(M, tm),)

    inputs = [x, w.astype(jnp.bfloat16)]
    in_specs = [pl.BlockSpec((tm, K), lambda i: (i, 0)),
                pl.BlockSpec((K, N), lambda i: (0, 0))]
    if in_affine:
        inputs += [in_scale.reshape(1, K).astype(jnp.float32),
                   in_shift.reshape(1, K).astype(jnp.float32)]
        in_specs += [pl.BlockSpec((1, K), lambda i: (0, 0)),
                     pl.BlockSpec((1, K), lambda i: (0, 0))]
    if out_affine:
        inputs += [out_scale.reshape(1, N).astype(jnp.float32),
                   out_shift.reshape(1, N).astype(jnp.float32)]
        in_specs += [pl.BlockSpec((1, N), lambda i: (0, 0)),
                     pl.BlockSpec((1, N), lambda i: (0, 0))]

    kernel = functools.partial(_fused_matmul_kernel, in_affine=in_affine,
                               in_relu=in_relu, out_affine=out_affine,
                               out_relu=out_relu)
    return pl.pallas_call(
        kernel,
        out_shape=jax.ShapeDtypeStruct((M, N), out_dtype),
        grid=grid,
        in_specs=in_specs,
        out_specs=pl.BlockSpec((tm, N), lambda i: (i, 0)),
        compiler_params=pltpu.CompilerParams(
            dimension_semantics=("parallel",),
            vmem_limit_bytes=_VMEM_LIMIT),
    )(*inputs)


# ----------------------------- 3x3 "same" conv (in-kernel im2col) -----------------------------

def _conv3x3_kernel(x_ref, w_ref, o_ref, *, th):
    # x_ref: (1, Hp, Wp, C) bf16 (BN+ReLU applied, zero halo); w_ref: (9*C, F) bf16
    # o_ref: (1, th, Wo, F) f32
    t = pl.program_id(1)
    Wo = o_ref.shape[2]
    w = w_ref[...]
    r0 = t * th
    for dr in range(th):                      # static unroll (th <= 8)
        pieces = []
        for ih in range(3):
            row = x_ref[0, r0 + dr + ih]      # (Wp, C), resident image, dynamic row
            for iw in range(3):
                pieces.append(row[iw:iw + Wo, :])
        patch = jnp.concatenate(pieces, axis=-1)           # (Wo, 9*C) built in registers
        o_ref[0, dr] = jnp.dot(patch, w,
                               preferred_element_type=jnp.float32).astype(o_ref.dtype)


def conv3x3_same(x, w_flat):
    """3x3 / stride 1 / pad 1 conv. x: (N,H,W,C) bf16 (already BN+ReLU'd so the zero
    halo added here matches PyTorch's conv padding); w_flat: (9*C, F) bf16."""
    N, H, W, C = x.shape
    F = w_flat.shape[1]
    assert w_flat.shape[0] == 9 * C
    xp = jnp.pad(x, ((0, 0), (1, 1), (1, 1), (0, 0)))       # zeros, post-ReLU => correct
    Hp, Wp = H + 2, W + 2
    th = _row_tile(H)
    kernel = functools.partial(_conv3x3_kernel, th=th)
    return pl.pallas_call(
        kernel,
        out_shape=jax.ShapeDtypeStruct((N, H, W, F), jnp.float32),
        grid=(N, H // th),
        in_specs=[pl.BlockSpec((1, Hp, Wp, C), lambda n, t: (n, 0, 0, 0)),   # resident image
                  pl.BlockSpec((9 * C, F), lambda n, t: (0, 0))],
        out_specs=pl.BlockSpec((1, th, W, F), lambda n, t: (n, t, 0, 0)),
        compiler_params=pltpu.CompilerParams(
            dimension_semantics=("parallel", "arbitrary"),
            vmem_limit_bytes=_VMEM_LIMIT),
    )(xp, w_flat.astype(jnp.bfloat16))


# ----------------------------- pooling (tap-reduce, tiled) -----------------------------

def _tap_pool_kernel(*refs, op, n_taps):
    o_ref = refs[n_taps]
    acc = refs[0][...].astype(jnp.float32)
    for i in range(1, n_taps):
        v = refs[i][...].astype(jnp.float32)
        acc = jnp.maximum(acc, v) if op == "max" else acc + v
    if op == "mean":
        acc = acc * (1.0 / n_taps)
    o_ref[...] = acc.astype(o_ref.dtype)


def _pool_reduce(taps, op):
    M, C = taps[0].shape
    tm = min(512, _round_up(M, 8))
    kernel = functools.partial(_tap_pool_kernel, op=op, n_taps=len(taps))
    return pl.pallas_call(
        kernel,
        out_shape=jax.ShapeDtypeStruct((M, C), jnp.float32),
        grid=(pl.cdiv(M, tm),),
        in_specs=[pl.BlockSpec((tm, C), lambda i: (i, 0)) for _ in taps],
        out_specs=pl.BlockSpec((tm, C), lambda i: (i, 0)),
        compiler_params=pltpu.CompilerParams(
            dimension_semantics=("parallel",),
            vmem_limit_bytes=_VMEM_LIMIT),
    )(*taps)


def max_pool_3x3_s2_p1(x):
    N, H, W, C = x.shape
    xp = jnp.pad(x, ((0, 0), (1, 1), (1, 1), (0, 0)), constant_values=-jnp.inf)
    Ho = (H - 1) // 2 + 1
    Wo = (W - 1) // 2 + 1
    taps = [xp[:, ih:ih + 2 * (Ho - 1) + 1:2, iw:iw + 2 * (Wo - 1) + 1:2, :]
            .reshape(N * Ho * Wo, C) for ih in range(3) for iw in range(3)]
    return _pool_reduce(taps, "max").reshape(N, Ho, Wo, C)


def avg_pool_2x2_s2(x):
    N, H, W, C = x.shape
    Ho, Wo = H // 2, W // 2
    taps = [x[:, ih:ih + 2 * (Ho - 1) + 1:2, iw:iw + 2 * (Wo - 1) + 1:2, :]
            .reshape(N * Ho * Wo, C) for ih in range(2) for iw in range(2)]
    return _pool_reduce(taps, "mean").reshape(N, Ho, Wo, C)


# ----------------------------- BN+ReLU + global average pool -----------------------------

def _bn_relu_gap_kernel(x_ref, sc_ref, sh_ref, o_ref):
    y = jnp.maximum(x_ref[0] * sc_ref[...] + sh_ref[...], 0.0)   # (HW, C)
    o_ref[0] = jnp.mean(y, axis=0, keepdims=True)


def bn_relu_global_avg_pool(x, scale, shift):
    """norm5 -> relu -> adaptive_avg_pool2d((1,1)): (N,H,W,C) -> (N,C)."""
    N, H, W, C = x.shape
    x3 = x.reshape(N, H * W, C)
    out = pl.pallas_call(
        _bn_relu_gap_kernel,
        out_shape=jax.ShapeDtypeStruct((N, 1, C), jnp.float32),
        grid=(N,),
        in_specs=[pl.BlockSpec((1, H * W, C), lambda n: (n, 0, 0)),
                  pl.BlockSpec((1, C), lambda n: (0, 0)),
                  pl.BlockSpec((1, C), lambda n: (0, 0))],
        out_specs=pl.BlockSpec((1, 1, C), lambda n: (n, 0, 0)),
        compiler_params=pltpu.CompilerParams(
            dimension_semantics=("parallel",),
            vmem_limit_bytes=_VMEM_LIMIT),
    )(x3, scale.reshape(1, C).astype(jnp.float32),
      shift.reshape(1, C).astype(jnp.float32))
    return out.reshape(N, C)


# ----------------------------- layout helpers (stem only) -----------------------------

def _im2col(x, kh, kw, stride, pad):
    """NHWC -> (N*Ho*Wo, kh*kw*C) patches; tap order (ih, iw, c).  Used for the 7x7
    stem only (Cin=3), so the absolute HBM blow-up is small."""
    N, H, W, C = x.shape
    if pad:
        x = jnp.pad(x, ((0, 0), (pad, pad), (pad, pad), (0, 0)))
    Ho = (H + 2 * pad - kh) // stride + 1
    Wo = (W + 2 * pad - kw) // stride + 1
    cols = []
    for ih in range(kh):
        for iw in range(kw):
            cols.append(x[:, ih:ih + stride * (Ho - 1) + 1:stride,
                          iw:iw + stride * (Wo - 1) + 1:stride, :])
    patches = jnp.concatenate(cols, axis=-1)
    return patches.reshape(N * Ho * Wo, kh * kw * C), Ho, Wo


# ----------------------------- parameters -----------------------------

def _kaiming_conv(key, kh, kw, cin, cout):
    fan_in = kh * kw * cin
    w = jax.random.normal(key, (kh, kw, cin, cout), jnp.float32) * jnp.sqrt(2.0 / fan_in)
    return w.reshape(kh * kw * cin, cout).astype(jnp.bfloat16)   # im2col weight, bf16


def _bn_folded(c):
    # Module init: gamma=1, beta=0; BatchNorm2d buffers: running_mean=0, running_var=1.
    gamma = jnp.ones((c,), jnp.float32)
    beta = jnp.zeros((c,), jnp.float32)
    mean = jnp.zeros((c,), jnp.float32)
    var = jnp.ones((c,), jnp.float32)
    scale = gamma / jnp.sqrt(var + EPS)
    shift = beta - mean * scale
    return scale, shift


def init_densenet_container_params(key, block_config, num_filters, bn_size, num_classes):
    growth_rate = 32  # DenseNetContainer.__init__ hardcodes growth_rate = 32
    keys = iter(jax.random.split(key, 4 * sum(block_config) + 16))

    params = {}
    params["conv0_w"] = _kaiming_conv(next(keys), 7, 7, 3, num_filters[0])
    # NOTE: norm0 uses num_filters[1] channels (matches num_filters[0] in this config).
    params["norm0"] = _bn_folded(num_filters[1])
    num_features = num_filters[1]

    blocks = []
    for i, num_layers in enumerate(block_config):
        layers = []
        for l in range(num_layers):
            cin = num_features + l * growth_rate
            layers.append({
                "norm1": _bn_folded(cin),
                "conv1_w": _kaiming_conv(next(keys), 1, 1, cin, bn_size * growth_rate),
                "norm2": _bn_folded(bn_size * growth_rate),
                "conv2_w": _kaiming_conv(next(keys), 3, 3, bn_size * growth_rate, growth_rate),
            })
        num_features += num_layers * growth_rate
        blk = {"layers": layers, "trans": None}
        if i != len(block_config) - 1:
            blk["trans"] = {
                "norm": _bn_folded(num_features),
                "conv_w": _kaiming_conv(next(keys), 1, 1, num_features, num_features // 2),
            }
            num_features //= 2
        blocks.append(blk)
    params["blocks"] = blocks

    params["norm5"] = _bn_folded(num_features)
    params["fc_w"] = (jax.random.normal(next(keys), (num_features, num_classes), jnp.float32)
                      / jnp.sqrt(float(num_features))).astype(jnp.bfloat16)
    params["fc_b"] = jnp.zeros((num_classes,), jnp.float32)   # nn.init.constant_(bias, 0)
    return params


# ----------------------------- forward -----------------------------

def _dense_layer(features, lp):
    """norm1 -> relu1 -> conv1(1x1) -> norm2 -> relu2 -> conv2(3x3, pad 1).
    norm1/relu1 run as the matmul prologue, norm2/relu2 as its epilogue."""
    x = jnp.concatenate(features, axis=-1) if len(features) > 1 else features[0]
    N, H, W, C = x.shape
    s1, b1 = lp["norm1"]
    s2, b2 = lp["norm2"]
    bott = fused_matmul(x.reshape(N * H * W, C), lp["conv1_w"],
                        in_scale=s1, in_shift=b1, in_relu=True,
                        out_scale=s2, out_shift=b2, out_relu=True,
                        out_dtype=jnp.bfloat16)               # fed straight to bf16 MXU
    bott = bott.reshape(N, H, W, -1)
    return conv3x3_same(bott, lp["conv2_w"])                  # zero halo added post-ReLU


def densenet_container_forward(params, x_nchw):
    x = jnp.transpose(x_nchw, (0, 2, 3, 1)).astype(jnp.float32)     # NCHW -> NHWC
    N = x.shape[0]

    # stem: conv0(7x7,s2,p3) with norm0+relu0 fused as epilogue, then maxpool0(3x3,s2,p1)
    patches, Ho, Wo = _im2col(x, 7, 7, 2, 3)
    s0, b0 = params["norm0"]
    y = fused_matmul(patches, params["conv0_w"],
                     out_scale=s0, out_shift=b0, out_relu=True)
    y = y.reshape(N, Ho, Wo, -1)
    y = max_pool_3x3_s2_p1(y)

    # dense blocks + transitions
    for blk in params["blocks"]:
        feats = [y]
        for lp in blk["layers"]:
            feats.append(_dense_layer(feats, lp))
        y = jnp.concatenate(feats, axis=-1)
        if blk["trans"] is not None:
            tp = blk["trans"]
            Nc, Hc, Wc, Cc = y.shape
            st, bt = tp["norm"]
            y = fused_matmul(y.reshape(Nc * Hc * Wc, Cc), tp["conv_w"],
                             in_scale=st, in_shift=bt, in_relu=True)
            y = avg_pool_2x2_s2(y.reshape(Nc, Hc, Wc, -1))

    # norm5 -> relu -> global avg pool (fused) -> classifier (bias fused as epilogue)
    s5, b5 = params["norm5"]
    pooled = bn_relu_global_avg_pool(y, s5, b5)                      # (N, C)
    ncls = params["fc_w"].shape[1]
    logits = fused_matmul(pooled, params["fc_w"],
                          out_scale=jnp.ones((ncls,), jnp.float32),
                          out_shift=params["fc_b"])
    return logits


if __name__ == "__main__":
    key = jax.random.PRNGKey(0)
    kp, kx = jax.random.split(key)

    # layer_index=1 (< 2) selects the standard _DenseBlock/_Transition path;
    # growth_rate is hardcoded to 32 in DenseNetContainer.__init__.
    block_config = (2, 2)
    num_filters = [16, 16]           # conv0 out channels / norm0 channels
    bn_size = 4
    num_classes = 14

    params = init_densenet_container_params(kp, block_config, num_filters,
                                             bn_size, num_classes)

    x = jax.random.normal(kx, (2, 3, 32, 32), jnp.float32)  # NCHW, like PyTorch

    fwd = jax.jit(densenet_container_forward)
    out = fwd(params, x)
    jax.block_until_ready(out)
    assert out.shape == (2, num_classes), out.shape
    assert bool(jnp.all(jnp.isfinite(out)))
    print("KERNEL_OK")
</pallas_src>

<mosaic_0001>
module attributes {stable_mosaic.version = 11 : i64} {
  func.func @_fused_matmul_kernel(%arg0: i32, %arg1: memref<512x147xf32, #tpu.memory_space<vmem>>, %arg2: memref<147x16xbf16, #tpu.memory_space<vmem>>, %arg3: memref<1x16xf32, #tpu.memory_space<vmem>>, %arg4: memref<1x16xf32, #tpu.memory_space<vmem>>, %arg5: memref<512x16xf32, #tpu.memory_space<vmem>>) attributes {dimension_semantics = [#tpu.dimension_semantics<parallel>], iteration_bounds = array<i64: 1>, scalar_prefetch = 0 : i64, scratch_operands = 0 : i64, tpu.core_type = #tpu.core_type<tc>, window_params = [{transform_indices = @transform_0, window_bounds = array<i64: 512, 147>}, {pipeline_mode = #tpu.pipeline_mode<synchronous>, transform_indices = @transform_1, window_bounds = array<i64: 147, 16>}, {pipeline_mode = #tpu.pipeline_mode<synchronous>, transform_indices = @transform_2, window_bounds = array<i64: 1, 16>}, {pipeline_mode = #tpu.pipeline_mode<synchronous>, transform_indices = @transform_3, window_bounds = array<i64: 1, 16>}, {transform_indices = @transform_4, window_bounds = array<i64: 512, 16>}]} {
    %c0 = arith.constant 0 : index
    %c0_0 = arith.constant 0 : index
    %0 = vector.load %arg1[%c0, %c0_0] : memref<512x147xf32, #tpu.memory_space<vmem>>, vector<512x147xf32>
    %1 = arith.truncf %0 : vector<512x147xf32> to vector<512x147xbf16>
    %c0_1 = arith.constant 0 : index
    %c0_2 = arith.constant 0 : index
    %2 = vector.load %arg2[%c0_1, %c0_2] : memref<147x16xbf16, #tpu.memory_space<vmem>>, vector<147x16xbf16>
    %cst = arith.constant dense<0.000000e+00> : vector<512x16xf32>
    %3 = tpu.matmul %1, %2, %cst {dimension_numbers = #tpu.dot_dimension_numbers<[1], [0], [0], [1], [0, 0, 1, 1], [], []>} : vector<512x147xbf16>, vector<147x16xbf16>, vector<512x16xf32> -> vector<512x16xf32>
    %c0_3 = arith.constant 0 : index
    %c0_4 = arith.constant 0 : index
    %4 = vector.load %arg3[%c0_3, %c0_4] : memref<1x16xf32, #tpu.memory_space<vmem>>, vector<1x16xf32>
    %5 = vector.broadcast %4 : vector<1x16xf32> to vector<512x16xf32>
    %6 = arith.mulf %3, %5 : vector<512x16xf32>
    %c0_5 = arith.constant 0 : index
    %c0_6 = arith.constant 0 : index
    %7 = vector.load %arg4[%c0_5, %c0_6] : memref<1x16xf32, #tpu.memory_space<vmem>>, vector<1x16xf32>
    %8 = vector.broadcast %7 : vector<1x16xf32> to vector<512x16xf32>
    %9 = arith.addf %6, %8 : vector<512x16xf32>
    %cst_7 = arith.constant 0.000000e+00 : f32
    %10 = vector.broadcast %cst_7 : f32 to vector<512x16xf32>
    %11 = arith.maximumf %9, %10 : vector<512x16xf32>
    %c0_8 = arith.constant 0 : index
    %c0_9 = arith.constant 0 : index
    %12 = vector.load %arg5[%c0_8, %c0_9] : memref<512x16xf32, #tpu.memory_space<vmem>>, vector<512x16xf32>
    tpu.vector_store %arg5[%c0_8, %c0_9], %11 {strides = array<i32>} : memref<512x16xf32, #tpu.memory_space<vmem>>, vector<512x16xf32>,
    return
  }
  func.func @transform_0(%arg0: i32) -> (i32, i32) {
    %c0_i32 = arith.constant 0 : i32
    %c0_i32_0 = arith.constant 0 : i32
    return %arg0, %c0_i32 : i32, i32
  }
  func.func @transform_1(%arg0: i32) -> (i32, i32) {
    %c0_i32 = arith.constant 0 : i32
    %c0_i32_0 = arith.constant 0 : i32
    %c0_i32_1 = arith.constant 0 : i32
    return %c0_i32, %c0_i32_0 : i32, i32
  }
  func.func @transform_2(%arg0: i32) -> (i32, i32) {
    %c0_i32 = arith.constant 0 : i32
    %c0_i32_0 = arith.constant 0 : i32
    %c0_i32_1 = arith.constant 0 : i32
    return %c0_i32, %c0_i32_0 : i32, i32
  }
  func.func @transform_3(%arg0: i32) -> (i32, i32) {
    %c0_i32 = arith.constant 0 : i32
    %c0_i32_0 = arith.constant 0 : i32
    %c0_i32_1 = arith.constant 0 : i32
    return %c0_i32, %c0_i32_0 : i32, i32
  }
  func.func @transform_4(%arg0: i32) -> (i32, i32) {
    %c0_i32 = arith.constant 0 : i32
    %c0_i32_0 = arith.constant 0 : i32
    return %arg0, %c0_i32 : i32, i32
  }
}

module attributes {stable_mosaic.version = 11 : i64} {
  func.func @_tap_pool_kernel(%arg0: i32, %arg1: memref<128x16xf32, #tpu.memory_space<vmem>>, %arg2: memref<128x16xf32, #tpu.memory_space<vmem>>, %arg3: memref<128x16xf32, #tpu.memory_space<vmem>>, %arg4: memref<128x16xf32, #tpu.memory_space<vmem>>, %arg5: memref<128x16xf32, #tpu.memory_space<vmem>>, %arg6: memref<128x16xf32, #tpu.memory_space<vmem>>, %arg7: memref<128x16xf32, #tpu.memory_space<vmem>>, %arg8: memref<128x16xf32, #tpu.memory_space<vmem>>, %arg9: memref<128x16xf32, #tpu.memory_space<vmem>>, %arg10: memref<128x16xf32, #tpu.memory_space<vmem>>) attributes {dimension_semantics = [#tpu.dimension_semantics<parallel>], iteration_bounds = array<i64: 1>, scalar_prefetch = 0 : i64, scratch_operands = 0 : i64, tpu.core_type = #tpu.core_type<tc>, window_params = [{transform_indices = @transform_0, window_bounds = array<i64: 128, 16>}, {transform_indices = @transform_1, window_bounds = array<i64: 128, 16>}, {transform_indices = @transform_2, window_bounds = array<i64: 128, 16>}, {transform_indices = @transform_3, window_bounds = array<i64: 128, 16>}, {transform_indices = @transform_4, window_bounds = array<i64: 128, 16>}, {transform_indices = @transform_5, window_bounds = array<i64: 128, 16>}, {transform_indices = @transform_6, window_bounds = array<i64: 128, 16>}, {transform_indices = @transform_7, window_bounds = array<i64: 128, 16>}, {transform_indices = @transform_8, window_bounds = array<i64: 128, 16>}, {transform_indices = @transform_9, window_bounds = array<i64: 128, 16>}]} {
    %c0 = arith.constant 0 : index
    %c0_0 = arith.constant 0 : index
    %0 = vector.load %arg1[%c0, %c0_0] : memref<128x16xf32, #tpu.memory_space<vmem>>, vector<128x16xf32>
    %c0_1 = arith.constant 0 : index
    %c0_2 = arith.constant 0 : index
    %1 = vector.load %arg2[%c0_1, %c0_2] : memref<128x16xf32, #tpu.memory_space<vmem>>, vector<128x16xf32>
    %2 = arith.maximumf %0, %1 : vector<128x16xf32>
    %c0_3 = arith.constant 0 : index
    %c0_4 = arith.constant 0 : index
    %3 = vector.load %arg3[%c0_3, %c0_4] : memref<128x16xf32, #tpu.memory_space<vmem>>, vector<128x16xf32>
    %4 = arith.maximumf %2, %3 : vector<128x16xf32>
    %c0_5 = arith.constant 0 : index
    %c0_6 = arith.constant 0 : index
    %5 = vector.load %arg4[%c0_5, %c0_6] : memref<128x16xf32, #tpu.memory_space<vmem>>, vector<128x16xf32>
    %6 = arith.maximumf %4, %5 : vector<128x16xf32>
    %c0_7 = arith.constant 0 : index
    %c0_8 = arith.constant 0 : index
    %7 = vector.load %arg5[%c0_7, %c0_8] : memref<128x16xf32, #tpu.memory_space<vmem>>, vector<128x16xf32>
    %8 = arith.maximumf %6, %7 : vector<128x16xf32>
    %c0_9 = arith.constant 0 : index
    %c0_10 = arith.constant 0 : index
    %9 = vector.load %arg6[%c0_9, %c0_10] : memref<128x16xf32, #tpu.memory_space<vmem>>, vector<128x16xf32>
    %10 = arith.maximumf %8, %9 : vector<128x16xf32>
    %c0_11 = arith.constant 0 : index
    %c0_12 = arith.constant 0 : index
    %11 = vector.load %arg7[%c0_11, %c0_12] : memref<128x16xf32, #tpu.memory_space<vmem>>, vector<128x16xf32>
    %12 = arith.maximumf %10, %11 : vector<128x16xf32>
    %c0_13 = arith.constant 0 : index
    %c0_14 = arith.constant 0 : index
    %13 = vector.load %arg8[%c0_13, %c0_14] : memref<128x16xf32, #tpu.memory_space<vmem>>, vector<128x16xf32>
    %14 = arith.maximumf %12, %13 : vector<128x16xf32>
    %c0_15 = arith.constant 0 : index
    %c0_16 = arith.constant 0 : index
    %15 = vector.load %arg9[%c0_15, %c0_16] : memref<128x16xf32, #tpu.memory_space<vmem>>, vector<128x16xf32>
    %16 = arith.maximumf %14, %15 : vector<128x16xf32>
    %c0_17 = arith.constant 0 : index
    %c0_18 = arith.constant 0 : index
    %17 = vector.load %arg10[%c0_17, %c0_18] : memref<128x16xf32, #tpu.memory_space<vmem>>, vector<128x16xf32>
    tpu.vector_store %arg10[%c0_17, %c0_18], %16 {strides = array<i32>} : memref<128x16xf32, #tpu.memory_space<vmem>>, vector<128x16xf32>,
    return
  }
  func.func @transform_0(%arg0: i32) -> (i32, i32) {
    %c0_i32 = arith.constant 0 : i32
    %c0_i32_0 = arith.constant 0 : i32
    return %arg0, %c0_i32 : i32, i32
  }
  func.func @transform_1(%arg0: i32) -> (i32, i32) {
    %c0_i32 = arith.constant 0 : i32
    %c0_i32_0 = arith.constant 0 : i32
    return %arg0, %c0_i32 : i32, i32
  }
  func.func @transform_2(%arg0: i32) -> (i32, i32) {
    %c0_i32 = arith.constant 0 : i32
    %c0_i32_0 = arith.constant 0 : i32
    return %arg0, %c0_i32 : i32, i32
  }
  func.func @transform_3(%arg0: i32) -> (i32, i32) {
    %c0_i32 = arith.constant 0 : i32
    %c0_i32_0 = arith.constant 0 : i32
    return %arg0, %c0_i32 : i32, i32
  }
  func.func @transform_4(%arg0: i32) -> (i32, i32) {
    %c0_i32 = arith.constant 0 : i32
    %c0_i32_0 = arith.constant 0 : i32
    return %arg0, %c0_i32 : i32, i32
  }
  func.func @transform_5(%arg0: i32) -> (i32, i32) {
    %c0_i32 = arith.constant 0 : i32
    %c0_i32_0 = arith.constant 0 : i32
    return %arg0, %c0_i32 : i32, i32
  }
  func.func @transform_6(%arg0: i32) -> (i32, i32) {
    %c0_i32 = arith.constant 0 : i32
    %c0_i32_0 = arith.constant 0 : i32
    return %arg0, %c0_i32 : i32, i32
  }
  func.func @transform_7(%arg0: i32) -> (i32, i32) {
    %c0_i32 = arith.constant 0 : i32
    %c0_i32_0 = arith.constant 0 : i32
    return %arg0, %c0_i32 : i32, i32
  }
  func.func @transform_8(%arg0: i32) -> (i32, i32) {
    %c0_i32 = arith.constant 0 : i32
    %c0_i32_0 = arith.constant 0 : i32
    return %arg0, %c0_i32 : i32, i32
  }
  func.func @transform_9(%arg0: i32) -> (i32, i32) {
    %c0_i32 = arith.constant 0 : i32
    %c0_i32_0 = arith.constant 0 : i32
    return %arg0, %c0_i32 : i32, i32
  }
}

module attributes {stable_mosaic.version = 11 : i64} {
  func.func @_fused_matmul_kernel(%arg0: i32, %arg1: memref<128x16xf32, #tpu.memory_space<vmem>>, %arg2: memref<16x128xbf16, #tpu.memory_space<vmem>>, %arg3: memref<1x16xf32, #tpu.memory_space<vmem>>, %arg4: memref<1x16xf32, #tpu.memory_space<vmem>>, %arg5: memref<1x128xf32, #tpu.memory_space<vmem>>, %arg6: memref<1x128xf32, #tpu.memory_space<vmem>>, %arg7: memref<128x128xbf16, #tpu.memory_space<vmem>>) attributes {dimension_semantics = [#tpu.dimension_semantics<parallel>], iteration_bounds = array<i64: 1>, scalar_prefetch = 0 : i64, scratch_operands = 0 : i64, tpu.core_type = #tpu.core_type<tc>, window_params = [{transform_indices = @transform_0, window_bounds = array<i64: 128, 16>}, {pipeline_mode = #tpu.pipeline_mode<synchronous>, transform_indices = @transform_1, window_bounds = array<i64: 16, 128>}, {pipeline_mode = #tpu.pipeline_mode<synchronous>, transform_indices = @transform_2, window_bounds = array<i64: 1, 16>}, {pipeline_mode = #tpu.pipeline_mode<synchronous>, transform_indices = @transform_3, window_bounds = array<i64: 1, 16>}, {pipeline_mode = #tpu.pipeline_mode<synchronous>, transform_indices = @transform_4, window_bounds = array<i64: 1, 128>}, {pipeline_mode = #tpu.pipeline_mode<synchronous>, transform_indices = @transform_5, window_bounds = array<i64: 1, 128>}, {transform_indices = @transform_6, window_bounds = array<i64: 128, 128>}]} {
    %c0 = arith.constant 0 : index
    %c0_0 = arith.constant 0 : index
    %0 = vector.load %arg1[%c0, %c0_0] : memref<128x16xf32, #tpu.memory_space<vmem>>, vector<128x16xf32>
    %c0_1 = arith.constant 0 : index
    %c0_2 = arith.constant 0 : index
    %1 = vector.load %arg3[%c0_1, %c0_2] : memref<1x16xf32, #tpu.memory_space<vmem>>, vector<1x16xf32>
    %2 = vector.broadcast %1 : vector<1x16xf32> to vector<128x16xf32>
    %3 = arith.mulf %0, %2 : vector<128x16xf32>
    %c0_3 = arith.constant 0 : index
    %c0_4 = arith.constant 0 : index
    %4 = vector.load %arg4[%c0_3, %c0_4] : memref<1x16xf32, #tpu.memory_space<vmem>>, vector<1x16xf32>
    %5 = vector.broadcast %4 : vector<1x16xf32> to vector<128x16xf32>
    %6 = arith.addf %3, %5 : vector<128x16xf32>
    %cst = arith.constant 0.000000e+00 : f32
    %7 = vector.broadcast %cst : f32 to vector<128x16xf32>
    %8 = arith.maximumf %6, %7 : vector<128x16xf32>
    %9 = arith.truncf %8 : vector<128x16xf32> to vector<128x16xbf16>
    %c0_5 = arith.constant 0 : index
    %c0_6 = arith.constant 0 : index
    %10 = vector.load %arg2[%c0_5, %c0_6] : memref<16x128xbf16, #tpu.memory_space<vmem>>, vector<16x128xbf16>
    %cst_7 = arith.constant dense<0.000000e+00> : vector<128x128xf32>
    %11 = tpu.matmul %9, %10, %cst_7 {dimension_numbers = #tpu.dot_dimension_numbers<[1], [0], [0], [1], [0, 0, 1, 1], [], []>} : vector<128x16xbf16>, vector<16x128xbf16>, vector<128x128xf32> -> vector<128x128xf32>
    %c0_8 = arith.constant 0 : index
    %c0_9 = arith.constant 0 : index
    %12 = vector.load %arg5[%c0_8, %c0_9] : memref<1x128xf32, #tpu.memory_space<vmem>>, vector<1x128xf32>
    %13 = vector.broadcast %12 : vector<1x128xf32> to vector<128x128xf32>
    %14 = arith.mulf %11, %13 : vector<128x128xf32>
    %c0_10 = arith.constant 0 : index
    %c0_11 = arith.constant 0 : index
    %15 = vector.load %arg6[%c0_10, %c0_11] : memref<1x128xf32, #tpu.memory_space<vmem>>, vector<1x128xf32>
    %16 = vector.broadcast %15 : vector<1x128xf32> to vector<128x128xf32>
    %17 = arith.addf %14, %16 : vector<128x128xf32>
    %cst_12 = arith.constant 0.000000e+00 : f32
    %18 = vector.broadcast %cst_12 : f32 to vector<128x128xf32>
    %19 = arith.maximumf %17, %18 : vector<128x128xf32>
    %20 = arith.truncf %19 : vector<128x128xf32> to vector<128x128xbf16>
    %c0_13 = arith.constant 0 : index
    %c0_14 = arith.constant 0 : index
    %21 = vector.load %arg7[%c0_13, %c0_14] : memref<128x128xbf16, #tpu.memory_space<vmem>>, vector<128x128xbf16>
    tpu.vector_store %arg7[%c0_13, %c0_14], %20 {strides = array<i32>} : memref<128x128xbf16, #tpu.memory_space<vmem>>, vector<128x128xbf16>,
    return
  }
  func.func @transform_0(%arg0: i32) -> (i32, i32) {
    %c0_i32 = arith.constant 0 : i32
    %c0_i32_0 = arith.constant 0 : i32
    return %arg0, %c0_i32 : i32, i32
  }
  func.func @transform_1(%arg0: i32) -> (i32, i32) {
    %c0_i32 = arith.constant 0 : i32
    %c0_i32_0 = arith.constant 0 : i32
    %c0_i32_1 = arith.constant 0 : i32
    return %c0_i32, %c0_i32_0 : i32, i32
  }
  func.func @transform_2(%arg0: i32) -> (i32, i32) {
    %c0_i32 = arith.constant 0 : i32
    %c0_i32_0 = arith.constant 0 : i32
    %c0_i32_1 = arith.constant 0 : i32
    return %c0_i32, %c0_i32_0 : i32, i32
  }
  func.func @transform_3(%arg0: i32) -> (i32, i32) {
    %c0_i32 = arith.constant 0 : i32
    %c0_i32_0 = arith.constant 0 : i32
    %c0_i32_1 = arith.constant 0 : i32
    return %c0_i32, %c0_i32_0 : i32, i32
  }
  func.func @transform_4(%arg0: i32) -> (i32, i32) {
    %c0_i32 = arith.constant 0 : i32
    %c0_i32_0 = arith.constant 0 : i32
    %c0_i32_1 = arith.constant 0 : i32
    return %c0_i32, %c0_i32_0 : i32, i32
  }
  func.func @transform_5(%arg0: i32) -> (i32, i32) {
    %c0_i32 = arith.constant 0 : i32
    %c0_i32_0 = arith.constant 0 : i32
    %c0_i32_1 = arith.constant 0 : i32
    return %c0_i32, %c0_i32_0 : i32, i32
  }
  func.func @transform_6(%arg0: i32) -> (i32, i32) {
    %c0_i32 = arith.constant 0 : i32
    %c0_i32_0 = arith.constant 0 : i32
    return %arg0, %c0_i32 : i32, i32
  }
}

module attributes {stable_mosaic.version = 11 : i64} {
  func.func @_conv3x3_kernel(%arg0: i32, %arg1: i32, %arg2: memref<1x10x10x128xbf16, #tpu.memory_space<vmem>>, %arg3: memref<1152x32xbf16, #tpu.memory_space<vmem>>, %arg4: memref<1x8x8x32xf32, #tpu.memory_space<vmem>>) attributes {dimension_semantics = [#tpu.dimension_semantics<parallel>, #tpu.dimension_semantics<arbitrary>], iteration_bounds = array<i64: 2, 1>, scalar_prefetch = 0 : i64, scratch_operands = 0 : i64, tpu.core_type = #tpu.core_type<tc>, window_params = [{transform_indices = @transform_0, window_bounds = array<i64: 1, 10, 10, 128>}, {pipeline_mode = #tpu.pipeline_mode<synchronous>, transform_indices = @transform_1, window_bounds = array<i64: 1152, 32>}, {transform_indices = @transform_2, window_bounds = array<i64: 1, 8, 8, 32>}]} {
    %c0 = arith.constant 0 : index
    %c0_0 = arith.constant 0 : index
    %0 = vector.load %arg3[%c0, %c0_0] : memref<1152x32xbf16, #tpu.memory_space<vmem>>, vector<1152x32xbf16>
    %c8_i32 = arith.constant 8 : i32
    %1 = arith.muli %arg1, %c8_i32 : i32
    %c0_i32 = arith.constant 0 : i32
    %2 = arith.addi %1, %c0_i32 : i32
    %c0_i32_1 = arith.constant 0 : i32
    %3 = arith.addi %2, %c0_i32_1 : i32
    %c0_2 = arith.constant 0 : index
    %4 = arith.index_cast %3 : i32 to index
    %c0_3 = arith.constant 0 : index
    %c0_4 = arith.constant 0 : index
    %5 = vector.load %arg2[%c0_2, %4, %c0_3, %c0_4] : memref<1x10x10x128xbf16, #tpu.memory_space<vmem>>, vector<1x1x10x128xbf16>
    %6 = vector.shape_cast %5 : vector<1x1x10x128xbf16> to vector<10x128xbf16>
    %7 = vector.extract_strided_slice %6 {offsets = [0, 0], sizes = [8, 128], strides = [1, 1]} : vector<10x128xbf16> to vector<8x128xbf16>
    %8 = vector.extract_strided_slice %6 {offsets = [1, 0], sizes = [8, 128], strides = [1, 1]} : vector<10x128xbf16> to vector<8x128xbf16>
    %9 = vector.extract_strided_slice %6 {offsets = [2, 0], sizes = [8, 128], strides = [1, 1]} : vector<10x128xbf16> to vector<8x128xbf16>
    %c0_i32_5 = arith.constant 0 : i32
    %10 = arith.addi %1, %c0_i32_5 : i32
    %c1_i32 = arith.constant 1 : i32
    %11 = arith.addi %10, %c1_i32 : i32
    %c0_6 = arith.constant 0 : index
    %12 = arith.index_cast %11 : i32 to index
    %c0_7 = arith.constant 0 : index
    %c0_8 = arith.constant 0 : index
    %13 = vector.load %arg2[%c0_6, %12, %c0_7, %c0_8] : memref<1x10x10x128xbf16, #tpu.memory_space<vmem>>, vector<1x1x10x128xbf16>
    %14 = vector.shape_cast %13 : vector<1x1x10x128xbf16> to vector<10x128xbf16>
    %15 = vector.extract_strided_slice %14 {offsets = [0, 0], sizes = [8, 128], strides = [1, 1]} : vector<10x128xbf16> to vector<8x128xbf16>
    %16 = vector.extract_strided_slice %14 {offsets = [1, 0], sizes = [8, 128], strides = [1, 1]} : vector<10x128xbf16> to vector<8x128xbf16>
    %17 = vector.extract_strided_slice %14 {offsets = [2, 0], sizes = [8, 128], strides = [1, 1]} : vector<10x128xbf16> to vector<8x128xbf16>
    %c0_i32_9 = arith.constant 0 : i32
    %18 = arith.addi %1, %c0_i32_9 : i32
    %c2_i32 = arith.constant 2 : i32
    %19 = arith.addi %18, %c2_i32 : i32
    %c0_10 = arith.constant 0 : index
    %20 = arith.index_cast %19 : i32 to index
    %c0_11 = arith.constant 0 : index
    %c0_12 = arith.constant 0 : index
    %21 = vector.load %arg2[%c0_10, %20, %c0_11, %c0_12] : memref<1x10x10x128xbf16, #tpu.memory_space<vmem>>, vector<1x1x10x128xbf16>
    %22 = vector.shape_cast %21 : vector<1x1x10x128xbf16> to vector<10x128xbf16>
    %23 = vector.extract_strided_slice %22 {offsets = [0, 0], sizes = [8, 128], strides = [1, 1]} : vector<10x128xbf16> to vector<8x128xbf16>
    %24 = vector.extract_strided_slice %22 {offsets = [1, 0], sizes = [8, 128], strides = [1, 1]} : vector<10x128xbf16> to vector<8x128xbf16>
    %25 = vector.extract_strided_slice %22 {offsets = [2, 0], sizes = [8, 128], strides = [1, 1]} : vector<10x128xbf16> to vector<8x128xbf16>
    %26 = tpu.concatenate %7, %8, %9, %15, %16, %17, %23, %24, %25 in 1 : vector<8x128xbf16>, vector<8x128xbf16>, vector<8x128xbf16>, vector<8x128xbf16>, vector<8x128xbf16>, vector<8x128xbf16>, vector<8x128xbf16>, vector<8x128xbf16>, vector<8x128xbf16> -> vector<8x1152xbf16>
    %cst = arith.constant dense<0.000000e+00> : vector<8x32xf32>
    %27 = tpu.matmul %26, %0, %cst {dimension_numbers = #tpu.dot_dimension_numbers<[1], [0], [0], [1], [0, 0, 1, 1], [], []>} : vector<8x1152xbf16>, vector<1152x32xbf16>, vector<8x32xf32> -> vector<8x32xf32>
    %c0_13 = arith.constant 0 : index
    %c0_14 = arith.constant 0 : index
    %c0_15 = arith.constant 0 : index
    %c0_16 = arith.constant 0 : index
    %28 = vector.load %arg4[%c0_13, %c0_14, %c0_15, %c0_16] : memref<1x8x8x32xf32, #tpu.memory_space<vmem>>, vector<1x1x8x32xf32>
    %29 = vector.shape_cast %28 : vector<1x1x8x32xf32> to vector<8x32xf32>
    %30 = vector.shape_cast %27 : vector<8x32xf32> to vector<1x1x8x32xf32>
    tpu.vector_store %arg4[%c0_13, %c0_14, %c0_15, %c0_16], %30 {strides = array<i32>} : memref<1x8x8x32xf32, #tpu.memory_space<vmem>>, vector<1x1x8x32xf32>,
    %c1_i32_17 = arith.constant 1 : i32
    %31 = arith.addi %1, %c1_i32_17 : i32
    %c0_i32_18 = arith.constant 0 : i32
    %32 = arith.addi %31, %c0_i32_18 : i32
    %c0_19 = arith.constant 0 : index
    %33 = arith.index_cast %32 : i32 to index
    %c0_20 = arith.constant 0 : index
    %c0_21 = arith.constant 0 : index
    %34 = vector.load %arg2[%c0_19, %33, %c0_20, %c0_21] : memref<1x10x10x128xbf16, #tpu.memory_space<vmem>>, vector<1x1x10x128xbf16>
    %35 = vector.shape_cast %34 : vector<1x1x10x128xbf16> to vector<10x128xbf16>
    %36 = vector.extract_strided_slice %35 {offsets = [0, 0], sizes = [8, 128], strides = [1, 1]} : vector<10x128xbf16> to vector<8x128xbf16>
    %37 = vector.extract_strided_slice %35 {offsets = [1, 0], sizes = [8, 128], strides = [1, 1]} : vector<10x128xbf16> to vector<8x128xbf16>
    %38 = vector.extract_strided_slice %35 {offsets = [2, 0], sizes = [8, 128], strides = [1, 1]} : vector<10x128xbf16> to vector<8x128xbf16>
    %c1_i32_22 = arith.constant 1 : i32
    %39 = arith.addi %1, %c1_i32_22 : i32
    %c1_i32_23 = arith.constant 1 : i32
    %40 = arith.addi %39, %c1_i32_23 : i32
    %c0_24 = arith.constant 0 : index
    %41 = arith.index_cast %40 : i32 to index
    %c0_25 = arith.constant 0 : index
    %c0_26 = arith.constant 0 : index
    %42 = vector.load %arg2[%c0_24, %41, %c0_25, %c0_26] : memref<1x10x10x128xbf16, #tpu.memory_space<vmem>>, vector<1x1x10x128xbf16>
    %43 = vector.shape_cast %42 : vector<1x1x10x128xbf16> to vector<10x128xbf16>
    %44 = vector.extract_strided_slice %43 {offsets = [0, 0], sizes = [8, 128], strides = [1, 1]} : vector<10x128xbf16> to vector<8x128xbf16>
    %45 = vector.extract_strided_slice %43 {offsets = [1, 0], sizes = [8, 128], strides = [1, 1]} : vector<10x128xbf16> to vector<8x128xbf16>
    %46 = vector.extract_strided_slice %43 {offsets = [2, 0], sizes = [8, 128], strides = [1, 1]} : vector<10x128xbf16> to vector<8x128xbf16>
    %c1_i32_27 = arith.constant 1 : i32
    %47 = arith.addi %1, %c1_i32_27 : i32
    %c2_i32_28 = arith.constant 2 : i32
    %48 = arith.addi %47, %c2_i32_28 : i32
    %c0_29 = arith.constant 0 : index
    %49 = arith.index_cast %48 : i32 to index
    %c0_30 = arith.constant 0 : index
    %c0_31 = arith.constant 0 : index
    %50 = vector.load %arg2[%c0_29, %49, %c0_30, %c0_31] : memref<1x10x10x128xbf16, #tpu.memory_space<vmem>>, vector<1x1x10x128xbf16>
    %51 = vector.shape_cast %50 : vector<1x1x10x128xbf16> to vector<10x128xbf16>
    %52 = vector.extract_strided_slice %51 {offsets = [0, 0], sizes = [8, 128], strides = [1, 1]} : vector<10x128xbf16> to vector<8x128xbf16>
    %53 = vector.extract_strided_slice %51 {offsets = [1, 0], sizes = [8, 128], strides = [1, 1]} : vector<10x128xbf16> to vector<8x128xbf16>
    %54 = vector.extract_strided_slice %51 {offsets = [2, 0], sizes = [8, 128], strides = [1, 1]} : vector<10x128xbf16> to vector<8x128xbf16>
    %55 = tpu.concatenate %36, %37, %38, %44, %45, %46, %52, %53, %54 in 1 : vector<8x128xbf16>, vector<8x128xbf16>, vector<8x128xbf16>, vector<8x128xbf16>, vector<8x128xbf16>, vector<8x128xbf16>, vector<8x128xbf16>, vector<8x128xbf16>, vector<8x128xbf16> -> vector<8x1152xbf16>
    %cst_32 = arith.constant dense<0.000000e+00> : vector<8x32xf32>
    %56 = tpu.matmul %55, %0, %cst_32 {dimension_numbers = #tpu.dot_dimension_numbers<[1], [0], [0], [1], [0, 0, 1, 1], [], []>} : vector<8x1152xbf16>, vector<1152x32xbf16>, vector<8x32xf32> -> vector<8x32xf32>
    %c0_33 = arith.constant 0 : index
    %c1 = arith.constant 1 : index
    %c0_34 = arith.constant 0 : index
    %c0_35 = arith.constant 0 : index
    %57 = vector.load %arg4[%c0_33, %c1, %c0_34, %c0_35] : memref<1x8x8x32xf32, #tpu.memory_space<vmem>>, vector<1x1x8x32xf32>
    %58 = vector.shape_cast %57 : vector<1x1x8x32xf32> to vector<8x32xf32>
    %59 = vector.shape_cast %56 : vector<8x32xf32> to vector<1x1x8x32xf32>
    tpu.vector_store %arg4[%c0_33, %c1, %c0_34, %c0_35], %59 {strides = array<i32>} : memref<1x8x8x32xf32, #tpu.memory_space<vmem>>, vector<1x1x8x32xf32>,
    %c2_i32_36 = arith.constant 2 : i32
    %60 = arith.addi %1, %c2_i32_36 : i32
    %c0_i32_37 = arith.constant 0 : i32
    %61 = arith.addi %60, %c0_i32_37 : i32
    %c0_38 = arith.constant 0 : index
    %62 = arith.index_cast %61 : i32 to index
    %c0_39 = arith.constant 0 : index
    %c0_40 = arith.constant 0 : index
    %63 = vector.load %arg2[%c0_38, %62, %c0_39, %c0_40] : memref<1x10x10x128xbf16, #tpu.memory_space<vmem>>, vector<1x1x10x128xbf16>
    %64 = vector.shape_cast %63 : vector<1x1x10x128xbf16> to vector<10x128xbf16>
    %65 = vector.extract_strided_slice %64 {offsets = [0, 0], sizes = [8, 128], strides = [1, 1]} : vector<10x128xbf16> to vector<8x128xbf16>
    %66 = vector.extract_strided_slice %64 {offsets = [1, 0], sizes = [8, 128], strides = [1, 1]} : vector<10x128xbf16> to vector<8x128xbf16>
    %67 = vector.extract_strided_slice %64 {offsets = [2, 0], sizes = [8, 128], strides = [1, 1]} : vector<10x128xbf16> to vector<8x128xbf16>
    %c2_i32_41 = arith.constant 2 : i32
    %68 = arith.addi %1, %c2_i32_41 : i32
    %c1_i32_42 = arith.constant 1 : i32
    %69 = arith.addi %68, %c1_i32_42 : i32
    %c0_43 = arith.constant 0 : index
    %70 = arith.index_cast %69 : i32 to index
    %c0_44 = arith.constant 0 : index
    %c0_45 = arith.constant 0 : index
    %71 = vector.load %arg2[%c0_43, %70, %c0_44, %c0_45] : memref<1x10x10x128xbf16, #tpu.memory_space<vmem>>, vector<1x1x10x128xbf16>
    %72 = vector.shape_cast %71 : vector<1x1x10x128xbf16> to vector<10x128xbf16>
    %73 = vector.extract_strided_slice %72 {offsets = [0, 0], sizes = [8, 128], strides = [1, 1]} : vector<10x128xbf16> to vector<8x128xbf16>
    %74 = vector.extract_strided_slice %72 {offsets = [1, 0], sizes = [8, 128], strides = [1, 1]} : vector<10x128xbf16> to vector<8x128xbf16>
    %75 = vector.extract_strided_slice %72 {offsets = [2, 0], sizes = [8, 128], strides = [1, 1]} : vector<10x128xbf16> to vector<8x128xbf16>
    %c2_i32_46 = arith.constant 2 : i32
    %76 = arith.addi %1, %c2_i32_46 : i32
    %c2_i32_47 = arith.constant 2 : i32
    %77 = arith.addi %76, %c2_i32_47 : i32
    %c0_48 = arith.constant 0 : index
    %78 = arith.index_cast %77 : i32 to index
    %c0_49 = arith.constant 0 : index
    %c0_50 = arith.constant 0 : index
    %79 = vector.load %arg2[%c0_48, %78, %c0_49, %c0_50] : memref<1x10x10x128xbf16, #tpu.memory_space<vmem>>, vector<1x1x10x128xbf16>
    %80 = vector.shape_cast %79 : vector<1x1x10x128xbf16> to vector<10x128xbf16>
    %81 = vector.extract_strided_slice %80 {offsets = [0, 0], sizes = [8, 128], strides = [1, 1]} : vector<10x128xbf16> to vector<8x128xbf16>
    %82 = vector.extract_strided_slice %80 {offsets = [1, 0], sizes = [8, 128], strides = [1, 1]} : vector<10x128xbf16> to vector<8x128xbf16>
    %83 = vector.extract_strided_slice %80 {offsets = [2, 0], sizes = [8, 128], strides = [1, 1]} : vector<10x128xbf16> to vector<8x128xbf16>
    %84 = tpu.concatenate %65, %66, %67, %73, %74, %75, %81, %82, %83 in 1 : vector<8x128xbf16>, vector<8x128xbf16>, vector<8x128xbf16>, vector<8x128xbf16>, vector<8x128xbf16>, vector<8x128xbf16>, vector<8x128xbf16>, vector<8x128xbf16>, vector<8x128xbf16> -> vector<8x1152xbf16>
    %cst_51 = arith.constant dense<0.000000e+00> : vector<8x32xf32>
    %85 = tpu.matmul %84, %0, %cst_51 {dimension_numbers = #tpu.dot_dimension_numbers<[1], [0], [0], [1], [0, 0, 1, 1], [], []>} : vector<8x1152xbf16>, vector<1152x32xbf16>, vector<8x32xf32> -> vector<8x32xf32>
    %c0_52 = arith.constant 0 : index
    %c2 = arith.constant 2 : index
    %c0_53 = arith.constant 0 : index
    %c0_54 = arith.constant 0 : index
    %86 = vector.load %arg4[%c0_52, %c2, %c0_53, %c0_54] : memref<1x8x8x32xf32, #tpu.memory_space<vmem>>, vector<1x1x8x32xf32>
    %87 = vector.shape_cast %86 : vector<1x1x8x32xf32> to vector<8x32xf32>
    %88 = vector.shape_cast %85 : vector<8x32xf32> to vector<1x1x8x32xf32>
    tpu.vector_store %arg4[%c0_52, %c2, %c0_53, %c0_54], %88 {strides = array<i32>} : memref<1x8x8x32xf32, #tpu.memory_space<vmem>>, vector<1x1x8x32xf32>,
    %c3_i32 = arith.constant 3 : i32
    %89 = arith.addi %1, %c3_i32 : i32
    %c0_i32_55 = arith.constant 0 : i32
    %90 = arith.addi %89, %c0_i32_55 : i32
    %c0_56 = arith.constant 0 : index
    %91 = arith.index_cast %90 : i32 to index
    %c0_57 = arith.constant 0 : index
    %c0_58 = arith.constant 0 : index
    %92 = vector.load %arg2[%c0_56, %91, %c0_57, %c0_58] : memref<1x10x10x128xbf16, #tpu.memory_space<vmem>>, vector<1x1x10x128xbf16>
    %93 = vector.shape_cast %92 : vector<1x1x10x128xbf16> to vector<10x128xbf16>
    %94 = vector.extract_strided_slice %93 {offsets = [0, 0], sizes = [8, 128], strides = [1, 1]} : vector<10x128xbf16> to vector<8x128xbf16>
    %95 = vector.extract_strided_slice %93 {offsets = [1, 0], sizes = [8, 128], strides = [1, 1]} : vector<10x128xbf16> to vector<8x128xbf16>
    %96 = vector.extract_strided_slice %93 {offsets = [2, 0], sizes = [8, 128], strides = [1, 1]} : vector<10x128xbf16> to vector<8x128xbf16>
    %c3_i32_59 = arith.constant 3 : i32
    %97 = arith.addi %1, %c3_i32_59 : i32
    %c1_i32_60 = arith.constant 1 : i32
    %98 = arith.addi %97, %c1_i32_60 : i32
    %c0_61 = arith.constant 0 : index
    %99 = arith.index_cast %98 : i32 to index
    %c0_62 = arith.constant 0 : index
    %c0_63 = arith.constant 0 : index
    %100 = vector.load %arg2[%c0_61, %99, %c0_62, %c0_63] : memref<1x10x10x128xbf16, #tpu.memory_space<vmem>>, vector<1x1x10x128xbf16>
    %101 = vector.shape_cast %100 : vector<1x1x10x128xbf16> to vector<10x128xbf16>
    %102 = vector.extract_strided_slice %101 {offsets = [0, 0], sizes = [8, 128], strides = [1, 1]} : vector<10x128xbf16> to vector<8x128xbf16>
    %103 = vector.extract_strided_slice %101 {offsets = [1, 0], sizes = [8, 128], strides = [1, 1]} : vector<10x128xbf16> to vector<8x128xbf16>
    %104 = vector.extract_strided_slice %101 {offsets = [2, 0], sizes = [8, 128], strides = [1, 1]} : vector<10x128xbf16> to vector<8x128xbf16>
    %c3_i32_64 = arith.constant 3 : i32
    %105 = arith.addi %1, %c3_i32_64 : i32
    %c2_i32_65 = arith.constant 2 : i32
    %106 = arith.addi %105, %c2_i32_65 : i32
    %c0_66 = arith.constant 0 : index
    %107 = arith.index_cast %106 : i32 to index
    %c0_67 = arith.constant 0 : index
    %c0_68 = arith.constant 0 : index
    %108 = vector.load %arg2[%c0_66, %107, %c0_67, %c0_68] : memref<1x10x10x128xbf16, #tpu.memory_space<vmem>>, vector<1x1x10x128xbf16>
    %109 = vector.shape_cast %108 : vector<1x1x10x128xbf16> to vector<10x128xbf16>
    %110 = vector.extract_strided_slice %109 {offsets = [0, 0], sizes = [8, 128], strides = [1, 1]} : vector<10x128xbf16> to vector<8x128xbf16>
    %111 = vector.extract_strided_slice %109 {offsets = [1, 0], sizes = [8, 128], strides = [1, 1]} : vector<10x128xbf16> to vector<8x128xbf16>
    %112 = vector.extract_strided_slice %109 {offsets = [2, 0], sizes = [8, 128], strides = [1, 1]} : vector<10x128xbf16> to vector<8x128xbf16>
    %113 = tpu.concatenate %94, %95, %96, %102, %103, %104, %110, %111, %112 in 1 : vector<8x128xbf16>, vector<8x128xbf16>, vector<8x128xbf16>, vector<8x128xbf16>, vector<8x128xbf16>, vector<8x128xbf16>, vector<8x128xbf16>, vector<8x128xbf16>, vector<8x128xbf16> -> vector<8x1152xbf16>
    %cst_69 = arith.constant dense<0.000000e+00> : vector<8x32xf32>
    %114 = tpu.matmul %113, %0, %cst_69 {dimension_numbers = #tpu.dot_dimension_numbers<[1], [0], [0], [1], [0, 0, 1, 1], [], []>} : vector<8x1152xbf16>, vector<1152x32xbf16>, vector<8x32xf32> -> vector<8x32xf32>
    %c0_70 = arith.constant 0 : index
    %c3 = arith.constant 3 : index
    %c0_71 = arith.constant 0 : index
    %c0_72 = arith.constant 0 : index
    %115 = vector.load %arg4[%c0_70, %c3, %c0_71, %c0_72] : memref<1x8x8x32xf32, #tpu.memory_space<vmem>>, vector<1x1x8x32xf32>
    %116 = vector.shape_cast %115 : vector<1x1x8x32xf32> to vector<8x32xf32>
    %117 = vector.shape_cast %114 : vector<8x32xf32> to vector<1x1x8x32xf32>
    tpu.vector_store %arg4[%c0_70, %c3, %c0_71, %c0_72], %117 {strides = array<i32>} : memref<1x8x8x32xf32, #tpu.memory_space<vmem>>, vector<1x1x8x32xf32>,
    %c4_i32 = arith.constant 4 : i32
    %118 = arith.addi %1, %c4_i32 : i32
    %c0_i32_73 = arith.constant 0 : i32
    %119 = arith.addi %118, %c0_i32_73 : i32
    %c0_74 = arith.constant 0 : index
    %120 = arith.index_cast %119 : i32 to index
    %c0_75 = arith.constant 0 : index
    %c0_76 = arith.constant 0 : index
    %121 = vector.load %arg2[%c0_74, %120, %c0_75, %c0_76] : memref<1x10x10x128xbf16, #tpu.memory_space<vmem>>, vector<1x1x10x128xbf16>
    %122 = vector.shape_cast %121 : vector<1x1x10x128xbf16> to vector<10x128xbf16>
    %123 = vector.extract_strided_slice %122 {offsets = [0, 0], sizes = [8, 128], strides = [1, 1]} : vector<10x128xbf16> to vector<8x128xbf16>
    %124 = vector.extract_strided_slice %122 {offsets = [1, 0], sizes = [8, 128], strides = [1, 1]} : vector<10x128xbf16> to vector<8x128xbf16>
    %125 = vector.extract_strided_slice %122 {offsets = [2, 0], sizes = [8, 128], strides = [1, 1]} : vector<10x128xbf16> to vector<8x128xbf16>
    %c4_i32_77 = arith.constant 4 : i32
    %126 = arith.addi %1, %c4_i32_77 : i32
    %c1_i32_78 = arith.constant 1 : i32
    %127 = arith.addi %126, %c1_i32_78 : i32
    %c0_79 = arith.constant 0 : index
    %128 = arith.index_cast %127 : i32 to index
    %c0_80 = arith.constant 0 : index
    %c0_81 = arith.constant 0 : index
    %129 = vector.load %arg2[%c0_79, %128, %c0_80, %c0_81] : memref<1x10x10x128xbf16, #tpu.memory_space<vmem>>, vector<1x1x10x128xbf16>
    %130 = vector.shape_cast %129 : vector<1x1x10x128xbf16> to vector<10x128xbf16>
    %131 = vector.extract_strided_slice %130 {offsets = [0, 0], sizes = [8, 128], strides = [1, 1]} : vector<10x128xbf16> to vector<8x128xbf16>
    %132 = vector.extract_strided_slice %130 {offsets = [1, 0], sizes = [8, 128], strides = [1, 1]} : vector<10x128xbf16> to vector<8x128xbf16>
    %133 = vector.extract_strided_slice %130 {offsets = [2, 0], sizes = [8, 128], strides = [1, 1]} : vector<10x128xbf16> to vector<8x128xbf16>
    %c4_i32_82 = arith.constant 4 : i32
    %134 = arith.addi %1, %c4_i32_82 : i32
    %c2_i32_83 = arith.constant 2 : i32
    %135 = arith.addi %134, %c2_i32_83 : i32
    %c0_84 = arith.constant 0 : index
    %136 = arith.index_cast %135 : i32 to index
    %c0_85 = arith.constant 0 : index
    %c0_86 = arith.constant 0 : index
    %137 = vector.load %arg2[%c0_84, %136, %c0_85, %c0_86] : memref<1x10x10x128xbf16, #tpu.memory_space<vmem>>, vector<1x1x10x128xbf16>
    %138 = vector.shape_cast %137 : vector<1x1x10x128xbf16> to vector<10x128xbf16>
    %139 = vector.extract_strided_slice %138 {offsets = [0, 0], sizes = [8, 128], strides = [1, 1]} : vector<10x128xbf16> to vector<8x128xbf16>
    %140 = vector.extract_strided_slice %138 {offsets = [1, 0], sizes = [8, 128], strides = [1, 1]} : vector<10x128xbf16> to vector<8x128xbf16>
    %141 = vector.extract_strided_slice %138 {offsets = [2, 0], sizes = [8, 128], strides = [1, 1]} : vector<10x128xbf16> to vector<8x128xbf16>
    %142 = tpu.concatenate %123, %124, %125, %131, %132, %133, %139, %140, %141 in 1 : vector<8x128xbf16>, vector<8x128xbf16>, vector<8x128xbf16>, vector<8x128xbf16>, vector<8x128xbf16>, vector<8x128xbf16>, vector<8x128xbf16>, vector<8x128xbf16>, vector<8x128xbf16> -> vector<8x1152xbf16>
    %cst_87 = arith.constant dense<0.000000e+00> : vector<8x32xf32>
    %143 = tpu.matmul %142, %0, %cst_87 {dimension_numbers = #tpu.dot_dimension_numbers<[1], [0], [0], [1], [0, 0, 1, 1], [], []>} : vector<8x1152xbf16>, vector<1152x32xbf16>, vector<8x32xf32> -> vector<8x32xf32>
    %c0_88 = arith.constant 0 : index
    %c4 = arith.constant 4 : index
    %c0_89 = arith.constant 0 : index
    %c0_90 = arith.constant 0 : index
    %144 = vector.load %arg4[%c0_88, %c4, %c0_89, %c0_90] : memref<1x8x8x32xf32, #tpu.memory_space<vmem>>, vector<1x1x8x32xf32>
    %145 = vector.shape_cast %144 : vector<1x1x8x32xf32> to vector<8x32xf32>
    %146 = vector.shape_cast %143 : vector<8x32xf32> to vector<1x1x8x32xf32>
    tpu.vector_store %arg4[%c0_88, %c4, %c0_89, %c0_90], %146 {strides = array<i32>} : memref<1x8x8x32xf32, #tpu.memory_space<vmem>>, vector<1x1x8x32xf32>,
    %c5_i32 = arith.constant 5 : i32
    %147 = arith.addi %1, %c5_i32 : i32
    %c0_i32_91 = arith.constant 0 : i32
    %148 = arith.addi %147, %c0_i32_91 : i32
    %c0_92 = arith.constant 0 : index
    %149 = arith.index_cast %148 : i32 to index
    %c0_93 = arith.constant 0 : index
    %c0_94 = arith.constant 0 : index
    %150 = vector.load %arg2[%c0_92, %149, %c0_93, %c0_94] : memref<1x10x10x128xbf16, #tpu.memory_space<vmem>>, vector<1x1x10x128xbf16>
    %151 = vector.shape_cast %150 : vector<1x1x10x128xbf16> to vector<10x128xbf16>
    %152 = vector.extract_strided_slice %151 {offsets = [0, 0], sizes = [8, 128], strides = [1, 1]} : vector<10x128xbf16> to vector<8x128xbf16>
    %153 = vector.extract_strided_slice %151 {offsets = [1, 0], sizes = [8, 128], strides = [1, 1]} : vector<10x128xbf16> to vector<8x128xbf16>
    %154 = vector.extract_strided_slice %151 {offsets = [2, 0], sizes = [8, 128], strides = [1, 1]} : vector<10x128xbf16> to vector<8x128xbf16>
    %c5_i32_95 = arith.constant 5 : i32
    %155 = arith.addi %1, %c5_i32_95 : i32
    %c1_i32_96 = arith.constant 1 : i32
    %156 = arith.addi %155, %c1_i32_96 : i32
    %c0_97 = arith.constant 0 : index
    %157 = arith.index_cast %156 : i32 to index
    %c0_98 = arith.constant 0 : index
    %c0_99 = arith.constant 0 : index
    %158 = vector.load %arg2[%c0_97, %157, %c0_98, %c0_99] : memref<1x10x10x128xbf16, #tpu.memory_space<vmem>>, vector<1x1x10x128xbf16>
    %159 = vector.shape_cast %158 : vector<1x1x10x128xbf16> to vector<10x128xbf16>
    %160 = vector.extract_strided_slice %159 {offsets = [0, 0], sizes = [8, 128], strides = [1, 1]} : vector<10x128xbf16> to vector<8x128xbf16>
    %161 = vector.extract_strided_slice %159 {offsets = [1, 0], sizes = [8, 128], strides = [1, 1]} : vector<10x128xbf16> to vector<8x128xbf16>
    %162 = vector.extract_strided_slice %159 {offsets = [2, 0], sizes = [8, 128], strides = [1, 1]} : vector<10x128xbf16> to vector<8x128xbf16>
    %c5_i32_100 = arith.constant 5 : i32
    %163 = arith.addi %1, %c5_i32_100 : i32
    %c2_i32_101 = arith.constant 2 : i32
    %164 = arith.addi %163, %c2_i32_101 : i32
    %c0_102 = arith.constant 0 : index
    %165 = arith.index_cast %164 : i32 to index
    %c0_103 = arith.constant 0 : index
    %c0_104 = arith.constant 0 : index
    %166 = vector.load %arg2[%c0_102, %165, %c0_103, %c0_104] : memref<1x10x10x128xbf16, #tpu.memory_space<vmem>>, vector<1x1x10x128xbf16>
    %167 = vector.shape_cast %166 : vector<1x1x10x128xbf16> to vector<10x128xbf16>
    %168 = vector.extract_strided_slice %167 {offsets = [0, 0], sizes = [8, 128], strides = [1, 1]} : vector<10x128xbf16> to vector<8x128xbf16>
    %169 = vector.extract_strided_slice %167 {offsets = [1, 0], sizes = [8, 128], strides = [1, 1]} : vector<10x128xbf16> to vector<8x128xbf16>
    %170 = vector.extract_strided_slice %167 {offsets = [2, 0], sizes = [8, 128], strides = [1, 1]} : vector<10x128xbf16> to vector<8x128xbf16>
    %171 = tpu.concatenate %152, %153, %154, %160, %161, %162, %168, %169, %170 in 1 : vector<8x128xbf16>, vector<8x128xbf16>, vector<8x128xbf16>, vector<8x128xbf16>, vector<8x128xbf16>, vector<8x128xbf16>, vector<8x128xbf16>, vector<8x128xbf16>, vector<8x128xbf16> -> vector<8x1152xbf16>
    %cst_105 = arith.constant dense<0.000000e+00> : vector<8x32xf32>
    %172 = tpu.matmul %171, %0, %cst_105 {dimension_numbers = #tpu.dot_dimension_numbers<[1], [0], [0], [1], [0, 0, 1, 1], [], []>} : vector<8x1152xbf16>, vector<1152x32xbf16>, vector<8x32xf32> -> vector<8x32xf32>
    %c0_106 = arith.constant 0 : index
    %c5 = arith.constant 5 : index
    %c0_107 = arith.constant 0 : index
    %c0_108 = arith.constant 0 : index
    %173 = vector.load %arg4[%c0_106, %c5, %c0_107, %c0_108] : memref<1x8x8x32xf32, #tpu.memory_space<vmem>>, vector<1x1x8x32xf32>
    %174 = vector.shape_cast %173 : vector<1x1x8x32xf32> to vector<8x32xf32>
    %175 = vector.shape_cast %172 : vector<8x32xf32> to vector<1x1x8x32xf32>
    tpu.vector_store %arg4[%c0_106, %c5, %c0_107, %c0_108], %175 {strides = array<i32>} : memref<1x8x8x32xf32, #tpu.memory_space<vmem>>, vector<1x1x8x32xf32>,
    %c6_i32 = arith.constant 6 : i32
    %176 = arith.addi %1, %c6_i32 : i32
    %c0_i32_109 = arith.constant 0 : i32
    %177 = arith.addi %176, %c0_i32_109 : i32
    %c0_110 = arith.constant 0 : index
    %178 = arith.index_cast %177 : i32 to index
    %c0_111 = arith.constant 0 : index
    %c0_112 = arith.constant 0 : index
    %179 = vector.load %arg2[%c0_110, %178, %c0_111, %c0_112] : memref<1x10x10x128xbf16, #tpu.memory_space<vmem>>, vector<1x1x10x128xbf16>
    %180 = vector.shape_cast %179 : vector<1x1x10x128xbf16> to vector<10x128xbf16>
    %181 = vector.extract_strided_slice %180 {offsets = [0, 0], sizes = [8, 128], strides = [1, 1]} : vector<10x128xbf16> to vector<8x128xbf16>
    %182 = vector.extract_strided_slice %180 {offsets = [1, 0], sizes = [8, 128], strides = [1, 1]} : vector<10x128xbf16> to vector<8x128xbf16>
    %183 = vector.extract_strided_slice %180 {offsets = [2, 0], sizes = [8, 128], strides = [1, 1]} : vector<10x128xbf16> to vector<8x128xbf16>
    %c6_i32_113 = arith.constant 6 : i32
    %184 = arith.addi %1, %c6_i32_113 : i32
    %c1_i32_114 = arith.constant 1 : i32
    %185 = arith.addi %184, %c1_i32_114 : i32
    %c0_115 = arith.constant 0 : index
    %186 = arith.index_cast %185 : i32 to index
    %c0_116 = arith.constant 0 : index
    %c0_117 = arith.constant 0 : index
    %187 = vector.load %arg2[%c0_115, %186, %c0_116, %c0_117] : memref<1x10x10x128xbf16, #tpu.memory_space<vmem>>, vector<1x1x10x128xbf16>
    %188 = vector.shape_cast %187 : vector<1x1x10x128xbf16> to vector<10x128xbf16>
    %189 = vector.extract_strided_slice %188 {offsets = [0, 0], sizes = [8, 128], strides = [1, 1]} : vector<10x128xbf16> to vector<8x128xbf16>
    %190 = vector.extract_strided_slice %188 {offsets = [1, 0], sizes = [8, 128], strides = [1, 1]} : vector<10x128xbf16> to vector<8x128xbf16>
    %191 = vector.extract_strided_slice %188 {offsets = [2, 0], sizes = [8, 128], strides = [1, 1]} : vector<10x128xbf16> to vector<8x128xbf16>
    %c6_i32_118 = arith.constant 6 : i32
    %192 = arith.addi %1, %c6_i32_118 : i32
    %c2_i32_119 = arith.constant 2 : i32
    %193 = arith.addi %192, %c2_i32_119 : i32
    %c0_120 = arith.constant 0 : index
    %194 = arith.index_cast %193 : i32 to index
    %c0_121 = arith.constant 0 : index
    %c0_122 = arith.constant 0 : index
    %195 = vector.load %arg2[%c0_120, %194, %c0_121, %c0_122] : memref<1x10x10x128xbf16, #tpu.memory_space<vmem>>, vector<1x1x10x128xbf16>
    %196 = vector.shape_cast %195 : vector<1x1x10x128xbf16> to vector<10x128xbf16>
    %197 = vector.extract_strided_slice %196 {offsets = [0, 0], sizes = [8, 128], strides = [1, 1]} : vector<10x128xbf16> to vector<8x128xbf16>
    %198 = vector.extract_strided_slice %196 {offsets = [1, 0], sizes = [8, 128], strides = [1, 1]} : vector<10x128xbf16> to vector<8x128xbf16>
    %199 = vector.extract_strided_slice %196 {offsets = [2, 0], sizes = [8, 128], strides = [1, 1]} : vector<10x128xbf16> to vector<8x128xbf16>
    %200 = tpu.concatenate %181, %182, %183, %189, %190, %191, %197, %198, %199 in 1 : vector<8x128xbf16>, vector<8x128xbf16>, vector<8x128xbf16>, vector<8x128xbf16>, vector<8x128xbf16>, vector<8x128xbf16>, vector<8x128xbf16>, vector<8x128xbf16>, vector<8x128xbf16> -> vector<8x1152xbf16>
    %cst_123 = arith.constant dense<0.000000e+00> : vector<8x32xf32>
    %201 = tpu.matmul %200, %0, %cst_123 {dimension_numbers = #tpu.dot_dimension_numbers<[1], [0], [0], [1], [0, 0, 1, 1], [], []>} : vector<8x1152xbf16>, vector<1152x32xbf16>, vector<8x32xf32> -> vector<8x32xf32>
    %c0_124 = arith.constant 0 : index
    %c6 = arith.constant 6 : index
    %c0_125 = arith.constant 0 : index
    %c0_126 = arith.constant 0 : index
    %202 = vector.load %arg4[%c0_124, %c6, %c0_125, %c0_126] : memref<1x8x8x32xf32, #tpu.memory_space<vmem>>, vector<1x1x8x32xf32>
    %203 = vector.shape_cast %202 : vector<1x1x8x32xf32> to vector<8x32xf32>
    %204 = vector.shape_cast %201 : vector<8x32xf32> to vector<1x1x8x32xf32>
    tpu.vector_store %arg4[%c0_124, %c6, %c0_125, %c0_126], %204 {strides = array<i32>} : memref<1x8x8x32xf32, #tpu.memory_space<vmem>>, vector<1x1x8x32xf32>,
    %c7_i32 = arith.constant 7 : i32
    %205 = arith.addi %1, %c7_i32 : i32
    %c0_i32_127 = arith.constant 0 : i32
    %206 = arith.addi %205, %c0_i32_127 : i32
    %c0_128 = arith.constant 0 : index
    %207 = arith.index_cast %206 : i32 to index
    %c0_129 = arith.constant 0 : index
    %c0_130 = arith.constant 0 : index
    %208 = vector.load %arg2[%c0_128, %207, %c0_129, %c0_130] : memref<1x10x10x128xbf16, #tpu.memory_space<vmem>>, vector<1x1x10x128xbf16>
    %209 = vector.shape_cast %208 : vector<1x1x10x128xbf16> to vector<10x128xbf16>
    %210 = vector.extract_strided_slice %209 {offsets = [0, 0], sizes = [8, 128], strides = [1, 1]} : vector<10x128xbf16> to vector<8x128xbf16>
    %211 = vector.extract_strided_slice %209 {offsets = [1, 0], sizes = [8, 128], strides = [1, 1]} : vector<10x128xbf16> to vector<8x128xbf16>
    %212 = vector.extract_strided_slice %209 {offsets = [2, 0], sizes = [8, 128], strides = [1, 1]} : vector<10x128xbf16> to vector<8x128xbf16>
    %c7_i32_131 = arith.constant 7 : i32
    %213 = arith.addi %1, %c7_i32_131 : i32
    %c1_i32_132 = arith.constant 1 : i32
    %214 = arith.addi %213, %c1_i32_132 : i32
    %c0_133 = arith.constant 0 : index
    %215 = arith.index_cast %214 : i32 to index
    %c0_134 = arith.constant 0 : index
    %c0_135 = arith.constant 0 : index
    %216 = vector.load %arg2[%c0_133, %215, %c0_134, %c0_135] : memref<1x10x10x128xbf16, #tpu.memory_space<vmem>>, vector<1x1x10x128xbf16>
    %217 = vector.shape_cast %216 : vector<1x1x10x128xbf16> to vector<10x128xbf16>
    %218 = vector.extract_strided_slice %217 {offsets = [0, 0], sizes = [8, 128], strides = [1, 1]} : vector<10x128xbf16> to vector<8x128xbf16>
    %219 = vector.extract_strided_slice %217 {offsets = [1, 0], sizes = [8, 128], strides = [1, 1]} : vector<10x128xbf16> to vector<8x128xbf16>
    %220 = vector.extract_strided_slice %217 {offsets = [2, 0], sizes = [8, 128], strides = [1, 1]} : vector<10x128xbf16> to vector<8x128xbf16>
    %c7_i32_136 = arith.constant 7 : i32
    %221 = arith.addi %1, %c7_i32_136 : i32
    %c2_i32_137 = arith.constant 2 : i32
    %222 = arith.addi %221, %c2_i32_137 : i32
    %c0_138 = arith.constant 0 : index
    %223 = arith.index_cast %222 : i32 to index
    %c0_139 = arith.constant 0 : index
    %c0_140 = arith.constant 0 : index
    %224 = vector.load %arg2[%c0_138, %223, %c0_139, %c0_140] : memref<1x10x10x128xbf16, #tpu.memory_space<vmem>>, vector<1x1x10x128xbf16>
    %225 = vector.shape_cast %224 : vector<1x1x10x128xbf16> to vector<10x128xbf16>
    %226 = vector.extract_strided_slice %225 {offsets = [0, 0], sizes = [8, 128], strides = [1, 1]} : vector<10x128xbf16> to vector<8x128xbf16>
    %227 = vector.extract_strided_slice %225 {offsets = [1, 0], sizes = [8, 128], strides = [1, 1]} : vector<10x128xbf16> to vector<8x128xbf16>
    %228 = vector.extract_strided_slice %225 {offsets = [2, 0], sizes = [8, 128], strides = [1, 1]} : vector<10x128xbf16> to vector<8x128xbf16>
    %229 = tpu.concatenate %210, %211, %212, %218, %219, %220, %226, %227, %228 in 1 : vector<8x128xbf16>, vector<8x128xbf16>, vector<8x128xbf16>, vector<8x128xbf16>, vector<8x128xbf16>, vector<8x128xbf16>, vector<8x128xbf16>, vector<8x128xbf16>, vector<8x128xbf16> -> vector<8x1152xbf16>
    %cst_141 = arith.constant dense<0.000000e+00> : vector<8x32xf32>
    %230 = tpu.matmul %229, %0, %cst_141 {dimension_numbers = #tpu.dot_dimension_numbers<[1], [0], [0], [1], [0, 0, 1, 1], [], []>} : vector<8x1152xbf16>, vector<1152x32xbf16>, vector<8x32xf32> -> vector<8x32xf32>
    %c0_142 = arith.constant 0 : index
    %c7 = arith.constant 7 : index
    %c0_143 = arith.constant 0 : index
    %c0_144 = arith.constant 0 : index
    %231 = vector.load %arg4[%c0_142, %c7, %c0_143, %c0_144] : memref<1x8x8x32xf32, #tpu.memory_space<vmem>>, vector<1x1x8x32xf32>
    %232 = vector.shape_cast %231 : vector<1x1x8x32xf32> to vector<8x32xf32>
    %233 = vector.shape_cast %230 : vector<8x32xf32> to vector<1x1x8x32xf32>
    tpu.vector_store %arg4[%c0_142, %c7, %c0_143, %c0_144], %233 {strides = array<i32>} : memref<1x8x8x32xf32, #tpu.memory_space<vmem>>, vector<1x1x8x32xf32>,
    return
  }
  func.func @transform_0(%arg0: i32, %arg1: i32) -> (i32, i32, i32, i32) {
    %c0_i32 = arith.constant 0 : i32
    %c0_i32_0 = arith.constant 0 : i32
    %c0_i32_1 = arith.constant 0 : i32
    %c0_i32_2 = arith.constant 0 : i32
    return %arg0, %c0_i32, %c0_i32_0, %c0_i32_1 : i32, i32, i32, i32
  }
  func.func @transform_1(%arg0: i32, %arg1: i32) -> (i32, i32) {
    %c0_i32 = arith.constant 0 : i32
    %c0_i32_0 = arith.constant 0 : i32
    %c0_i32_1 = arith.constant 0 : i32
    return %c0_i32, %c0_i32_0 : i32, i32
  }
  func.func @transform_2(%arg0: i32, %arg1: i32) -> (i32, i32, i32, i32) {
    %c0_i32 = arith.constant 0 : i32
    %c0_i32_0 = arith.constant 0 : i32
    %c0_i32_1 = arith.constant 0 : i32
    return %arg0, %arg1, %c0_i32, %c0_i32_0 : i32, i32, i32, i32
  }
}

module attributes {stable_mosaic.version = 11 : i64} {
  func.func @_fused_matmul_kernel(%arg0: i32, %arg1: memref<128x48xf32, #tpu.memory_space<vmem>>, %arg2: memref<48x128xbf16, #tpu.memory_space<vmem>>, %arg3: memref<1x48xf32, #tpu.memory_space<vmem>>, %arg4: memref<1x48xf32, #tpu.memory_space<vmem>>, %arg5: memref<1x128xf32, #tpu.memory_space<vmem>>, %arg6: memref<1x128xf32, #tpu.memory_space<vmem>>, %arg7: memref<128x128xbf16, #tpu.memory_space<vmem>>) attributes {dimension_semantics = [#tpu.dimension_semantics<parallel>], iteration_bounds = array<i64: 1>, scalar_prefetch = 0 : i64, scratch_operands = 0 : i64, tpu.core_type = #tpu.core_type<tc>, window_params = [{transform_indices = @transform_0, window_bounds = array<i64: 128, 48>}, {pipeline_mode = #tpu.pipeline_mode<synchronous>, transform_indices = @transform_1, window_bounds = array<i64: 48, 128>}, {pipeline_mode = #tpu.pipeline_mode<synchronous>, transform_indices = @transform_2, window_bounds = array<i64: 1, 48>}, {pipeline_mode = #tpu.pipeline_mode<synchronous>, transform_indices = @transform_3, window_bounds = array<i64: 1, 48>}, {pipeline_mode = #tpu.pipeline_mode<synchronous>, transform_indices = @transform_4, window_bounds = array<i64: 1, 128>}, {pipeline_mode = #tpu.pipeline_mode<synchronous>, transform_indices = @transform_5, window_bounds = array<i64: 1, 128>}, {transform_indices = @transform_6, window_bounds = array<i64: 128, 128>}]} {
    %c0 = arith.constant 0 : index
    %c0_0 = arith.constant 0 : index
    %0 = vector.load %arg1[%c0, %c0_0] : memref<128x48xf32, #tpu.memory_space<vmem>>, vector<128x48xf32>
    %c0_1 = arith.constant 0 : index
    %c0_2 = arith.constant 0 : index
    %1 = vector.load %arg3[%c0_1, %c0_2] : memref<1x48xf32, #tpu.memory_space<vmem>>, vector<1x48xf32>
    %2 = vector.broadcast %1 : vector<1x48xf32> to vector<128x48xf32>
    %3 = arith.mulf %0, %2 : vector<128x48xf32>
    %c0_3 = arith.constant 0 : index
    %c0_4 = arith.constant 0 : index
    %4 = vector.load %arg4[%c0_3, %c0_4] : memref<1x48xf32, #tpu.memory_space<vmem>>, vector<1x48xf32>
    %5 = vector.broadcast %4 : vector<1x48xf32> to vector<128x48xf32>
    %6 = arith.addf %3, %5 : vector<128x48xf32>
    %cst = arith.constant 0.000000e+00 : f32
    %7 = vector.broadcast %cst : f32 to vector<128x48xf32>
    %8 = arith.maximumf %6, %7 : vector<128x48xf32>
    %9 = arith.truncf %8 : vector<128x48xf32> to vector<128x48xbf16>
    %c0_5 = arith.constant 0 : index
    %c0_6 = arith.constant 0 : index
    %10 = vector.load %arg2[%c0_5, %c0_6] : memref<48x128xbf16, #tpu.memory_space<vmem>>, vector<48x128xbf16>
    %cst_7 = arith.constant dense<0.000000e+00> : vector<128x128xf32>
    %11 = tpu.matmul %9, %10, %cst_7 {dimension_numbers = #tpu.dot_dimension_numbers<[1], [0], [0], [1], [0, 0, 1, 1], [], []>} : vector<128x48xbf16>, vector<48x128xbf16>, vector<128x128xf32> -> vector<128x128xf32>
    %c0_8 = arith.constant 0 : index
    %c0_9 = arith.constant 0 : index
    %12 = vector.load %arg5[%c0_8, %c0_9] : memref<1x128xf32, #tpu.memory_space<vmem>>, vector<1x128xf32>
    %13 = vector.broadcast %12 : vector<1x128xf32> to vector<128x128xf32>
    %14 = arith.mulf %11, %13 : vector<128x128xf32>
    %c0_10 = arith.constant 0 : index
    %c0_11 = arith.constant 0 : index
    %15 = vector.load %arg6[%c0_10, %c0_11] : memref<1x128xf32, #tpu.memory_space<vmem>>, vector<1x128xf32>
    %16 = vector.broadcast %15 : vector<1x128xf32> to vector<128x128xf32>
    %17 = arith.addf %14, %16 : vector<128x128xf32>
    %cst_12 = arith.constant 0.000000e+00 : f32
    %18 = vector.broadcast %cst_12 : f32 to vector<128x128xf32>
    %19 = arith.maximumf %17, %18 : vector<128x128xf32>
    %20 = arith.truncf %19 : vector<128x128xf32> to vector<128x128xbf16>
    %c0_13 = arith.constant 0 : index
    %c0_14 = arith.constant 0 : index
    %21 = vector.load %arg7[%c0_13, %c0_14] : memref<128x128xbf16, #tpu.memory_space<vmem>>, vector<128x128xbf16>
    tpu.vector_store %arg7[%c0_13, %c0_14], %20 {strides = array<i32>} : memref<128x128xbf16, #tpu.memory_space<vmem>>, vector<128x128xbf16>,
    return
  }
  func.func @transform_0(%arg0: i32) -> (i32, i32) {
    %c0_i32 = arith.constant 0 : i32
    %c0_i32_0 = arith.constant 0 : i32
    return %arg0, %c0_i32 : i32, i32
  }
  func.func @transform_1(%arg0: i32) -> (i32, i32) {
    %c0_i32 = arith.constant 0 : i32
    %c0_i32_0 = arith.constant 0 : i32
    %c0_i32_1 = arith.constant 0 : i32
    return %c0_i32, %c0_i32_0 : i32, i32
  }
  func.func @transform_2(%arg0: i32) -> (i32, i32) {
    %c0_i32 = arith.constant 0 : i32
    %c0_i32_0 = arith.constant 0 : i32
    %c0_i32_1 = arith.constant 0 : i32
    return %c0_i32, %c0_i32_0 : i32, i32
  }
  func.func @transform_3(%arg0: i32) -> (i32, i32) {
    %c0_i32 = arith.constant 0 : i32
    %c0_i32_0 = arith.constant 0 : i32
    %c0_i32_1 = arith.constant 0 : i32
    return %c0_i32, %c0_i32_0 : i32, i32
  }
  func.func @transform_4(%arg0: i32) -> (i32, i32) {
    %c0_i32 = arith.constant 0 : i32
    %c0_i32_0 = arith.constant 0 : i32
    %c0_i32_1 = arith.constant 0 : i32
    return %c0_i32, %c0_i32_0 : i32, i32
  }
  func.func @transform_5(%arg0: i32) -> (i32, i32) {
    %c0_i32 = arith.constant 0 : i32
    %c0_i32_0 = arith.constant 0 : i32
    %c0_i32_1 = arith.constant 0 : i32
    return %c0_i32, %c0_i32_0 : i32, i32
  }
  func.func @transform_6(%arg0: i32) -> (i32, i32) {
    %c0_i32 = arith.constant 0 : i32
    %c0_i32_0 = arith.constant 0 : i32
    return %arg0, %c0_i32 : i32, i32
  }
}

module attributes {stable_mosaic.version = 11 : i64} {
  func.func @_fused_matmul_kernel(%arg0: i32, %arg1: memref<128x80xf32, #tpu.memory_space<vmem>>, %arg2: memref<80x40xbf16, #tpu.memory_space<vmem>>, %arg3: memref<1x80xf32, #tpu.memory_space<vmem>>, %arg4: memref<1x80xf32, #tpu.memory_space<vmem>>, %arg5: memref<128x40xf32, #tpu.memory_space<vmem>>) attributes {dimension_semantics = [#tpu.dimension_semantics<parallel>], iteration_bounds = array<i64: 1>, scalar_prefetch = 0 : i64, scratch_operands = 0 : i64, tpu.core_type = #tpu.core_type<tc>, window_params = [{transform_indices = @transform_0, window_bounds = array<i64: 128, 80>}, {pipeline_mode = #tpu.pipeline_mode<synchronous>, transform_indices = @transform_1, window_bounds = array<i64: 80, 40>}, {pipeline_mode = #tpu.pipeline_mode<synchronous>, transform_indices = @transform_2, window_bounds = array<i64: 1, 80>}, {pipeline_mode = #tpu.pipeline_mode<synchronous>, transform_indices = @transform_3, window_bounds = array<i64: 1, 80>}, {transform_indices = @transform_4, window_bounds = array<i64: 128, 40>}]} {
    %c0 = arith.constant 0 : index
    %c0_0 = arith.constant 0 : index
    %0 = vector.load %arg1[%c0, %c0_0] : memref<128x80xf32, #tpu.memory_space<vmem>>, vector<128x80xf32>
    %c0_1 = arith.constant 0 : index
    %c0_2 = arith.constant 0 : index
    %1 = vector.load %arg3[%c0_1, %c0_2] : memref<1x80xf32, #tpu.memory_space<vmem>>, vector<1x80xf32>
    %2 = vector.broadcast %1 : vector<1x80xf32> to vector<128x80xf32>
    %3 = arith.mulf %0, %2 : vector<128x80xf32>
    %c0_3 = arith.constant 0 : index
    %c0_4 = arith.constant 0 : index
    %4 = vector.load %arg4[%c0_3, %c0_4] : memref<1x80xf32, #tpu.memory_space<vmem>>, vector<1x80xf32>
    %5 = vector.broadcast %4 : vector<1x80xf32> to vector<128x80xf32>
    %6 = arith.addf %3, %5 : vector<128x80xf32>
    %cst = arith.constant 0.000000e+00 : f32
    %7 = vector.broadcast %cst : f32 to vector<128x80xf32>
    %8 = arith.maximumf %6, %7 : vector<128x80xf32>
    %9 = arith.truncf %8 : vector<128x80xf32> to vector<128x80xbf16>
    %c0_5 = arith.constant 0 : index
    %c0_6 = arith.constant 0 : index
    %10 = vector.load %arg2[%c0_5, %c0_6] : memref<80x40xbf16, #tpu.memory_space<vmem>>, vector<80x40xbf16>
    %cst_7 = arith.constant dense<0.000000e+00> : vector<128x40xf32>
    %11 = tpu.matmul %9, %10, %cst_7 {dimension_numbers = #tpu.dot_dimension_numbers<[1], [0], [0], [1], [0, 0, 1, 1], [], []>} : vector<128x80xbf16>, vector<80x40xbf16>, vector<128x40xf32> -> vector<128x40xf32>
    %c0_8 = arith.constant 0 : index
    %c0_9 = arith.constant 0 : index
    %12 = vector.load %arg5[%c0_8, %c0_9] : memref<128x40xf32, #tpu.memory_space<vmem>>, vector<128x40xf32>
    tpu.vector_store %arg5[%c0_8, %c0_9], %11 {strides = array<i32>} : memref<128x40xf32, #tpu.memory_space<vmem>>, vector<128x40xf32>,
    return
  }
  func.func @transform_0(%arg0: i32) -> (i32, i32) {
    %c0_i32 = arith.constant 0 : i32
    %c0_i32_0 = arith.constant 0 : i32
    return %arg0, %c0_i32 : i32, i32
  }
  func.func @transform_1(%arg0: i32) -> (i32, i32) {
    %c0_i32 = arith.constant 0 : i32
    %c0_i32_0 = arith.constant 0 : i32
    %c0_i32_1 = arith.constant 0 : i32
    return %c0_i32, %c0_i32_0 : i32, i32
  }
  func.func @transform_2(%arg0: i32) -> (i32, i32) {
    %c0_i32 = arith.constant 0 : i32
    %c0_i32_0 = arith.constant 0 : i32
    %c0_i32_1 = arith.constant 0 : i32
    return %c0_i32, %c0_i32_0 : i32, i32
  }
  func.func @transform_3(%arg0: i32) -> (i32, i32) {
    %c0_i32 = arith.constant 0 : i32
    %c0_i32_0 = arith.constant 0 : i32
    %c0_i32_1 = arith.constant 0 : i32
    return %c0_i32, %c0_i32_0 : i32, i32
  }
  func.func @transform_4(%arg0: i32) -> (i32, i32) {
    %c0_i32 = arith.constant 0 : i32
    %c0_i32_0 = arith.constant 0 : i32
    return %arg0, %c0_i32 : i32, i32
  }
}

module attributes {stable_mosaic.version = 11 : i64} {
  func.func @_tap_pool_kernel(%arg0: i32, %arg1: memref<32x40xf32, #tpu.memory_space<vmem>>, %arg2: memref<32x40xf32, #tpu.memory_space<vmem>>, %arg3: memref<32x40xf32, #tpu.memory_space<vmem>>, %arg4: memref<32x40xf32, #tpu.memory_space<vmem>>, %arg5: memref<32x40xf32, #tpu.memory_space<vmem>>) attributes {dimension_semantics = [#tpu.dimension_semantics<parallel>], iteration_bounds = array<i64: 1>, scalar_prefetch = 0 : i64, scratch_operands = 0 : i64, tpu.core_type = #tpu.core_type<tc>, window_params = [{transform_indices = @transform_0, window_bounds = array<i64: 32, 40>}, {transform_indices = @transform_1, window_bounds = array<i64: 32, 40>}, {transform_indices = @transform_2, window_bounds = array<i64: 32, 40>}, {transform_indices = @transform_3, window_bounds = array<i64: 32, 40>}, {transform_indices = @transform_4, window_bounds = array<i64: 32, 40>}]} {
    %c0 = arith.constant 0 : index
    %c0_0 = arith.constant 0 : index
    %0 = vector.load %arg1[%c0, %c0_0] : memref<32x40xf32, #tpu.memory_space<vmem>>, vector<32x40xf32>
    %c0_1 = arith.constant 0 : index
    %c0_2 = arith.constant 0 : index
    %1 = vector.load %arg2[%c0_1, %c0_2] : memref<32x40xf32, #tpu.memory_space<vmem>>, vector<32x40xf32>
    %2 = arith.addf %0, %1 : vector<32x40xf32>
    %c0_3 = arith.constant 0 : index
    %c0_4 = arith.constant 0 : index
    %3 = vector.load %arg3[%c0_3, %c0_4] : memref<32x40xf32, #tpu.memory_space<vmem>>, vector<32x40xf32>
    %4 = arith.addf %2, %3 : vector<32x40xf32>
    %c0_5 = arith.constant 0 : index
    %c0_6 = arith.constant 0 : index
    %5 = vector.load %arg4[%c0_5, %c0_6] : memref<32x40xf32, #tpu.memory_space<vmem>>, vector<32x40xf32>
    %6 = arith.addf %4, %5 : vector<32x40xf32>
    %cst = arith.constant 2.500000e-01 : f32
    %7 = vector.broadcast %cst : f32 to vector<32x40xf32>
    %8 = arith.mulf %6, %7 : vector<32x40xf32>
    %c0_7 = arith.constant 0 : index
    %c0_8 = arith.constant 0 : index
    %9 = vector.load %arg5[%c0_7, %c0_8] : memref<32x40xf32, #tpu.memory_space<vmem>>, vector<32x40xf32>
    tpu.vector_store %arg5[%c0_7, %c0_8], %8 {strides = array<i32>} : memref<32x40xf32, #tpu.memory_space<vmem>>, vector<32x40xf32>,
    return
  }
  func.func @transform_0(%arg0: i32) -> (i32, i32) {
    %c0_i32 = arith.constant 0 : i32
    %c0_i32_0 = arith.constant 0 : i32
    return %arg0, %c0_i32 : i32, i32
  }
  func.func @transform_1(%arg0: i32) -> (i32, i32) {
    %c0_i32 = arith.constant 0 : i32
    %c0_i32_0 = arith.constant 0 : i32
    return %arg0, %c0_i32 : i32, i32
  }
  func.func @transform_2(%arg0: i32) -> (i32, i32) {
    %c0_i32 = arith.constant 0 : i32
    %c0_i32_0 = arith.constant 0 : i32
    return %arg0, %c0_i32 : i32, i32
  }
  func.func @transform_3(%arg0: i32) -> (i32, i32) {
    %c0_i32 = arith.constant 0 : i32
    %c0_i32_0 = arith.constant 0 : i32
    return %arg0, %c0_i32 : i32, i32
  }
  func.func @transform_4(%arg0: i32) -> (i32, i32) {
    %c0_i32 = arith.constant 0 : i32
    %c0_i32_0 = arith.constant 0 : i32
    return %arg0, %c0_i32 : i32, i32
  }
}

module attributes {stable_mosaic.version = 11 : i64} {
  func.func @_fused_matmul_kernel(%arg0: i32, %arg1: memref<32x40xf32, #tpu.memory_space<vmem>>, %arg2: memref<40x128xbf16, #tpu.memory_space<vmem>>, %arg3: memref<1x40xf32, #tpu.memory_space<vmem>>, %arg4: memref<1x40xf32, #tpu.memory_space<vmem>>, %arg5: memref<1x128xf32, #tpu.memory_space<vmem>>, %arg6: memref<1x128xf32, #tpu.memory_space<vmem>>, %arg7: memref<32x128xbf16, #tpu.memory_space<vmem>>) attributes {dimension_semantics = [#tpu.dimension_semantics<parallel>], iteration_bounds = array<i64: 1>, scalar_prefetch = 0 : i64, scratch_operands = 0 : i64, tpu.core_type = #tpu.core_type<tc>, window_params = [{transform_indices = @transform_0, window_bounds = array<i64: 32, 40>}, {pipeline_mode = #tpu.pipeline_mode<synchronous>, transform_indices = @transform_1, window_bounds = array<i64: 40, 128>}, {pipeline_mode = #tpu.pipeline_mode<synchronous>, transform_indices = @transform_2, window_bounds = array<i64: 1, 40>}, {pipeline_mode = #tpu.pipeline_mode<synchronous>, transform_indices = @transform_3, window_bounds = array<i64: 1, 40>}, {pipeline_mode = #tpu.pipeline_mode<synchronous>, transform_indices = @transform_4, window_bounds = array<i64: 1, 128>}, {pipeline_mode = #tpu.pipeline_mode<synchronous>, transform_indices = @transform_5, window_bounds = array<i64: 1, 128>}, {transform_indices = @transform_6, window_bounds = array<i64: 32, 128>}]} {
    %c0 = arith.constant 0 : index
    %c0_0 = arith.constant 0 : index
    %0 = vector.load %arg1[%c0, %c0_0] : memref<32x40xf32, #tpu.memory_space<vmem>>, vector<32x40xf32>
    %c0_1 = arith.constant 0 : index
    %c0_2 = arith.constant 0 : index
    %1 = vector.load %arg3[%c0_1, %c0_2] : memref<1x40xf32, #tpu.memory_space<vmem>>, vector<1x40xf32>
    %2 = vector.broadcast %1 : vector<1x40xf32> to vector<32x40xf32>
    %3 = arith.mulf %0, %2 : vector<32x40xf32>
    %c0_3 = arith.constant 0 : index
    %c0_4 = arith.constant 0 : index
    %4 = vector.load %arg4[%c0_3, %c0_4] : memref<1x40xf32, #tpu.memory_space<vmem>>, vector<1x40xf32>
    %5 = vector.broadcast %4 : vector<1x40xf32> to vector<32x40xf32>
    %6 = arith.addf %3, %5 : vector<32x40xf32>
    %cst = arith.constant 0.000000e+00 : f32
    %7 = vector.broadcast %cst : f32 to vector<32x40xf32>
    %8 = arith.maximumf %6, %7 : vector<32x40xf32>
    %9 = arith.truncf %8 : vector<32x40xf32> to vector<32x40xbf16>
    %c0_5 = arith.constant 0 : index
    %c0_6 = arith.constant 0 : index
    %10 = vector.load %arg2[%c0_5, %c0_6] : memref<40x128xbf16, #tpu.memory_space<vmem>>, vector<40x128xbf16>
    %cst_7 = arith.constant dense<0.000000e+00> : vector<32x128xf32>
    %11 = tpu.matmul %9, %10, %cst_7 {dimension_numbers = #tpu.dot_dimension_numbers<[1], [0], [0], [1], [0, 0, 1, 1], [], []>} : vector<32x40xbf16>, vector<40x128xbf16>, vector<32x128xf32> -> vector<32x128xf32>
    %c0_8 = arith.constant 0 : index
    %c0_9 = arith.constant 0 : index
    %12 = vector.load %arg5[%c0_8, %c0_9] : memref<1x128xf32, #tpu.memory_space<vmem>>, vector<1x128xf32>
    %13 = vector.broadcast %12 : vector<1x128xf32> to vector<32x128xf32>
    %14 = arith.mulf %11, %13 : vector<32x128xf32>
    %c0_10 = arith.constant 0 : index
    %c0_11 = arith.constant 0 : index
    %15 = vector.load %arg6[%c0_10, %c0_11] : memref<1x128xf32, #tpu.memory_space<vmem>>, vector<1x128xf32>
    %16 = vector.broadcast %15 : vector<1x128xf32> to vector<32x128xf32>
    %17 = arith.addf %14, %16 : vector<32x128xf32>
    %cst_12 = arith.constant 0.000000e+00 : f32
    %18 = vector.broadcast %cst_12 : f32 to vector<32x128xf32>
    %19 = arith.maximumf %17, %18 : vector<32x128xf32>
    %20 = arith.truncf %19 : vector<32x128xf32> to vector<32x128xbf16>
    %c0_13 = arith.constant 0 : index
    %c0_14 = arith.constant 0 : index
    %21 = vector.load %arg7[%c0_13, %c0_14] : memref<32x128xbf16, #tpu.memory_space<vmem>>, vector<32x128xbf16>
    tpu.vector_store %arg7[%c0_13, %c0_14], %20 {strides = array<i32>} : memref<32x128xbf16, #tpu.memory_space<vmem>>, vector<32x128xbf16>,
    return
  }
  func.func @transform_0(%arg0: i32) -> (i32, i32) {
    %c0_i32 = arith.constant 0 : i32
    %c0_i32_0 = arith.constant 0 : i32
    return %arg0, %c0_i32 : i32, i32
  }
  func.func @transform_1(%arg0: i32) -> (i32, i32) {
    %c0_i32 = arith.constant 0 : i32
    %c0_i32_0 = arith.constant 0 : i32
    %c0_i32_1 = arith.constant 0 : i32
    return %c0_i32, %c0_i32_0 : i32, i32
  }
  func.func @transform_2(%arg0: i32) -> (i32, i32) {
    %c0_i32 = arith.constant 0 : i32
    %c0_i32_0 = arith.constant 0 : i32
    %c0_i32_1 = arith.constant 0 : i32
    return %c0_i32, %c0_i32_0 : i32, i32
  }
  func.func @transform_3(%arg0: i32) -> (i32, i32) {
    %c0_i32 = arith.constant 0 : i32
    %c0_i32_0 = arith.constant 0 : i32
    %c0_i32_1 = arith.constant 0 : i32
    return %c0_i32, %c0_i32_0 : i32, i32
  }
  func.func @transform_4(%arg0: i32) -> (i32, i32) {
    %c0_i32 = arith.constant 0 : i32
    %c0_i32_0 = arith.constant 0 : i32
    %c0_i32_1 = arith.constant 0 : i32
    return %c0_i32, %c0_i32_0 : i32, i32
  }
  func.func @transform_5(%arg0: i32) -> (i32, i32) {
    %c0_i32 = arith.constant 0 : i32
    %c0_i32_0 = arith.constant 0 : i32
    %c0_i32_1 = arith.constant 0 : i32
    return %c0_i32, %c0_i32_0 : i32, i32
  }
  func.func @transform_6(%arg0: i32) -> (i32, i32) {
    %c0_i32 = arith.constant 0 : i32
    %c0_i32_0 = arith.constant 0 : i32
    return %arg0, %c0_i32 : i32, i32
  }
}

module attributes {stable_mosaic.version = 11 : i64} {
  func.func @_conv3x3_kernel(%arg0: i32, %arg1: i32, %arg2: memref<1x6x6x128xbf16, #tpu.memory_space<vmem>>, %arg3: memref<1152x32xbf16, #tpu.memory_space<vmem>>, %arg4: memref<1x4x4x32xf32, #tpu.memory_space<vmem>>) attributes {dimension_semantics = [#tpu.dimension_semantics<parallel>, #tpu.dimension_semantics<arbitrary>], iteration_bounds = array<i64: 2, 1>, scalar_prefetch = 0 : i64, scratch_operands = 0 : i64, tpu.core_type = #tpu.core_type<tc>, window_params = [{transform_indices = @transform_0, window_bounds = array<i64: 1, 6, 6, 128>}, {pipeline_mode = #tpu.pipeline_mode<synchronous>, transform_indices = @transform_1, window_bounds = array<i64: 1152, 32>}, {transform_indices = @transform_2, window_bounds = array<i64: 1, 4, 4, 32>}]} {
    %c0 = arith.constant 0 : index
    %c0_0 = arith.constant 0 : index
    %0 = vector.load %arg3[%c0, %c0_0] : memref<1152x32xbf16, #tpu.memory_space<vmem>>, vector<1152x32xbf16>
    %c4_i32 = arith.constant 4 : i32
    %1 = arith.muli %arg1, %c4_i32 : i32
    %c0_i32 = arith.constant 0 : i32
    %2 = arith.addi %1, %c0_i32 : i32
    %c0_i32_1 = arith.constant 0 : i32
    %3 = arith.addi %2, %c0_i32_1 : i32
    %c0_2 = arith.constant 0 : index
    %4 = arith.index_cast %3 : i32 to index
    %c0_3 = arith.constant 0 : index
    %c0_4 = arith.constant 0 : index
    %5 = vector.load %arg2[%c0_2, %4, %c0_3, %c0_4] : memref<1x6x6x128xbf16, #tpu.memory_space<vmem>>, vector<1x1x6x128xbf16>
    %6 = vector.shape_cast %5 : vector<1x1x6x128xbf16> to vector<6x128xbf16>
    %7 = vector.extract_strided_slice %6 {offsets = [0, 0], sizes = [4, 128], strides = [1, 1]} : vector<6x128xbf16> to vector<4x128xbf16>
    %8 = vector.extract_strided_slice %6 {offsets = [1, 0], sizes = [4, 128], strides = [1, 1]} : vector<6x128xbf16> to vector<4x128xbf16>
    %9 = vector.extract_strided_slice %6 {offsets = [2, 0], sizes = [4, 128], strides = [1, 1]} : vector<6x128xbf16> to vector<4x128xbf16>
    %c0_i32_5 = arith.constant 0 : i32
    %10 = arith.addi %1, %c0_i32_5 : i32
    %c1_i32 = arith.constant 1 : i32
    %11 = arith.addi %10, %c1_i32 : i32
    %c0_6 = arith.constant 0 : index
    %12 = arith.index_cast %11 : i32 to index
    %c0_7 = arith.constant 0 : index
    %c0_8 = arith.constant 0 : index
    %13 = vector.load %arg2[%c0_6, %12, %c0_7, %c0_8] : memref<1x6x6x128xbf16, #tpu.memory_space<vmem>>, vector<1x1x6x128xbf16>
    %14 = vector.shape_cast %13 : vector<1x1x6x128xbf16> to vector<6x128xbf16>
    %15 = vector.extract_strided_slice %14 {offsets = [0, 0], sizes = [4, 128], strides = [1, 1]} : vector<6x128xbf16> to vector<4x128xbf16>
    %16 = vector.extract_strided_slice %14 {offsets = [1, 0], sizes = [4, 128], strides = [1, 1]} : vector<6x128xbf16> to vector<4x128xbf16>
    %17 = vector.extract_strided_slice %14 {offsets = [2, 0], sizes = [4, 128], strides = [1, 1]} : vector<6x128xbf16> to vector<4x128xbf16>
    %c0_i32_9 = arith.constant 0 : i32
    %18 = arith.addi %1, %c0_i32_9 : i32
    %c2_i32 = arith.constant 2 : i32
    %19 = arith.addi %18, %c2_i32 : i32
    %c0_10 = arith.constant 0 : index
    %20 = arith.index_cast %19 : i32 to index
    %c0_11 = arith.constant 0 : index
    %c0_12 = arith.constant 0 : index
    %21 = vector.load %arg2[%c0_10, %20, %c0_11, %c0_12] : memref<1x6x6x128xbf16, #tpu.memory_space<vmem>>, vector<1x1x6x128xbf16>
    %22 = vector.shape_cast %21 : vector<1x1x6x128xbf16> to vector<6x128xbf16>
    %23 = vector.extract_strided_slice %22 {offsets = [0, 0], sizes = [4, 128], strides = [1, 1]} : vector<6x128xbf16> to vector<4x128xbf16>
    %24 = vector.extract_strided_slice %22 {offsets = [1, 0], sizes = [4, 128], strides = [1, 1]} : vector<6x128xbf16> to vector<4x128xbf16>
    %25 = vector.extract_strided_slice %22 {offsets = [2, 0], sizes = [4, 128], strides = [1, 1]} : vector<6x128xbf16> to vector<4x128xbf16>
    %26 = tpu.concatenate %7, %8, %9, %15, %16, %17, %23, %24, %25 in 1 : vector<4x128xbf16>, vector<4x128xbf16>, vector<4x128xbf16>, vector<4x128xbf16>, vector<4x128xbf16>, vector<4x128xbf16>, vector<4x128xbf16>, vector<4x128xbf16>, vector<4x128xbf16> -> vector<4x1152xbf16>
    %cst = arith.constant dense<0.000000e+00> : vector<4x32xf32>
    %27 = tpu.matmul %26, %0, %cst {dimension_numbers = #tpu.dot_dimension_numbers<[1], [0], [0], [1], [0, 0, 1, 1], [], []>} : vector<4x1152xbf16>, vector<1152x32xbf16>, vector<4x32xf32> -> vector<4x32xf32>
    %c0_13 = arith.constant 0 : index
    %c0_14 = arith.constant 0 : index
    %c0_15 = arith.constant 0 : index
    %c0_16 = arith.constant 0 : index
    %28 = vector.load %arg4[%c0_13, %c0_14, %c0_15, %c0_16] : memref<1x4x4x32xf32, #tpu.memory_space<vmem>>, vector<1x1x4x32xf32>
    %29 = vector.shape_cast %28 : vector<1x1x4x32xf32> to vector<4x32xf32>
    %30 = vector.shape_cast %27 : vector<4x32xf32> to vector<1x1x4x32xf32>
    tpu.vector_store %arg4[%c0_13, %c0_14, %c0_15, %c0_16], %30 {strides = array<i32>} : memref<1x4x4x32xf32, #tpu.memory_space<vmem>>, vector<1x1x4x32xf32>,
    %c1_i32_17 = arith.constant 1 : i32
    %31 = arith.addi %1, %c1_i32_17 : i32
    %c0_i32_18 = arith.constant 0 : i32
    %32 = arith.addi %31, %c0_i32_18 : i32
    %c0_19 = arith.constant 0 : index
    %33 = arith.index_cast %32 : i32 to index
    %c0_20 = arith.constant 0 : index
    %c0_21 = arith.constant 0 : index
    %34 = vector.load %arg2[%c0_19, %33, %c0_20, %c0_21] : memref<1x6x6x128xbf16, #tpu.memory_space<vmem>>, vector<1x1x6x128xbf16>
    %35 = vector.shape_cast %34 : vector<1x1x6x128xbf16> to vector<6x128xbf16>
    %36 = vector.extract_strided_slice %35 {offsets = [0, 0], sizes = [4, 128], strides = [1, 1]} : vector<6x128xbf16> to vector<4x128xbf16>
    %37 = vector.extract_strided_slice %35 {offsets = [1, 0], sizes = [4, 128], strides = [1, 1]} : vector<6x128xbf16> to vector<4x128xbf16>
    %38 = vector.extract_strided_slice %35 {offsets = [2, 0], sizes = [4, 128], strides = [1, 1]} : vector<6x128xbf16> to vector<4x128xbf16>
    %c1_i32_22 = arith.constant 1 : i32
    %39 = arith.addi %1, %c1_i32_22 : i32
    %c1_i32_23 = arith.constant 1 : i32
    %40 = arith.addi %39, %c1_i32_23 : i32
    %c0_24 = arith.constant 0 : index
    %41 = arith.index_cast %40 : i32 to index
    %c0_25 = arith.constant 0 : index
    %c0_26 = arith.constant 0 : index
    %42 = vector.load %arg2[%c0_24, %41, %c0_25, %c0_26] : memref<1x6x6x128xbf16, #tpu.memory_space<vmem>>, vector<1x1x6x128xbf16>
    %43 = vector.shape_cast %42 : vector<1x1x6x128xbf16> to vector<6x128xbf16>
    %44 = vector.extract_strided_slice %43 {offsets = [0, 0], sizes = [4, 128], strides = [1, 1]} : vector<6x128xbf16> to vector<4x128xbf16>
    %45 = vector.extract_strided_slice %43 {offsets = [1, 0], sizes = [4, 128], strides = [1, 1]} : vector<6x128xbf16> to vector<4x128xbf16>
    %46 = vector.extract_strided_slice %43 {offsets = [2, 0], sizes = [4, 128], strides = [1, 1]} : vector<6x128xbf16> to vector<4x128xbf16>
    %c1_i32_27 = arith.constant 1 : i32
    %47 = arith.addi %1, %c1_i32_27 : i32
    %c2_i32_28 = arith.constant 2 : i32
    %48 = arith.addi %47, %c2_i32_28 : i32
    %c0_29 = arith.constant 0 : index
    %49 = arith.index_cast %48 : i32 to index
    %c0_30 = arith.constant 0 : index
    %c0_31 = arith.constant 0 : index
    %50 = vector.load %arg2[%c0_29, %49, %c0_30, %c0_31] : memref<1x6x6x128xbf16, #tpu.memory_space<vmem>>, vector<1x1x6x128xbf16>
    %51 = vector.shape_cast %50 : vector<1x1x6x128xbf16> to vector<6x128xbf16>
    %52 = vector.extract_strided_slice %51 {offsets = [0, 0], sizes = [4, 128], strides = [1, 1]} : vector<6x128xbf16> to vector<4x128xbf16>
    %53 = vector.extract_strided_slice %51 {offsets = [1, 0], sizes = [4, 128], strides = [1, 1]} : vector<6x128xbf16> to vector<4x128xbf16>
    %54 = vector.extract_strided_slice %51 {offsets = [2, 0], sizes = [4, 128], strides = [1, 1]} : vector<6x128xbf16> to vector<4x128xbf16>
    %55 = tpu.concatenate %36, %37, %38, %44, %45, %46, %52, %53, %54 in 1 : vector<4x128xbf16>, vector<4x128xbf16>, vector<4x128xbf16>, vector<4x128xbf16>, vector<4x128xbf16>, vector<4x128xbf16>, vector<4x128xbf16>, vector<4x128xbf16>, vector<4x128xbf16> -> vector<4x1152xbf16>
    %cst_32 = arith.constant dense<0.000000e+00> : vector<4x32xf32>
    %56 = tpu.matmul %55, %0, %cst_32 {dimension_numbers = #tpu.dot_dimension_numbers<[1], [0], [0], [1], [0, 0, 1, 1], [], []>} : vector<4x1152xbf16>, vector<1152x32xbf16>, vector<4x32xf32> -> vector<4x32xf32>
    %c0_33 = arith.constant 0 : index
    %c1 = arith.constant 1 : index
    %c0_34 = arith.constant 0 : index
    %c0_35 = arith.constant 0 : index
    %57 = vector.load %arg4[%c0_33, %c1, %c0_34, %c0_35] : memref<1x4x4x32xf32, #tpu.memory_space<vmem>>, vector<1x1x4x32xf32>
    %58 = vector.shape_cast %57 : vector<1x1x4x32xf32> to vector<4x32xf32>
    %59 = vector.shape_cast %56 : vector<4x32xf32> to vector<1x1x4x32xf32>
    tpu.vector_store %arg4[%c0_33, %c1, %c0_34, %c0_35], %59 {strides = array<i32>} : memref<1x4x4x32xf32, #tpu.memory_space<vmem>>, vector<1x1x4x32xf32>,
    %c2_i32_36 = arith.constant 2 : i32
    %60 = arith.addi %1, %c2_i32_36 : i32
    %c0_i32_37 = arith.constant 0 : i32
    %61 = arith.addi %60, %c0_i32_37 : i32
    %c0_38 = arith.constant 0 : index
    %62 = arith.index_cast %61 : i32 to index
    %c0_39 = arith.constant 0 : index
    %c0_40 = arith.constant 0 : index
    %63 = vector.load %arg2[%c0_38, %62, %c0_39, %c0_40] : memref<1x6x6x128xbf16, #tpu.memory_space<vmem>>, vector<1x1x6x128xbf16>
    %64 = vector.shape_cast %63 : vector<1x1x6x128xbf16> to vector<6x128xbf16>
    %65 = vector.extract_strided_slice %64 {offsets = [0, 0], sizes = [4, 128], strides = [1, 1]} : vector<6x128xbf16> to vector<4x128xbf16>
    %66 = vector.extract_strided_slice %64 {offsets = [1, 0], sizes = [4, 128], strides = [1, 1]} : vector<6x128xbf16> to vector<4x128xbf16>
    %67 = vector.extract_strided_slice %64 {offsets = [2, 0], sizes = [4, 128], strides = [1, 1]} : vector<6x128xbf16> to vector<4x128xbf16>
    %c2_i32_41 = arith.constant 2 : i32
    %68 = arith.addi %1, %c2_i32_41 : i32
    %c1_i32_42 = arith.constant 1 : i32
    %69 = arith.addi %68, %c1_i32_42 : i32
    %c0_43 = arith.constant 0 : index
    %70 = arith.index_cast %69 : i32 to index
    %c0_44 = arith.constant 0 : index
    %c0_45 = arith.constant 0 : index
    %71 = vector.load %arg2[%c0_43, %70, %c0_44, %c0_45] : memref<1x6x6x128xbf16, #tpu.memory_space<vmem>>, vector<1x1x6x128xbf16>
    %72 = vector.shape_cast %71 : vector<1x1x6x128xbf16> to vector<6x128xbf16>
    %73 = vector.extract_strided_slice %72 {offsets = [0, 0], sizes = [4, 128], strides = [1, 1]} : vector<6x128xbf16> to vector<4x128xbf16>
    %74 = vector.extract_strided_slice %72 {offsets = [1, 0], sizes = [4, 128], strides = [1, 1]} : vector<6x128xbf16> to vector<4x128xbf16>
    %75 = vector.extract_strided_slice %72 {offsets = [2, 0], sizes = [4, 128], strides = [1, 1]} : vector<6x128xbf16> to vector<4x128xbf16>
    %c2_i32_46 = arith.constant 2 : i32
    %76 = arith.addi %1, %c2_i32_46 : i32
    %c2_i32_47 = arith.constant 2 : i32
    %77 = arith.addi %76, %c2_i32_47 : i32
    %c0_48 = arith.constant 0 : index
    %78 = arith.index_cast %77 : i32 to index
    %c0_49 = arith.constant 0 : index
    %c0_50 = arith.constant 0 : index
    %79 = vector.load %arg2[%c0_48, %78, %c0_49, %c0_50] : memref<1x6x6x128xbf16, #tpu.memory_space<vmem>>, vector<1x1x6x128xbf16>
    %80 = vector.shape_cast %79 : vector<1x1x6x128xbf16> to vector<6x128xbf16>
    %81 = vector.extract_strided_slice %80 {offsets = [0, 0], sizes = [4, 128], strides = [1, 1]} : vector<6x128xbf16> to vector<4x128xbf16>
    %82 = vector.extract_strided_slice %80 {offsets = [1, 0], sizes = [4, 128], strides = [1, 1]} : vector<6x128xbf16> to vector<4x128xbf16>
    %83 = vector.extract_strided_slice %80 {offsets = [2, 0], sizes = [4, 128], strides = [1, 1]} : vector<6x128xbf16> to vector<4x128xbf16>
    %84 = tpu.concatenate %65, %66, %67, %73, %74, %75, %81, %82, %83 in 1 : vector<4x128xbf16>, vector<4x128xbf16>, vector<4x128xbf16>, vector<4x128xbf16>, vector<4x128xbf16>, vector<4x128xbf16>, vector<4x128xbf16>, vector<4x128xbf16>, vector<4x128xbf16> -> vector<4x1152xbf16>
    %cst_51 = arith.constant dense<0.000000e+00> : vector<4x32xf32>
    %85 = tpu.matmul %84, %0, %cst_51 {dimension_numbers = #tpu.dot_dimension_numbers<[1], [0], [0], [1], [0, 0, 1, 1], [], []>} : vector<4x1152xbf16>, vector<1152x32xbf16>, vector<4x32xf32> -> vector<4x32xf32>
    %c0_52 = arith.constant 0 : index
    %c2 = arith.constant 2 : index
    %c0_53 = arith.constant 0 : index
    %c0_54 = arith.constant 0 : index
    %86 = vector.load %arg4[%c0_52, %c2, %c0_53, %c0_54] : memref<1x4x4x32xf32, #tpu.memory_space<vmem>>, vector<1x1x4x32xf32>
    %87 = vector.shape_cast %86 : vector<1x1x4x32xf32> to vector<4x32xf32>
    %88 = vector.shape_cast %85 : vector<4x32xf32> to vector<1x1x4x32xf32>
    tpu.vector_store %arg4[%c0_52, %c2, %c0_53, %c0_54], %88 {strides = array<i32>} : memref<1x4x4x32xf32, #tpu.memory_space<vmem>>, vector<1x1x4x32xf32>,
    %c3_i32 = arith.constant 3 : i32
    %89 = arith.addi %1, %c3_i32 : i32
    %c0_i32_55 = arith.constant 0 : i32
    %90 = arith.addi %89, %c0_i32_55 : i32
    %c0_56 = arith.constant 0 : index
    %91 = arith.index_cast %90 : i32 to index
    %c0_57 = arith.constant 0 : index
    %c0_58 = arith.constant 0 : index
    %92 = vector.load %arg2[%c0_56, %91, %c0_57, %c0_58] : memref<1x6x6x128xbf16, #tpu.memory_space<vmem>>, vector<1x1x6x128xbf16>
    %93 = vector.shape_cast %92 : vector<1x1x6x128xbf16> to vector<6x128xbf16>
    %94 = vector.extract_strided_slice %93 {offsets = [0, 0], sizes = [4, 128], strides = [1, 1]} : vector<6x128xbf16> to vector<4x128xbf16>
    %95 = vector.extract_strided_slice %93 {offsets = [1, 0], sizes = [4, 128], strides = [1, 1]} : vector<6x128xbf16> to vector<4x128xbf16>
    %96 = vector.extract_strided_slice %93 {offsets = [2, 0], sizes = [4, 128], strides = [1, 1]} : vector<6x128xbf16> to vector<4x128xbf16>
    %c3_i32_59 = arith.constant 3 : i32
    %97 = arith.addi %1, %c3_i32_59 : i32
    %c1_i32_60 = arith.constant 1 : i32
    %98 = arith.addi %97, %c1_i32_60 : i32
    %c0_61 = arith.constant 0 : index
    %99 = arith.index_cast %98 : i32 to index
    %c0_62 = arith.constant 0 : index
    %c0_63 = arith.constant 0 : index
    %100 = vector.load %arg2[%c0_61, %99, %c0_62, %c0_63] : memref<1x6x6x128xbf16, #tpu.memory_space<vmem>>, vector<1x1x6x128xbf16>
    %101 = vector.shape_cast %100 : vector<1x1x6x128xbf16> to vector<6x128xbf16>
    %102 = vector.extract_strided_slice %101 {offsets = [0, 0], sizes = [4, 128], strides = [1, 1]} : vector<6x128xbf16> to vector<4x128xbf16>
    %103 = vector.extract_strided_slice %101 {offsets = [1, 0], sizes = [4, 128], strides = [1, 1]} : vector<6x128xbf16> to vector<4x128xbf16>
    %104 = vector.extract_strided_slice %101 {offsets = [2, 0], sizes = [4, 128], strides = [1, 1]} : vector<6x128xbf16> to vector<4x128xbf16>
    %c3_i32_64 = arith.constant 3 : i32
    %105 = arith.addi %1, %c3_i32_64 : i32
    %c2_i32_65 = arith.constant 2 : i32
    %106 = arith.addi %105, %c2_i32_65 : i32
    %c0_66 = arith.constant 0 : index
    %107 = arith.index_cast %106 : i32 to index
    %c0_67 = arith.constant 0 : index
    %c0_68 = arith.constant 0 : index
    %108 = vector.load %arg2[%c0_66, %107, %c0_67, %c0_68] : memref<1x6x6x128xbf16, #tpu.memory_space<vmem>>, vector<1x1x6x128xbf16>
    %109 = vector.shape_cast %108 : vector<1x1x6x128xbf16> to vector<6x128xbf16>
    %110 = vector.extract_strided_slice %109 {offsets = [0, 0], sizes = [4, 128], strides = [1, 1]} : vector<6x128xbf16> to vector<4x128xbf16>
    %111 = vector.extract_strided_slice %109 {offsets = [1, 0], sizes = [4, 128], strides = [1, 1]} : vector<6x128xbf16> to vector<4x128xbf16>
    %112 = vector.extract_strided_slice %109 {offsets = [2, 0], sizes = [4, 128], strides = [1, 1]} : vector<6x128xbf16> to vector<4x128xbf16>
    %113 = tpu.concatenate %94, %95, %96, %102, %103, %104, %110, %111, %112 in 1 : vector<4x128xbf16>, vector<4x128xbf16>, vector<4x128xbf16>, vector<4x128xbf16>, vector<4x128xbf16>, vector<4x128xbf16>, vector<4x128xbf16>, vector<4x128xbf16>, vector<4x128xbf16> -> vector<4x1152xbf16>
    %cst_69 = arith.constant dense<0.000000e+00> : vector<4x32xf32>
    %114 = tpu.matmul %113, %0, %cst_69 {dimension_numbers = #tpu.dot_dimension_numbers<[1], [0], [0], [1], [0, 0, 1, 1], [], []>} : vector<4x1152xbf16>, vector<1152x32xbf16>, vector<4x32xf32> -> vector<4x32xf32>
    %c0_70 = arith.constant 0 : index
    %c3 = arith.constant 3 : index
    %c0_71 = arith.constant 0 : index
    %c0_72 = arith.constant 0 : index
    %115 = vector.load %arg4[%c0_70, %c3, %c0_71, %c0_72] : memref<1x4x4x32xf32, #tpu.memory_space<vmem>>, vector<1x1x4x32xf32>
    %116 = vector.shape_cast %115 : vector<1x1x4x32xf32> to vector<4x32xf32>
    %117 = vector.shape_cast %114 : vector<4x32xf32> to vector<1x1x4x32xf32>
    tpu.vector_store %arg4[%c0_70, %c3, %c0_71, %c0_72], %117 {strides = array<i32>} : memref<1x4x4x32xf32, #tpu.memory_space<vmem>>, vector<1x1x4x32xf32>,
    return
  }
  func.func @transform_0(%arg0: i32, %arg1: i32) -> (i32, i32, i32, i32) {
    %c0_i32 = arith.constant 0 : i32
    %c0_i32_0 = arith.constant 0 : i32
    %c0_i32_1 = arith.constant 0 : i32
    %c0_i32_2 = arith.constant 0 : i32
    return %arg0, %c0_i32, %c0_i32_0, %c0_i32_1 : i32, i32, i32, i32
  }
  func.func @transform_1(%arg0: i32, %arg1: i32) -> (i32, i32) {
    %c0_i32 = arith.constant 0 : i32
    %c0_i32_0 = arith.constant 0 : i32
    %c0_i32_1 = arith.constant 0 : i32
    return %c0_i32, %c0_i32_0 : i32, i32
  }
  func.func @transform_2(%arg0: i32, %arg1: i32) -> (i32, i32, i32, i32) {
    %c0_i32 = arith.constant 0 : i32
    %c0_i32_0 = arith.constant 0 : i32
    %c0_i32_1 = arith.constant 0 : i32
    return %arg0, %arg1, %c0_i32, %c0_i32_0 : i32, i32, i32, i32
  }
}

module attributes {stable_mosaic.version = 11 : i64} {
  func.func @_fused_matmul_kernel(%arg0: i32, %arg1: memref<32x72xf32, #tpu.memory_space<vmem>>, %arg2: memref<72x128xbf16, #tpu.memory_space<vmem>>, %arg3: memref<1x72xf32, #tpu.memory_space<vmem>>, %arg4: memref<1x72xf32, #tpu.memory_space<vmem>>, %arg5: memref<1x128xf32, #tpu.memory_space<vmem>>, %arg6: memref<1x128xf32, #tpu.memory_space<vmem>>, %arg7: memref<32x128xbf16, #tpu.memory_space<vmem>>) attributes {dimension_semantics = [#tpu.dimension_semantics<parallel>], iteration_bounds = array<i64: 1>, scalar_prefetch = 0 : i64, scratch_operands = 0 : i64, tpu.core_type = #tpu.core_type<tc>, window_params = [{transform_indices = @transform_0, window_bounds = array<i64: 32, 72>}, {pipeline_mode = #tpu.pipeline_mode<synchronous>, transform_indices = @transform_1, window_bounds = array<i64: 72, 128>}, {pipeline_mode = #tpu.pipeline_mode<synchronous>, transform_indices = @transform_2, window_bounds = array<i64: 1, 72>}, {pipeline_mode = #tpu.pipeline_mode<synchronous>, transform_indices = @transform_3, window_bounds = array<i64: 1, 72>}, {pipeline_mode = #tpu.pipeline_mode<synchronous>, transform_indices = @transform_4, window_bounds = array<i64: 1, 128>}, {pipeline_mode = #tpu.pipeline_mode<synchronous>, transform_indices = @transform_5, window_bounds = array<i64: 1, 128>}, {transform_indices = @transform_6, window_bounds = array<i64: 32, 128>}]} {
    %c0 = arith.constant 0 : index
    %c0_0 = arith.constant 0 : index
    %0 = vector.load %arg1[%c0, %c0_0] : memref<32x72xf32, #tpu.memory_space<vmem>>, vector<32x72xf32>
    %c0_1 = arith.constant 0 : index
    %c0_2 = arith.constant 0 : index
    %1 = vector.load %arg3[%c0_1, %c0_2] : memref<1x72xf32, #tpu.memory_space<vmem>>, vector<1x72xf32>
    %2 = vector.broadcast %1 : vector<1x72xf32> to vector<32x72xf32>
    %3 = arith.mulf %0, %2 : vector<32x72xf32>
    %c0_3 = arith.constant 0 : index
    %c0_4 = arith.constant 0 : index
    %4 = vector.load %arg4[%c0_3, %c0_4] : memref<1x72xf32, #tpu.memory_space<vmem>>, vector<1x72xf32>
    %5 = vector.broadcast %4 : vector<1x72xf32> to vector<32x72xf32>
    %6 = arith.addf %3, %5 : vector<32x72xf32>
    %cst = arith.constant 0.000000e+00 : f32
    %7 = vector.broadcast %cst : f32 to vector<32x72xf32>
    %8 = arith.maximumf %6, %7 : vector<32x72xf32>
    %9 = arith.truncf %8 : vector<32x72xf32> to vector<32x72xbf16>
    %c0_5 = arith.constant 0 : index
    %c0_6 = arith.constant 0 : index
    %10 = vector.load %arg2[%c0_5, %c0_6] : memref<72x128xbf16, #tpu.memory_space<vmem>>, vector<72x128xbf16>
    %cst_7 = arith.constant dense<0.000000e+00> : vector<32x128xf32>
    %11 = tpu.matmul %9, %10, %cst_7 {dimension_numbers = #tpu.dot_dimension_numbers<[1], [0], [0], [1], [0, 0, 1, 1], [], []>} : vector<32x72xbf16>, vector<72x128xbf16>, vector<32x128xf32> -> vector<32x128xf32>
    %c0_8 = arith.constant 0 : index
    %c0_9 = arith.constant 0 : index
    %12 = vector.load %arg5[%c0_8, %c0_9] : memref<1x128xf32, #tpu.memory_space<vmem>>, vector<1x128xf32>
    %13 = vector.broadcast %12 : vector<1x128xf32> to vector<32x128xf32>
    %14 = arith.mulf %11, %13 : vector<32x128xf32>
    %c0_10 = arith.constant 0 : index
    %c0_11 = arith.constant 0 : index
    %15 = vector.load %arg6[%c0_10, %c0_11] : memref<1x128xf32, #tpu.memory_space<vmem>>, vector<1x128xf32>
    %16 = vector.broadcast %15 : vector<1x128xf32> to vector<32x128xf32>
    %17 = arith.addf %14, %16 : vector<32x128xf32>
    %cst_12 = arith.constant 0.000000e+00 : f32
    %18 = vector.broadcast %cst_12 : f32 to vector<32x128xf32>
    %19 = arith.maximumf %17, %18 : vector<32x128xf32>
    %20 = arith.truncf %19 : vector<32x128xf32> to vector<32x128xbf16>
    %c0_13 = arith.constant 0 : index
    %c0_14 = arith.constant 0 : index
    %21 = vector.load %arg7[%c0_13, %c0_14] : memref<32x128xbf16, #tpu.memory_space<vmem>>, vector<32x128xbf16>
    tpu.vector_store %arg7[%c0_13, %c0_14], %20 {strides = array<i32>} : memref<32x128xbf16, #tpu.memory_space<vmem>>, vector<32x128xbf16>,
    return
  }
  func.func @transform_0(%arg0: i32) -> (i32, i32) {
    %c0_i32 = arith.constant 0 : i32
    %c0_i32_0 = arith.constant 0 : i32
    return %arg0, %c0_i32 : i32, i32
  }
  func.func @transform_1(%arg0: i32) -> (i32, i32) {
    %c0_i32 = arith.constant 0 : i32
    %c0_i32_0 = arith.constant 0 : i32
    %c0_i32_1 = arith.constant 0 : i32
    return %c0_i32, %c0_i32_0 : i32, i32
  }
  func.func @transform_2(%arg0: i32) -> (i32, i32) {
    %c0_i32 = arith.constant 0 : i32
    %c0_i32_0 = arith.constant 0 : i32
    %c0_i32_1 = arith.constant 0 : i32
    return %c0_i32, %c0_i32_0 : i32, i32
  }
  func.func @transform_3(%arg0: i32) -> (i32, i32) {
    %c0_i32 = arith.constant 0 : i32
    %c0_i32_0 = arith.constant 0 : i32
    %c0_i32_1 = arith.constant 0 : i32
    return %c0_i32, %c0_i32_0 : i32, i32
  }
  func.func @transform_4(%arg0: i32) -> (i32, i32) {
    %c0_i32 = arith.constant 0 : i32
    %c0_i32_0 = arith.constant 0 : i32
    %c0_i32_1 = arith.constant 0 : i32
    return %c0_i32, %c0_i32_0 : i32, i32
  }
  func.func @transform_5(%arg0: i32) -> (i32, i32) {
    %c0_i32 = arith.constant 0 : i32
    %c0_i32_0 = arith.constant 0 : i32
    %c0_i32_1 = arith.constant 0 : i32
    return %c0_i32, %c0_i32_0 : i32, i32
  }
  func.func @transform_6(%arg0: i32) -> (i32, i32) {
    %c0_i32 = arith.constant 0 : i32
    %c0_i32_0 = arith.constant 0 : i32
    return %arg0, %c0_i32 : i32, i32
  }
}

module attributes {stable_mosaic.version = 11 : i64} {
  func.func @_bn_relu_gap_kernel(%arg0: i32, %arg1: memref<1x16x104xf32, #tpu.memory_space<vmem>>, %arg2: memref<1x104xf32, #tpu.memory_space<vmem>>, %arg3: memref<1x104xf32, #tpu.memory_space<vmem>>, %arg4: memref<1x1x104xf32, #tpu.memory_space<vmem>>) attributes {dimension_semantics = [#tpu.dimension_semantics<parallel>], iteration_bounds = array<i64: 2>, scalar_prefetch = 0 : i64, scratch_operands = 0 : i64, tpu.core_type = #tpu.core_type<tc>, window_params = [{transform_indices = @transform_0, window_bounds = array<i64: 1, 16, 104>}, {pipeline_mode = #tpu.pipeline_mode<synchronous>, transform_indices = @transform_1, window_bounds = array<i64: 1, 104>}, {pipeline_mode = #tpu.pipeline_mode<synchronous>, transform_indices = @transform_2, window_bounds = array<i64: 1, 104>}, {transform_indices = @transform_3, window_bounds = array<i64: 1, 1, 104>}]} {
    %c0 = arith.constant 0 : index
    %c0_0 = arith.constant 0 : index
    %c0_1 = arith.constant 0 : index
    %0 = vector.load %arg1[%c0, %c0_0, %c0_1] : memref<1x16x104xf32, #tpu.memory_space<vmem>>, vector<1x16x104xf32>
    %1 = vector.shape_cast %0 : vector<1x16x104xf32> to vector<16x104xf32>
    %c0_2 = arith.constant 0 : index
    %c0_3 = arith.constant 0 : index
    %2 = vector.load %arg2[%c0_2, %c0_3] : memref<1x104xf32, #tpu.memory_space<vmem>>, vector<1x104xf32>
    %3 = vector.broadcast %2 : vector<1x104xf32> to vector<16x104xf32>
    %4 = arith.mulf %1, %3 : vector<16x104xf32>
    %c0_4 = arith.constant 0 : index
    %c0_5 = arith.constant 0 : index
    %5 = vector.load %arg3[%c0_4, %c0_5] : memref<1x104xf32, #tpu.memory_space<vmem>>, vector<1x104xf32>
    %6 = vector.broadcast %5 : vector<1x104xf32> to vector<16x104xf32>
    %7 = arith.addf %4, %6 : vector<16x104xf32>
    %cst = arith.constant 0.000000e+00 : f32
    %8 = vector.broadcast %cst : f32 to vector<16x104xf32>
    %9 = arith.maximumf %7, %8 : vector<16x104xf32>
    %cst_6 = arith.constant dense<0.000000e+00> : vector<104xf32>
    %10 = vector.multi_reduction <add>, %9, %cst_6 [0] : vector<16x104xf32> to vector<104xf32>
    %11 = vector.shape_cast %10 : vector<104xf32> to vector<1x104xf32>
    %cst_7 = arith.constant 1.600000e+01 : f32
    %12 = vector.broadcast %cst_7 : f32 to vector<1x104xf32>
    %13 = arith.divf %11, %12 : vector<1x104xf32>
    %c0_8 = arith.constant 0 : index
    %c0_9 = arith.constant 0 : index
    %c0_10 = arith.constant 0 : index
    %14 = vector.load %arg4[%c0_8, %c0_9, %c0_10] : memref<1x1x104xf32, #tpu.memory_space<vmem>>, vector<1x1x104xf32>
    %15 = vector.shape_cast %14 : vector<1x1x104xf32> to vector<1x104xf32>
    %16 = vector.shape_cast %13 : vector<1x104xf32> to vector<1x1x104xf32>
    tpu.vector_store %arg4[%c0_8, %c0_9, %c0_10], %16 {strides = array<i32>} : memref<1x1x104xf32, #tpu.memory_space<vmem>>, vector<1x1x104xf32>,
    return
  }
  func.func @transform_0(%arg0: i32) -> (i32, i32, i32) {
    %c0_i32 = arith.constant 0 : i32
    %c0_i32_0 = arith.constant 0 : i32
    %c0_i32_1 = arith.constant 0 : i32
    return %arg0, %c0_i32, %c0_i32_0 : i32, i32, i32
  }
  func.func @transform_1(%arg0: i32) -> (i32, i32) {
    %c0_i32 = arith.constant 0 : i32
    %c0_i32_0 = arith.constant 0 : i32
    %c0_i32_1 = arith.constant 0 : i32
    return %c0_i32, %c0_i32_0 : i32, i32
  }
  func.func @transform_2(%arg0: i32) -> (i32, i32) {
    %c0_i32 = arith.constant 0 : i32
    %c0_i32_0 = arith.constant 0 : i32
    %c0_i32_1 = arith.constant 0 : i32
    return %c0_i32, %c0_i32_0 : i32, i32
  }
  func.func @transform_3(%arg0: i32) -> (i32, i32, i32) {
    %c0_i32 = arith.constant 0 : i32
    %c0_i32_0 = arith.constant 0 : i32
    %c0_i32_1 = arith.constant 0 : i32
    return %arg0, %c0_i32, %c0_i32_0 : i32, i32, i32
  }
}

module attributes {stable_mosaic.version = 11 : i64} {
  func.func @_fused_matmul_kernel(%arg0: i32, %arg1: memref<8x104xf32, #tpu.memory_space<vmem>>, %arg2: memref<104x14xbf16, #tpu.memory_space<vmem>>, %arg3: memref<1x14xf32, #tpu.memory_space<vmem>>, %arg4: memref<1x14xf32, #tpu.memory_space<vmem>>, %arg5: memref<8x14xf32, #tpu.memory_space<vmem>>) attributes {dimension_semantics = [#tpu.dimension_semantics<parallel>], iteration_bounds = array<i64: 1>, scalar_prefetch = 0 : i64, scratch_operands = 0 : i64, tpu.core_type = #tpu.core_type<tc>, window_params = [{transform_indices = @transform_0, window_bounds = array<i64: 8, 104>}, {pipeline_mode = #tpu.pipeline_mode<synchronous>, transform_indices = @transform_1, window_bounds = array<i64: 104, 14>}, {pipeline_mode = #tpu.pipeline_mode<synchronous>, transform_indices = @transform_2, window_bounds = array<i64: 1, 14>}, {pipeline_mode = #tpu.pipeline_mode<synchronous>, transform_indices = @transform_3, window_bounds = array<i64: 1, 14>}, {transform_indices = @transform_4, window_bounds = array<i64: 8, 14>}]} {
    %c0 = arith.constant 0 : index
    %c0_0 = arith.constant 0 : index
    %0 = vector.load %arg1[%c0, %c0_0] : memref<8x104xf32, #tpu.memory_space<vmem>>, vector<8x104xf32>
    %1 = arith.truncf %0 : vector<8x104xf32> to vector<8x104xbf16>
    %c0_1 = arith.constant 0 : index
    %c0_2 = arith.constant 0 : index
    %2 = vector.load %arg2[%c0_1, %c0_2] : memref<104x14xbf16, #tpu.memory_space<vmem>>, vector<104x14xbf16>
    %cst = arith.constant dense<0.000000e+00> : vector<8x14xf32>
    %3 = tpu.matmul %1, %2, %cst {dimension_numbers = #tpu.dot_dimension_numbers<[1], [0], [0], [1], [0, 0, 1, 1], [], []>} : vector<8x104xbf16>, vector<104x14xbf16>, vector<8x14xf32> -> vector<8x14xf32>
    %c0_3 = arith.constant 0 : index
    %c0_4 = arith.constant 0 : index
    %4 = vector.load %arg3[%c0_3, %c0_4] : memref<1x14xf32, #tpu.memory_space<vmem>>, vector<1x14xf32>
    %5 = vector.broadcast %4 : vector<1x14xf32> to vector<8x14xf32>
    %6 = arith.mulf %3, %5 : vector<8x14xf32>
    %c0_5 = arith.constant 0 : index
    %c0_6 = arith.constant 0 : index
    %7 = vector.load %arg4[%c0_5, %c0_6] : memref<1x14xf32, #tpu.memory_space<vmem>>, vector<1x14xf32>
    %8 = vector.broadcast %7 : vector<1x14xf32> to vector<8x14xf32>
    %9 = arith.addf %6, %8 : vector<8x14xf32>
    %c0_7 = arith.constant 0 : index
    %c0_8 = arith.constant 0 : index
    %10 = vector.load %arg5[%c0_7, %c0_8] : memref<8x14xf32, #tpu.memory_space<vmem>>, vector<8x14xf32>
    tpu.vector_store %arg5[%c0_7, %c0_8], %9 {strides = array<i32>} : memref<8x14xf32, #tpu.memory_space<vmem>>, vector<8x14xf32>,
    return
  }
  func.func @transform_0(%arg0: i32) -> (i32, i32) {
    %c0_i32 = arith.constant 0 : i32
    %c0_i32_0 = arith.constant 0 : i32
    return %arg0, %c0_i32 : i32, i32
  }
  func.func @transform_1(%arg0: i32) -> (i32, i32) {
    %c0_i32 = arith.constant 0 : i32
    %c0_i32_0 = arith.constant 0 : i32
    %c0_i32_1 = arith.constant 0 : i32
    return %c0_i32, %c0_i32_0 : i32, i32
  }
  func.func @transform_2(%arg0: i32) -> (i32, i32) {
    %c0_i32 = arith.constant 0 : i32
    %c0_i32_0 = arith.constant 0 : i32
    %c0_i32_1 = arith.constant 0 : i32
    return %c0_i32, %c0_i32_0 : i32, i32
  }
  func.func @transform_3(%arg0: i32) -> (i32, i32) {
    %c0_i32 = arith.constant 0 : i32
    %c0_i32_0 = arith.constant 0 : i32
    %c0_i32_1 = arith.constant 0 : i32
    return %c0_i32, %c0_i32_0 : i32, i32
  }
  func.func @transform_4(%arg0: i32) -> (i32, i32) {
    %c0_i32 = arith.constant 0 : i32
    %c0_i32_0 = arith.constant 0 : i32
    return %arg0, %c0_i32 : i32, i32
  }
}

</mosaic_0001>

<llo_original>
// kernel: densenet_container_forward.16
$region0: #{densenet_container_forward.16}
  #allocation0 [shape = 'u32[]', space=smem, size = 0x4, offset = 0x4, fixed_abs, tag = 'smem constant byte address 0x4 - core index']
  #allocation1 [shape = 'u32[72,128]{1,0:T(1,128)}', space=vmem, size = 0x9000, scoped, tag = 'internal scratch']
  %s0 = inlined_call_operand.vmem [shape: f32[128,16], index: 0, kind: input, shape index: {}]
  %s1 = inlined_call_operand.vmem [shape: bf16[16,128], index: 1, kind: input, shape index: {}]
  %s2 = inlined_call_operand.vmem [shape: f32[1,16], index: 2, kind: input, shape index: {}]
  %s3 = inlined_call_operand.vmem [shape: f32[1,16], index: 3, kind: input, shape index: {}]
  %s4 = inlined_call_operand.vmem [shape: f32[1,128], index: 4, kind: input, shape index: {}]
  %s5 = inlined_call_operand.vmem [shape: f32[1,128], index: 5, kind: input, shape index: {}]
  %s6 = inlined_call_operand.vmem [shape: bf16[128,128], index: 6, kind: output, shape index: {}]
  %s7 = sld [smem:[#allocation0]]
  $region34: #{densenet_container_forward.16} parent=0
    _
  %s9 = ssub.s32 1, %s7
  %s10 = scalar_select 0, %s9, %s7
  // Predicated region
  $region2: #{densenet_container_forward.16} parent=0 // pred_check
    _
  $region3: #{densenet_container_forward.16} parent=0 // pred_check_branch
    %12 = sbr.rel (0) target = $region5
  $region4: #{densenet_container_forward.16} parent=0 // pred_region
    _
  $region5: #{densenet_container_forward.16} parent=0 // pred_fallthru
    _
  // Predicated region
  $region6: #{densenet_container_forward.16} parent=0 // pred_check
    _
  $region7: #{densenet_container_forward.16} parent=0 // pred_check_branch
    %14 = sbr.rel (0) target = $region9
  $region8: #{densenet_container_forward.16} parent=0 // pred_region
    _
  $region9: #{densenet_container_forward.16} parent=0 // pred_fallthru
    _
  // Predicated region
  $region10: #{densenet_container_forward.16} parent=0 // pred_check
    _
  $region11: #{densenet_container_forward.16} parent=0 // pred_check_branch
    %16 = sbr.rel (0) target = $region13
  $region12: #{densenet_container_forward.16} parent=0 // pred_region
    _
  $region13: #{densenet_container_forward.16} parent=0 // pred_fallthru
    _
  // Predicated region
  $region14: #{densenet_container_forward.16} parent=0 // pred_check
    _
  $region15: #{densenet_container_forward.16} parent=0 // pred_check_branch
    %18 = sbr.rel (0) target = $region17
  $region16: #{densenet_container_forward.16} parent=0 // pred_region
    _
  $region17: #{densenet_container_forward.16} parent=0 // pred_fallthru
    _
  // Predicated region
  $region18: #{densenet_container_forward.16} parent=0 // pred_check
    _
  $region19: #{densenet_container_forward.16} parent=0 // pred_check_branch
    %20 = sbr.rel (0) target = $region21
  $region20: #{densenet_container_forward.16} parent=0 // pred_region
    _
  $region21: #{densenet_container_forward.16} parent=0 // pred_fallthru
    _
  // Predicated region
  $region22: #{densenet_container_forward.16} parent=0 // pred_check
    _
  $region23: #{densenet_container_forward.16} parent=0 // pred_check_branch
    %22 = sbr.rel (0) target = $region25
  $region24: #{densenet_container_forward.16} parent=0 // pred_region
    _
  $region25: #{densenet_container_forward.16} parent=0 // pred_fallthru
    _
  %v24 = vld [vmem:[%s0] sm:$0xff]
  %v25 = vld [vmem:[%s0 + $0x8] sm:$0xff]
  %v26 = vld [vmem:[%s0 + $0x10] sm:$0xff]
  %v27 = vld [vmem:[%s0 + $0x18] sm:$0xff]
  %v28 = vld [vmem:[%s0 + $0x20] sm:$0xff]
  %v29 = vld [vmem:[%s0 + $0x28] sm:$0xff]
  %v30 = vld [vmem:[%s0 + $0x30] sm:$0xff]
  %v31 = vld [vmem:[%s0 + $0x38] sm:$0xff]
  %v32 = vld [vmem:[%s0 + $0x40] sm:$0xff]
  %v33 = vld [vmem:[%s0 + $0x48] sm:$0xff]
  %v34 = vld [vmem:[%s0 + $0x50] sm:$0xff]
  %v35 = vld [vmem:[%s0 + $0x58] sm:$0xff]
  %v36 = vld [vmem:[%s0 + $0x60] sm:$0xff]
  %v37 = vld [vmem:[%s0 + $0x68] sm:$0xff]
  %v38 = vld [vmem:[%s0 + $0x70] sm:$0xff]
  %v39 = vld [vmem:[%s0 + $0x78] sm:$0xff]
  %v40 = vld [vmem:[%s2] sm:$0x1]
  %v42 = vperm.slane %v40, 0
  %v44 = vmul.f32 %v24, %v42
  %v45 = vmul.f32 %v25, %v42
  %v46 = vmul.f32 %v26, %v42
  %v47 = vmul.f32 %v27, %v42
  %v48 = vmul.f32 %v28, %v42
  %v49 = vmul.f32 %v29, %v42
  %v50 = vmul.f32 %v30, %v42
  %v51 = vmul.f32 %v31, %v42
  %v52 = vmul.f32 %v32, %v42
  %v53 = vmul.f32 %v33, %v42
  %v54 = vmul.f32 %v34, %v42
  %v55 = vmul.f32 %v35, %v42
  %v56 = vmul.f32 %v36, %v42
  %v57 = vmul.f32 %v37, %v42
  %v58 = vmul.f32 %v38, %v42
  %v59 = vmul.f32 %v39, %v42
  %v60 = vld [vmem:[%s3] sm:$0x1]
  %v62 = vperm.slane %v60, 0
  %v64 = vadd.f32 %v44, %v62
  %v65 = vadd.f32 %v45, %v62
  %v66 = vadd.f32 %v46, %v62
  %v67 = vadd.f32 %v47, %v62
  %v68 = vadd.f32 %v48, %v62
  %v69 = vadd.f32 %v49, %v62
  %v70 = vadd.f32 %v50, %v62
  %v71 = vadd.f32 %v51, %v62
  %v72 = vadd.f32 %v52, %v62
  %v73 = vadd.f32 %v53, %v62
  %v74 = vadd.f32 %v54, %v62
  %v75 = vadd.f32 %v55, %v62
  %v76 = vadd.f32 %v56, %v62
  %v77 = vadd.f32 %v57, %v62
  %v78 = vadd.f32 %v58, %v62
  %v79 = vadd.f32 %v59, %v62
  %v80 = vmax.f32 %v64, 0.0
  %v81 = vmax.f32 %v65, 0.0
  %v82 = vmax.f32 %v66, 0.0
  %v83 = vmax.f32 %v67, 0.0
  %v84 = vmax.f32 %v68, 0.0
  %v85 = vmax.f32 %v69, 0.0
  %v86 = vmax.f32 %v70, 0.0
  %v87 = vmax.f32 %v71, 0.0
  %v88 = vmax.f32 %v72, 0.0
  %v89 = vmax.f32 %v73, 0.0
  %v90 = vmax.f32 %v74, 0.0
  %v91 = vmax.f32 %v75, 0.0
  %v92 = vmax.f32 %v76, 0.0
  %v93 = vmax.f32 %v77, 0.0
  %v94 = vmax.f32 %v78, 0.0
  %v95 = vmax.f32 %v79, 0.0
  %v96 = vpack.c.bf16 %v81, %v80
  %v97 = vpack.c.bf16 %v83, %v82
  %v98 = vpack.c.bf16 %v85, %v84
  %v99 = vpack.c.bf16 %v87, %v86
  %v100 = vpack.c.bf16 %v89, %v88
  %v101 = vpack.c.bf16 %v91, %v90
  %v102 = vpack.c.bf16 %v93, %v92
  %v103 = vpack.c.bf16 %v95, %v94
  %v104 = vld [vmem:[%s1] sm:$0xf]
  %v105 = vld [vmem:[%s1 + $0x4] sm:$0xf]
  %v108 = vunpack.c.l.b16 %v104
  %v109 = vunpack.c.l.b16 %v105
  %v110 = vpack.c.b16 %v109, %v108
  %vm112 = vcmask 130048
  %v114 = vsel %vm112, %v96, 0
  %v117 = vsel %vm112, %v97, 0
  %v120 = vsel %vm112, %v98, 0
  %v123 = vsel %vm112, %v99, 0
  %v126 = vsel %vm112, %v100, 0
  %v129 = vsel %vm112, %v101, 0
  %v132 = vsel %vm112, %v102, 0
  %v135 = vsel %vm112, %v103, 0
  %137 = vmatpush.bf16.msra.mxu0 0
  %138 = vmatpush.bf16.msra.mxu0 0
  %139 = vmatpush.bf16.msra.mxu0 0
  %140 = vmatpush.bf16.msra.mxu0 0
  %141 = vmatpush.bf16.msra.mxu0 0
  %142 = vmatpush.bf16.msra.mxu0 0
  %143 = vmatpush.bf16.msra.mxu0 0
  %144 = vmatpush.bf16.msra.mxu0 %v110
  %145 = vmatmul.bf16.gmra.mxu0 %v114
  %v146 = vpop.f32.mrf.mxu0
  %v147 = vadd.f32 0.0, %v146
  %v148 = vpop.f32.mrf.mxu0
  %v149 = vadd.f32 0.0, %v148
  %150 = vmatmul.bf16.gmra.mxu0 %v117
  %v151 = vpop.f32.mrf.mxu0
  %v152 = vadd.f32 0.0, %v151
  %v153 = vpop.f32.mrf.mxu0
  %v154 = vadd.f32 0.0, %v153
  %155 = vmatmul.bf16.gmra.mxu0 %v120
  %v156 = vpop.f32.mrf.mxu0
  %v157 = vadd.f32 0.0, %v156
  %v158 = vpop.f32.mrf.mxu0
  %v159 = vadd.f32 0.0, %v158
  %160 = vmatmul.bf16.gmra.mxu0 %v123
  %v161 = vpop.f32.mrf.mxu0
  %v162 = vadd.f32 0.0, %v161
  %v163 = vpop.f32.mrf.mxu0
  %v164 = vadd.f32 0.0, %v163
  %165 = vmatmul.bf16.gmra.mxu0 %v126
  %v166 = vpop.f32.mrf.mxu0
  %v167 = vadd.f32 0.0, %v166
  %v168 = vpop.f32.mrf.mxu0
  %v169 = vadd.f32 0.0, %v168
  %170 = vmatmul.bf16.gmra.mxu0 %v129
  %v171 = vpop.f32.mrf.mxu0
  %v172 = vadd.f32 0.0, %v171
  %v173 = vpop.f32.mrf.mxu0
  %v174 = vadd.f32 0.0, %v173
  %175 = vmatmul.bf16.gmra.mxu0 %v132
  %v176 = vpop.f32.mrf.mxu0
  %v177 = vadd.f32 0.0, %v176
  %v178 = vpop.f32.mrf.mxu0
  %v179 = vadd.f32 0.0, %v178
  %180 = vmatmul.bf16.gmra.mxu0 %v135
  %v181 = vpop.f32.mrf.mxu0
  %v182 = vadd.f32 0.0, %v181
  %v183 = vpop.f32.mrf.mxu0
  %v184 = vadd.f32 0.0, %v183
  %185 = vdwg.mxu0
  %v186 = vld [vmem:[%s4] sm:$0x1]
  %v188 = vperm.slane %v186, 0
  %v190 = vmul.f32 %v147, %v188
  %v191 = vmul.f32 %v149, %v188
  %v192 = vmul.f32 %v152, %v188
  %v193 = vmul.f32 %v154, %v188
  %v194 = vmul.f32 %v157, %v188
  %v195 = vmul.f32 %v159, %v188
  %v196 = vmul.f32 %v162, %v188
  %v197 = vmul.f32 %v164, %v188
  %v198 = vmul.f32 %v167, %v188
  %v199 = vmul.f32 %v169, %v188
  %v200 = vmul.f32 %v172, %v188
  %v201 = vmul.f32 %v174, %v188
  %v202 = vmul.f32 %v177, %v188
  %v203 = vmul.f32 %v179, %v188
  %v204 = vmul.f32 %v182, %v188
  %v205 = vmul.f32 %v184, %v188
  %v206 = vld [vmem:[%s5] sm:$0x1]
  %v208 = vperm.slane %v206, 0
  %v210 = vadd.f32 %v190, %v208
  %v211 = vadd.f32 %v191, %v208
  %v212 = vadd.f32 %v192, %v208
  %v213 = vadd.f32 %v193, %v208
  %v214 = vadd.f32 %v194, %v208
  %v215 = vadd.f32 %v195, %v208
  %v216 = vadd.f32 %v196, %v208
  %v217 = vadd.f32 %v197, %v208
  %v218 = vadd.f32 %v198, %v208
  %v219 = vadd.f32 %v199, %v208
  %v220 = vadd.f32 %v200, %v208
  %v221 = vadd.f32 %v201, %v208
  %v222 = vadd.f32 %v202, %v208
  %v223 = vadd.f32 %v203, %v208
  %v224 = vadd.f32 %v204, %v208
  %v225 = vadd.f32 %v205, %v208
  %v226 = vmax.f32 %v210, 0.0
  %v227 = vmax.f32 %v211, 0.0
  %v228 = vmax.f32 %v212, 0.0
  %v229 = vmax.f32 %v213, 0.0
  %v230 = vmax.f32 %v214, 0.0
  %v231 = vmax.f32 %v215, 0.0
  %v232 = vmax.f32 %v216, 0.0
  %v233 = vmax.f32 %v217, 0.0
  %v234 = vmax.f32 %v218, 0.0
  %v235 = vmax.f32 %v219, 0.0
  %v236 = vmax.f32 %v220, 0.0
  %v237 = vmax.f32 %v221, 0.0
  %v238 = vmax.f32 %v222, 0.0
  %v239 = vmax.f32 %v223, 0.0
  %v240 = vmax.f32 %v224, 0.0
  %v241 = vmax.f32 %v225, 0.0
  %v242 = vpack.c.bf16 %v226, %v226
  %v243 = vpack.c.bf16 %v227, %v227
  %v244 = vpack.c.bf16 %v228, %v228
  %v245 = vpack.c.bf16 %v229, %v229
  %v246 = vpack.c.bf16 %v230, %v230
  %v247 = vpack.c.bf16 %v231, %v231
  %v248 = vpack.c.bf16 %v232, %v232
  %v249 = vpack.c.bf16 %v233, %v233
  %v250 = vpack.c.bf16 %v234, %v234
  %v251 = vpack.c.bf16 %v235, %v235
  %v252 = vpack.c.bf16 %v236, %v236
  %v253 = vpack.c.bf16 %v237, %v237
  %v254 = vpack.c.bf16 %v238, %v238
  %v255 = vpack.c.bf16 %v239, %v239
  %v256 = vpack.c.bf16 %v240, %v240
  %v257 = vpack.c.bf16 %v241, %v241
  %258 = vst [vmem:[%s6] sm:$0xf] %v242
  %259 = vst [vmem:[%s6 + $0x4] sm:$0xf] %v243
  %260 = vst [vmem:[%s6 + $0x8] sm:$0xf] %v244
  %261 = vst [vmem:[%s6 + $0xc] sm:$0xf] %v245
  %262 = vst [vmem:[%s6 + $0x10] sm:$0xf] %v246
  %263 = vst [vmem:[%s6 + $0x14] sm:$0xf] %v247
  %264 = vst [vmem:[%s6 + $0x18] sm:$0xf] %v248
  %265 = vst [vmem:[%s6 + $0x1c] sm:$0xf] %v249
  %266 = vst [vmem:[%s6 + $0x20] sm:$0xf] %v250
  %267 = vst [vmem:[%s6 + $0x24] sm:$0xf] %v251
  %268 = vst [vmem:[%s6 + $0x28] sm:$0xf] %v252
  %269 = vst [vmem:[%s6 + $0x2c] sm:$0xf] %v253
  %270 = vst [vmem:[%s6 + $0x30] sm:$0xf] %v254
  %271 = vst [vmem:[%s6 + $0x34] sm:$0xf] %v255
  %272 = vst [vmem:[%s6 + $0x38] sm:$0xf] %v256
  %273 = vst [vmem:[%s6 + $0x3c] sm:$0xf] %v257
  // Predicated region
  $region26: #{densenet_container_forward.16} parent=0 // pred_check
    _
  $region27: #{densenet_container_forward.16} parent=0 // pred_check_branch
    %275 = sbr.rel (0) target = $region29
  $region28: #{densenet_container_forward.16} parent=0 // pred_region
    _
  $region29: #{densenet_container_forward.16} parent=0 // pred_fallthru
    _
  // Predicated region
  $region30: #{densenet_container_forward.16} parent=0 // pred_check
    _
  $region31: #{densenet_container_forward.16} parent=0 // pred_check_branch
    %277 = sbr.rel (0) target = $region33
  $region32: #{densenet_container_forward.16} parent=0 // pred_region
    _
  $region33: #{densenet_container_forward.16} parent=0 // pred_fallthru
    _

// kernel: densenet_container_forward.15
$region0: #{densenet_container_forward.15}
  #allocation0 [shape = 'u32[]', space=smem, size = 0x4, offset = 0x4, fixed_abs, tag = 'smem constant byte address 0x4 - core index']
  #allocation1 [shape = 'u32[72,128]{1,0:T(1,128)}', space=vmem, size = 0x9000, scoped, tag = 'internal scratch']
  %s0 = inlined_call_operand.vmem [shape: f32[128,16], index: 0, kind: input, shape index: {}]
  %s1 = inlined_call_operand.vmem [shape: f32[128,16], index: 1, kind: input, shape index: {}]
  %s2 = inlined_call_operand.vmem [shape: f32[128,16], index: 2, kind: input, shape index: {}]
  %s3 = inlined_call_operand.vmem [shape: f32[128,16], index: 3, kind: input, shape index: {}]
  %s4 = inlined_call_operand.vmem [shape: f32[128,16], index: 4, kind: input, shape index: {}]
  %s5 = inlined_call_operand.vmem [shape: f32[128,16], index: 5, kind: input, shape index: {}]
  %s6 = inlined_call_operand.vmem [shape: f32[128,16], index: 6, kind: input, shape index: {}]
  %s7 = inlined_call_operand.vmem [shape: f32[128,16], index: 7, kind: input, shape index: {}]
  %s8 = inlined_call_operand.vmem [shape: f32[128,16], index: 8, kind: input, shape index: {}]
  %s9 = inlined_call_operand.vmem [shape: f32[128,16], index: 9, kind: output, shape index: {}]
  %s10 = sld [smem:[#allocation0]]
  $region46: #{densenet_container_forward.15} parent=0
    _
  %s12 = ssub.s32 1, %s10
  %s13 = scalar_select 0, %s12, %s10
  // Predicated region
  $region2: #{densenet_container_forward.15} parent=0 // pred_check
    _
  $region3: #{densenet_container_forward.15} parent=0 // pred_check_branch
    %15 = sbr.rel (0) target = $region5
  $region4: #{densenet_container_forward.15} parent=0 // pred_region
    _
  $region5: #{densenet_container_forward.15} parent=0 // pred_fallthru
    _
  // Predicated region
  $region6: #{densenet_container_forward.15} parent=0 // pred_check
    _
  $region7: #{densenet_container_forward.15} parent=0 // pred_check_branch
    %17 = sbr.rel (0) target = $region9
  $region8: #{densenet_container_forward.15} parent=0 // pred_region
    _
  $region9: #{densenet_container_forward.15} parent=0 // pred_fallthru
    _
  // Predicated region
  $region10: #{densenet_container_forward.15} parent=0 // pred_check
    _
  $region11: #{densenet_container_forward.15} parent=0 // pred_check_branch
    %19 = sbr.rel (0) target = $region13
  $region12: #{densenet_container_forward.15} parent=0 // pred_region
    _
  $region13: #{densenet_container_forward.15} parent=0 // pred_fallthru
    _
  // Predicated region
  $region14: #{densenet_container_forward.15} parent=0 // pred_check
    _
  $region15: #{densenet_container_forward.15} parent=0 // pred_check_branch
    %21 = sbr.rel (0) target = $region17
  $region16: #{densenet_container_forward.15} parent=0 // pred_region
    _
  $region17: #{densenet_container_forward.15} parent=0 // pred_fallthru
    _
  // Predicated region
  $region18: #{densenet_container_forward.15} parent=0 // pred_check
    _
  $region19: #{densenet_container_forward.15} parent=0 // pred_check_branch
    %23 = sbr.rel (0) target = $region21
  $region20: #{densenet_container_forward.15} parent=0 // pred_region
    _
  $region21: #{densenet_container_forward.15} parent=0 // pred_fallthru
    _
  // Predicated region
  $region22: #{densenet_container_forward.15} parent=0 // pred_check
    _
  $region23: #{densenet_container_forward.15} parent=0 // pred_check_branch
    %25 = sbr.rel (0) target = $region25
  $region24: #{densenet_container_forward.15} parent=0 // pred_region
    _
  $region25: #{densenet_container_forward.15} parent=0 // pred_fallthru
    _
  // Predicated region
  $region26: #{densenet_container_forward.15} parent=0 // pred_check
    _
  $region27: #{densenet_container_forward.15} parent=0 // pred_check_branch
    %27 = sbr.rel (0) target = $region29
  $region28: #{densenet_container_forward.15} parent=0 // pred_region
    _
  $region29: #{densenet_container_forward.15} parent=0 // pred_fallthru
    _
  // Predicated region
  $region30: #{densenet_container_forward.15} parent=0 // pred_check
    _
  $region31: #{densenet_container_forward.15} parent=0 // pred_check_branch
    %29 = sbr.rel (0) target = $region33
  $region32: #{densenet_container_forward.15} parent=0 // pred_region
    _
  $region33: #{densenet_container_forward.15} parent=0 // pred_fallthru
    _
  // Predicated region
  $region34: #{densenet_container_forward.15} parent=0 // pred_check
    _
  $region35: #{densenet_container_forward.15} parent=0 // pred_check_branch
    %31 = sbr.rel (0) target = $region37
  $region36: #{densenet_container_forward.15} parent=0 // pred_region
    _
  $region37: #{densenet_container_forward.15} parent=0 // pred_fallthru
    _
  %v32 = vld [vmem:[%s0] sm:$0xff]
  %v33 = vld [vmem:[%s0 + $0x8] sm:$0xff]
  %v34 = vld [vmem:[%s0 + $0x10] sm:$0xff]
  %v35 = vld [vmem:[%s0 + $0x18] sm:$0xff]
  %v36 = vld [vmem:[%s0 + $0x20] sm:$0xff]
  %v37 = vld [vmem:[%s0 + $0x28] sm:$0xff]
  %v38 = vld [vmem:[%s0 + $0x30] sm:$0xff]
  %v39 = vld [vmem:[%s0 + $0x38] sm:$0xff]
  %v40 = vld [vmem:[%s0 + $0x40] sm:$0xff]
  %v41 = vld [vmem:[%s0 + $0x48] sm:$0xff]
  %v42 = vld [vmem:[%s0 + $0x50] sm:$0xff]
  %v43 = vld [vmem:[%s0 + $0x58] sm:$0xff]
  %v44 = vld [vmem:[%s0 + $0x60] sm:$0xff]
  %v45 = vld [vmem:[%s0 + $0x68] sm:$0xff]
  %v46 = vld [vmem:[%s0 + $0x70] sm:$0xff]
  %v47 = vld [vmem:[%s0 + $0x78] sm:$0xff]
  %v48 = vld [vmem:[%s1] sm:$0xff]
  %v49 = vld [vmem:[%s1 + $0x8] sm:$0xff]
  %v50 = vld [vmem:[%s1 + $0x10] sm:$0xff]
  %v51 = vld [vmem:[%s1 + $0x18] sm:$0xff]
  %v52 = vld [vmem:[%s1 + $0x20] sm:$0xff]
  %v53 = vld [vmem:[%s1 + $0x28] sm:$0xff]
  %v54 = vld [vmem:[%s1 + $0x30] sm:$0xff]
  %v55 = vld [vmem:[%s1 + $0x38] sm:$0xff]
  %v56 = vld [vmem:[%s1 + $0x40] sm:$0xff]
  %v57 = vld [vmem:[%s1 + $0x48] sm:$0xff]
  %v58 = vld [vmem:[%s1 + $0x50] sm:$0xff]
  %v59 = vld [vmem:[%s1 + $0x58] sm:$0xff]
  %v60 = vld [vmem:[%s1 + $0x60] sm:$0xff]
  %v61 = vld [vmem:[%s1 + $0x68] sm:$0xff]
  %v62 = vld [vmem:[%s1 + $0x70] sm:$0xff]
  %v63 = vld [vmem:[%s1 + $0x78] sm:$0xff]
  %v64 = vmax.f32 %v32, %v48
  %v65 = vmax.f32 %v33, %v49
  %v66 = vmax.f32 %v34, %v50
  %v67 = vmax.f32 %v35, %v51
  %v68 = vmax.f32 %v36, %v52
  %v69 = vmax.f32 %v37, %v53
  %v70 = vmax.f32 %v38, %v54
  %v71 = vmax.f32 %v39, %v55
  %v72 = vmax.f32 %v40, %v56
  %v73 = vmax.f32 %v41, %v57
  %v74 = vmax.f32 %v42, %v58
  %v75 = vmax.f32 %v43, %v59
  %v76 = vmax.f32 %v44, %v60
  %v77 = vmax.f32 %v45, %v61
  %v78 = vmax.f32 %v46, %v62
  %v79 = vmax.f32 %v47, %v63
  %v80 = vld [vmem:[%s2] sm:$0xff]
  %v81 = vld [vmem:[%s2 + $0x8] sm:$0xff]
  %v82 = vld [vmem:[%s2 + $0x10] sm:$0xff]
  %v83 = vld [vmem:[%s2 + $0x18] sm:$0xff]
  %v84 = vld [vmem:[%s2 + $0x20] sm:$0xff]
  %v85 = vld [vmem:[%s2 + $0x28] sm:$0xff]
  %v86 = vld [vmem:[%s2 + $0x30] sm:$0xff]
  %v87 = vld [vmem:[%s2 + $0x38] sm:$0xff]
  %v88 = vld [vmem:[%s2 + $0x40] sm:$0xff]
  %v89 = vld [vmem:[%s2 + $0x48] sm:$0xff]
  %v90 = vld [vmem:[%s2 + $0x50] sm:$0xff]
  %v91 = vld [vmem:[%s2 + $0x58] sm:$0xff]
  %v92 = vld [vmem:[%s2 + $0x60] sm:$0xff]
  %v93 = vld [vmem:[%s2 + $0x68] sm:$0xff]
  %v94 = vld [vmem:[%s2 + $0x70] sm:$0xff]
  %v95 = vld [vmem:[%s2 + $0x78] sm:$0xff]
  %v96 = vmax.f32 %v64, %v80
  %v97 = vmax.f32 %v65, %v81
  %v98 = vmax.f32 %v66, %v82
  %v99 = vmax.f32 %v67, %v83
  %v100 = vmax.f32 %v68, %v84
  %v101 = vmax.f32 %v69, %v85
  %v102 = vmax.f32 %v70, %v86
  %v103 = vmax.f32 %v71, %v87
  %v104 = vmax.f32 %v72, %v88
  %v105 = vmax.f32 %v73, %v89
  %v106 = vmax.f32 %v74, %v90
  %v107 = vmax.f32 %v75, %v91
  %v108 = vmax.f32 %v76, %v92
  %v109 = vmax.f32 %v77, %v93
  %v110 = vmax.f32 %v78, %v94
  %v111 = vmax.f32 %v79, %v95
  %v112 = vld [vmem:[%s3] sm:$0xff]
  %v113 = vld [vmem:[%s3 + $0x8] sm:$0xff]
  %v114 = vld [vmem:[%s3 + $0x10] sm:$0xff]
  %v115 = vld [vmem:[%s3 + $0x18] sm:$0xff]
  %v116 = vld [vmem:[%s3 + $0x20] sm:$0xff]
  %v117 = vld [vmem:[%s3 + $0x28] sm:$0xff]
  %v118 = vld [vmem:[%s3 + $0x30] sm:$0xff]
  %v119 = vld [vmem:[%s3 + $0x38] sm:$0xff]
  %v120 = vld [vmem:[%s3 + $0x40] sm:$0xff]
  %v121 = vld [vmem:[%s3 + $0x48] sm:$0xff]
  %v122 = vld [vmem:[%s3 + $0x50] sm:$0xff]
  %v123 = vld [vmem:[%s3 + $0x58] sm:$0xff]
  %v124 = vld [vmem:[%s3 + $0x60] sm:$0xff]
  %v125 = vld [vmem:[%s3 + $0x68] sm:$0xff]
  %v126 = vld [vmem:[%s3 + $0x70] sm:$0xff]
  %v127 = vld [vmem:[%s3 + $0x78] sm:$0xff]
  %v128 = vmax.f32 %v96, %v112
  %v129 = vmax.f32 %v97, %v113
  %v130 = vmax.f32 %v98, %v114
  %v131 = vmax.f32 %v99, %v115
  %v132 = vmax.f32 %v100, %v116
  %v133 = vmax.f32 %v101, %v117
  %v134 = vmax.f32 %v102, %v118
  %v135 = vmax.f32 %v103, %v119
  %v136 = vmax.f32 %v104, %v120
  %v137 = vmax.f32 %v105, %v121
  %v138 = vmax.f32 %v106, %v122
  %v139 = vmax.f32 %v107, %v123
  %v140 = vmax.f32 %v108, %v124
  %v141 = vmax.f32 %v109, %v125
  %v142 = vmax.f32 %v110, %v126
  %v143 = vmax.f32 %v111, %v127
  %v144 = vld [vmem:[%s4] sm:$0xff]
  %v145 = vld [vmem:[%s4 + $0x8] sm:$0xff]
  %v146 = vld [vmem:[%s4 + $0x10] sm:$0xff]
  %v147 = vld [vmem:[%s4 + $0x18] sm:$0xff]
  %v148 = vld [vmem:[%s4 + $0x20] sm:$0xff]
  %v149 = vld [vmem:[%s4 + $0x28] sm:$0xff]
  %v150 = vld [vmem:[%s4 + $0x30] sm:$0xff]
  %v151 = vld [vmem:[%s4 + $0x38] sm:$0xff]
  %v152 = vld [vmem:[%s4 + $0x40] sm:$0xff]
  %v153 = vld [vmem:[%s4 + $0x48] sm:$0xff]
  %v154 = vld [vmem:[%s4 + $0x50] sm:$0xff]
  %v155 = vld [vmem:[%s4 + $0x58] sm:$0xff]
  %v156 = vld [vmem:[%s4 + $0x60] sm:$0xff]
  %v157 = vld [vmem:[%s4 + $0x68] sm:$0xff]
  %v158 = vld [vmem:[%s4 + $0x70] sm:$0xff]
  %v159 = vld [vmem:[%s4 + $0x78] sm:$0xff]
  %v160 = vmax.f32 %v128, %v144
  %v161 = vmax.f32 %v129, %v145
  %v162 = vmax.f32 %v130, %v146
  %v163 = vmax.f32 %v131, %v147
  %v164 = vmax.f32 %v132, %v148
  %v165 = vmax.f32 %v133, %v149
  %v166 = vmax.f32 %v134, %v150
  %v167 = vmax.f32 %v135, %v151
  %v168 = vmax.f32 %v136, %v152
  %v169 = vmax.f32 %v137, %v153
  %v170 = vmax.f32 %v138, %v154
  %v171 = vmax.f32 %v139, %v155
  %v172 = vmax.f32 %v140, %v156
  %v173 = vmax.f32 %v141, %v157
  %v174 = vmax.f32 %v142, %v158
  %v175 = vmax.f32 %v143, %v159
  %v176 = vld [vmem:[%s5] sm:$0xff]
  %v177 = vld [vmem:[%s5 + $0x8] sm:$0xff]
  %v178 = vld [vmem:[%s5 + $0x10] sm:$0xff]
  %v179 = vld [vmem:[%s5 + $0x18] sm:$0xff]
  %v180 = vld [vmem:[%s5 + $0x20] sm:$0xff]
  %v181 = vld [vmem:[%s5 + $0x28] sm:$0xff]
  %v182 = vld [vmem:[%s5 + $0x30] sm:$0xff]
  %v183 = vld [vmem:[%s5 + $0x38] sm:$0xff]
  %v184 = vld [vmem:[%s5 + $0x40] sm:$0xff]
  %v185 = vld [vmem:[%s5 + $0x48] sm:$0xff]
  %v186 = vld [vmem:[%s5 + $0x50] sm:$0xff]
  %v187 = vld [vmem:[%s5 + $0x58] sm:$0xff]
  %v188 = vld [vmem:[%s5 + $0x60] sm:$0xff]
  %v189 = vld [vmem:[%s5 + $0x68] sm:$0xff]
  %v190 = vld [vmem:[%s5 + $0x70] sm:$0xff]
  %v191 = vld [vmem:[%s5 + $0x78] sm:$0xff]
  %v192 = vmax.f32 %v160, %v176
  %v193 = vmax.f32 %v161, %v177
  %v194 = vmax.f32 %v162, %v178
  %v195 = vmax.f32 %v163, %v179
  %v196 = vmax.f32 %v164, %v180
  %v197 = vmax.f32 %v165, %v181
  %v198 = vmax.f32 %v166, %v182
  %v199 = vmax.f32 %v167, %v183
  %v200 = vmax.f32 %v168, %v184
  %v201 = vmax.f32 %v169, %v185
  %v202 = vmax.f32 %v170, %v186
  %v203 = vmax.f32 %v171, %v187
  %v204 = vmax.f32 %v172, %v188
  %v205 = vmax.f32 %v173, %v189
  %v206 = vmax.f32 %v174, %v190
  %v207 = vmax.f32 %v175, %v191
  %v208 = vld [vmem:[%s6] sm:$0xff]
  %v209 = vld [vmem:[%s6 + $0x8] sm:$0xff]
  %v210 = vld [vmem:[%s6 + $0x10] sm:$0xff]
  %v211 = vld [vmem:[%s6 + $0x18] sm:$0xff]
  %v212 = vld [vmem:[%s6 + $0x20] sm:$0xff]
  %v213 = vld [vmem:[%s6 + $0x28] sm:$0xff]
  %v214 = vld [vmem:[%s6 + $0x30] sm:$0xff]
  %v215 = vld [vmem:[%s6 + $0x38] sm:$0xff]
  %v216 = vld [vmem:[%s6 + $0x40] sm:$0xff]
  %v217 = vld [vmem:[%s6 + $0x48] sm:$0xff]
  %v218 = vld [vmem:[%s6 + $0x50] sm:$0xff]
  %v219 = vld [vmem:[%s6 + $0x58] sm:$0xff]
  %v220 = vld [vmem:[%s6 + $0x60] sm:$0xff]
  %v221 = vld [vmem:[%s6 + $0x68] sm:$0xff]
  %v222 = vld [vmem:[%s6 + $0x70] sm:$0xff]
  %v223 = vld [vmem:[%s6 + $0x78] sm:$0xff]
  %v224 = vmax.f32 %v192, %v208
  %v225 = vmax.f32 %v193, %v209
  %v226 = vmax.f32 %v194, %v210
  %v227 = vmax.f32 %v195, %v211
  %v228 = vmax.f32 %v196, %v212
  %v229 = vmax.f32 %v197, %v213
  %v230 = vmax.f32 %v198, %v214
  %v231 = vmax.f32 %v199, %v215
  %v232 = vmax.f32 %v200, %v216
  %v233 = vmax.f32 %v201, %v217
  %v234 = vmax.f32 %v202, %v218
  %v235 = vmax.f32 %v203, %v219
  %v236 = vmax.f32 %v204, %v220
  %v237 = vmax.f32 %v205, %v221
  %v238 = vmax.f32 %v206, %v222
  %v239 = vmax.f32 %v207, %v223
  %v240 = vld [vmem:[%s7] sm:$0xff]
  %v241 = vld [vmem:[%s7 + $0x8] sm:$0xff]
  %v242 = vld [vmem:[%s7 + $0x10] sm:$0xff]
  %v243 = vld [vmem:[%s7 + $0x18] sm:$0xff]
  %v244 = vld [vmem:[%s7 + $0x20] sm:$0xff]
  %v245 = vld [vmem:[%s7 + $0x28] sm:$0xff]
  %v246 = vld [vmem:[%s7 + $0x30] sm:$0xff]
  %v247 = vld [vmem:[%s7 + $0x38] sm:$0xff]
  %v248 = vld [vmem:[%s7 + $0x40] sm:$0xff]
  %v249 = vld [vmem:[%s7 + $0x48] sm:$0xff]
  %v250 = vld [vmem:[%s7 + $0x50] sm:$0xff]
  %v251 = vld [vmem:[%s7 + $0x58] sm:$0xff]
  %v252 = vld [vmem:[%s7 + $0x60] sm:$0xff]
  %v253 = vld [vmem:[%s7 + $0x68] sm:$0xff]
  %v254 = vld [vmem:[%s7 + $0x70] sm:$0xff]
  %v255 = vld [vmem:[%s7 + $0x78] sm:$0xff]
  %v256 = vmax.f32 %v224, %v240
  %v257 = vmax.f32 %v225, %v241
  %v258 = vmax.f32 %v226, %v242
  %v259 = vmax.f32 %v227, %v243
  %v260 = vmax.f32 %v228, %v244
  %v261 = vmax.f32 %v229, %v245
  %v262 = vmax.f32 %v230, %v246
  %v263 = vmax.f32 %v231, %v247
  %v264 = vmax.f32 %v232, %v248
  %v265 = vmax.f32 %v233, %v249
  %v266 = vmax.f32 %v234, %v250
  %v267 = vmax.f32 %v235, %v251
  %v268 = vmax.f32 %v236, %v252
  %v269 = vmax.f32 %v237, %v253
  %v270 = vmax.f32 %v238, %v254
  %v271 = vmax.f32 %v239, %v255
  %v272 = vld [vmem:[%s8] sm:$0xff]
  %v273 = vld [vmem:[%s8 + $0x8] sm:$0xff]
  %v274 = vld [vmem:[%s8 + $0x10] sm:$0xff]
  %v275 = vld [vmem:[%s8 + $0x18] sm:$0xff]
  %v276 = vld [vmem:[%s8 + $0x20] sm:$0xff]
  %v277 = vld [vmem:[%s8 + $0x28] sm:$0xff]
  %v278 = vld [vmem:[%s8 + $0x30] sm:$0xff]
  %v279 = vld [vmem:[%s8 + $0x38] sm:$0xff]
  %v280 = vld [vmem:[%s8 + $0x40] sm:$0xff]
  %v281 = vld [vmem:[%s8 + $0x48] sm:$0xff]
  %v282 = vld [vmem:[%s8 + $0x50] sm:$0xff]
  %v283 = vld [vmem:[%s8 + $0x58] sm:$0xff]
  %v284 = vld [vmem:[%s8 + $0x60] sm:$0xff]
  %v285 = vld [vmem:[%s8 + $0x68] sm:$0xff]
  %v286 = vld [vmem:[%s8 + $0x70] sm:$0xff]
  %v287 = vld [vmem:[%s8 + $0x78] sm:$0xff]
  %v288 = vmax.f32 %v256, %v272
  %v289 = vmax.f32 %v257, %v273
  %v290 = vmax.f32 %v258, %v274
  %v291 = vmax.f32 %v259, %v275
  %v292 = vmax.f32 %v260, %v276
  %v293 = vmax.f32 %v261, %v277
  %v294 = vmax.f32 %v262, %v278
  %v295 = vmax.f32 %v263, %v279
  %v296 = vmax.f32 %v264, %v280
  %v297 = vmax.f32 %v265, %v281
  %v298 = vmax.f32 %v266, %v282
  %v299 = vmax.f32 %v267, %v283
  %v300 = vmax.f32 %v268, %v284
  %v301 = vmax.f32 %v269, %v285
  %v302 = vmax.f32 %v270, %v286
  %v303 = vmax.f32 %v271, %v287
  %vm304 = vcmask 130048
  %305 = vst.msk [vmem:[%s9] sm:$0xff] %vm304, %v288
  %306 = vst.msk [vmem:[%s9 + $0x8] sm:$0xff] %vm304, %v289
  %307 = vst.msk [vmem:[%s9 + $0x10] sm:$0xff] %vm304, %v290
  %308 = vst.msk [vmem:[%s9 + $0x18] sm:$0xff] %vm304, %v291
  %309 = vst.msk [vmem:[%s9 + $0x20] sm:$0xff] %vm304, %v292
  %310 = vst.msk [vmem:[%s9 + $0x28] sm:$0xff] %vm304, %v293
  %311 = vst.msk [vmem:[%s9 + $0x30] sm:$0xff] %vm304, %v294
  %312 = vst.msk [vmem:[%s9 + $0x38] sm:$0xff] %vm304, %v295
  %313 = vst.msk [vmem:[%s9 + $0x40] sm:$0xff] %vm304, %v296
  %314 = vst.msk [vmem:[%s9 + $0x48] sm:$0xff] %vm304, %v297
  %315 = vst.msk [vmem:[%s9 + $0x50] sm:$0xff] %vm304, %v298
  %316 = vst.msk [vmem:[%s9 + $0x58] sm:$0xff] %vm304, %v299
  %317 = vst.msk [vmem:[%s9 + $0x60] sm:$0xff] %vm304, %v300
  %318 = vst.msk [vmem:[%s9 + $0x68] sm:$0xff] %vm304, %v301
  %319 = vst.msk [vmem:[%s9 + $0x70] sm:$0xff] %vm304, %v302
  %320 = vst.msk [vmem:[%s9 + $0x78] sm:$0xff] %vm304, %v303
  // Predicated region
  $region38: #{densenet_container_forward.15} parent=0 // pred_check
    _
  $region39: #{densenet_container_forward.15} parent=0 // pred_check_branch
    %322 = sbr.rel (0) target = $region41
  $region40: #{densenet_container_forward.15} parent=0 // pred_region
    _
  $region41: #{densenet_container_forward.15} parent=0 // pred_fallthru
    _
  // Predicated region
  $region42: #{densenet_container_forward.15} parent=0 // pred_check
    _
  $region43: #{densenet_container_forward.15} parent=0 // pred_check_branch
    %324 = sbr.rel (0) target = $region45
  $region44: #{densenet_container_forward.15} parent=0 // pred_region
    _
  $region45: #{densenet_container_forward.15} parent=0 // pred_fallthru
    _

// kernel: densenet_container_forward.14
$region0: #{densenet_container_forward.14}
  #allocation0 [shape = 'u32[]', space=smem, size = 0x4, offset = 0x4, fixed_abs, tag = 'smem constant byte address 0x4 - core index']
  #allocation1 [shape = 'u32[72,128]{1,0:T(1,128)}', space=vmem, size = 0x9000, scoped, tag = 'internal scratch']
  %s0 = inlined_call_operand.vmem [shape: f32[512,147], index: 0, kind: input, shape index: {}]
  %s1 = inlined_call_operand.vmem [shape: bf16[147,16], index: 1, kind: input, shape index: {}]
  %s2 = inlined_call_operand.vmem [shape: f32[1,16], index: 2, kind: input, shape index: {}]
  %s3 = inlined_call_operand.vmem [shape: f32[1,16], index: 3, kind: input, shape index: {}]
  %s4 = inlined_call_operand.vmem [shape: f32[512,16], index: 4, kind: output, shape index: {}]
  %s5 = sld [smem:[#allocation0]]
  $region26: #{densenet_container_forward.14} parent=0
    _
  %s7 = ssub.s32 1, %s5
  %s8 = scalar_select 0, %s7, %s5
  // Predicated region
  $region2: #{densenet_container_forward.14} parent=0 // pred_check
    _
  $region3: #{densenet_container_forward.14} parent=0 // pred_check_branch
    %10 = sbr.rel (0) target = $region5
  $region4: #{densenet_container_forward.14} parent=0 // pred_region
    _
  $region5: #{densenet_container_forward.14} parent=0 // pred_fallthru
    _
  // Predicated region
  $region6: #{densenet_container_forward.14} parent=0 // pred_check
    _
  $region7: #{densenet_container_forward.14} parent=0 // pred_check_branch
    %12 = sbr.rel (0) target = $region9
  $region8: #{densenet_container_forward.14} parent=0 // pred_region
    _
  $region9: #{densenet_container_forward.14} parent=0 // pred_fallthru
    _
  // Predicated region
  $region10: #{densenet_container_forward.14} parent=0 // pred_check
    _
  $region11: #{densenet_container_forward.14} parent=0 // pred_check_branch
    %14 = sbr.rel (0) target = $region13
  $region12: #{densenet_container_forward.14} parent=0 // pred_region
    _
  $region13: #{densenet_container_forward.14} parent=0 // pred_fallthru
    _
  // Predicated region
  $region14: #{densenet_container_forward.14} parent=0 // pred_check
    _
  $region15: #{densenet_container_forward.14} parent=0 // pred_check_branch
    %16 = sbr.rel (0) target = $region17
  $region16: #{densenet_container_forward.14} parent=0 // pred_region
    _
  $region17: #{densenet_container_forward.14} parent=0 // pred_fallthru
    _
  %v18 = vld [vmem:[%s0] sm:$0xff]
  %v19 = vld [vmem:[%s0 + $0x8] sm:$0xff]
  %v20 = vld [vmem:[%s0 + $0x10] sm:$0xff]
  %v21 = vld [vmem:[%s0 + $0x18] sm:$0xff]
  %v22 = vld [vmem:[%s0 + $0x20] sm:$0xff]
  %v23 = vld [vmem:[%s0 + $0x28] sm:$0xff]
  %v24 = vld [vmem:[%s0 + $0x30] sm:$0xff]
  %v25 = vld [vmem:[%s0 + $0x38] sm:$0xff]
  %v26 = vld [vmem:[%s0 + $0x40] sm:$0xff]
  %v27 = vld [vmem:[%s0 + $0x48] sm:$0xff]
  %v28 = vld [vmem:[%s0 + $0x50] sm:$0xff]
  %v29 = vld [vmem:[%s0 + $0x58] sm:$0xff]
  %v30 = vld [vmem:[%s0 + $0x60] sm:$0xff]
  %v31 = vld [vmem:[%s0 + $0x68] sm:$0xff]
  %v32 = vld [vmem:[%s0 + $0x70] sm:$0xff]
  %v33 = vld [vmem:[%s0 + $0x78] sm:$0xff]
  %v34 = vld [vmem:[%s0 + $0x80] sm:$0xff]
  %v35 = vld [vmem:[%s0 + $0x88] sm:$0xff]
  %v36 = vld [vmem:[%s0 + $0x90] sm:$0xff]
  %v37 = vld [vmem:[%s0 + $0x98] sm:$0xff]
  %v38 = vld [vmem:[%s0 + $0xa0] sm:$0xff]
  %v39 = vld [vmem:[%s0 + $0xa8] sm:$0xff]
  %v40 = vld [vmem:[%s0 + $0xb0] sm:$0xff]
  %v41 = vld [vmem:[%s0 + $0xb8] sm:$0xff]
  %v42 = vld [vmem:[%s0 + $0xc0] sm:$0xff]
  %v43 = vld [vmem:[%s0 + $0xc8] sm:$0xff]
  %v44 = vld [vmem:[%s0 + $0xd0] sm:$0xff]
  %v45 = vld [vmem:[%s0 + $0xd8] sm:$0xff]
  %v46 = vld [vmem:[%s0 + $0xe0] sm:$0xff]
  %v47 = vld [vmem:[%s0 + $0xe8] sm:$0xff]
  %v48 = vld [vmem:[%s0 + $0xf0] sm:$0xff]
  %v49 = vld [vmem:[%s0 + $0xf8] sm:$0xff]
  %v50 = vld [vmem:[%s0 + $0x100] sm:$0xff]
  %v51 = vld [vmem:[%s0 + $0x108] sm:$0xff]
  %v52 = vld [vmem:[%s0 + $0x110] sm:$0xff]
  %v53 = vld [vmem:[%s0 + $0x118] sm:$0xff]
  %v54 = vld [vmem:[%s0 + $0x120] sm:$0xff]
  %v55 = vld [vmem:[%s0 + $0x128] sm:$0xff]
  %v56 = vld [vmem:[%s0 + $0x130] sm:$0xff]
  %v57 = vld [vmem:[%s0 + $0x138] sm:$0xff]
  %v58 = vld [vmem:[%s0 + $0x140] sm:$0xff]
  %v59 = vld [vmem:[%s0 + $0x148] sm:$0xff]
  %v60 = vld [vmem:[%s0 + $0x150] sm:$0xff]
  %v61 = vld [vmem:[%s0 + $0x158] sm:$0xff]
  %v62 = vld [vmem:[%s0 + $0x160] sm:$0xff]
  %v63 = vld [vmem:[%s0 + $0x168] sm:$0xff]
  %v64 = vld [vmem:[%s0 + $0x170] sm:$0xff]
  %v65 = vld [vmem:[%s0 + $0x178] sm:$0xff]
  %v66 = vld [vmem:[%s0 + $0x180] sm:$0xff]
  %v67 = vld [vmem:[%s0 + $0x188] sm:$0xff]
  %v68 = vld [vmem:[%s0 + $0x190] sm:$0xff]
  %v69 = vld [vmem:[%s0 + $0x198] sm:$0xff]
  %v70 = vld [vmem:[%s0 + $0x1a0] sm:$0xff]
  %v71 = vld [vmem:[%s0 + $0x1a8] sm:$0xff]
  %v72 = vld [vmem:[%s0 + $0x1b0] sm:$0xff]
  %v73 = vld [vmem:[%s0 + $0x1b8] sm:$0xff]
  %v74 = vld [vmem:[%s0 + $0x1c0] sm:$0xff]
  %v75 = vld [vmem:[%s0 + $0x1c8] sm:$0xff]
  %v76 = vld [vmem:[%s0 + $0x1d0] sm:$0xff]
  %v77 = vld [vmem:[%s0 + $0x1d8] sm:$0xff]
  %v78 = vld [vmem:[%s0 + $0x1e0] sm:$0xff]
  %v79 = vld [vmem:[%s0 + $0x1e8] sm:$0xff]
  %v80 = vld [vmem:[%s0 + $0x1f0] sm:$0xff]
  %v81 = vld [vmem:[%s0 + $0x1f8] sm:$0xff]
  %v82 = vld [vmem:[%s0 + $0x200] sm:$0xff]
  %v83 = vld [vmem:[%s0 + $0x208] sm:$0xff]
  %v84 = vld [vmem:[%s0 + $0x210] sm:$0xff]
  %v85 = vld [vmem:[%s0 + $0x218] sm:$0xff]
  %v86 = vld [vmem:[%s0 + $0x220] sm:$0xff]
  %v87 = vld [vmem:[%s0 + $0x228] sm:$0xff]
  %v88 = vld [vmem:[%s0 + $0x230] sm:$0xff]
  %v89 = vld [vmem:[%s0 + $0x238] sm:$0xff]
  %v90 = vld [vmem:[%s0 + $0x240] sm:$0xff]
  %v91 = vld [vmem:[%s0 + $0x248] sm:$0xff]
  %v92 = vld [vmem:[%s0 + $0x250] sm:$0xff]
  %v93 = vld [vmem:[%s0 + $0x258] sm:$0xff]
  %v94 = vld [vmem:[%s0 + $0x260] sm:$0xff]
  %v95 = vld [vmem:[%s0 + $0x268] sm:$0xff]
  %v96 = vld [vmem:[%s0 + $0x270] sm:$0xff]
  %v97 = vld [vmem:[%s0 + $0x278] sm:$0xff]
  %v98 = vld [vmem:[%s0 + $0x280] sm:$0xff]
  %v99 = vld [vmem:[%s0 + $0x288] sm:$0xff]
  %v100 = vld [vmem:[%s0 + $0x290] sm:$0xff]
  %v101 = vld [vmem:[%s0 + $0x298] sm:$0xff]
  %v102 = vld [vmem:[%s0 + $0x2a0] sm:$0xff]
  %v103 = vld [vmem:[%s0 + $0x2a8] sm:$0xff]
  %v104 = vld [vmem:[%s0 + $0x2b0] sm:$0xff]
  %v105 = vld [vmem:[%s0 + $0x2b8] sm:$0xff]
  %v106 = vld [vmem:[%s0 + $0x2c0] sm:$0xff]
  %v107 = vld [vmem:[%s0 + $0x2c8] sm:$0xff]
  %v108 = vld [vmem:[%s0 + $0x2d0] sm:$0xff]
  %v109 = vld [vmem:[%s0 + $0x2d8] sm:$0xff]
  %v110 = vld [vmem:[%s0 + $0x2e0] sm:$0xff]
  %v111 = vld [vmem:[%s0 + $0x2e8] sm:$0xff]
  %v112 = vld [vmem:[%s0 + $0x2f0] sm:$0xff]
  %v113 = vld [vmem:[%s0 + $0x2f8] sm:$0xff]
  %v114 = vld [vmem:[%s0 + $0x300] sm:$0xff]
  %v115 = vld [vmem:[%s0 + $0x308] sm:$0xff]
  %v116 = vld [vmem:[%s0 + $0x310] sm:$0xff]
  %v117 = vld [vmem:[%s0 + $0x318] sm:$0xff]
  %v118 = vld [vmem:[%s0 + $0x320] sm:$0xff]
  %v119 = vld [vmem:[%s0 + $0x328] sm:$0xff]
  %v120 = vld [vmem:[%s0 + $0x330] sm:$0xff]
  %v121 = vld [vmem:[%s0 + $0x338] sm:$0xff]
  %v122 = vld [vmem:[%s0 + $0x340] sm:$0xff]
  %v123 = vld [vmem:[%s0 + $0x348] sm:$0xff]
  %v124 = vld [vmem:[%s0 + $0x350] sm:$0xff]
  %v125 = vld [vmem:[%s0 + $0x358] sm:$0xff]
  %v126 = vld [vmem:[%s0 + $0x360] sm:$0xff]
  %v127 = vld [vmem:[%s0 + $0x368] sm:$0xff]
  %v128 = vld [vmem:[%s0 + $0x370] sm:$0xff]
  %v129 = vld [vmem:[%s0 + $0x378] sm:$0xff]
  %v130 = vld [vmem:[%s0 + $0x380] sm:$0xff]
  %v131 = vld [vmem:[%s0 + $0x388] sm:$0xff]
  %v132 = vld [vmem:[%s0 + $0x390] sm:$0xff]
  %v133 = vld [vmem:[%s0 + $0x398] sm:$0xff]
  %v134 = vld [vmem:[%s0 + $0x3a0] sm:$0xff]
  %v135 = vld [vmem:[%s0 + $0x3a8] sm:$0xff]
  %v136 = vld [vmem:[%s0 + $0x3b0] sm:$0xff]
  %v137 = vld [vmem:[%s0 + $0x3b8] sm:$0xff]
  %v138 = vld [vmem:[%s0 + $0x3c0] sm:$0xff]
  %v139 = vld [vmem:[%s0 + $0x3c8] sm:$0xff]
  %v140 = vld [vmem:[%s0 + $0x3d0] sm:$0xff]
  %v141 = vld [vmem:[%s0 + $0x3d8] sm:$0xff]
  %v142 = vld [vmem:[%s0 + $0x3e0] sm:$0xff]
  %v143 = vld [vmem:[%s0 + $0x3e8] sm:$0xff]
  %v144 = vld [vmem:[%s0 + $0x3f0] sm:$0xff]
  %v145 = vld [vmem:[%s0 + $0x3f8] sm:$0xff]
  %v146 = vpack.c.bf16 %v20, %v18
  %v147 = vpack.c.bf16 %v21, %v19
  %v148 = vpack.c.bf16 %v24, %v22
  %v149 = vpack.c.bf16 %v25, %v23
  %v150 = vpack.c.bf16 %v28, %v26
  %v151 = vpack.c.bf16 %v29, %v27
  %v152 = vpack.c.bf16 %v32, %v30
  %v153 = vpack.c.bf16 %v33, %v31
  %v154 = vpack.c.bf16 %v36, %v34
  %v155 = vpack.c.bf16 %v37, %v35
  %v156 = vpack.c.bf16 %v40, %v38
  %v157 = vpack.c.bf16 %v41, %v39
  %v158 = vpack.c.bf16 %v44, %v42
  %v159 = vpack.c.bf16 %v45, %v43
  %v160 = vpack.c.bf16 %v48, %v46
  %v161 = vpack.c.bf16 %v49, %v47
  %v162 = vpack.c.bf16 %v52, %v50
  %v163 = vpack.c.bf16 %v53, %v51
  %v164 = vpack.c.bf16 %v56, %v54
  %v165 = vpack.c.bf16 %v57, %v55
  %v166 = vpack.c.bf16 %v60, %v58
  %v167 = vpack.c.bf16 %v61, %v59
  %v168 = vpack.c.bf16 %v64, %v62
  %v169 = vpack.c.bf16 %v65, %v63
  %v170 = vpack.c.bf16 %v68, %v66
  %v171 = vpack.c.bf16 %v69, %v67
  %v172 = vpack.c.bf16 %v72, %v70
  %v173 = vpack.c.bf16 %v73, %v71
  %v174 = vpack.c.bf16 %v76, %v74
  %v175 = vpack.c.bf16 %v77, %v75
  %v176 = vpack.c.bf16 %v80, %v78
  %v177 = vpack.c.bf16 %v81, %v79
  %v178 = vpack.c.bf16 %v84, %v82
  %v179 = vpack.c.bf16 %v85, %v83
  %v180 = vpack.c.bf16 %v88, %v86
  %v181 = vpack.c.bf16 %v89, %v87
  %v182 = vpack.c.bf16 %v92, %v90
  %v183 = vpack.c.bf16 %v93, %v91
  %v184 = vpack.c.bf16 %v96, %v94
  %v185 = vpack.c.bf16 %v97, %v95
  %v186 = vpack.c.bf16 %v100, %v98
  %v187 = vpack.c.bf16 %v101, %v99
  %v188 = vpack.c.bf16 %v104, %v102
  %v189 = vpack.c.bf16 %v105, %v103
  %v190 = vpack.c.bf16 %v108, %v106
  %v191 = vpack.c.bf16 %v109, %v107
  %v192 = vpack.c.bf16 %v112, %v110
  %v193 = vpack.c.bf16 %v113, %v111
  %v194 = vpack.c.bf16 %v116, %v114
  %v195 = vpack.c.bf16 %v117, %v115
  %v196 = vpack.c.bf16 %v120, %v118
  %v197 = vpack.c.bf16 %v121, %v119
  %v198 = vpack.c.bf16 %v124, %v122
  %v199 = vpack.c.bf16 %v125, %v123
  %v200 = vpack.c.bf16 %v128, %v126
  %v201 = vpack.c.bf16 %v129, %v127
  %v202 = vpack.c.bf16 %v132, %v130
  %v203 = vpack.c.bf16 %v133, %v131
  %v204 = vpack.c.bf16 %v136, %v134
  %v205 = vpack.c.bf16 %v137, %v135
  %v206 = vpack.c.bf16 %v140, %v138
  %v207 = vpack.c.bf16 %v141, %v139
  %v208 = vpack.c.bf16 %v144, %v142
  %v209 = vpack.c.bf16 %v145, %v143
  %v210 = vld [vmem:[%s1] sm:$0xf]
  %v211 = vld [vmem:[%s1 + $0x4] sm:$0xf]
  %v212 = vld [vmem:[%s1 + $0x8] sm:$0xf]
  %v213 = vld [vmem:[%s1 + $0xc] sm:$0xf]
  %v214 = vld [vmem:[%s1 + $0x10] sm:$0xf]
  %v215 = vld [vmem:[%s1 + $0x14] sm:$0xf]
  %v216 = vld [vmem:[%s1 + $0x18] sm:$0xf]
  %v217 = vld [vmem:[%s1 + $0x1c] sm:$0xf]
  %v218 = vld [vmem:[%s1 + $0x20] sm:$0xf]
  %v219 = vld [vmem:[%s1 + $0x24] sm:$0xf]
  %v220 = vld [vmem:[%s1 + $0x28] sm:$0xf]
  %v221 = vld [vmem:[%s1 + $0x2c] sm:$0xf]
  %v222 = vld [vmem:[%s1 + $0x30] sm:$0xf]
  %v223 = vld [vmem:[%s1 + $0x34] sm:$0xf]
  %v224 = vld [vmem:[%s1 + $0x38] sm:$0xf]
  %v225 = vld [vmem:[%s1 + $0x3c] sm:$0xf]
  %v226 = vld [vmem:[%s1 + $0x40] sm:$0xf]
  %v227 = vld [vmem:[%s1 + $0x44] sm:$0xf]
  %v228 = vld [vmem:[%s1 + $0x48] sm:$0x3]
  %v248 = vunpack.c.l.b16 %v210
  %v249 = vunpack.c.l.b16 %v211
  %v250 = vunpack.c.l.b16 %v212
  %v251 = vunpack.c.l.b16 %v213
  %v252 = vunpack.c.l.b16 %v214
  %v253 = vunpack.c.l.b16 %v215
  %v254 = vunpack.c.l.b16 %v216
  %v255 = vunpack.c.l.b16 %v217
  %v256 = vunpack.c.l.b16 %v218
  %v257 = vunpack.c.l.b16 %v219
  %v258 = vunpack.c.l.b16 %v220
  %v259 = vunpack.c.l.b16 %v221
  %v260 = vunpack.c.l.b16 %v222
  %v261 = vunpack.c.l.b16 %v223
  %v262 = vunpack.c.l.b16 %v224
  %v263 = vunpack.c.l.b16 %v225
  %v264 = vunpack.c.l.b16 %v226
  %v265 = vunpack.c.l.b16 %v227
  %v266 = vunpack.c.l.b16 %v228
  %v267 = vpack.c.b16 %v249, %v248
  %v268 = vpack.c.b16 %v251, %v250
  %v269 = vpack.c.b16 %v253, %v252
  %v270 = vpack.c.b16 %v255, %v254
  %v271 = vpack.c.b16 %v257, %v256
  %v272 = vpack.c.b16 %v259, %v258
  %v273 = vpack.c.b16 %v261, %v260
  %v274 = vpack.c.b16 %v263, %v262
  %v275 = vpack.c.b16 %v265, %v264
  %v276 = vpack.c.b16 %v266, %v266
  %vm286 = vcmask 154624
  %v288 = vsel %vm286, %v147, 0
  %v291 = vsel %vm286, %v149, 0
  %v294 = vsel %vm286, %v151, 0
  %v297 = vsel %vm286, %v153, 0
  %v300 = vsel %vm286, %v155, 0
  %v303 = vsel %vm286, %v157, 0
  %v306 = vsel %vm286, %v159, 0
  %v309 = vsel %vm286, %v161, 0
  %v312 = vsel %vm286, %v163, 0
  %v315 = vsel %vm286, %v165, 0
  %v318 = vsel %vm286, %v167, 0
  %v321 = vsel %vm286, %v169, 0
  %v324 = vsel %vm286, %v171, 0
  %v327 = vsel %vm286, %v173, 0
  %v330 = vsel %vm286, %v175, 0
  %v333 = vsel %vm286, %v177, 0
  %v336 = vsel %vm286, %v179, 0
  %v339 = vsel %vm286, %v181, 0
  %v342 = vsel %vm286, %v183, 0
  %v345 = vsel %vm286, %v185, 0
  %v348 = vsel %vm286, %v187, 0
  %v351 = vsel %vm286, %v189, 0
  %v354 = vsel %vm286, %v191, 0
  %v357 = vsel %vm286, %v193, 0
  %v360 = vsel %vm286, %v195, 0
  %v363 = vsel %vm286, %v197, 0
  %v366 = vsel %vm286, %v199, 0
  %v369 = vsel %vm286, %v201, 0
  %v372 = vsel %vm286, %v203, 0
  %v375 = vsel %vm286, %v205, 0
  %v378 = vsel %vm286, %v207, 0
  %v381 = vsel %vm286, %v209, 0
  %vm383 = vcmask 1040384
  %vm384 = vcmask 1041408
  %v385 = vsel %vm383, 4294967295, 65535
  %v386 = vsel %vm384, %v385, 0
  %v388 = vand.u32 %v276, %v386
  %390 = vmatpush.bf16.msra.mxu0 %v274
  %391 = vmatpush.bf16.msra.mxu0 %v273
  %392 = vmatpush.bf16.msra.mxu0 %v272
  %393 = vmatpush.bf16.msra.mxu0 %v271
  %394 = vmatpush.bf16.msra.mxu0 %v270
  %395 = vmatpush.bf16.msra.mxu0 %v269
  %396 = vmatpush.bf16.msra.mxu0 %v268
  %397 = vmatpush.bf16.msra.mxu0 %v267
  %398 = vmatmul.bf16.gmra.mxu0 %v146
  %v399 = vpop.f32.mrf.mxu0
  %v400 = vadd.f32 0.0, %v399
  %v401 = vpop.f32.mrf.mxu0
  %v402 = vadd.f32 0.0, %v401
  %403 = vmatmul.bf16.gmra.mxu0 %v148
  %v404 = vpop.f32.mrf.mxu0
  %v405 = vadd.f32 0.0, %v404
  %v406 = vpop.f32.mrf.mxu0
  %v407 = vadd.f32 0.0, %v406
  %408 = vmatmul.bf16.gmra.mxu0 %v150
  %v409 = vpop.f32.mrf.mxu0
  %v410 = vadd.f32 0.0, %v409
  %v411 = vpop.f32.mrf.mxu0
  %v412 = vadd.f32 0.0, %v411
  %413 = vmatmul.bf16.gmra.mxu0 %v152
  %v414 = vpop.f32.mrf.mxu0
  %v415 = vadd.f32 0.0, %v414
  %v416 = vpop.f32.mrf.mxu0
  %v417 = vadd.f32 0.0, %v416
  %418 = vmatmul.bf16.gmra.mxu0 %v154
  %v419 = vpop.f32.mrf.mxu0
  %v420 = vadd.f32 0.0, %v419
  %v421 = vpop.f32.mrf.mxu0
  %v422 = vadd.f32 0.0, %v421
  %423 = vmatmul.bf16.gmra.mxu0 %v156
  %v424 = vpop.f32.mrf.mxu0
  %v425 = vadd.f32 0.0, %v424
  %v426 = vpop.f32.mrf.mxu0
  %v427 = vadd.f32 0.0, %v426
  %428 = vmatmul.bf16.gmra.mxu0 %v158
  %v429 = vpop.f32.mrf.mxu0
  %v430 = vadd.f32 0.0, %v429
  %v431 = vpop.f32.mrf.mxu0
  %v432 = vadd.f32 0.0, %v431
  %433 = vmatmul.bf16.gmra.mxu0 %v160
  %v434 = vpop.f32.mrf.mxu0
  %v435 = vadd.f32 0.0, %v434
  %v436 = vpop.f32.mrf.mxu0
  %v437 = vadd.f32 0.0, %v436
  %438 = vmatmul.bf16.gmra.mxu0 %v162
  %v439 = vpop.f32.mrf.mxu0
  %v440 = vadd.f32 0.0, %v439
  %v441 = vpop.f32.mrf.mxu0
  %v442 = vadd.f32 0.0, %v441
  %443 = vmatmul.bf16.gmra.mxu0 %v164
  %v444 = vpop.f32.mrf.mxu0
  %v445 = vadd.f32 0.0, %v444
  %v446 = vpop.f32.mrf.mxu0
  %v447 = vadd.f32 0.0, %v446
  %448 = vmatmul.bf16.gmra.mxu0 %v166
  %v449 = vpop.f32.mrf.mxu0
  %v450 = vadd.f32 0.0, %v449
  %v451 = vpop.f32.mrf.mxu0
  %v452 = vadd.f32 0.0, %v451
  %453 = vmatmul.bf16.gmra.mxu0 %v168
  %v454 = vpop.f32.mrf.mxu0
  %v455 = vadd.f32 0.0, %v454
  %v456 = vpop.f32.mrf.mxu0
  %v457 = vadd.f32 0.0, %v456
  %458 = vmatmul.bf16.gmra.mxu0 %v170
  %v459 = vpop.f32.mrf.mxu0
  %v460 = vadd.f32 0.0, %v459
  %v461 = vpop.f32.mrf.mxu0
  %v462 = vadd.f32 0.0, %v461
  %463 = vmatmul.bf16.gmra.mxu0 %v172
  %v464 = vpop.f32.mrf.mxu0
  %v465 = vadd.f32 0.0, %v464
  %v466 = vpop.f32.mrf.mxu0
  %v467 = vadd.f32 0.0, %v466
  %468 = vmatmul.bf16.gmra.mxu0 %v174
  %v469 = vpop.f32.mrf.mxu0
  %v470 = vadd.f32 0.0, %v469
  %v471 = vpop.f32.mrf.mxu0
  %v472 = vadd.f32 0.0, %v471
  %473 = vmatmul.bf16.gmra.mxu0 %v176
  %v474 = vpop.f32.mrf.mxu0
  %v475 = vadd.f32 0.0, %v474
  %v476 = vpop.f32.mrf.mxu0
  %v477 = vadd.f32 0.0, %v476
  %478 = vmatmul.bf16.gmra.mxu0 %v178
  %v479 = vpop.f32.mrf.mxu0
  %v480 = vadd.f32 0.0, %v479
  %v481 = vpop.f32.mrf.mxu0
  %v482 = vadd.f32 0.0, %v481
  %483 = vmatmul.bf16.gmra.mxu0 %v180
  %v484 = vpop.f32.mrf.mxu0
  %v485 = vadd.f32 0.0, %v484
  %v486 = vpop.f32.mrf.mxu0
  %v487 = vadd.f32 0.0, %v486
  %488 = vmatmul.bf16.gmra.mxu0 %v182
  %v489 = vpop.f32.mrf.mxu0
  %v490 = vadd.f32 0.0, %v489
  %v491 = vpop.f32.mrf.mxu0
  %v492 = vadd.f32 0.0, %v491
  %493 = vmatmul.bf16.gmra.mxu0 %v184
  %v494 = vpop.f32.mrf.mxu0
  %v495 = vadd.f32 0.0, %v494
  %v496 = vpop.f32.mrf.mxu0
  %v497 = vadd.f32 0.0, %v496
  %498 = vmatmul.bf16.gmra.mxu0 %v186
  %v499 = vpop.f32.mrf.mxu0
  %v500 = vadd.f32 0.0, %v499
  %v501 = vpop.f32.mrf.mxu0
  %v502 = vadd.f32 0.0, %v501
  %503 = vmatmul.bf16.gmra.mxu0 %v188
  %v504 = vpop.f32.mrf.mxu0
  %v505 = vadd.f32 0.0, %v504
  %v506 = vpop.f32.mrf.mxu0
  %v507 = vadd.f32 0.0, %v506
  %508 = vmatmul.bf16.gmra.mxu0 %v190
  %v509 = vpop.f32.mrf.mxu0
  %v510 = vadd.f32 0.0, %v509
  %v511 = vpop.f32.mrf.mxu0
  %v512 = vadd.f32 0.0, %v511
  %513 = vmatmul.bf16.gmra.mxu0 %v192
  %v514 = vpop.f32.mrf.mxu0
  %v515 = vadd.f32 0.0, %v514
  %v516 = vpop.f32.mrf.mxu0
  %v517 = vadd.f32 0.0, %v516
  %518 = vmatmul.bf16.gmra.mxu0 %v194
  %v519 = vpop.f32.mrf.mxu0
  %v520 = vadd.f32 0.0, %v519
  %v521 = vpop.f32.mrf.mxu0
  %v522 = vadd.f32 0.0, %v521
  %523 = vmatmul.bf16.gmra.mxu0 %v196
  %v524 = vpop.f32.mrf.mxu0
  %v525 = vadd.f32 0.0, %v524
  %v526 = vpop.f32.mrf.mxu0
  %v527 = vadd.f32 0.0, %v526
  %528 = vmatmul.bf16.gmra.mxu0 %v198
  %v529 = vpop.f32.mrf.mxu0
  %v530 = vadd.f32 0.0, %v529
  %v531 = vpop.f32.mrf.mxu0
  %v532 = vadd.f32 0.0, %v531
  %533 = vmatmul.bf16.gmra.mxu0 %v200
  %v534 = vpop.f32.mrf.mxu0
  %v535 = vadd.f32 0.0, %v534
  %v536 = vpop.f32.mrf.mxu0
  %v537 = vadd.f32 0.0, %v536
  %538 = vmatmul.bf16.gmra.mxu0 %v202
  %v539 = vpop.f32.mrf.mxu0
  %v540 = vadd.f32 0.0, %v539
  %v541 = vpop.f32.mrf.mxu0
  %v542 = vadd.f32 0.0, %v541
  %543 = vmatmul.bf16.gmra.mxu0 %v204
  %v544 = vpop.f32.mrf.mxu0
  %v545 = vadd.f32 0.0, %v544
  %v546 = vpop.f32.mrf.mxu0
  %v547 = vadd.f32 0.0, %v546
  %548 = vmatmul.bf16.gmra.mxu0 %v206
  %v549 = vpop.f32.mrf.mxu0
  %v550 = vadd.f32 0.0, %v549
  %v551 = vpop.f32.mrf.mxu0
  %v552 = vadd.f32 0.0, %v551
  %553 = vmatmul.bf16.gmra.mxu0 %v208
  %v554 = vpop.f32.mrf.mxu0
  %v555 = vadd.f32 0.0, %v554
  %v556 = vpop.f32.mrf.mxu0
  %v557 = vadd.f32 0.0, %v556
  %558 = vdwg.mxu0
  %559 = vmatpush.bf16.msra.mxu0 0
  %560 = vmatpush.bf16.msra.mxu0 0
  %561 = vmatpush.bf16.msra.mxu0 0
  %562 = vmatpush.bf16.msra.mxu0 0
  %563 = vmatpush.bf16.msra.mxu0 0
  %564 = vmatpush.bf16.msra.mxu0 0
  %565 = vmatpush.bf16.msra.mxu0 %v388
  %566 = vmatpush.bf16.msra.mxu0 %v275
  %567 = vmatmul.bf16.gmra.mxu0 %v288
  %v568 = vpop.f32.mrf.mxu0
  %v569 = vadd.f32 %v400, %v568
  %v570 = vpop.f32.mrf.mxu0
  %v571 = vadd.f32 %v402, %v570
  %572 = vmatmul.bf16.gmra.mxu0 %v291
  %v573 = vpop.f32.mrf.mxu0
  %v574 = vadd.f32 %v405, %v573
  %v575 = vpop.f32.mrf.mxu0
  %v576 = vadd.f32 %v407, %v575
  %577 = vmatmul.bf16.gmra.mxu0 %v294
  %v578 = vpop.f32.mrf.mxu0
  %v579 = vadd.f32 %v410, %v578
  %v580 = vpop.f32.mrf.mxu0
  %v581 = vadd.f32 %v412, %v580
  %582 = vmatmul.bf16.gmra.mxu0 %v297
  %v583 = vpop.f32.mrf.mxu0
  %v584 = vadd.f32 %v415, %v583
  %v585 = vpop.f32.mrf.mxu0
  %v586 = vadd.f32 %v417, %v585
  %587 = vmatmul.bf16.gmra.mxu0 %v300
  %v588 = vpop.f32.mrf.mxu0
  %v589 = vadd.f32 %v420, %v588
  %v590 = vpop.f32.mrf.mxu0
  %v591 = vadd.f32 %v422, %v590
  %592 = vmatmul.bf16.gmra.mxu0 %v303
  %v593 = vpop.f32.mrf.mxu0
  %v594 = vadd.f32 %v425, %v593
  %v595 = vpop.f32.mrf.mxu0
  %v596 = vadd.f32 %v427, %v595
  %597 = vmatmul.bf16.gmra.mxu0 %v306
  %v598 = vpop.f32.mrf.mxu0
  %v599 = vadd.f32 %v430, %v598
  %v600 = vpop.f32.mrf.mxu0
  %v601 = vadd.f32 %v432, %v600
  %602 = vmatmul.bf16.gmra.mxu0 %v309
  %v603 = vpop.f32.mrf.mxu0
  %v604 = vadd.f32 %v435, %v603
  %v605 = vpop.f32.mrf.mxu0
  %v606 = vadd.f32 %v437, %v605
  %607 = vmatmul.bf16.gmra.mxu0 %v312
  %v608 = vpop.f32.mrf.mxu0
  %v609 = vadd.f32 %v440, %v608
  %v610 = vpop.f32.mrf.mxu0
  %v611 = vadd.f32 %v442, %v610
  %612 = vmatmul.bf16.gmra.mxu0 %v315
  %v613 = vpop.f32.mrf.mxu0
  %v614 = vadd.f32 %v445, %v613
  %v615 = vpop.f32.mrf.mxu0
  %v616 = vadd.f32 %v447, %v615
  %617 = vmatmul.bf16.gmra.mxu0 %v318
  %v618 = vpop.f32.mrf.mxu0
  %v619 = vadd.f32 %v450, %v618
  %v620 = vpop.f32.mrf.mxu0
  %v621 = vadd.f32 %v452, %v620
  %622 = vmatmul.bf16.gmra.mxu0 %v321
  %v623 = vpop.f32.mrf.mxu0
  %v624 = vadd.f32 %v455, %v623
  %v625 = vpop.f32.mrf.mxu0
  %v626 = vadd.f32 %v457, %v625
  %627 = vmatmul.bf16.gmra.mxu0 %v324
  %v628 = vpop.f32.mrf.mxu0
  %v629 = vadd.f32 %v460, %v628
  %v630 = vpop.f32.mrf.mxu0
  %v631 = vadd.f32 %v462, %v630
  %632 = vmatmul.bf16.gmra.mxu0 %v327
  %v633 = vpop.f32.mrf.mxu0
  %v634 = vadd.f32 %v465, %v633
  %v635 = vpop.f32.mrf.mxu0
  %v636 = vadd.f32 %v467, %v635
  %637 = vmatmul.bf16.gmra.mxu0 %v330
  %v638 = vpop.f32.mrf.mxu0
  %v639 = vadd.f32 %v470, %v638
  %v640 = vpop.f32.mrf.mxu0
  %v641 = vadd.f32 %v472, %v640
  %642 = vmatmul.bf16.gmra.mxu0 %v333
  %v643 = vpop.f32.mrf.mxu0
  %v644 = vadd.f32 %v475, %v643
  %v645 = vpop.f32.mrf.mxu0
  %v646 = vadd.f32 %v477, %v645
  %647 = vmatmul.bf16.gmra.mxu0 %v336
  %v648 = vpop.f32.mrf.mxu0
  %v649 = vadd.f32 %v480, %v648
  %v650 = vpop.f32.mrf.mxu0
  %v651 = vadd.f32 %v482, %v650
  %652 = vmatmul.bf16.gmra.mxu0 %v339
  %v653 = vpop.f32.mrf.mxu0
  %v654 = vadd.f32 %v485, %v653
  %v655 = vpop.f32.mrf.mxu0
  %v656 = vadd.f32 %v487, %v655
  %657 = vmatmul.bf16.gmra.mxu0 %v342
  %v658 = vpop.f32.mrf.mxu0
  %v659 = vadd.f32 %v490, %v658
  %v660 = vpop.f32.mrf.mxu0
  %v661 = vadd.f32 %v492, %v660
  %662 = vmatmul.bf16.gmra.mxu0 %v345
  %v663 = vpop.f32.mrf.mxu0
  %v664 = vadd.f32 %v495, %v663
  %v665 = vpop.f32.mrf.mxu0
  %v666 = vadd.f32 %v497, %v665
  %667 = vmatmul.bf16.gmra.mxu0 %v348
  %v668 = vpop.f32.mrf.mxu0
  %v669 = vadd.f32 %v500, %v668
  %v670 = vpop.f32.mrf.mxu0
  %v671 = vadd.f32 %v502, %v670
  %672 = vmatmul.bf16.gmra.mxu0 %v351
  %v673 = vpop.f32.mrf.mxu0
  %v674 = vadd.f32 %v505, %v673
  %v675 = vpop.f32.mrf.mxu0
  %v676 = vadd.f32 %v507, %v675
  %677 = vmatmul.bf16.gmra.mxu0 %v354
  %v678 = vpop.f32.mrf.mxu0
  %v679 = vadd.f32 %v510, %v678
  %v680 = vpop.f32.mrf.mxu0
  %v681 = vadd.f32 %v512, %v680
  %682 = vmatmul.bf16.gmra.mxu0 %v357
  %v683 = vpop.f32.mrf.mxu0
  %v684 = vadd.f32 %v515, %v683
  %v685 = vpop.f32.mrf.mxu0
  %v686 = vadd.f32 %v517, %v685
  %687 = vmatmul.bf16.gmra.mxu0 %v360
  %v688 = vpop.f32.mrf.mxu0
  %v689 = vadd.f32 %v520, %v688
  %v690 = vpop.f32.mrf.mxu0
  %v691 = vadd.f32 %v522, %v690
  %692 = vmatmul.bf16.gmra.mxu0 %v363
  %v693 = vpop.f32.mrf.mxu0
  %v694 = vadd.f32 %v525, %v693
  %v695 = vpop.f32.mrf.mxu0
  %v696 = vadd.f32 %v527, %v695
  %697 = vmatmul.bf16.gmra.mxu0 %v366
  %v698 = vpop.f32.mrf.mxu0
  %v699 = vadd.f32 %v530, %v698
  %v700 = vpop.f32.mrf.mxu0
  %v701 = vadd.f32 %v532, %v700
  %702 = vmatmul.bf16.gmra.mxu0 %v369
  %v703 = vpop.f32.mrf.mxu0
  %v704 = vadd.f32 %v535, %v703
  %v705 = vpop.f32.mrf.mxu0
  %v706 = vadd.f32 %v537, %v705
  %707 = vmatmul.bf16.gmra.mxu0 %v372
  %v708 = vpop.f32.mrf.mxu0
  %v709 = vadd.f32 %v540, %v708
  %v710 = vpop.f32.mrf.mxu0
  %v711 = vadd.f32 %v542, %v710
  %712 = vmatmul.bf16.gmra.mxu0 %v375
  %v713 = vpop.f32.mrf.mxu0
  %v714 = vadd.f32 %v545, %v713
  %v715 = vpop.f32.mrf.mxu0
  %v716 = vadd.f32 %v547, %v715
  %717 = vmatmul.bf16.gmra.mxu0 %v378
  %v718 = vpop.f32.mrf.mxu0
  %v719 = vadd.f32 %v550, %v718
  %v720 = vpop.f32.mrf.mxu0
  %v721 = vadd.f32 %v552, %v720
  %722 = vmatmul.bf16.gmra.mxu0 %v381
  %v723 = vpop.f32.mrf.mxu0
  %v724 = vadd.f32 %v555, %v723
  %v725 = vpop.f32.mrf.mxu0
  %v726 = vadd.f32 %v557, %v725
  %727 = vdwg.mxu0
  %v728 = vld [vmem:[%s2] sm:$0x1]
  %v730 = vperm.slane %v728, 0
  %v732 = vmul.f32 %v569, %v730
  %v733 = vmul.f32 %v571, %v730
  %v734 = vmul.f32 %v574, %v730
  %v735 = vmul.f32 %v576, %v730
  %v736 = vmul.f32 %v579, %v730
  %v737 = vmul.f32 %v581, %v730
  %v738 = vmul.f32 %v584, %v730
  %v739 = vmul.f32 %v586, %v730
  %v740 = vmul.f32 %v589, %v730
  %v741 = vmul.f32 %v591, %v730
  %v742 = vmul.f32 %v594, %v730
  %v743 = vmul.f32 %v596, %v730
  %v744 = vmul.f32 %v599, %v730
  %v745 = vmul.f32 %v601, %v730
  %v746 = vmul.f32 %v604, %v730
  %v747 = vmul.f32 %v606, %v730
  %v748 = vmul.f32 %v609, %v730
  %v749 = vmul.f32 %v611, %v730
  %v750 = vmul.f32 %v614, %v730
  %v751 = vmul.f32 %v616, %v730
  %v752 = vmul.f32 %v619, %v730
  %v753 = vmul.f32 %v621, %v730
  %v754 = vmul.f32 %v624, %v730
  %v755 = vmul.f32 %v626, %v730
  %v756 = vmul.f32 %v629, %v730
  %v757 = vmul.f32 %v631, %v730
  %v758 = vmul.f32 %v634, %v730
  %v759 = vmul.f32 %v636, %v730
  %v760 = vmul.f32 %v639, %v730
  %v761 = vmul.f32 %v641, %v730
  %v762 = vmul.f32 %v644, %v730
  %v763 = vmul.f32 %v646, %v730
  %v764 = vmul.f32 %v649, %v730
  %v765 = vmul.f32 %v651, %v730
  %v766 = vmul.f32 %v654, %v730
  %v767 = vmul.f32 %v656, %v730
  %v768 = vmul.f32 %v659, %v730
  %v769 = vmul.f32 %v661, %v730
  %v770 = vmul.f32 %v664, %v730
  %v771 = vmul.f32 %v666, %v730
  %v772 = vmul.f32 %v669, %v730
  %v773 = vmul.f32 %v671, %v730
  %v774 = vmul.f32 %v674, %v730
  %v775 = vmul.f32 %v676, %v730
  %v776 = vmul.f32 %v679, %v730
  %v777 = vmul.f32 %v681, %v730
  %v778 = vmul.f32 %v684, %v730
  %v779 = vmul.f32 %v686, %v730
  %v780 = vmul.f32 %v689, %v730
  %v781 = vmul.f32 %v691, %v730
  %v782 = vmul.f32 %v694, %v730
  %v783 = vmul.f32 %v696, %v730
  %v784 = vmul.f32 %v699, %v730
  %v785 = vmul.f32 %v701, %v730
  %v786 = vmul.f32 %v704, %v730
  %v787 = vmul.f32 %v706, %v730
  %v788 = vmul.f32 %v709, %v730
  %v789 = vmul.f32 %v711, %v730
  %v790 = vmul.f32 %v714, %v730
  %v791 = vmul.f32 %v716, %v730
  %v792 = vmul.f32 %v719, %v730
  %v793 = vmul.f32 %v721, %v730
  %v794 = vmul.f32 %v724, %v730
  %v795 = vmul.f32 %v726, %v730
  %v796 = vld [vmem:[%s3] sm:$0x1]
  %v798 = vperm.slane %v796, 0
  %v800 = vadd.f32 %v732, %v798
  %v801 = vadd.f32 %v733, %v798
  %v802 = vadd.f32 %v734, %v798
  %v803 = vadd.f32 %v735, %v798
  %v804 = vadd.f32 %v736, %v798
  %v805 = vadd.f32 %v737, %v798
  %v806 = vadd.f32 %v738, %v798
  %v807 = vadd.f32 %v739, %v798
  %v808 = vadd.f32 %v740, %v798
  %v809 = vadd.f32 %v741, %v798
  %v810 = vadd.f32 %v742, %v798
  %v811 = vadd.f32 %v743, %v798
  %v812 = vadd.f32 %v744, %v798
  %v813 = vadd.f32 %v745, %v798
  %v814 = vadd.f32 %v746, %v798
  %v815 = vadd.f32 %v747, %v798
  %v816 = vadd.f32 %v748, %v798
  %v817 = vadd.f32 %v749, %v798
  %v818 = vadd.f32 %v750, %v798
  %v819 = vadd.f32 %v751, %v798
  %v820 = vadd.f32 %v752, %v798
  %v821 = vadd.f32 %v753, %v798
  %v822 = vadd.f32 %v754, %v798
  %v823 = vadd.f32 %v755, %v798
  %v824 = vadd.f32 %v756, %v798
  %v825 = vadd.f32 %v757, %v798
  %v826 = vadd.f32 %v758, %v798
  %v827 = vadd.f32 %v759, %v798
  %v828 = vadd.f32 %v760, %v798
  %v829 = vadd.f32 %v761, %v798
  %v830 = vadd.f32 %v762, %v798
  %v831 = vadd.f32 %v763, %v798
  %v832 = vadd.f32 %v764, %v798
  %v833 = vadd.f32 %v765, %v798
  %v834 = vadd.f32 %v766, %v798
  %v835 = vadd.f32 %v767, %v798
  %v836 = vadd.f32 %v768, %v798
  %v837 = vadd.f32 %v769, %v798
  %v838 = vadd.f32 %v770, %v798
  %v839 = vadd.f32 %v771, %v798
  %v840 = vadd.f32 %v772, %v798
  %v841 = vadd.f32 %v773, %v798
  %v842 = vadd.f32 %v774, %v798
  %v843 = vadd.f32 %v775, %v798
  %v844 = vadd.f32 %v776, %v798
  %v845 = vadd.f32 %v777, %v798
  %v846 = vadd.f32 %v778, %v798
  %v847 = vadd.f32 %v779, %v798
  %v848 = vadd.f32 %v780, %v798
  %v849 = vadd.f32 %v781, %v798
  %v850 = vadd.f32 %v782, %v798
  %v851 = vadd.f32 %v783, %v798
  %v852 = vadd.f32 %v784, %v798
  %v853 = vadd.f32 %v785, %v798
  %v854 = vadd.f32 %v786, %v798
  %v855 = vadd.f32 %v787, %v798
  %v856 = vadd.f32 %v788, %v798
  %v857 = vadd.f32 %v789, %v798
  %v858 = vadd.f32 %v790, %v798
  %v859 = vadd.f32 %v791, %v798
  %v860 = vadd.f32 %v792, %v798
  %v861 = vadd.f32 %v793, %v798
  %v862 = vadd.f32 %v794, %v798
  %v863 = vadd.f32 %v795, %v798
  %v864 = vmax.f32 %v800, 0.0
  %v865 = vmax.f32 %v801, 0.0
  %v866 = vmax.f32 %v802, 0.0
  %v867 = vmax.f32 %v803, 0.0
  %v868 = vmax.f32 %v804, 0.0
  %v869 = vmax.f32 %v805, 0.0
  %v870 = vmax.f32 %v806, 0.0
  %v871 = vmax.f32 %v807, 0.0
  %v872 = vmax.f32 %v808, 0.0
  %v873 = vmax.f32 %v809, 0.0
  %v874 = vmax.f32 %v810, 0.0
  %v875 = vmax.f32 %v811, 0.0
  %v876 = vmax.f32 %v812, 0.0
  %v877 = vmax.f32 %v813, 0.0
  %v878 = vmax.f32 %v814, 0.0
  %v879 = vmax.f32 %v815, 0.0
  %v880 = vmax.f32 %v816, 0.0
  %v881 = vmax.f32 %v817, 0.0
  %v882 = vmax.f32 %v818, 0.0
  %v883 = vmax.f32 %v819, 0.0
  %v884 = vmax.f32 %v820, 0.0
  %v885 = vmax.f32 %v821, 0.0
  %v886 = vmax.f32 %v822, 0.0
  %v887 = vmax.f32 %v823, 0.0
  %v888 = vmax.f32 %v824, 0.0
  %v889 = vmax.f32 %v825, 0.0
  %v890 = vmax.f32 %v826, 0.0
  %v891 = vmax.f32 %v827, 0.0
  %v892 = vmax.f32 %v828, 0.0
  %v893 = vmax.f32 %v829, 0.0
  %v894 = vmax.f32 %v830, 0.0
  %v895 = vmax.f32 %v831, 0.0
  %v896 = vmax.f32 %v832, 0.0
  %v897 = vmax.f32 %v833, 0.0
  %v898 = vmax.f32 %v834, 0.0
  %v899 = vmax.f32 %v835, 0.0
  %v900 = vmax.f32 %v836, 0.0
  %v901 = vmax.f32 %v837, 0.0
  %v902 = vmax.f32 %v838, 0.0
  %v903 = vmax.f32 %v839, 0.0
  %v904 = vmax.f32 %v840, 0.0
  %v905 = vmax.f32 %v841, 0.0
  %v906 = vmax.f32 %v842, 0.0
  %v907 = vmax.f32 %v843, 0.0
  %v908 = vmax.f32 %v844, 0.0
  %v909 = vmax.f32 %v845, 0.0
  %v910 = vmax.f32 %v846, 0.0
  %v911 = vmax.f32 %v847, 0.0
  %v912 = vmax.f32 %v848, 0.0
  %v913 = vmax.f32 %v849, 0.0
  %v914 = vmax.f32 %v850, 0.0
  %v915 = vmax.f32 %v851, 0.0
  %v916 = vmax.f32 %v852, 0.0
  %v917 = vmax.f32 %v853, 0.0
  %v918 = vmax.f32 %v854, 0.0
  %v919 = vmax.f32 %v855, 0.0
  %v920 = vmax.f32 %v856, 0.0
  %v921 = vmax.f32 %v857, 0.0
  %v922 = vmax.f32 %v858, 0.0
  %v923 = vmax.f32 %v859, 0.0
  %v924 = vmax.f32 %v860, 0.0
  %v925 = vmax.f32 %v861, 0.0
  %v926 = vmax.f32 %v862, 0.0
  %v927 = vmax.f32 %v863, 0.0
  %vm928 = vcmask 130048
  %929 = vst.msk [vmem:[%s4] sm:$0xff] %vm928, %v864
  %930 = vst.msk [vmem:[%s4 + $0x8] sm:$0xff] %vm928, %v865
  %931 = vst.msk [vmem:[%s4 + $0x10] sm:$0xff] %vm928, %v866
  %932 = vst.msk [vmem:[%s4 + $0x18] sm:$0xff] %vm928, %v867
  %933 = vst.msk [vmem:[%s4 + $0x20] sm:$0xff] %vm928, %v868
  %934 = vst.msk [vmem:[%s4 + $0x28] sm:$0xff] %vm928, %v869
  %935 = vst.msk [vmem:[%s4 + $0x30] sm:$0xff] %vm928, %v870
  %936 = vst.msk [vmem:[%s4 + $0x38] sm:$0xff] %vm928, %v871
  %937 = vst.msk [vmem:[%s4 + $0x40] sm:$0xff] %vm928, %v872
  %938 = vst.msk [vmem:[%s4 + $0x48] sm:$0xff] %vm928, %v873
  %939 = vst.msk [vmem:[%s4 + $0x50] sm:$0xff] %vm928, %v874
  %940 = vst.msk [vmem:[%s4 + $0x58] sm:$0xff] %vm928, %v875
  %941 = vst.msk [vmem:[%s4 + $0x60] sm:$0xff] %vm928, %v876
  %942 = vst.msk [vmem:[%s4 + $0x68] sm:$0xff] %vm928, %v877
  %943 = vst.msk [vmem:[%s4 + $0x70] sm:$0xff] %vm928, %v878
  %944 = vst.msk [vmem:[%s4 + $0x78] sm:$0xff] %vm928, %v879
  %945 = vst.msk [vmem:[%s4 + $0x80] sm:$0xff] %vm928, %v880
  %946 = vst.msk [vmem:[%s4 + $0x88] sm:$0xff] %vm928, %v881
  %947 = vst.msk [vmem:[%s4 + $0x90] sm:$0xff] %vm928, %v882
  %948 = vst.msk [vmem:[%s4 + $0x98] sm:$0xff] %vm928, %v883
  %949 = vst.msk [vmem:[%s4 + $0xa0] sm:$0xff] %vm928, %v884
  %950 = vst.msk [vmem:[%s4 + $0xa8] sm:$0xff] %vm928, %v885
  %951 = vst.msk [vmem:[%s4 + $0xb0] sm:$0xff] %vm928, %v886
  %952 = vst.msk [vmem:[%s4 + $0xb8] sm:$0xff] %vm928, %v887
  %953 = vst.msk [vmem:[%s4 + $0xc0] sm:$0xff] %vm928, %v888
  %954 = vst.msk [vmem:[%s4 + $0xc8] sm:$0xff] %vm928, %v889
  %955 = vst.msk [vmem:[%s4 + $0xd0] sm:$0xff] %vm928, %v890
  %956 = vst.msk [vmem:[%s4 + $0xd8] sm:$0xff] %vm928, %v891
  %957 = vst.msk [vmem:[%s4 + $0xe0] sm:$0xff] %vm928, %v892
  %958 = vst.msk [vmem:[%s4 + $0xe8] sm:$0xff] %vm928, %v893
  %959 = vst.msk [vmem:[%s4 + $0xf0] sm:$0xff] %vm928, %v894
  %960 = vst.msk [vmem:[%s4 + $0xf8] sm:$0xff] %vm928, %v895
  %961 = vst.msk [vmem:[%s4 + $0x100] sm:$0xff] %vm928, %v896
  %962 = vst.msk [vmem:[%s4 + $0x108] sm:$0xff] %vm928, %v897
  %963 = vst.msk [vmem:[%s4 + $0x110] sm:$0xff] %vm928, %v898
  %964 = vst.msk [vmem:[%s4 + $0x118] sm:$0xff] %vm928, %v899
  %965 = vst.msk [vmem:[%s4 + $0x120] sm:$0xff] %vm928, %v900
  %966 = vst.msk [vmem:[%s4 + $0x128] sm:$0xff] %vm928, %v901
  %967 = vst.msk [vmem:[%s4 + $0x130] sm:$0xff] %vm928, %v902
  %968 = vst.msk [vmem:[%s4 + $0x138] sm:$0xff] %vm928, %v903
  %969 = vst.msk [vmem:[%s4 + $0x140] sm:$0xff] %vm928, %v904
  %970 = vst.msk [vmem:[%s4 + $0x148] sm:$0xff] %vm928, %v905
  %971 = vst.msk [vmem:[%s4 + $0x150] sm:$0xff] %vm928, %v906
  %972 = vst.msk [vmem:[%s4 + $0x158] sm:$0xff] %vm928, %v907
  %973 = vst.msk [vmem:[%s4 + $0x160] sm:$0xff] %vm928, %v908
  %974 = vst.msk [vmem:[%s4 + $0x168] sm:$0xff] %vm928, %v909
  %975 = vst.msk [vmem:[%s4 + $0x170] sm:$0xff] %vm928, %v910
  %976 = vst.msk [vmem:[%s4 + $0x178] sm:$0xff] %vm928, %v911
  %977 = vst.msk [vmem:[%s4 + $0x180] sm:$0xff] %vm928, %v912
  %978 = vst.msk [vmem:[%s4 + $0x188] sm:$0xff] %vm928, %v913
  %979 = vst.msk [vmem:[%s4 + $0x190] sm:$0xff] %vm928, %v914
  %980 = vst.msk [vmem:[%s4 + $0x198] sm:$0xff] %vm928, %v915
  %981 = vst.msk [vmem:[%s4 + $0x1a0] sm:$0xff] %vm928, %v916
  %982 = vst.msk [vmem:[%s4 + $0x1a8] sm:$0xff] %vm928, %v917
  %983 = vst.msk [vmem:[%s4 + $0x1b0] sm:$0xff] %vm928, %v918
  %984 = vst.msk [vmem:[%s4 + $0x1b8] sm:$0xff] %vm928, %v919
  %985 = vst.msk [vmem:[%s4 + $0x1c0] sm:$0xff] %vm928, %v920
  %986 = vst.msk [vmem:[%s4 + $0x1c8] sm:$0xff] %vm928, %v921
  %987 = vst.msk [vmem:[%s4 + $0x1d0] sm:$0xff] %vm928, %v922
  %988 = vst.msk [vmem:[%s4 + $0x1d8] sm:$0xff] %vm928, %v923
  %989 = vst.msk [vmem:[%s4 + $0x1e0] sm:$0xff] %vm928, %v924
  %990 = vst.msk [vmem:[%s4 + $0x1e8] sm:$0xff] %vm928, %v925
  %991 = vst.msk [vmem:[%s4 + $0x1f0] sm:$0xff] %vm928, %v926
  %992 = vst.msk [vmem:[%s4 + $0x1f8] sm:$0xff] %vm928, %v927
  // Predicated region
  $region18: #{densenet_container_forward.14} parent=0 // pred_check
    _
  $region19: #{densenet_container_forward.14} parent=0 // pred_check_branch
    %994 = sbr.rel (0) target = $region21
  $region20: #{densenet_container_forward.14} parent=0 // pred_region
    _
  $region21: #{densenet_container_forward.14} parent=0 // pred_fallthru
    _
  // Predicated region
  $region22: #{densenet_container_forward.14} parent=0 // pred_check
    _
  $region23: #{densenet_container_forward.14} parent=0 // pred_check_branch
    %996 = sbr.rel (0) target = $region25
  $region24: #{densenet_container_forward.14} parent=0 // pred_region
    _
  $region25: #{densenet_container_forward.14} parent=0 // pred_fallthru
    _

// kernel: densenet_container_forward.18
$region0: #{densenet_container_forward.18}
  #allocation0 [shape = 'u32[]', space=smem, size = 0x4, offset = 0x4, fixed_abs, tag = 'smem constant byte address 0x4 - core index']
  #allocation1 [shape = 'u32[72,128]{1,0:T(1,128)}', space=vmem, size = 0x9000, scoped, tag = 'internal scratch']
  %s0 = inlined_call_operand.vmem [shape: f32[128,48], index: 0, kind: input, shape index: {}]
  %s1 = inlined_call_operand.vmem [shape: bf16[48,128], index: 1, kind: input, shape index: {}]
  %s2 = inlined_call_operand.vmem [shape: f32[1,48], index: 2, kind: input, shape index: {}]
  %s3 = inlined_call_operand.vmem [shape: f32[1,48], index: 3, kind: input, shape index: {}]
  %s4 = inlined_call_operand.vmem [shape: f32[1,128], index: 4, kind: input, shape index: {}]
  %s5 = inlined_call_operand.vmem [shape: f32[1,128], index: 5, kind: input, shape index: {}]
  %s6 = inlined_call_operand.vmem [shape: bf16[128,128], index: 6, kind: output, shape index: {}]
  %s7 = sld [smem:[#allocation0]]
  $region34: #{densenet_container_forward.18} parent=0
    _
  %s9 = ssub.s32 1, %s7
  %s10 = scalar_select 0, %s9, %s7
  // Predicated region
  $region2: #{densenet_container_forward.18} parent=0 // pred_check
    _
  $region3: #{densenet_container_forward.18} parent=0 // pred_check_branch
    %12 = sbr.rel (0) target = $region5
  $region4: #{densenet_container_forward.18} parent=0 // pred_region
    _
  $region5: #{densenet_container_forward.18} parent=0 // pred_fallthru
    _
  // Predicated region
  $region6: #{densenet_container_forward.18} parent=0 // pred_check
    _
  $region7: #{densenet_container_forward.18} parent=0 // pred_check_branch
    %14 = sbr.rel (0) target = $region9
  $region8: #{densenet_container_forward.18} parent=0 // pred_region
    _
  $region9: #{densenet_container_forward.18} parent=0 // pred_fallthru
    _
  // Predicated region
  $region10: #{densenet_container_forward.18} parent=0 // pred_check
    _
  $region11: #{densenet_container_forward.18} parent=0 // pred_check_branch
    %16 = sbr.rel (0) target = $region13
  $region12: #{densenet_container_forward.18} parent=0 // pred_region
    _
  $region13: #{densenet_container_forward.18} parent=0 // pred_fallthru
    _
  // Predicated region
  $region14: #{densenet_container_forward.18} parent=0 // pred_check
    _
  $region15: #{densenet_container_forward.18} parent=0 // pred_check_branch
    %18 = sbr.rel (0) target = $region17
  $region16: #{densenet_container_forward.18} parent=0 // pred_region
    _
  $region17: #{densenet_container_forward.18} parent=0 // pred_fallthru
    _
  // Predicated region
  $region18: #{densenet_container_forward.18} parent=0 // pred_check
    _
  $region19: #{densenet_container_forward.18} parent=0 // pred_check_branch
    %20 = sbr.rel (0) target = $region21
  $region20: #{densenet_container_forward.18} parent=0 // pred_region
    _
  $region21: #{densenet_container_forward.18} parent=0 // pred_fallthru
    _
  // Predicated region
  $region22: #{densenet_container_forward.18} parent=0 // pred_check
    _
  $region23: #{densenet_container_forward.18} parent=0 // pred_check_branch
    %22 = sbr.rel (0) target = $region25
  $region24: #{densenet_container_forward.18} parent=0 // pred_region
    _
  $region25: #{densenet_container_forward.18} parent=0 // pred_fallthru
    _
  %v24 = vld [vmem:[%s0] sm:$0xff]
  %v25 = vld [vmem:[%s0 + $0x8] sm:$0xff]
  %v26 = vld [vmem:[%s0 + $0x10] sm:$0xff]
  %v27 = vld [vmem:[%s0 + $0x18] sm:$0xff]
  %v28 = vld [vmem:[%s0 + $0x20] sm:$0xff]
  %v29 = vld [vmem:[%s0 + $0x28] sm:$0xff]
  %v30 = vld [vmem:[%s0 + $0x30] sm:$0xff]
  %v31 = vld [vmem:[%s0 + $0x38] sm:$0xff]
  %v32 = vld [vmem:[%s0 + $0x40] sm:$0xff]
  %v33 = vld [vmem:[%s0 + $0x48] sm:$0xff]
  %v34 = vld [vmem:[%s0 + $0x50] sm:$0xff]
  %v35 = vld [vmem:[%s0 + $0x58] sm:$0xff]
  %v36 = vld [vmem:[%s0 + $0x60] sm:$0xff]
  %v37 = vld [vmem:[%s0 + $0x68] sm:$0xff]
  %v38 = vld [vmem:[%s0 + $0x70] sm:$0xff]
  %v39 = vld [vmem:[%s0 + $0x78] sm:$0xff]
  %v40 = vld [vmem:[%s2] sm:$0x1]
  %v42 = vperm.slane %v40, 0
  %v44 = vmul.f32 %v24, %v42
  %v45 = vmul.f32 %v25, %v42
  %v46 = vmul.f32 %v26, %v42
  %v47 = vmul.f32 %v27, %v42
  %v48 = vmul.f32 %v28, %v42
  %v49 = vmul.f32 %v29, %v42
  %v50 = vmul.f32 %v30, %v42
  %v51 = vmul.f32 %v31, %v42
  %v52 = vmul.f32 %v32, %v42
  %v53 = vmul.f32 %v33, %v42
  %v54 = vmul.f32 %v34, %v42
  %v55 = vmul.f32 %v35, %v42
  %v56 = vmul.f32 %v36, %v42
  %v57 = vmul.f32 %v37, %v42
  %v58 = vmul.f32 %v38, %v42
  %v59 = vmul.f32 %v39, %v42
  %v60 = vld [vmem:[%s3] sm:$0x1]
  %v62 = vperm.slane %v60, 0
  %v64 = vadd.f32 %v44, %v62
  %v65 = vadd.f32 %v45, %v62
  %v66 = vadd.f32 %v46, %v62
  %v67 = vadd.f32 %v47, %v62
  %v68 = vadd.f32 %v48, %v62
  %v69 = vadd.f32 %v49, %v62
  %v70 = vadd.f32 %v50, %v62
  %v71 = vadd.f32 %v51, %v62
  %v72 = vadd.f32 %v52, %v62
  %v73 = vadd.f32 %v53, %v62
  %v74 = vadd.f32 %v54, %v62
  %v75 = vadd.f32 %v55, %v62
  %v76 = vadd.f32 %v56, %v62
  %v77 = vadd.f32 %v57, %v62
  %v78 = vadd.f32 %v58, %v62
  %v79 = vadd.f32 %v59, %v62
  %v80 = vmax.f32 %v64, 0.0
  %v81 = vmax.f32 %v65, 0.0
  %v82 = vmax.f32 %v66, 0.0
  %v83 = vmax.f32 %v67, 0.0
  %v84 = vmax.f32 %v68, 0.0
  %v85 = vmax.f32 %v69, 0.0
  %v86 = vmax.f32 %v70, 0.0
  %v87 = vmax.f32 %v71, 0.0
  %v88 = vmax.f32 %v72, 0.0
  %v89 = vmax.f32 %v73, 0.0
  %v90 = vmax.f32 %v74, 0.0
  %v91 = vmax.f32 %v75, 0.0
  %v92 = vmax.f32 %v76, 0.0
  %v93 = vmax.f32 %v77, 0.0
  %v94 = vmax.f32 %v78, 0.0
  %v95 = vmax.f32 %v79, 0.0
  %v96 = vpack.c.bf16 %v81, %v80
  %v97 = vpack.c.bf16 %v83, %v82
  %v98 = vpack.c.bf16 %v85, %v84
  %v99 = vpack.c.bf16 %v87, %v86
  %v100 = vpack.c.bf16 %v89, %v88
  %v101 = vpack.c.bf16 %v91, %v90
  %v102 = vpack.c.bf16 %v93, %v92
  %v103 = vpack.c.bf16 %v95, %v94
  %v104 = vld [vmem:[%s1] sm:$0xf]
  %v105 = vld [vmem:[%s1 + $0x4] sm:$0xf]
  %v106 = vld [vmem:[%s1 + $0x8] sm:$0xf]
  %v107 = vld [vmem:[%s1 + $0xc] sm:$0xf]
  %v108 = vld [vmem:[%s1 + $0x10] sm:$0xf]
  %v109 = vld [vmem:[%s1 + $0x14] sm:$0xf]
  %v116 = vunpack.c.l.b16 %v104
  %v117 = vunpack.c.l.b16 %v105
  %v118 = vunpack.c.l.b16 %v106
  %v119 = vunpack.c.l.b16 %v107
  %v120 = vunpack.c.l.b16 %v108
  %v121 = vunpack.c.l.b16 %v109
  %v122 = vpack.c.b16 %v117, %v116
  %v123 = vpack.c.b16 %v119, %v118
  %v124 = vpack.c.b16 %v121, %v120
  %vm128 = vcmask 392192
  %v130 = vsel %vm128, %v96, 0
  %v133 = vsel %vm128, %v97, 0
  %v136 = vsel %vm128, %v98, 0
  %v139 = vsel %vm128, %v99, 0
  %v142 = vsel %vm128, %v100, 0
  %v145 = vsel %vm128, %v101, 0
  %v148 = vsel %vm128, %v102, 0
  %v151 = vsel %vm128, %v103, 0
  %153 = vmatpush.bf16.msra.mxu0 0
  %154 = vmatpush.bf16.msra.mxu0 0
  %155 = vmatpush.bf16.msra.mxu0 0
  %156 = vmatpush.bf16.msra.mxu0 0
  %157 = vmatpush.bf16.msra.mxu0 0
  %158 = vmatpush.bf16.msra.mxu0 %v124
  %159 = vmatpush.bf16.msra.mxu0 %v123
  %160 = vmatpush.bf16.msra.mxu0 %v122
  %161 = vmatmul.bf16.gmra.mxu0 %v130
  %v162 = vpop.f32.mrf.mxu0
  %v163 = vadd.f32 0.0, %v162
  %v164 = vpop.f32.mrf.mxu0
  %v165 = vadd.f32 0.0, %v164
  %166 = vmatmul.bf16.gmra.mxu0 %v133
  %v167 = vpop.f32.mrf.mxu0
  %v168 = vadd.f32 0.0, %v167
  %v169 = vpop.f32.mrf.mxu0
  %v170 = vadd.f32 0.0, %v169
  %171 = vmatmul.bf16.gmra.mxu0 %v136
  %v172 = vpop.f32.mrf.mxu0
  %v173 = vadd.f32 0.0, %v172
  %v174 = vpop.f32.mrf.mxu0
  %v175 = vadd.f32 0.0, %v174
  %176 = vmatmul.bf16.gmra.mxu0 %v139
  %v177 = vpop.f32.mrf.mxu0
  %v178 = vadd.f32 0.0, %v177
  %v179 = vpop.f32.mrf.mxu0
  %v180 = vadd.f32 0.0, %v179
  %181 = vmatmul.bf16.gmra.mxu0 %v142
  %v182 = vpop.f32.mrf.mxu0
  %v183 = vadd.f32 0.0, %v182
  %v184 = vpop.f32.mrf.mxu0
  %v185 = vadd.f32 0.0, %v184
  %186 = vmatmul.bf16.gmra.mxu0 %v145
  %v187 = vpop.f32.mrf.mxu0
  %v188 = vadd.f32 0.0, %v187
  %v189 = vpop.f32.mrf.mxu0
  %v190 = vadd.f32 0.0, %v189
  %191 = vmatmul.bf16.gmra.mxu0 %v148
  %v192 = vpop.f32.mrf.mxu0
  %v193 = vadd.f32 0.0, %v192
  %v194 = vpop.f32.mrf.mxu0
  %v195 = vadd.f32 0.0, %v194
  %196 = vmatmul.bf16.gmra.mxu0 %v151
  %v197 = vpop.f32.mrf.mxu0
  %v198 = vadd.f32 0.0, %v197
  %v199 = vpop.f32.mrf.mxu0
  %v200 = vadd.f32 0.0, %v199
  %201 = vdwg.mxu0
  %v202 = vld [vmem:[%s4] sm:$0x1]
  %v204 = vperm.slane %v202, 0
  %v206 = vmul.f32 %v163, %v204
  %v207 = vmul.f32 %v165, %v204
  %v208 = vmul.f32 %v168, %v204
  %v209 = vmul.f32 %v170, %v204
  %v210 = vmul.f32 %v173, %v204
  %v211 = vmul.f32 %v175, %v204
  %v212 = vmul.f32 %v178, %v204
  %v213 = vmul.f32 %v180, %v204
  %v214 = vmul.f32 %v183, %v204
  %v215 = vmul.f32 %v185, %v204
  %v216 = vmul.f32 %v188, %v204
  %v217 = vmul.f32 %v190, %v204
  %v218 = vmul.f32 %v193, %v204
  %v219 = vmul.f32 %v195, %v204
  %v220 = vmul.f32 %v198, %v204
  %v221 = vmul.f32 %v200, %v204
  %v222 = vld [vmem:[%s5] sm:$0x1]
  %v224 = vperm.slane %v222, 0
  %v226 = vadd.f32 %v206, %v224
  %v227 = vadd.f32 %v207, %v224
  %v228 = vadd.f32 %v208, %v224
  %v229 = vadd.f32 %v209, %v224
  %v230 = vadd.f32 %v210, %v224
  %v231 = vadd.f32 %v211, %v224
  %v232 = vadd.f32 %v212, %v224
  %v233 = vadd.f32 %v213, %v224
  %v234 = vadd.f32 %v214, %v224
  %v235 = vadd.f32 %v215, %v224
  %v236 = vadd.f32 %v216, %v224
  %v237 = vadd.f32 %v217, %v224
  %v238 = vadd.f32 %v218, %v224
  %v239 = vadd.f32 %v219, %v224
  %v240 = vadd.f32 %v220, %v224
  %v241 = vadd.f32 %v221, %v224
  %v242 = vmax.f32 %v226, 0.0
  %v243 = vmax.f32 %v227, 0.0
  %v244 = vmax.f32 %v228, 0.0
  %v245 = vmax.f32 %v229, 0.0
  %v246 = vmax.f32 %v230, 0.0
  %v247 = vmax.f32 %v231, 0.0
  %v248 = vmax.f32 %v232, 0.0
  %v249 = vmax.f32 %v233, 0.0
  %v250 = vmax.f32 %v234, 0.0
  %v251 = vmax.f32 %v235, 0.0
  %v252 = vmax.f32 %v236, 0.0
  %v253 = vmax.f32 %v237, 0.0
  %v254 = vmax.f32 %v238, 0.0
  %v255 = vmax.f32 %v239, 0.0
  %v256 = vmax.f32 %v240, 0.0
  %v257 = vmax.f32 %v241, 0.0
  %v258 = vpack.c.bf16 %v242, %v242
  %v259 = vpack.c.bf16 %v243, %v243
  %v260 = vpack.c.bf16 %v244, %v244
  %v261 = vpack.c.bf16 %v245, %v245
  %v262 = vpack.c.bf16 %v246, %v246
  %v263 = vpack.c.bf16 %v247, %v247
  %v264 = vpack.c.bf16 %v248, %v248
  %v265 = vpack.c.bf16 %v249, %v249
  %v266 = vpack.c.bf16 %v250, %v250
  %v267 = vpack.c.bf16 %v251, %v251
  %v268 = vpack.c.bf16 %v252, %v252
  %v269 = vpack.c.bf16 %v253, %v253
  %v270 = vpack.c.bf16 %v254, %v254
  %v271 = vpack.c.bf16 %v255, %v255
  %v272 = vpack.c.bf16 %v256, %v256
  %v273 = vpack.c.bf16 %v257, %v257
  %274 = vst [vmem:[%s6] sm:$0xf] %v258
  %275 = vst [vmem:[%s6 + $0x4] sm:$0xf] %v259
  %276 = vst [vmem:[%s6 + $0x8] sm:$0xf] %v260
  %277 = vst [vmem:[%s6 + $0xc] sm:$0xf] %v261
  %278 = vst [vmem:[%s6 + $0x10] sm:$0xf] %v262
  %279 = vst [vmem:[%s6 + $0x14] sm:$0xf] %v263
  %280 = vst [vmem:[%s6 + $0x18] sm:$0xf] %v264
  %281 = vst [vmem:[%s6 + $0x1c] sm:$0xf] %v265
  %282 = vst [vmem:[%s6 + $0x20] sm:$0xf] %v266
  %283 = vst [vmem:[%s6 + $0x24] sm:$0xf] %v267
  %284 = vst [vmem:[%s6 + $0x28] sm:$0xf] %v268
  %285 = vst [vmem:[%s6 + $0x2c] sm:$0xf] %v269
  %286 = vst [vmem:[%s6 + $0x30] sm:$0xf] %v270
  %287 = vst [vmem:[%s6 + $0x34] sm:$0xf] %v271
  %288 = vst [vmem:[%s6 + $0x38] sm:$0xf] %v272
  %289 = vst [vmem:[%s6 + $0x3c] sm:$0xf] %v273
  // Predicated region
  $region26: #{densenet_container_forward.18} parent=0 // pred_check
    _
  $region27: #{densenet_container_forward.18} parent=0 // pred_check_branch
    %291 = sbr.rel (0) target = $region29
  $region28: #{densenet_container_forward.18} parent=0 // pred_region
    _
  $region29: #{densenet_container_forward.18} parent=0 // pred_fallthru
    _
  // Predicated region
  $region30: #{densenet_container_forward.18} parent=0 // pred_check
    _
  $region31: #{densenet_container_forward.18} parent=0 // pred_check_branch
    %293 = sbr.rel (0) target = $region33
  $region32: #{densenet_container_forward.18} parent=0 // pred_region
    _
  $region33: #{densenet_container_forward.18} parent=0 // pred_fallthru
    _

// kernel: densenet_container_forward.20
$region0: #{densenet_container_forward.20}
  #allocation0 [shape = 'u32[]', space=smem, size = 0x4, offset = 0x4, fixed_abs, tag = 'smem constant byte address 0x4 - core index']
  #allocation1 [shape = 'u32[72,128]{1,0:T(1,128)}', space=vmem, size = 0x9000, scoped, tag = 'internal scratch']
  %s0 = inlined_call_operand.vmem [shape: f32[128,80], index: 0, kind: input, shape index: {}]
  %s1 = inlined_call_operand.vmem [shape: bf16[80,40], index: 1, kind: input, shape index: {}]
  %s2 = inlined_call_operand.vmem [shape: f32[1,80], index: 2, kind: input, shape index: {}]
  %s3 = inlined_call_operand.vmem [shape: f32[1,80], index: 3, kind: input, shape index: {}]
  %s4 = inlined_call_operand.vmem [shape: f32[128,40], index: 4, kind: output, shape index: {}]
  %s5 = sld [smem:[#allocation0]]
  $region26: #{densenet_container_forward.20} parent=0
    _
  %s7 = ssub.s32 1, %s5
  %s8 = scalar_select 0, %s7, %s5
  // Predicated region
  $region2: #{densenet_container_forward.20} parent=0 // pred_check
    _
  $region3: #{densenet_container_forward.20} parent=0 // pred_check_branch
    %10 = sbr.rel (0) target = $region5
  $region4: #{densenet_container_forward.20} parent=0 // pred_region
    _
  $region5: #{densenet_container_forward.20} parent=0 // pred_fallthru
    _
  // Predicated region
  $region6: #{densenet_container_forward.20} parent=0 // pred_check
    _
  $region7: #{densenet_container_forward.20} parent=0 // pred_check_branch
    %12 = sbr.rel (0) target = $region9
  $region8: #{densenet_container_forward.20} parent=0 // pred_region
    _
  $region9: #{densenet_container_forward.20} parent=0 // pred_fallthru
    _
  // Predicated region
  $region10: #{densenet_container_forward.20} parent=0 // pred_check
    _
  $region11: #{densenet_container_forward.20} parent=0 // pred_check_branch
    %14 = sbr.rel (0) target = $region13
  $region12: #{densenet_container_forward.20} parent=0 // pred_region
    _
  $region13: #{densenet_container_forward.20} parent=0 // pred_fallthru
    _
  // Predicated region
  $region14: #{densenet_container_forward.20} parent=0 // pred_check
    _
  $region15: #{densenet_container_forward.20} parent=0 // pred_check_branch
    %16 = sbr.rel (0) target = $region17
  $region16: #{densenet_container_forward.20} parent=0 // pred_region
    _
  $region17: #{densenet_container_forward.20} parent=0 // pred_fallthru
    _
  %v18 = vld [vmem:[%s0] sm:$0xff]
  %v19 = vld [vmem:[%s0 + $0x8] sm:$0xff]
  %v20 = vld [vmem:[%s0 + $0x10] sm:$0xff]
  %v21 = vld [vmem:[%s0 + $0x18] sm:$0xff]
  %v22 = vld [vmem:[%s0 + $0x20] sm:$0xff]
  %v23 = vld [vmem:[%s0 + $0x28] sm:$0xff]
  %v24 = vld [vmem:[%s0 + $0x30] sm:$0xff]
  %v25 = vld [vmem:[%s0 + $0x38] sm:$0xff]
  %v26 = vld [vmem:[%s0 + $0x40] sm:$0xff]
  %v27 = vld [vmem:[%s0 + $0x48] sm:$0xff]
  %v28 = vld [vmem:[%s0 + $0x50] sm:$0xff]
  %v29 = vld [vmem:[%s0 + $0x58] sm:$0xff]
  %v30 = vld [vmem:[%s0 + $0x60] sm:$0xff]
  %v31 = vld [vmem:[%s0 + $0x68] sm:$0xff]
  %v32 = vld [vmem:[%s0 + $0x70] sm:$0xff]
  %v33 = vld [vmem:[%s0 + $0x78] sm:$0xff]
  %v34 = vld [vmem:[%s2] sm:$0x1]
  %v36 = vperm.slane %v34, 0
  %v38 = vmul.f32 %v18, %v36
  %v39 = vmul.f32 %v19, %v36
  %v40 = vmul.f32 %v20, %v36
  %v41 = vmul.f32 %v21, %v36
  %v42 = vmul.f32 %v22, %v36
  %v43 = vmul.f32 %v23, %v36
  %v44 = vmul.f32 %v24, %v36
  %v45 = vmul.f32 %v25, %v36
  %v46 = vmul.f32 %v26, %v36
  %v47 = vmul.f32 %v27, %v36
  %v48 = vmul.f32 %v28, %v36
  %v49 = vmul.f32 %v29, %v36
  %v50 = vmul.f32 %v30, %v36
  %v51 = vmul.f32 %v31, %v36
  %v52 = vmul.f32 %v32, %v36
  %v53 = vmul.f32 %v33, %v36
  %v54 = vld [vmem:[%s3] sm:$0x1]
  %v56 = vperm.slane %v54, 0
  %v58 = vadd.f32 %v38, %v56
  %v59 = vadd.f32 %v39, %v56
  %v60 = vadd.f32 %v40, %v56
  %v61 = vadd.f32 %v41, %v56
  %v62 = vadd.f32 %v42, %v56
  %v63 = vadd.f32 %v43, %v56
  %v64 = vadd.f32 %v44, %v56
  %v65 = vadd.f32 %v45, %v56
  %v66 = vadd.f32 %v46, %v56
  %v67 = vadd.f32 %v47, %v56
  %v68 = vadd.f32 %v48, %v56
  %v69 = vadd.f32 %v49, %v56
  %v70 = vadd.f32 %v50, %v56
  %v71 = vadd.f32 %v51, %v56
  %v72 = vadd.f32 %v52, %v56
  %v73 = vadd.f32 %v53, %v56
  %v74 = vmax.f32 %v58, 0.0
  %v75 = vmax.f32 %v59, 0.0
  %v76 = vmax.f32 %v60, 0.0
  %v77 = vmax.f32 %v61, 0.0
  %v78 = vmax.f32 %v62, 0.0
  %v79 = vmax.f32 %v63, 0.0
  %v80 = vmax.f32 %v64, 0.0
  %v81 = vmax.f32 %v65, 0.0
  %v82 = vmax.f32 %v66, 0.0
  %v83 = vmax.f32 %v67, 0.0
  %v84 = vmax.f32 %v68, 0.0
  %v85 = vmax.f32 %v69, 0.0
  %v86 = vmax.f32 %v70, 0.0
  %v87 = vmax.f32 %v71, 0.0
  %v88 = vmax.f32 %v72, 0.0
  %v89 = vmax.f32 %v73, 0.0
  %v90 = vpack.c.bf16 %v75, %v74
  %v91 = vpack.c.bf16 %v77, %v76
  %v92 = vpack.c.bf16 %v79, %v78
  %v93 = vpack.c.bf16 %v81, %v80
  %v94 = vpack.c.bf16 %v83, %v82
  %v95 = vpack.c.bf16 %v85, %v84
  %v96 = vpack.c.bf16 %v87, %v86
  %v97 = vpack.c.bf16 %v89, %v88
  %v98 = vld [vmem:[%s1] sm:$0xf]
  %v99 = vld [vmem:[%s1 + $0x4] sm:$0xf]
  %v100 = vld [vmem:[%s1 + $0x8] sm:$0xf]
  %v101 = vld [vmem:[%s1 + $0xc] sm:$0xf]
  %v102 = vld [vmem:[%s1 + $0x10] sm:$0xf]
  %v103 = vld [vmem:[%s1 + $0x14] sm:$0xf]
  %v104 = vld [vmem:[%s1 + $0x18] sm:$0xf]
  %v105 = vld [vmem:[%s1 + $0x1c] sm:$0xf]
  %v106 = vld [vmem:[%s1 + $0x20] sm:$0xf]
  %v107 = vld [vmem:[%s1 + $0x24] sm:$0xf]
  %v118 = vunpack.c.l.b16 %v98
  %v119 = vunpack.c.l.b16 %v99
  %v120 = vunpack.c.l.b16 %v100
  %v121 = vunpack.c.l.b16 %v101
  %v122 = vunpack.c.l.b16 %v102
  %v123 = vunpack.c.l.b16 %v103
  %v124 = vunpack.c.l.b16 %v104
  %v125 = vunpack.c.l.b16 %v105
  %v126 = vunpack.c.l.b16 %v106
  %v127 = vunpack.c.l.b16 %v107
  %v128 = vpack.c.b16 %v119, %v118
  %v129 = vpack.c.b16 %v121, %v120
  %v130 = vpack.c.b16 %v123, %v122
  %v131 = vpack.c.b16 %v125, %v124
  %v132 = vpack.c.b16 %v127, %v126
  %vm138 = vcmask 654336
  %v140 = vsel %vm138, %v90, 0
  %v143 = vsel %vm138, %v91, 0
  %v146 = vsel %vm138, %v92, 0
  %v149 = vsel %vm138, %v93, 0
  %v152 = vsel %vm138, %v94, 0
  %v155 = vsel %vm138, %v95, 0
  %v158 = vsel %vm138, %v96, 0
  %v161 = vsel %vm138, %v97, 0
  %163 = vmatpush.bf16.msra.mxu0 0
  %164 = vmatpush.bf16.msra.mxu0 0
  %165 = vmatpush.bf16.msra.mxu0 0
  %166 = vmatpush.bf16.msra.mxu0 %v132
  %167 = vmatpush.bf16.msra.mxu0 %v131
  %168 = vmatpush.bf16.msra.mxu0 %v130
  %169 = vmatpush.bf16.msra.mxu0 %v129
  %170 = vmatpush.bf16.msra.mxu0 %v128
  %171 = vmatmul.bf16.gmra.mxu0 %v140
  %v172 = vpop.f32.mrf.mxu0
  %v173 = vadd.f32 0.0, %v172
  %v174 = vpop.f32.mrf.mxu0
  %v175 = vadd.f32 0.0, %v174
  %176 = vmatmul.bf16.gmra.mxu0 %v143
  %v177 = vpop.f32.mrf.mxu0
  %v178 = vadd.f32 0.0, %v177
  %v179 = vpop.f32.mrf.mxu0
  %v180 = vadd.f32 0.0, %v179
  %181 = vmatmul.bf16.gmra.mxu0 %v146
  %v182 = vpop.f32.mrf.mxu0
  %v183 = vadd.f32 0.0, %v182
  %v184 = vpop.f32.mrf.mxu0
  %v185 = vadd.f32 0.0, %v184
  %186 = vmatmul.bf16.gmra.mxu0 %v149
  %v187 = vpop.f32.mrf.mxu0
  %v188 = vadd.f32 0.0, %v187
  %v189 = vpop.f32.mrf.mxu0
  %v190 = vadd.f32 0.0, %v189
  %191 = vmatmul.bf16.gmra.mxu0 %v152
  %v192 = vpop.f32.mrf.mxu0
  %v193 = vadd.f32 0.0, %v192
  %v194 = vpop.f32.mrf.mxu0
  %v195 = vadd.f32 0.0, %v194
  %196 = vmatmul.bf16.gmra.mxu0 %v155
  %v197 = vpop.f32.mrf.mxu0
  %v198 = vadd.f32 0.0, %v197
  %v199 = vpop.f32.mrf.mxu0
  %v200 = vadd.f32 0.0, %v199
  %201 = vmatmul.bf16.gmra.mxu0 %v158
  %v202 = vpop.f32.mrf.mxu0
  %v203 = vadd.f32 0.0, %v202
  %v204 = vpop.f32.mrf.mxu0
  %v205 = vadd.f32 0.0, %v204
  %206 = vmatmul.bf16.gmra.mxu0 %v161
  %v207 = vpop.f32.mrf.mxu0
  %v208 = vadd.f32 0.0, %v207
  %v209 = vpop.f32.mrf.mxu0
  %v210 = vadd.f32 0.0, %v209
  %211 = vdwg.mxu0
  %vm212 = vcmask 326656
  %213 = vst.msk [vmem:[%s4] sm:$0xff] %vm212, %v173
  %214 = vst.msk [vmem:[%s4 + $0x8] sm:$0xff] %vm212, %v175
  %215 = vst.msk [vmem:[%s4 + $0x10] sm:$0xff] %vm212, %v178
  %216 = vst.msk [vmem:[%s4 + $0x18] sm:$0xff] %vm212, %v180
  %217 = vst.msk [vmem:[%s4 + $0x20] sm:$0xff] %vm212, %v183
  %218 = vst.msk [vmem:[%s4 + $0x28] sm:$0xff] %vm212, %v185
  %219 = vst.msk [vmem:[%s4 + $0x30] sm:$0xff] %vm212, %v188
  %220 = vst.msk [vmem:[%s4 + $0x38] sm:$0xff] %vm212, %v190
  %221 = vst.msk [vmem:[%s4 + $0x40] sm:$0xff] %vm212, %v193
  %222 = vst.msk [vmem:[%s4 + $0x48] sm:$0xff] %vm212, %v195
  %223 = vst.msk [vmem:[%s4 + $0x50] sm:$0xff] %vm212, %v198
  %224 = vst.msk [vmem:[%s4 + $0x58] sm:$0xff] %vm212, %v200
  %225 = vst.msk [vmem:[%s4 + $0x60] sm:$0xff] %vm212, %v203
  %226 = vst.msk [vmem:[%s4 + $0x68] sm:$0xff] %vm212, %v205
  %227 = vst.msk [vmem:[%s4 + $0x70] sm:$0xff] %vm212, %v208
  %228 = vst.msk [vmem:[%s4 + $0x78] sm:$0xff] %vm212, %v210
  // Predicated region
  $region18: #{densenet_container_forward.20} parent=0 // pred_check
    _
  $region19: #{densenet_container_forward.20} parent=0 // pred_check_branch
    %230 = sbr.rel (0) target = $region21
  $region20: #{densenet_container_forward.20} parent=0 // pred_region
    _
  $region21: #{densenet_container_forward.20} parent=0 // pred_fallthru
    _
  // Predicated region
  $region22: #{densenet_container_forward.20} parent=0 // pred_check
    _
  $region23: #{densenet_container_forward.20} parent=0 // pred_check_branch
    %232 = sbr.rel (0) target = $region25
  $region24: #{densenet_container_forward.20} parent=0 // pred_region
    _
  $region25: #{densenet_container_forward.20} parent=0 // pred_fallthru
    _

// kernel: densenet_container_forward.21
$region0: #{densenet_container_forward.21}
  #allocation0 [shape = 'u32[]', space=smem, size = 0x4, offset = 0x4, fixed_abs, tag = 'smem constant byte address 0x4 - core index']
  #allocation1 [shape = 'u32[72,128]{1,0:T(1,128)}', space=vmem, size = 0x9000, scoped, tag = 'internal scratch']
  %s0 = inlined_call_operand.vmem [shape: f32[32,40], index: 0, kind: input, shape index: {}]
  %s1 = inlined_call_operand.vmem [shape: f32[32,40], index: 1, kind: input, shape index: {}]
  %s2 = inlined_call_operand.vmem [shape: f32[32,40], index: 2, kind: input, shape index: {}]
  %s3 = inlined_call_operand.vmem [shape: f32[32,40], index: 3, kind: input, shape index: {}]
  %s4 = inlined_call_operand.vmem [shape: f32[32,40], index: 4, kind: output, shape index: {}]
  %s5 = sld [smem:[#allocation0]]
  $region26: #{densenet_container_forward.21} parent=0
    _
  %s7 = ssub.s32 1, %s5
  %s8 = scalar_select 0, %s7, %s5
  // Predicated region
  $region2: #{densenet_container_forward.21} parent=0 // pred_check
    _
  $region3: #{densenet_container_forward.21} parent=0 // pred_check_branch
    %10 = sbr.rel (0) target = $region5
  $region4: #{densenet_container_forward.21} parent=0 // pred_region
    _
  $region5: #{densenet_container_forward.21} parent=0 // pred_fallthru
    _
  // Predicated region
  $region6: #{densenet_container_forward.21} parent=0 // pred_check
    _
  $region7: #{densenet_container_forward.21} parent=0 // pred_check_branch
    %12 = sbr.rel (0) target = $region9
  $region8: #{densenet_container_forward.21} parent=0 // pred_region
    _
  $region9: #{densenet_container_forward.21} parent=0 // pred_fallthru
    _
  // Predicated region
  $region10: #{densenet_container_forward.21} parent=0 // pred_check
    _
  $region11: #{densenet_container_forward.21} parent=0 // pred_check_branch
    %14 = sbr.rel (0) target = $region13
  $region12: #{densenet_container_forward.21} parent=0 // pred_region
    _
  $region13: #{densenet_container_forward.21} parent=0 // pred_fallthru
    _
  // Predicated region
  $region14: #{densenet_container_forward.21} parent=0 // pred_check
    _
  $region15: #{densenet_container_forward.21} parent=0 // pred_check_branch
    %16 = sbr.rel (0) target = $region17
  $region16: #{densenet_container_forward.21} parent=0 // pred_region
    _
  $region17: #{densenet_container_forward.21} parent=0 // pred_fallthru
    _
  %v17 = vld [vmem:[%s0] sm:$0xff]
  %v18 = vld [vmem:[%s0 + $0x8] sm:$0xff]
  %v19 = vld [vmem:[%s0 + $0x10] sm:$0xff]
  %v20 = vld [vmem:[%s0 + $0x18] sm:$0xff]
  %v21 = vld [vmem:[%s1] sm:$0xff]
  %v22 = vld [vmem:[%s1 + $0x8] sm:$0xff]
  %v23 = vld [vmem:[%s1 + $0x10] sm:$0xff]
  %v24 = vld [vmem:[%s1 + $0x18] sm:$0xff]
  %v25 = vadd.f32 %v17, %v21
  %v26 = vadd.f32 %v18, %v22
  %v27 = vadd.f32 %v19, %v23
  %v28 = vadd.f32 %v20, %v24
  %v29 = vld [vmem:[%s2] sm:$0xff]
  %v30 = vld [vmem:[%s2 + $0x8] sm:$0xff]
  %v31 = vld [vmem:[%s2 + $0x10] sm:$0xff]
  %v32 = vld [vmem:[%s2 + $0x18] sm:$0xff]
  %v33 = vadd.f32 %v25, %v29
  %v34 = vadd.f32 %v26, %v30
  %v35 = vadd.f32 %v27, %v31
  %v36 = vadd.f32 %v28, %v32
  %v37 = vld [vmem:[%s3] sm:$0xff]
  %v38 = vld [vmem:[%s3 + $0x8] sm:$0xff]
  %v39 = vld [vmem:[%s3 + $0x10] sm:$0xff]
  %v40 = vld [vmem:[%s3 + $0x18] sm:$0xff]
  %v41 = vadd.f32 %v33, %v37
  %v42 = vadd.f32 %v34, %v38
  %v43 = vadd.f32 %v35, %v39
  %v44 = vadd.f32 %v36, %v40
  %v45 = vmul.f32 %v41, 0.25
  %v46 = vmul.f32 %v42, 0.25
  %v47 = vmul.f32 %v43, 0.25
  %v48 = vmul.f32 %v44, 0.25
  %vm49 = vcmask 326656
  %50 = vst.msk [vmem:[%s4] sm:$0xff] %vm49, %v45
  %51 = vst.msk [vmem:[%s4 + $0x8] sm:$0xff] %vm49, %v46
  %52 = vst.msk [vmem:[%s4 + $0x10] sm:$0xff] %vm49, %v47
  %53 = vst.msk [vmem:[%s4 + $0x18] sm:$0xff] %vm49, %v48
  // Predicated region
  $region18: #{densenet_container_forward.21} parent=0 // pred_check
    _
  $region19: #{densenet_container_forward.21} parent=0 // pred_check_branch
    %55 = sbr.rel (0) target = $region21
  $region20: #{densenet_container_forward.21} parent=0 // pred_region
    _
  $region21: #{densenet_container_forward.21} parent=0 // pred_fallthru
    _
  // Predicated region
  $region22: #{densenet_container_forward.21} parent=0 // pred_check
    _
  $region23: #{densenet_container_forward.21} parent=0 // pred_check_branch
    %57 = sbr.rel (0) target = $region25
  $region24: #{densenet_container_forward.21} parent=0 // pred_region
    _
  $region25: #{densenet_container_forward.21} parent=0 // pred_fallthru
    _

// kernel: densenet_container_forward.22
$region0: #{densenet_container_forward.22}
  #allocation0 [shape = 'u32[]', space=smem, size = 0x4, offset = 0x4, fixed_abs, tag = 'smem constant byte address 0x4 - core index']
  #allocation1 [shape = 'u32[72,128]{1,0:T(1,128)}', space=vmem, size = 0x9000, scoped, tag = 'internal scratch']
  %s0 = inlined_call_operand.vmem [shape: f32[32,40], index: 0, kind: input, shape index: {}]
  %s1 = inlined_call_operand.vmem [shape: bf16[40,128], index: 1, kind: input, shape index: {}]
  %s2 = inlined_call_operand.vmem [shape: f32[1,40], index: 2, kind: input, shape index: {}]
  %s3 = inlined_call_operand.vmem [shape: f32[1,40], index: 3, kind: input, shape index: {}]
  %s4 = inlined_call_operand.vmem [shape: f32[1,128], index: 4, kind: input, shape index: {}]
  %s5 = inlined_call_operand.vmem [shape: f32[1,128], index: 5, kind: input, shape index: {}]
  %s6 = inlined_call_operand.vmem [shape: bf16[32,128], index: 6, kind: output, shape index: {}]
  %s7 = sld [smem:[#allocation0]]
  $region34: #{densenet_container_forward.22} parent=0
    _
  %s9 = ssub.s32 1, %s7
  %s10 = scalar_select 0, %s9, %s7
  // Predicated region
  $region2: #{densenet_container_forward.22} parent=0 // pred_check
    _
  $region3: #{densenet_container_forward.22} parent=0 // pred_check_branch
    %12 = sbr.rel (0) target = $region5
  $region4: #{densenet_container_forward.22} parent=0 // pred_region
    _
  $region5: #{densenet_container_forward.22} parent=0 // pred_fallthru
    _
  // Predicated region
  $region6: #{densenet_container_forward.22} parent=0 // pred_check
    _
  $region7: #{densenet_container_forward.22} parent=0 // pred_check_branch
    %14 = sbr.rel (0) target = $region9
  $region8: #{densenet_container_forward.22} parent=0 // pred_region
    _
  $region9: #{densenet_container_forward.22} parent=0 // pred_fallthru
    _
  // Predicated region
  $region10: #{densenet_container_forward.22} parent=0 // pred_check
    _
  $region11: #{densenet_container_forward.22} parent=0 // pred_check_branch
    %16 = sbr.rel (0) target = $region13
  $region12: #{densenet_container_forward.22} parent=0 // pred_region
    _
  $region13: #{densenet_container_forward.22} parent=0 // pred_fallthru
    _
  // Predicated region
  $region14: #{densenet_container_forward.22} parent=0 // pred_check
    _
  $region15: #{densenet_container_forward.22} parent=0 // pred_check_branch
    %18 = sbr.rel (0) target = $region17
  $region16: #{densenet_container_forward.22} parent=0 // pred_region
    _
  $region17: #{densenet_container_forward.22} parent=0 // pred_fallthru
    _
  // Predicated region
  $region18: #{densenet_container_forward.22} parent=0 // pred_check
    _
  $region19: #{densenet_container_forward.22} parent=0 // pred_check_branch
    %20 = sbr.rel (0) target = $region21
  $region20: #{densenet_container_forward.22} parent=0 // pred_region
    _
  $region21: #{densenet_container_forward.22} parent=0 // pred_fallthru
    _
  // Predicated region
  $region22: #{densenet_container_forward.22} parent=0 // pred_check
    _
  $region23: #{densenet_container_forward.22} parent=0 // pred_check_branch
    %22 = sbr.rel (0) target = $region25
  $region24: #{densenet_container_forward.22} parent=0 // pred_region
    _
  $region25: #{densenet_container_forward.22} parent=0 // pred_fallthru
    _
  %v24 = vld [vmem:[%s0] sm:$0xff]
  %v25 = vld [vmem:[%s0 + $0x8] sm:$0xff]
  %v26 = vld [vmem:[%s0 + $0x10] sm:$0xff]
  %v27 = vld [vmem:[%s0 + $0x18] sm:$0xff]
  %v28 = vld [vmem:[%s2] sm:$0x1]
  %v30 = vperm.slane %v28, 0
  %v32 = vmul.f32 %v24, %v30
  %v33 = vmul.f32 %v25, %v30
  %v34 = vmul.f32 %v26, %v30
  %v35 = vmul.f32 %v27, %v30
  %v36 = vld [vmem:[%s3] sm:$0x1]
  %v38 = vperm.slane %v36, 0
  %v40 = vadd.f32 %v32, %v38
  %v41 = vadd.f32 %v33, %v38
  %v42 = vadd.f32 %v34, %v38
  %v43 = vadd.f32 %v35, %v38
  %v44 = vmax.f32 %v40, 0.0
  %v45 = vmax.f32 %v41, 0.0
  %v46 = vmax.f32 %v42, 0.0
  %v47 = vmax.f32 %v43, 0.0
  %v48 = vpack.c.bf16 %v45, %v44
  %v49 = vpack.c.bf16 %v47, %v46
  %v50 = vld [vmem:[%s1] sm:$0xf]
  %v51 = vld [vmem:[%s1 + $0x4] sm:$0xf]
  %v52 = vld [vmem:[%s1 + $0x8] sm:$0xf]
  %v53 = vld [vmem:[%s1 + $0xc] sm:$0xf]
  %v54 = vld [vmem:[%s1 + $0x10] sm:$0xf]
  %v60 = vunpack.c.l.b16 %v50
  %v61 = vunpack.c.l.b16 %v51
  %v62 = vunpack.c.l.b16 %v52
  %v63 = vunpack.c.l.b16 %v53
  %v64 = vunpack.c.l.b16 %v54
  %v65 = vpack.c.b16 %v61, %v60
  %v66 = vpack.c.b16 %v63, %v62
  %v67 = vpack.c.b16 %v64, %v64
  %vm70 = vcmask 326656
  %v72 = vsel %vm70, %v48, 0
  %v75 = vsel %vm70, %v49, 0
  %vm77 = vcmask 1043456
  %v79 = vsel %vm77, %v67, 0
  %81 = vmatpush.bf16.msra.mxu0 0
  %82 = vmatpush.bf16.msra.mxu0 0
  %83 = vmatpush.bf16.msra.mxu0 0
  %84 = vmatpush.bf16.msra.mxu0 0
  %85 = vmatpush.bf16.msra.mxu0 0
  %86 = vmatpush.bf16.msra.mxu0 %v79
  %87 = vmatpush.bf16.msra.mxu0 %v66
  %88 = vmatpush.bf16.msra.mxu0 %v65
  %89 = vmatmul.bf16.gmra.mxu0 %v72
  %v90 = vpop.f32.mrf.mxu0
  %v91 = vadd.f32 0.0, %v90
  %v92 = vpop.f32.mrf.mxu0
  %v93 = vadd.f32 0.0, %v92
  %94 = vmatmul.bf16.gmra.mxu0 %v75
  %v95 = vpop.f32.mrf.mxu0
  %v96 = vadd.f32 0.0, %v95
  %v97 = vpop.f32.mrf.mxu0
  %v98 = vadd.f32 0.0, %v97
  %99 = vdwg.mxu0
  %v100 = vld [vmem:[%s4] sm:$0x1]
  %v102 = vperm.slane %v100, 0
  %v104 = vmul.f32 %v91, %v102
  %v105 = vmul.f32 %v93, %v102
  %v106 = vmul.f32 %v96, %v102
  %v107 = vmul.f32 %v98, %v102
  %v108 = vld [vmem:[%s5] sm:$0x1]
  %v110 = vperm.slane %v108, 0
  %v112 = vadd.f32 %v104, %v110
  %v113 = vadd.f32 %v105, %v110
  %v114 = vadd.f32 %v106, %v110
  %v115 = vadd.f32 %v107, %v110
  %v116 = vmax.f32 %v112, 0.0
  %v117 = vmax.f32 %v113, 0.0
  %v118 = vmax.f32 %v114, 0.0
  %v119 = vmax.f32 %v115, 0.0
  %v120 = vpack.c.bf16 %v116, %v116
  %v121 = vpack.c.bf16 %v117, %v117
  %v122 = vpack.c.bf16 %v118, %v118
  %v123 = vpack.c.bf16 %v119, %v119
  %124 = vst [vmem:[%s6] sm:$0xf] %v120
  %125 = vst [vmem:[%s6 + $0x4] sm:$0xf] %v121
  %126 = vst [vmem:[%s6 + $0x8] sm:$0xf] %v122
  %127 = vst [vmem:[%s6 + $0xc] sm:$0xf] %v123
  // Predicated region
  $region26: #{densenet_container_forward.22} parent=0 // pred_check
    _
  $region27: #{densenet_container_forward.22} parent=0 // pred_check_branch
    %129 = sbr.rel (0) target = $region29
  $region28: #{densenet_container_forward.22} parent=0 // pred_region
    _
  $region29: #{densenet_container_forward.22} parent=0 // pred_fallthru
    _
  // Predicated region
  $region30: #{densenet_container_forward.22} parent=0 // pred_check
    _
  $region31: #{densenet_container_forward.22} parent=0 // pred_check_branch
    %131 = sbr.rel (0) target = $region33
  $region32: #{densenet_container_forward.22} parent=0 // pred_region
    _
  $region33: #{densenet_container_forward.22} parent=0 // pred_fallthru
    _

// kernel: densenet_container_forward.17
$region0: #{densenet_container_forward.17}
  #allocation0 [shape = 'u32[]', space=smem, size = 0x4, offset = 0x4, fixed_abs, tag = 'smem constant byte address 0x4 - core index']
  #allocation1 [shape = 'u32[72,128]{1,0:T(1,128)}', space=vmem, size = 0x9000, scoped, tag = 'internal scratch']
  %s0 = inlined_call_operand.vmem [shape: bf16[2,10,10,128], index: 0, kind: input, shape index: {}]
  %s1 = inlined_call_operand.vmem [shape: bf16[1152,32], index: 1, kind: input, shape index: {}]
  %s2 = inlined_call_operand.vmem [shape: f32[2,8,8,32], index: 2, kind: output, shape index: {}]
  %s3 = sld [smem:[#allocation0]]
  $region41: #{densenet_container_forward.17} parent=0
    _
  %s5 = ssub.s32 1, %s3
  %s6 = scalar_select 0, %s5, %s3
  loop: start=0, step=1, limit=4
  $region2: #{densenet_container_forward.17} parent=0 // loop_pre_header
    _
  $region3: #{densenet_container_forward.17} parent=0 // loop_header
    %s8 = sphi 0, %s12
    %p9 = scmp.ge.s32.totalorder %s8, 4
    %s15 = sphi 0, %s27
    %s16 = sphi 0, %s23
    %s17 = sphi 0, %s15
    %s18 = sphi 0, %s16
    %s19 = sphi 0, %s17
    %s20 = sphi 0, %s18
    %s30 = sphi 0, %s32
    %s33 = sphi 0, %s30
    %s34 = sphi 0, %s33
    %s50 = sphi 0, %s34
    %s54 = sphi 0, %s54
    %s56 = sphi 0, %s54
    %s57 = sphi 0, %s56
    %s71 = sphi 0, %s57
    %s79 = sphi 0, %s81
    %s82 = sphi 0, %s79
    %s83 = sphi 0, %s82
    %s99 = sphi 0, %s83
  $region4: #{densenet_container_forward.17} parent=0 // loop_header_branch
    %11 = sbr.rel (%p9) target = $region8
  $region5: #{densenet_container_forward.17} parent=0 // loop_body
    %s13 = ssub.s32 %s8, 1
    %s14 = ssub.s32 %s8, 2
    %s21 = sadd.s32 1, %s16
    %p22 = scmp.ge.s32.totalorder %s21, 1
    %s23 = scalar_select %p22, 0, %s21
    %s24 = sadd.s32 1, %s15
    %s25 = scalar_select %p22, %s24, %s15
    %p26 = scmp.ge.s32.totalorder %s25, 2
    %s27 = scalar_select %p26, 0, %s25
    %s28 = ssub.s32 %s15, %s27
    %p29 = scmp.eq.s32.totalorder %s28, 0
    %s31 = sadd.s32 %s30, 1
    %s32 = scalar_select %p29, %s30, %s31
    %p35 = pneg %p29
    %p36 = scmp.eq.s32.totalorder %s8, 1
    %p37 = por %p35, %p36
    %p38 = scmp.ne.s32.totalorder %s30, %s33
    %p39 = scmp.eq.s32.totalorder %s8, 0
    %p40 = por %p38, %p39
    %p41 = scmp.ne.s32.totalorder %s30, %s33
    %p42 = scmp.eq.s32.totalorder %s13, 1
    %p43 = por %p41, %p42
    %p44 = scmp.ne.s32.totalorder %s33, %s34
    %p45 = scmp.eq.s32.totalorder %s13, 0
    %p46 = por %p44, %p45
    %p47 = scmp.ne.s32.totalorder %s33, %s34
    %p48 = scmp.eq.s32.totalorder %s14, 1
    %p49 = por %p47, %p48
    %p51 = scmp.ne.s32.totalorder %s34, %s50
    %p52 = scmp.eq.s32.totalorder %s14, 0
    %p53 = por %p51, %p52
    %s55 = sadd.s32 %s54, 1
    %p58 = scmp.eq.s32.totalorder %s8, 1
    %p59 = scmp.ne.s32.totalorder %s54, %s56
    %p60 = scmp.eq.s32.totalorder %s8, 0
    %p61 = por %p59, %p60
    %p62 = scmp.ne.s32.totalorder %s54, %s56
    %p63 = scmp.eq.s32.totalorder %s13, 1
    %p64 = por %p62, %p63
    %p65 = scmp.ne.s32.totalorder %s56, %s57
    %p66 = scmp.eq.s32.totalorder %s13, 0
    %p67 = por %p65, %p66
    %p68 = scmp.ne.s32.totalorder %s56, %s57
    %p69 = scmp.eq.s32.totalorder %s14, 1
    %p70 = por %p68, %p69
    %p72 = scmp.ne.s32.totalorder %s57, %s71
    %p73 = scmp.eq.s32.totalorder %s14, 0
    %p74 = por %p72, %p73
    %s75 = ssub.s32 %s15, %s27
    %s76 = ssub.s32 %s16, %s23
    %s77 = sor.u32 %s75, %s76
    %p78 = scmp.eq.s32.totalorder %s77, 0
    %s80 = sadd.s32 %s79, 1
    %s81 = scalar_select %p78, %s79, %s80
    %p84 = pneg %p78
    %p85 = scmp.eq.s32.totalorder %s8, 1
    %p86 = por %p84, %p85
    %p87 = scmp.ne.s32.totalorder %s79, %s82
    %p88 = scmp.eq.s32.totalorder %s8, 0
    %p89 = por %p87, %p88
    %p90 = scmp.ne.s32.totalorder %s79, %s82
    %p91 = scmp.eq.s32.totalorder %s13, 1
    %p92 = por %p90, %p91
    %p93 = scmp.ne.s32.totalorder %s82, %s83
    %p94 = scmp.eq.s32.totalorder %s13, 0
    %p95 = por %p93, %p94
    %p96 = scmp.ne.s32.totalorder %s82, %s83
    %p97 = scmp.eq.s32.totalorder %s14, 1
    %p98 = por %p96, %p97
    %p100 = scmp.ne.s32.totalorder %s83, %s99
    %p101 = scmp.eq.s32.totalorder %s14, 0
    %p102 = por %p100, %p101
    %p103 = scmp.le.s32.totalorder 1, %s8
    %p104 = scmp.lt.s32.totalorder %s8, 3
    %p105 = pnand %p103, %p104
    %p106 = pneg %p105
    // Predicated region
    $region9: #{densenet_container_forward.17} parent=5 // pred_check
      _
    $region10: #{densenet_container_forward.17} parent=5 // pred_check_branch
      %108 = sbr.rel (%p105) target = $region12
    $region11: #{densenet_container_forward.17} parent=5 // pred_region
      %s109 = ssub.s32 %s8, 1
      // Predicated region
      $region13: #{densenet_container_forward.17} parent=11 // pred_check
        %p110 = pneg %p67
      $region14: #{densenet_container_forward.17} parent=11 // pred_check_branch
        %112 = sbr.rel (%p110) target = $region16
      $region15: #{densenet_container_forward.17} parent=11 // pred_region
        _
      $region16: #{densenet_container_forward.17} parent=11 // pred_fallthru
        _
    $region12: #{densenet_container_forward.17} parent=5 // pred_fallthru
      _
    %p113 = scmp.lt.s32.totalorder %s8, 2
    // Predicated region
    $region17: #{densenet_container_forward.17} parent=5 // pred_check
      %p114 = pneg %p113
    $region18: #{densenet_container_forward.17} parent=5 // pred_check_branch
      %116 = sbr.rel (%p114) target = $region20
    $region19: #{densenet_container_forward.17} parent=5 // pred_region
      // Predicated region
      $region21: #{densenet_container_forward.17} parent=19 // pred_check
        %p117 = pneg %p40
      $region22: #{densenet_container_forward.17} parent=19 // pred_check_branch
        %119 = sbr.rel (%p117) target = $region24
      $region23: #{densenet_container_forward.17} parent=19 // pred_region
        %p120 = scmp.lt.s32.totalorder %s15, 1
        %s121 = scalar_select %p120, %s15, 1
        %s122 = smul.addr %s121, 20
        %s123 = smul.addr %s122, 4
        %s124 = scalar_lea.vmem %s0, %s123
      $region24: #{densenet_container_forward.17} parent=19 // pred_fallthru
        _
    $region20: #{densenet_container_forward.17} parent=5 // pred_fallthru
      _
    %p125 = scmp.le.s32.totalorder 1, %s8
    %p126 = scmp.lt.s32.totalorder %s8, 3
    %p127 = pnand %p125, %p126
    %p128 = pneg %p127
    // Predicated region
    $region25: #{densenet_container_forward.17} parent=5 // pred_check
      _
    $region26: #{densenet_container_forward.17} parent=5 // pred_check_branch
      %130 = sbr.rel (%p127) target = $region28
    $region27: #{densenet_container_forward.17} parent=5 // pred_region
      %s131 = ssub.s32 %s8, 1
      %p132 = scmp.lt.s32.totalorder %s17, 1
      %s133 = scalar_select %p132, %s17, 1
      %s134 = smul.addr %s133, 20
      %s135 = smul.addr %s134, 4
      %s136 = scalar_lea.vmem %s0, %s135
      %p137 = pneg %p46
      %p138 = pneg %p43
      %p139 = pneg %p67
      %p140 = pneg %p64
      %p141 = pneg %p95
      %p142 = pneg %p92
      %s143 = smul.u32 8, %s18
      %p144 = scmp.lt.s32.totalorder %s17, 1
      %s145 = scalar_select %p144, %s17, 1
      %p146 = scmp.lt.s32.totalorder %s143, 7
      %s147 = scalar_select %p146, %s143, 7
      %s148 = smul.addr %s145, 8
      %s149 = sadd.s32 %s147, %s148
      %s150 = smul.addr %s149, 8
      %s151 = scalar_lea.vmem %s2, %s150
      %p152 = scmp.lt.s32.totalorder %s17, 1
      %s153 = scalar_select %p152, %s17, 1
      %s154 = smul.addr %s153, 20
      %s155 = smul.addr %s154, 4
      %s156 = scalar_lea.vmem %s0, %s155
      %s157 = smul.u32 8, %s18
      %p158 = scmp.lt.s32.totalorder %s17, 1
      %s159 = scalar_select %p158, %s17, 1
      %p160 = scmp.lt.s32.totalorder %s157, 7
      %s161 = scalar_select %p160, %s157, 7
      %s162 = smul.addr %s159, 8
      %s163 = sadd.s32 %s161, %s162
      %s164 = smul.addr %s163, 8
      %s165 = scalar_lea.vmem %s2, %s164
      %s166 = smul.u32 8, %s18
      %v167 = vld [vmem:[%s1] sm:$0xf]
      %v168 = vld [vmem:[%s1 + $0x4] sm:$0xf]
      %v169 = vld [vmem:[%s1 + $0x8] sm:$0xf]
      %v170 = vld [vmem:[%s1 + $0xc] sm:$0xf]
      %v171 = vld [vmem:[%s1 + $0x10] sm:$0xf]
      %v172 = vld [vmem:[%s1 + $0x14] sm:$0xf]
      %v173 = vld [vmem:[%s1 + $0x18] sm:$0xf]
      %v174 = vld [vmem:[%s1 + $0x1c] sm:$0xf]
      %v175 = vld [vmem:[%s1 + $0x20] sm:$0xf]
      %v176 = vld [vmem:[%s1 + $0x24] sm:$0xf]
      %v177 = vld [vmem:[%s1 + $0x28] sm:$0xf]
      %v178 = vld [vmem:[%s1 + $0x2c] sm:$0xf]
      %v179 = vld [vmem:[%s1 + $0x30] sm:$0xf]
      %v180 = vld [vmem:[%s1 + $0x34] sm:$0xf]
      %v181 = vld [vmem:[%s1 + $0x38] sm:$0xf]
      %v182 = vld [vmem:[%s1 + $0x3c] sm:$0xf]
      %v183 = vld [vmem:[%s1 + $0x40] sm:$0xf]
      %v184 = vld [vmem:[%s1 + $0x44] sm:$0xf]
      %v185 = vld [vmem:[%s1 + $0x48] sm:$0xf]
      %v186 = vld [vmem:[%s1 + $0x4c] sm:$0xf]
      %v187 = vld [vmem:[%s1 + $0x50] sm:$0xf]
      %v188 = vld [vmem:[%s1 + $0x54] sm:$0xf]
      %v189 = vld [vmem:[%s1 + $0x58] sm:$0xf]
      %v190 = vld [vmem:[%s1 + $0x5c] sm:$0xf]
      %v191 = vld [vmem:[%s1 + $0x60] sm:$0xf]
      %v192 = vld [vmem:[%s1 + $0x64] sm:$0xf]
      %v193 = vld [vmem:[%s1 + $0x68] sm:$0xf]
      %v194 = vld [vmem:[%s1 + $0x6c] sm:$0xf]
      %v195 = vld [vmem:[%s1 + $0x70] sm:$0xf]
      %v196 = vld [vmem:[%s1 + $0x74] sm:$0xf]
      %v197 = vld [vmem:[%s1 + $0x78] sm:$0xf]
      %v198 = vld [vmem:[%s1 + $0x7c] sm:$0xf]
      %v199 = vld [vmem:[%s1 + $0x80] sm:$0xf]
      %v200 = vld [vmem:[%s1 + $0x84] sm:$0xf]
      %v201 = vld [vmem:[%s1 + $0x88] sm:$0xf]
      %v202 = vld [vmem:[%s1 + $0x8c] sm:$0xf]
      %v203 = vld [vmem:[%s1 + $0x90] sm:$0xf]
      %v204 = vld [vmem:[%s1 + $0x94] sm:$0xf]
      %v205 = vld [vmem:[%s1 + $0x98] sm:$0xf]
      %v206 = vld [vmem:[%s1 + $0x9c] sm:$0xf]
      %v207 = vld [vmem:[%s1 + $0xa0] sm:$0xf]
      %v208 = vld [vmem:[%s1 + $0xa4] sm:$0xf]
      %v209 = vld [vmem:[%s1 + $0xa8] sm:$0xf]
      %v210 = vld [vmem:[%s1 + $0xac] sm:$0xf]
      %v211 = vld [vmem:[%s1 + $0xb0] sm:$0xf]
      %v212 = vld [vmem:[%s1 + $0xb4] sm:$0xf]
      %v213 = vld [vmem:[%s1 + $0xb8] sm:$0xf]
      %v214 = vld [vmem:[%s1 + $0xbc] sm:$0xf]
      %v215 = vld [vmem:[%s1 + $0xc0] sm:$0xf]
      %v216 = vld [vmem:[%s1 + $0xc4] sm:$0xf]
      %v217 = vld [vmem:[%s1 + $0xc8] sm:$0xf]
      %v218 = vld [vmem:[%s1 + $0xcc] sm:$0xf]
      %v219 = vld [vmem:[%s1 + $0xd0] sm:$0xf]
      %v220 = vld [vmem:[%s1 + $0xd4] sm:$0xf]
      %v221 = vld [vmem:[%s1 + $0xd8] sm:$0xf]
      %v222 = vld [vmem:[%s1 + $0xdc] sm:$0xf]
      %v223 = vld [vmem:[%s1 + $0xe0] sm:$0xf]
      %v224 = vld [vmem:[%s1 + $0xe4] sm:$0xf]
      %v225 = vld [vmem:[%s1 + $0xe8] sm:$0xf]
      %v226 = vld [vmem:[%s1 + $0xec] sm:$0xf]
      %v227 = vld [vmem:[%s1 + $0xf0] sm:$0xf]
      %v228 = vld [vmem:[%s1 + $0xf4] sm:$0xf]
      %v229 = vld [vmem:[%s1 + $0xf8] sm:$0xf]
      %v230 = vld [vmem:[%s1 + $0xfc] sm:$0xf]
      %v231 = vld [vmem:[%s1 + $0x100] sm:$0xf]
      %v232 = vld [vmem:[%s1 + $0x104] sm:$0xf]
      %v233 = vld [vmem:[%s1 + $0x108] sm:$0xf]
      %v234 = vld [vmem:[%s1 + $0x10c] sm:$0xf]
      %v235 = vld [vmem:[%s1 + $0x110] sm:$0xf]
      %v236 = vld [vmem:[%s1 + $0x114] sm:$0xf]
      %v237 = vld [vmem:[%s1 + $0x118] sm:$0xf]
      %v238 = vld [vmem:[%s1 + $0x11c] sm:$0xf]
      %v239 = vld [vmem:[%s1 + $0x120] sm:$0xf]
      %v240 = vld [vmem:[%s1 + $0x124] sm:$0xf]
      %v241 = vld [vmem:[%s1 + $0x128] sm:$0xf]
      %v242 = vld [vmem:[%s1 + $0x12c] sm:$0xf]
      %v243 = vld [vmem:[%s1 + $0x130] sm:$0xf]
      %v244 = vld [vmem:[%s1 + $0x134] sm:$0xf]
      %v245 = vld [vmem:[%s1 + $0x138] sm:$0xf]
      %v246 = vld [vmem:[%s1 + $0x13c] sm:$0xf]
      %v247 = vld [vmem:[%s1 + $0x140] sm:$0xf]
      %v248 = vld [vmem:[%s1 + $0x144] sm:$0xf]
      %v249 = vld [vmem:[%s1 + $0x148] sm:$0xf]
      %v250 = vld [vmem:[%s1 + $0x14c] sm:$0xf]
      %v251 = vld [vmem:[%s1 + $0x150] sm:$0xf]
      %v252 = vld [vmem:[%s1 + $0x154] sm:$0xf]
      %v253 = vld [vmem:[%s1 + $0x158] sm:$0xf]
      %v254 = vld [vmem:[%s1 + $0x15c] sm:$0xf]
      %v255 = vld [vmem:[%s1 + $0x160] sm:$0xf]
      %v256 = vld [vmem:[%s1 + $0x164] sm:$0xf]
      %v257 = vld [vmem:[%s1 + $0x168] sm:$0xf]
      %v258 = vld [vmem:[%s1 + $0x16c] sm:$0xf]
      %v259 = vld [vmem:[%s1 + $0x170] sm:$0xf]
      %v260 = vld [vmem:[%s1 + $0x174] sm:$0xf]
      %v261 = vld [vmem:[%s1 + $0x178] sm:$0xf]
      %v262 = vld [vmem:[%s1 + $0x17c] sm:$0xf]
      %v263 = vld [vmem:[%s1 + $0x180] sm:$0xf]
      %v264 = vld [vmem:[%s1 + $0x184] sm:$0xf]
      %v265 = vld [vmem:[%s1 + $0x188] sm:$0xf]
      %v266 = vld [vmem:[%s1 + $0x18c] sm:$0xf]
      %v267 = vld [vmem:[%s1 + $0x190] sm:$0xf]
      %v268 = vld [vmem:[%s1 + $0x194] sm:$0xf]
      %v269 = vld [vmem:[%s1 + $0x198] sm:$0xf]
      %v270 = vld [vmem:[%s1 + $0x19c] sm:$0xf]
      %v271 = vld [vmem:[%s1 + $0x1a0] sm:$0xf]
      %v272 = vld [vmem:[%s1 + $0x1a4] sm:$0xf]
      %v273 = vld [vmem:[%s1 + $0x1a8] sm:$0xf]
      %v274 = vld [vmem:[%s1 + $0x1ac] sm:$0xf]
      %v275 = vld [vmem:[%s1 + $0x1b0] sm:$0xf]
      %v276 = vld [vmem:[%s1 + $0x1b4] sm:$0xf]
      %v277 = vld [vmem:[%s1 + $0x1b8] sm:$0xf]
      %v278 = vld [vmem:[%s1 + $0x1bc] sm:$0xf]
      %v279 = vld [vmem:[%s1 + $0x1c0] sm:$0xf]
      %v280 = vld [vmem:[%s1 + $0x1c4] sm:$0xf]
      %v281 = vld [vmem:[%s1 + $0x1c8] sm:$0xf]
      %v282 = vld [vmem:[%s1 + $0x1cc] sm:$0xf]
      %v283 = vld [vmem:[%s1 + $0x1d0] sm:$0xf]
      %v284 = vld [vmem:[%s1 + $0x1d4] sm:$0xf]
      %v285 = vld [vmem:[%s1 + $0x1d8] sm:$0xf]
      %v286 = vld [vmem:[%s1 + $0x1dc] sm:$0xf]
      %v287 = vld [vmem:[%s1 + $0x1e0] sm:$0xf]
      %v288 = vld [vmem:[%s1 + $0x1e4] sm:$0xf]
      %v289 = vld [vmem:[%s1 + $0x1e8] sm:$0xf]
      %v290 = vld [vmem:[%s1 + $0x1ec] sm:$0xf]
      %v291 = vld [vmem:[%s1 + $0x1f0] sm:$0xf]
      %v292 = vld [vmem:[%s1 + $0x1f4] sm:$0xf]
      %v293 = vld [vmem:[%s1 + $0x1f8] sm:$0xf]
      %v294 = vld [vmem:[%s1 + $0x1fc] sm:$0xf]
      %v295 = vld [vmem:[%s1 + $0x200] sm:$0xf]
      %v296 = vld [vmem:[%s1 + $0x204] sm:$0xf]
      %v297 = vld [vmem:[%s1 + $0x208] sm:$0xf]
      %v298 = vld [vmem:[%s1 + $0x20c] sm:$0xf]
      %v299 = vld [vmem:[%s1 + $0x210] sm:$0xf]
      %v300 = vld [vmem:[%s1 + $0x214] sm:$0xf]
      %v301 = vld [vmem:[%s1 + $0x218] sm:$0xf]
      %v302 = vld [vmem:[%s1 + $0x21c] sm:$0xf]
      %v303 = vld [vmem:[%s1 + $0x220] sm:$0xf]
      %v304 = vld [vmem:[%s1 + $0x224] sm:$0xf]
      %v305 = vld [vmem:[%s1 + $0x228] sm:$0xf]
      %v306 = vld [vmem:[%s1 + $0x22c] sm:$0xf]
      %v307 = vld [vmem:[%s1 + $0x230] sm:$0xf]
      %v308 = vld [vmem:[%s1 + $0x234] sm:$0xf]
      %v309 = vld [vmem:[%s1 + $0x238] sm:$0xf]
      %v310 = vld [vmem:[%s1 + $0x23c] sm:$0xf]
      %s311 = smul.u32 %s18, 8
      %s312 = smul.u32 %s311, 2
      %s313 = smul.addr %s312, 4
      %s314 = scalar_lea.vmem %s156, %s313
      %v315 = vld [vmem:[%s314] sm:$0xf]
      %v316 = vld [vmem:[%s314 + $0x4] sm:$0x1]
      %s317 = sadd.s32 %s311, 1
      %s318 = smul.u32 %s317, 2
      %s319 = smul.addr %s318, 4
      %s320 = scalar_lea.vmem %s156, %s319
      %v321 = vld [vmem:[%s320] sm:$0xf]
      %v322 = vld [vmem:[%s320 + $0x4] sm:$0x1]
      %s323 = sadd.s32 %s311, 2
      %s324 = smul.u32 %s323, 2
      %s325 = smul.addr %s324, 4
      %s326 = scalar_lea.vmem %s156, %s325
      %v327 = vld [vmem:[%s326] sm:$0xf]
      %v328 = vld [vmem:[%s326 + $0x4] sm:$0x1]
      %v331 = vunpack.c.l.b16 %v315
      %v332 = vunpack.c.l.b16 %v316
      %v333 = vpack.c.b16 %v332, %v331
      %v335 = vshrl.u32 %v333, 16
      %v337 = vshll.u32 %v333, 16
      %v339 = vrot.slane %v337, 1
      %v340 = vor.u32 %v335, %v339
      %v342 = vrot.slane %v333, 1
      %v346 = vunpack.c.l.b16 %v321
      %v347 = vunpack.c.l.b16 %v322
      %v348 = vpack.c.b16 %v347, %v346
      %v350 = vshrl.u32 %v348, 16
      %v352 = vshll.u32 %v348, 16
      %v354 = vrot.slane %v352, 1
      %v355 = vor.u32 %v350, %v354
      %v357 = vrot.slane %v348, 1
      %v361 = vunpack.c.l.b16 %v327
      %v362 = vunpack.c.l.b16 %v328
      %v363 = vpack.c.b16 %v362, %v361
      %v365 = vshrl.u32 %v363, 16
      %v367 = vshll.u32 %v363, 16
      %v369 = vrot.slane %v367, 1
      %v370 = vor.u32 %v365, %v369
      %v372 = vrot.slane %v363, 1
      %v518 = vunpack.c.l.b16 %v167
      %v519 = vunpack.c.l.b16 %v168
      %v520 = vunpack.c.l.b16 %v169
      %v521 = vunpack.c.l.b16 %v170
      %v522 = vunpack.c.l.b16 %v171
      %v523 = vunpack.c.l.b16 %v172
      %v524 = vunpack.c.l.b16 %v173
      %v525 = vunpack.c.l.b16 %v174
      %v526 = vunpack.c.l.b16 %v175
      %v527 = vunpack.c.l.b16 %v176
      %v528 = vunpack.c.l.b16 %v177
      %v529 = vunpack.c.l.b16 %v178
      %v530 = vunpack.c.l.b16 %v179
      %v531 = vunpack.c.l.b16 %v180
      %v532 = vunpack.c.l.b16 %v181
      %v533 = vunpack.c.l.b16 %v182
      %v534 = vunpack.c.l.b16 %v183
      %v535 = vunpack.c.l.b16 %v184
      %v536 = vunpack.c.l.b16 %v185
      %v537 = vunpack.c.l.b16 %v186
      %v538 = vunpack.c.l.b16 %v187
      %v539 = vunpack.c.l.b16 %v188
      %v540 = vunpack.c.l.b16 %v189
      %v541 = vunpack.c.l.b16 %v190
      %v542 = vunpack.c.l.b16 %v191
      %v543 = vunpack.c.l.b16 %v192
      %v544 = vunpack.c.l.b16 %v193
      %v545 = vunpack.c.l.b16 %v194
      %v546 = vunpack.c.l.b16 %v195
      %v547 = vunpack.c.l.b16 %v196
      %v548 = vunpack.c.l.b16 %v197
      %v549 = vunpack.c.l.b16 %v198
      %v550 = vunpack.c.l.b16 %v199
      %v551 = vunpack.c.l.b16 %v200
      %v552 = vunpack.c.l.b16 %v201
      %v553 = vunpack.c.l.b16 %v202
      %v554 = vunpack.c.l.b16 %v203
      %v555 = vunpack.c.l.b16 %v204
      %v556 = vunpack.c.l.b16 %v205
      %v557 = vunpack.c.l.b16 %v206
      %v558 = vunpack.c.l.b16 %v207
      %v559 = vunpack.c.l.b16 %v208
      %v560 = vunpack.c.l.b16 %v209
      %v561 = vunpack.c.l.b16 %v210
      %v562 = vunpack.c.l.b16 %v211
      %v563 = vunpack.c.l.b16 %v212
      %v564 = vunpack.c.l.b16 %v213
      %v565 = vunpack.c.l.b16 %v214
      %v566 = vunpack.c.l.b16 %v215
      %v567 = vunpack.c.l.b16 %v216
      %v568 = vunpack.c.l.b16 %v217
      %v569 = vunpack.c.l.b16 %v218
      %v570 = vunpack.c.l.b16 %v219
      %v571 = vunpack.c.l.b16 %v220
      %v572 = vunpack.c.l.b16 %v221
      %v573 = vunpack.c.l.b16 %v222
      %v574 = vunpack.c.l.b16 %v223
      %v575 = vunpack.c.l.b16 %v224
      %v576 = vunpack.c.l.b16 %v225
      %v577 = vunpack.c.l.b16 %v226
      %v578 = vunpack.c.l.b16 %v227
      %v579 = vunpack.c.l.b16 %v228
      %v580 = vunpack.c.l.b16 %v229
      %v581 = vunpack.c.l.b16 %v230
      %v582 = vunpack.c.l.b16 %v231
      %v583 = vunpack.c.l.b16 %v232
      %v584 = vunpack.c.l.b16 %v233
      %v585 = vunpack.c.l.b16 %v234
      %v586 = vunpack.c.l.b16 %v235
      %v587 = vunpack.c.l.b16 %v236
      %v588 = vunpack.c.l.b16 %v237
      %v589 = vunpack.c.l.b16 %v238
      %v590 = vunpack.c.l.b16 %v239
      %v591 = vunpack.c.l.b16 %v240
      %v592 = vunpack.c.l.b16 %v241
      %v593 = vunpack.c.l.b16 %v242
      %v594 = vunpack.c.l.b16 %v243
      %v595 = vunpack.c.l.b16 %v244
      %v596 = vunpack.c.l.b16 %v245
      %v597 = vunpack.c.l.b16 %v246
      %v598 = vunpack.c.l.b16 %v247
      %v599 = vunpack.c.l.b16 %v248
      %v600 = vunpack.c.l.b16 %v249
      %v601 = vunpack.c.l.b16 %v250
      %v602 = vunpack.c.l.b16 %v251
      %v603 = vunpack.c.l.b16 %v252
      %v604 = vunpack.c.l.b16 %v253
      %v605 = vunpack.c.l.b16 %v254
      %v606 = vunpack.c.l.b16 %v255
      %v607 = vunpack.c.l.b16 %v256
      %v608 = vunpack.c.l.b16 %v257
      %v609 = vunpack.c.l.b16 %v258
      %v610 = vunpack.c.l.b16 %v259
      %v611 = vunpack.c.l.b16 %v260
      %v612 = vunpack.c.l.b16 %v261
      %v613 = vunpack.c.l.b16 %v262
      %v614 = vunpack.c.l.b16 %v263
      %v615 = vunpack.c.l.b16 %v264
      %v616 = vunpack.c.l.b16 %v265
      %v617 = vunpack.c.l.b16 %v266
      %v618 = vunpack.c.l.b16 %v267
      %v619 = vunpack.c.l.b16 %v268
      %v620 = vunpack.c.l.b16 %v269
      %v621 = vunpack.c.l.b16 %v270
      %v622 = vunpack.c.l.b16 %v271
      %v623 = vunpack.c.l.b16 %v272
      %v624 = vunpack.c.l.b16 %v273
      %v625 = vunpack.c.l.b16 %v274
      %v626 = vunpack.c.l.b16 %v275
      %v627 = vunpack.c.l.b16 %v276
      %v628 = vunpack.c.l.b16 %v277
      %v629 = vunpack.c.l.b16 %v278
      %v630 = vunpack.c.l.b16 %v279
      %v631 = vunpack.c.l.b16 %v280
      %v632 = vunpack.c.l.b16 %v281
      %v633 = vunpack.c.l.b16 %v282
      %v634 = vunpack.c.l.b16 %v283
      %v635 = vunpack.c.l.b16 %v284
      %v636 = vunpack.c.l.b16 %v285
      %v637 = vunpack.c.l.b16 %v286
      %v638 = vunpack.c.l.b16 %v287
      %v639 = vunpack.c.l.b16 %v288
      %v640 = vunpack.c.l.b16 %v289
      %v641 = vunpack.c.l.b16 %v290
      %v642 = vunpack.c.l.b16 %v291
      %v643 = vunpack.c.l.b16 %v292
      %v644 = vunpack.c.l.b16 %v293
      %v645 = vunpack.c.l.b16 %v294
      %v646 = vunpack.c.l.b16 %v295
      %v647 = vunpack.c.l.b16 %v296
      %v648 = vunpack.c.l.b16 %v297
      %v649 = vunpack.c.l.b16 %v298
      %v650 = vunpack.c.l.b16 %v299
      %v651 = vunpack.c.l.b16 %v300
      %v652 = vunpack.c.l.b16 %v301
      %v653 = vunpack.c.l.b16 %v302
      %v654 = vunpack.c.l.b16 %v303
      %v655 = vunpack.c.l.b16 %v304
      %v656 = vunpack.c.l.b16 %v305
      %v657 = vunpack.c.l.b16 %v306
      %v658 = vunpack.c.l.b16 %v307
      %v659 = vunpack.c.l.b16 %v308
      %v660 = vunpack.c.l.b16 %v309
      %v661 = vunpack.c.l.b16 %v310
      %v662 = vpack.c.b16 %v519, %v518
      %v663 = vpack.c.b16 %v521, %v520
      %v664 = vpack.c.b16 %v523, %v522
      %v665 = vpack.c.b16 %v525, %v524
      %v666 = vpack.c.b16 %v527, %v526
      %v667 = vpack.c.b16 %v529, %v528
      %v668 = vpack.c.b16 %v531, %v530
      %v669 = vpack.c.b16 %v533, %v532
      %v670 = vpack.c.b16 %v535, %v534
      %v671 = vpack.c.b16 %v537, %v536
      %v672 = vpack.c.b16 %v539, %v538
      %v673 = vpack.c.b16 %v541, %v540
      %v674 = vpack.c.b16 %v543, %v542
      %v675 = vpack.c.b16 %v545, %v544
      %v676 = vpack.c.b16 %v547, %v546
      %v677 = vpack.c.b16 %v549, %v548
      %v678 = vpack.c.b16 %v551, %v550
      %v679 = vpack.c.b16 %v553, %v552
      %v680 = vpack.c.b16 %v555, %v554
      %v681 = vpack.c.b16 %v557, %v556
      %v682 = vpack.c.b16 %v559, %v558
      %v683 = vpack.c.b16 %v561, %v560
      %v684 = vpack.c.b16 %v563, %v562
      %v685 = vpack.c.b16 %v565, %v564
      %v686 = vpack.c.b16 %v567, %v566
      %v687 = vpack.c.b16 %v569, %v568
      %v688 = vpack.c.b16 %v571, %v570
      %v689 = vpack.c.b16 %v573, %v572
      %v690 = vpack.c.b16 %v575, %v574
      %v691 = vpack.c.b16 %v577, %v576
      %v692 = vpack.c.b16 %v579, %v578
      %v693 = vpack.c.b16 %v581, %v580
      %v694 = vpack.c.b16 %v583, %v582
      %v695 = vpack.c.b16 %v585, %v584
      %v696 = vpack.c.b16 %v587, %v586
      %v697 = vpack.c.b16 %v589, %v588
      %v698 = vpack.c.b16 %v591, %v590
      %v699 = vpack.c.b16 %v593, %v592
      %v700 = vpack.c.b16 %v595, %v594
      %v701 = vpack.c.b16 %v597, %v596
      %v702 = vpack.c.b16 %v599, %v598
      %v703 = vpack.c.b16 %v601, %v600
      %v704 = vpack.c.b16 %v603, %v602
      %v705 = vpack.c.b16 %v605, %v604
      %v706 = vpack.c.b16 %v607, %v606
      %v707 = vpack.c.b16 %v609, %v608
      %v708 = vpack.c.b16 %v611, %v610
      %v709 = vpack.c.b16 %v613, %v612
      %v710 = vpack.c.b16 %v615, %v614
      %v711 = vpack.c.b16 %v617, %v616
      %v712 = vpack.c.b16 %v619, %v618
      %v713 = vpack.c.b16 %v621, %v620
      %v714 = vpack.c.b16 %v623, %v622
      %v715 = vpack.c.b16 %v625, %v624
      %v716 = vpack.c.b16 %v627, %v626
      %v717 = vpack.c.b16 %v629, %v628
      %v718 = vpack.c.b16 %v631, %v630
      %v719 = vpack.c.b16 %v633, %v632
      %v720 = vpack.c.b16 %v635, %v634
      %v721 = vpack.c.b16 %v637, %v636
      %v722 = vpack.c.b16 %v639, %v638
      %v723 = vpack.c.b16 %v641, %v640
      %v724 = vpack.c.b16 %v643, %v642
      %v725 = vpack.c.b16 %v645, %v644
      %v726 = vpack.c.b16 %v647, %v646
      %v727 = vpack.c.b16 %v649, %v648
      %v728 = vpack.c.b16 %v651, %v650
      %v729 = vpack.c.b16 %v653, %v652
      %v730 = vpack.c.b16 %v655, %v654
      %v731 = vpack.c.b16 %v657, %v656
      %v732 = vpack.c.b16 %v659, %v658
      %v733 = vpack.c.b16 %v661, %v660
      %806 = vmatpush.bf16.msra.mxu0 %v669
      %807 = vmatpush.bf16.msra.mxu0 %v668
      %808 = vmatpush.bf16.msra.mxu0 %v667
      %809 = vmatpush.bf16.msra.mxu0 %v666
      %810 = vmatpush.bf16.msra.mxu0 %v665
      %811 = vmatpush.bf16.msra.mxu0 %v664
      %812 = vmatpush.bf16.msra.mxu0 %v663
      %813 = vmatpush.bf16.msra.mxu0 %v662
      %814 = vmatmul.bf16.gmra.mxu0 %v315
      %v815 = vpop.f32.mrf.mxu0
      %v816 = vadd.f32 0.0, %v815
      %v817 = vpop.f32.mrf.mxu0
      %818 = vdwg.mxu0
      %819 = vmatpush.bf16.msra.mxu0 %v677
      %820 = vmatpush.bf16.msra.mxu0 %v676
      %821 = vmatpush.bf16.msra.mxu0 %v675
      %822 = vmatpush.bf16.msra.mxu0 %v674
      %823 = vmatpush.bf16.msra.mxu0 %v673
      %824 = vmatpush.bf16.msra.mxu0 %v672
      %825 = vmatpush.bf16.msra.mxu0 %v671
      %826 = vmatpush.bf16.msra.mxu0 %v670
      %827 = vmatmul.bf16.gmra.mxu0 %v340
      %v828 = vpop.f32.mrf.mxu0
      %v829 = vadd.f32 %v816, %v828
      %v830 = vpop.f32.mrf.mxu0
      %831 = vdwg.mxu0
      %832 = vmatpush.bf16.msra.mxu0 %v685
      %833 = vmatpush.bf16.msra.mxu0 %v684
      %834 = vmatpush.bf16.msra.mxu0 %v683
      %835 = vmatpush.bf16.msra.mxu0 %v682
      %836 = vmatpush.bf16.msra.mxu0 %v681
      %837 = vmatpush.bf16.msra.mxu0 %v680
      %838 = vmatpush.bf16.msra.mxu0 %v679
      %839 = vmatpush.bf16.msra.mxu0 %v678
      %840 = vmatmul.bf16.gmra.mxu0 %v342
      %v841 = vpop.f32.mrf.mxu0
      %v842 = vadd.f32 %v829, %v841
      %v843 = vpop.f32.mrf.mxu0
      %844 = vdwg.mxu0
      %845 = vmatpush.bf16.msra.mxu0 %v693
      %846 = vmatpush.bf16.msra.mxu0 %v692
      %847 = vmatpush.bf16.msra.mxu0 %v691
      %848 = vmatpush.bf16.msra.mxu0 %v690
      %849 = vmatpush.bf16.msra.mxu0 %v689
      %850 = vmatpush.bf16.msra.mxu0 %v688
      %851 = vmatpush.bf16.msra.mxu0 %v687
      %852 = vmatpush.bf16.msra.mxu0 %v686
      %853 = vmatmul.bf16.gmra.mxu0 %v321
      %v854 = vpop.f32.mrf.mxu0
      %v855 = vadd.f32 %v842, %v854
      %v856 = vpop.f32.mrf.mxu0
      %857 = vdwg.mxu0
      %858 = vmatpush.bf16.msra.mxu0 %v701
      %859 = vmatpush.bf16.msra.mxu0 %v700
      %860 = vmatpush.bf16.msra.mxu0 %v699
      %861 = vmatpush.bf16.msra.mxu0 %v698
      %862 = vmatpush.bf16.msra.mxu0 %v697
      %863 = vmatpush.bf16.msra.mxu0 %v696
      %864 = vmatpush.bf16.msra.mxu0 %v695
      %865 = vmatpush.bf16.msra.mxu0 %v694
      %866 = vmatmul.bf16.gmra.mxu0 %v355
      %v867 = vpop.f32.mrf.mxu0
      %v868 = vadd.f32 %v855, %v867
      %v869 = vpop.f32.mrf.mxu0
      %870 = vdwg.mxu0
      %871 = vmatpush.bf16.msra.mxu0 %v709
      %872 = vmatpush.bf16.msra.mxu0 %v708
      %873 = vmatpush.bf16.msra.mxu0 %v707
      %874 = vmatpush.bf16.msra.mxu0 %v706
      %875 = vmatpush.bf16.msra.mxu0 %v705
      %876 = vmatpush.bf16.msra.mxu0 %v704
      %877 = vmatpush.bf16.msra.mxu0 %v703
      %878 = vmatpush.bf16.msra.mxu0 %v702
      %879 = vmatmul.bf16.gmra.mxu0 %v357
      %v880 = vpop.f32.mrf.mxu0
      %v881 = vadd.f32 %v868, %v880
      %v882 = vpop.f32.mrf.mxu0
      %883 = vdwg.mxu0
      %884 = vmatpush.bf16.msra.mxu0 %v717
      %885 = vmatpush.bf16.msra.mxu0 %v716
      %886 = vmatpush.bf16.msra.mxu0 %v715
      %887 = vmatpush.bf16.msra.mxu0 %v714
      %888 = vmatpush.bf16.msra.mxu0 %v713
      %889 = vmatpush.bf16.msra.mxu0 %v712
      %890 = vmatpush.bf16.msra.mxu0 %v711
      %891 = vmatpush.bf16.msra.mxu0 %v710
      %892 = vmatmul.bf16.gmra.mxu0 %v327
      %v893 = vpop.f32.mrf.mxu0
      %v894 = vadd.f32 %v881, %v893
      %v895 = vpop.f32.mrf.mxu0
      %896 = vdwg.mxu0
      %897 = vmatpush.bf16.msra.mxu0 %v725
      %898 = vmatpush.bf16.msra.mxu0 %v724
      %899 = vmatpush.bf16.msra.mxu0 %v723
      %900 = vmatpush.bf16.msra.mxu0 %v722
      %901 = vmatpush.bf16.msra.mxu0 %v721
      %902 = vmatpush.bf16.msra.mxu0 %v720
      %903 = vmatpush.bf16.msra.mxu0 %v719
      %904 = vmatpush.bf16.msra.mxu0 %v718
      %905 = vmatmul.bf16.gmra.mxu0 %v370
      %v906 = vpop.f32.mrf.mxu0
      %v907 = vadd.f32 %v894, %v906
      %v908 = vpop.f32.mrf.mxu0
      %909 = vdwg.mxu0
      %910 = vmatpush.bf16.msra.mxu0 %v733
      %911 = vmatpush.bf16.msra.mxu0 %v732
      %912 = vmatpush.bf16.msra.mxu0 %v731
      %913 = vmatpush.bf16.msra.mxu0 %v730
      %914 = vmatpush.bf16.msra.mxu0 %v729
      %915 = vmatpush.bf16.msra.mxu0 %v728
      %916 = vmatpush.bf16.msra.mxu0 %v727
      %917 = vmatpush.bf16.msra.mxu0 %v726
      %918 = vmatmul.bf16.gmra.mxu0 %v372
      %v919 = vpop.f32.mrf.mxu0
      %v920 = vadd.f32 %v907, %v919
      %v921 = vpop.f32.mrf.mxu0
      %922 = vdwg.mxu0
      %vm923 = vcmask 261120
      %924 = vst.msk [vmem:[%s165] sm:$0xff] %vm923, %v920
      %v925 = vld [vmem:[%s320] sm:$0xf]
      %v926 = vld [vmem:[%s320 + $0x4] sm:$0x1]
      %v927 = vld [vmem:[%s326] sm:$0xf]
      %v928 = vld [vmem:[%s326 + $0x4] sm:$0x1]
      %s929 = sadd.s32 %s311, 3
      %s930 = smul.u32 %s929, 2
      %s931 = smul.addr %s930, 4
      %s932 = scalar_lea.vmem %s156, %s931
      %v933 = vld [vmem:[%s932] sm:$0xf]
      %v934 = vld [vmem:[%s932 + $0x4] sm:$0x1]
      %v937 = vunpack.c.l.b16 %v925
      %v938 = vunpack.c.l.b16 %v926
      %v939 = vpack.c.b16 %v938, %v937
      %v941 = vshrl.u32 %v939, 16
      %v943 = vshll.u32 %v939, 16
      %v945 = vrot.slane %v943, 1
      %v946 = vor.u32 %v941, %v945
      %v948 = vrot.slane %v939, 1
      %v952 = vunpack.c.l.b16 %v927
      %v953 = vunpack.c.l.b16 %v928
      %v954 = vpack.c.b16 %v953, %v952
      %v956 = vshrl.u32 %v954, 16
      %v958 = vshll.u32 %v954, 16
      %v960 = vrot.slane %v958, 1
      %v961 = vor.u32 %v956, %v960
      %v963 = vrot.slane %v954, 1
      %v967 = vunpack.c.l.b16 %v933
      %v968 = vunpack.c.l.b16 %v934
      %v969 = vpack.c.b16 %v968, %v967
      %v971 = vshrl.u32 %v969, 16
      %v973 = vshll.u32 %v969, 16
      %v975 = vrot.slane %v973, 1
      %v976 = vor.u32 %v971, %v975
      %v978 = vrot.slane %v969, 1
      %980 = vmatpush.bf16.msra.mxu0 %v669
      %981 = vmatpush.bf16.msra.mxu0 %v668
      %982 = vmatpush.bf16.msra.mxu0 %v667
      %983 = vmatpush.bf16.msra.mxu0 %v666
      %984 = vmatpush.bf16.msra.mxu0 %v665
      %985 = vmatpush.bf16.msra.mxu0 %v664
      %986 = vmatpush.bf16.msra.mxu0 %v663
      %987 = vmatpush.bf16.msra.mxu0 %v662
      %988 = vmatmul.bf16.gmra.mxu0 %v925
      %v989 = vpop.f32.mrf.mxu0
      %v990 = vadd.f32 0.0, %v989
      %v991 = vpop.f32.mrf.mxu0
      %992 = vdwg.mxu0
      %993 = vmatpush.bf16.msra.mxu0 %v677
      %994 = vmatpush.bf16.msra.mxu0 %v676
      %995 = vmatpush.bf16.msra.mxu0 %v675
      %996 = vmatpush.bf16.msra.mxu0 %v674
      %997 = vmatpush.bf16.msra.mxu0 %v673
      %998 = vmatpush.bf16.msra.mxu0 %v672
      %999 = vmatpush.bf16.msra.mxu0 %v671
      %1000 = vmatpush.bf16.msra.mxu0 %v670
      %1001 = vmatmul.bf16.gmra.mxu0 %v946
      %v1002 = vpop.f32.mrf.mxu0
      %v1003 = vadd.f32 %v990, %v1002
      %v1004 = vpop.f32.mrf.mxu0
      %1005 = vdwg.mxu0
      %1006 = vmatpush.bf16.msra.mxu0 %v685
      %1007 = vmatpush.bf16.msra.mxu0 %v684
      %1008 = vmatpush.bf16.msra.mxu0 %v683
      %1009 = vmatpush.bf16.msra.mxu0 %v682
      %1010 = vmatpush.bf16.msra.mxu0 %v681
      %1011 = vmatpush.bf16.msra.mxu0 %v680
      %1012 = vmatpush.bf16.msra.mxu0 %v679
      %1013 = vmatpush.bf16.msra.mxu0 %v678
      %1014 = vmatmul.bf16.gmra.mxu0 %v948
      %v1015 = vpop.f32.mrf.mxu0
      %v1016 = vadd.f32 %v1003, %v1015
      %v1017 = vpop.f32.mrf.mxu0
      %1018 = vdwg.mxu0
      %1019 = vmatpush.bf16.msra.mxu0 %v693
      %1020 = vmatpush.bf16.msra.mxu0 %v692
      %1021 = vmatpush.bf16.msra.mxu0 %v691
      %1022 = vmatpush.bf16.msra.mxu0 %v690
      %1023 = vmatpush.bf16.msra.mxu0 %v689
      %1024 = vmatpush.bf16.msra.mxu0 %v688
      %1025 = vmatpush.bf16.msra.mxu0 %v687
      %1026 = vmatpush.bf16.msra.mxu0 %v686
      %1027 = vmatmul.bf16.gmra.mxu0 %v927
      %v1028 = vpop.f32.mrf.mxu0
      %v1029 = vadd.f32 %v1016, %v1028
      %v1030 = vpop.f32.mrf.mxu0
      %1031 = vdwg.mxu0
      %1032 = vmatpush.bf16.msra.mxu0 %v701
      %1033 = vmatpush.bf16.msra.mxu0 %v700
      %1034 = vmatpush.bf16.msra.mxu0 %v699
      %1035 = vmatpush.bf16.msra.mxu0 %v698
      %1036 = vmatpush.bf16.msra.mxu0 %v697
      %1037 = vmatpush.bf16.msra.mxu0 %v696
      %1038 = vmatpush.bf16.msra.mxu0 %v695
      %1039 = vmatpush.bf16.msra.mxu0 %v694
      %1040 = vmatmul.bf16.gmra.mxu0 %v961
      %v1041 = vpop.f32.mrf.mxu0
      %v1042 = vadd.f32 %v1029, %v1041
      %v1043 = vpop.f32.mrf.mxu0
      %1044 = vdwg.mxu0
      %1045 = vmatpush.bf16.msra.mxu0 %v709
      %1046 = vmatpush.bf16.msra.mxu0 %v708
      %1047 = vmatpush.bf16.msra.mxu0 %v707
      %1048 = vmatpush.bf16.msra.mxu0 %v706
      %1049 = vmatpush.bf16.msra.mxu0 %v705
      %1050 = vmatpush.bf16.msra.mxu0 %v704
      %1051 = vmatpush.bf16.msra.mxu0 %v703
      %1052 = vmatpush.bf16.msra.mxu0 %v702
      %1053 = vmatmul.bf16.gmra.mxu0 %v963
      %v1054 = vpop.f32.mrf.mxu0
      %v1055 = vadd.f32 %v1042, %v1054
      %v1056 = vpop.f32.mrf.mxu0
      %1057 = vdwg.mxu0
      %1058 = vmatpush.bf16.msra.mxu0 %v717
      %1059 = vmatpush.bf16.msra.mxu0 %v716
      %1060 = vmatpush.bf16.msra.mxu0 %v715
      %1061 = vmatpush.bf16.msra.mxu0 %v714
      %1062 = vmatpush.bf16.msra.mxu0 %v713
      %1063 = vmatpush.bf16.msra.mxu0 %v712
      %1064 = vmatpush.bf16.msra.mxu0 %v711
      %1065 = vmatpush.bf16.msra.mxu0 %v710
      %1066 = vmatmul.bf16.gmra.mxu0 %v933
      %v1067 = vpop.f32.mrf.mxu0
      %v1068 = vadd.f32 %v1055, %v1067
      %v1069 = vpop.f32.mrf.mxu0
      %1070 = vdwg.mxu0
      %1071 = vmatpush.bf16.msra.mxu0 %v725
      %1072 = vmatpush.bf16.msra.mxu0 %v724
      %1073 = vmatpush.bf16.msra.mxu0 %v723
      %1074 = vmatpush.bf16.msra.mxu0 %v722
      %1075 = vmatpush.bf16.msra.mxu0 %v721
      %1076 = vmatpush.bf16.msra.mxu0 %v720
      %1077 = vmatpush.bf16.msra.mxu0 %v719
      %1078 = vmatpush.bf16.msra.mxu0 %v718
      %1079 = vmatmul.bf16.gmra.mxu0 %v976
      %v1080 = vpop.f32.mrf.mxu0
      %v1081 = vadd.f32 %v1068, %v1080
      %v1082 = vpop.f32.mrf.mxu0
      %1083 = vdwg.mxu0
      %1084 = vmatpush.bf16.msra.mxu0 %v733
      %1085 = vmatpush.bf16.msra.mxu0 %v732
      %1086 = vmatpush.bf16.msra.mxu0 %v731
      %1087 = vmatpush.bf16.msra.mxu0 %v730
      %1088 = vmatpush.bf16.msra.mxu0 %v729
      %1089 = vmatpush.bf16.msra.mxu0 %v728
      %1090 = vmatpush.bf16.msra.mxu0 %v727
      %1091 = vmatpush.bf16.msra.mxu0 %v726
      %1092 = vmatmul.bf16.gmra.mxu0 %v978
      %v1093 = vpop.f32.mrf.mxu0
      %v1094 = vadd.f32 %v1081, %v1093
      %v1095 = vpop.f32.mrf.mxu0
      %1096 = vdwg.mxu0
      %s1097 = scalar_lea.vmem %s165, 8
      %1098 = vst.msk [vmem:[%s1097] sm:$0xff] %vm923, %v1094
      %v1099 = vld [vmem:[%s326] sm:$0xf]
      %v1100 = vld [vmem:[%s326 + $0x4] sm:$0x1]
      %v1101 = vld [vmem:[%s932] sm:$0xf]
      %v1102 = vld [vmem:[%s932 + $0x4] sm:$0x1]
      %s1103 = sadd.s32 %s311, 4
      %s1104 = smul.u32 %s1103, 2
      %s1105 = smul.addr %s1104, 4
      %s1106 = scalar_lea.vmem %s156, %s1105
      %v1107 = vld [vmem:[%s1106] sm:$0xf]
      %v1108 = vld [vmem:[%s1106 + $0x4] sm:$0x1]
      %v1111 = vunpack.c.l.b16 %v1099
      %v1112 = vunpack.c.l.b16 %v1100
      %v1113 = vpack.c.b16 %v1112, %v1111
      %v1115 = vshrl.u32 %v1113, 16
      %v1117 = vshll.u32 %v1113, 16
      %v1119 = vrot.slane %v1117, 1
      %v1120 = vor.u32 %v1115, %v1119
      %v1122 = vrot.slane %v1113, 1
      %v1126 = vunpack.c.l.b16 %v1101
      %v1127 = vunpack.c.l.b16 %v1102
      %v1128 = vpack.c.b16 %v1127, %v1126
      %v1130 = vshrl.u32 %v1128, 16
      %v1132 = vshll.u32 %v1128, 16
      %v1134 = vrot.slane %v1132, 1
      %v1135 = vor.u32 %v1130, %v1134
      %v1137 = vrot.slane %v1128, 1
      %v1141 = vunpack.c.l.b16 %v1107
      %v1142 = vunpack.c.l.b16 %v1108
      %v1143 = vpack.c.b16 %v1142, %v1141
      %v1145 = vshrl.u32 %v1143, 16
      %v1147 = vshll.u32 %v1143, 16
      %v1149 = vrot.slane %v1147, 1
      %v1150 = vor.u32 %v1145, %v1149
      %v1152 = vrot.slane %v1143, 1
      %1154 = vmatpush.bf16.msra.mxu0 %v669
      %1155 = vmatpush.bf16.msra.mxu0 %v668
      %1156 = vmatpush.bf16.msra.mxu0 %v667
      %1157 = vmatpush.bf16.msra.mxu0 %v666
      %1158 = vmatpush.bf16.msra.mxu0 %v665
      %1159 = vmatpush.bf16.msra.mxu0 %v664
      %1160 = vmatpush.bf16.msra.mxu0 %v663
      %1161 = vmatpush.bf16.msra.mxu0 %v662
      %1162 = vmatmul.bf16.gmra.mxu0 %v1099
      %v1163 = vpop.f32.mrf.mxu0
      %v1164 = vadd.f32 0.0, %v1163
      %v1165 = vpop.f32.mrf.mxu0
      %1166 = vdwg.mxu0
      %1167 = vmatpush.bf16.msra.mxu0 %v677
      %1168 = vmatpush.bf16.msra.mxu0 %v676
      %1169 = vmatpush.bf16.msra.mxu0 %v675
      %1170 = vmatpush.bf16.msra.mxu0 %v674
      %1171 = vmatpush.bf16.msra.mxu0 %v673
      %1172 = vmatpush.bf16.msra.mxu0 %v672
      %1173 = vmatpush.bf16.msra.mxu0 %v671
      %1174 = vmatpush.bf16.msra.mxu0 %v670
      %1175 = vmatmul.bf16.gmra.mxu0 %v1120
      %v1176 = vpop.f32.mrf.mxu0
      %v1177 = vadd.f32 %v1164, %v1176
      %v1178 = vpop.f32.mrf.mxu0
      %1179 = vdwg.mxu0
      %1180 = vmatpush.bf16.msra.mxu0 %v685
      %1181 = vmatpush.bf16.msra.mxu0 %v684
      %1182 = vmatpush.bf16.msra.mxu0 %v683
      %1183 = vmatpush.bf16.msra.mxu0 %v682
      %1184 = vmatpush.bf16.msra.mxu0 %v681
      %1185 = vmatpush.bf16.msra.mxu0 %v680
      %1186 = vmatpush.bf16.msra.mxu0 %v679
      %1187 = vmatpush.bf16.msra.mxu0 %v678
      %1188 = vmatmul.bf16.gmra.mxu0 %v1122
      %v1189 = vpop.f32.mrf.mxu0
      %v1190 = vadd.f32 %v1177, %v1189
      %v1191 = vpop.f32.mrf.mxu0
      %1192 = vdwg.mxu0
      %1193 = vmatpush.bf16.msra.mxu0 %v693
      %1194 = vmatpush.bf16.msra.mxu0 %v692
      %1195 = vmatpush.bf16.msra.mxu0 %v691
      %1196 = vmatpush.bf16.msra.mxu0 %v690
      %1197 = vmatpush.bf16.msra.mxu0 %v689
      %1198 = vmatpush.bf16.msra.mxu0 %v688
      %1199 = vmatpush.bf16.msra.mxu0 %v687
      %1200 = vmatpush.bf16.msra.mxu0 %v686
      %1201 = vmatmul.bf16.gmra.mxu0 %v1101
      %v1202 = vpop.f32.mrf.mxu0
      %v1203 = vadd.f32 %v1190, %v1202
      %v1204 = vpop.f32.mrf.mxu0
      %1205 = vdwg.mxu0
      %1206 = vmatpush.bf16.msra.mxu0 %v701
      %1207 = vmatpush.bf16.msra.mxu0 %v700
      %1208 = vmatpush.bf16.msra.mxu0 %v699
      %1209 = vmatpush.bf16.msra.mxu0 %v698
      %1210 = vmatpush.bf16.msra.mxu0 %v697
      %1211 = vmatpush.bf16.msra.mxu0 %v696
      %1212 = vmatpush.bf16.msra.mxu0 %v695
      %1213 = vmatpush.bf16.msra.mxu0 %v694
      %1214 = vmatmul.bf16.gmra.mxu0 %v1135
      %v1215 = vpop.f32.mrf.mxu0
      %v1216 = vadd.f32 %v1203, %v1215
      %v1217 = vpop.f32.mrf.mxu0
      %1218 = vdwg.mxu0
      %1219 = vmatpush.bf16.msra.mxu0 %v709
      %1220 = vmatpush.bf16.msra.mxu0 %v708
      %1221 = vmatpush.bf16.msra.mxu0 %v707
      %1222 = vmatpush.bf16.msra.mxu0 %v706
      %1223 = vmatpush.bf16.msra.mxu0 %v705
      %1224 = vmatpush.bf16.msra.mxu0 %v704
      %1225 = vmatpush.bf16.msra.mxu0 %v703
      %1226 = vmatpush.bf16.msra.mxu0 %v702
      %1227 = vmatmul.bf16.gmra.mxu0 %v1137
      %v1228 = vpop.f32.mrf.mxu0
      %v1229 = vadd.f32 %v1216, %v1228
      %v1230 = vpop.f32.mrf.mxu0
      %1231 = vdwg.mxu0
      %1232 = vmatpush.bf16.msra.mxu0 %v717
      %1233 = vmatpush.bf16.msra.mxu0 %v716
      %1234 = vmatpush.bf16.msra.mxu0 %v715
      %1235 = vmatpush.bf16.msra.mxu0 %v714
      %1236 = vmatpush.bf16.msra.mxu0 %v713
      %1237 = vmatpush.bf16.msra.mxu0 %v712
      %1238 = vmatpush.bf16.msra.mxu0 %v711
      %1239 = vmatpush.bf16.msra.mxu0 %v710
      %1240 = vmatmul.bf16.gmra.mxu0 %v1107
      %v1241 = vpop.f32.mrf.mxu0
      %v1242 = vadd.f32 %v1229, %v1241
      %v1243 = vpop.f32.mrf.mxu0
      %1244 = vdwg.mxu0
      %1245 = vmatpush.bf16.msra.mxu0 %v725
      %1246 = vmatpush.bf16.msra.mxu0 %v724
      %1247 = vmatpush.bf16.msra.mxu0 %v723
      %1248 = vmatpush.bf16.msra.mxu0 %v722
      %1249 = vmatpush.bf16.msra.mxu0 %v721
      %1250 = vmatpush.bf16.msra.mxu0 %v720
      %1251 = vmatpush.bf16.msra.mxu0 %v719
      %1252 = vmatpush.bf16.msra.mxu0 %v718
      %1253 = vmatmul.bf16.gmra.mxu0 %v1150
      %v1254 = vpop.f32.mrf.mxu0
      %v1255 = vadd.f32 %v1242, %v1254
      %v1256 = vpop.f32.mrf.mxu0
      %1257 = vdwg.mxu0
      %1258 = vmatpush.bf16.msra.mxu0 %v733
      %1259 = vmatpush.bf16.msra.mxu0 %v732
      %1260 = vmatpush.bf16.msra.mxu0 %v731
      %1261 = vmatpush.bf16.msra.mxu0 %v730
      %1262 = vmatpush.bf16.msra.mxu0 %v729
      %1263 = vmatpush.bf16.msra.mxu0 %v728
      %1264 = vmatpush.bf16.msra.mxu0 %v727
      %1265 = vmatpush.bf16.msra.mxu0 %v726
      %1266 = vmatmul.bf16.gmra.mxu0 %v1152
      %v1267 = vpop.f32.mrf.mxu0
      %v1268 = vadd.f32 %v1255, %v1267
      %v1269 = vpop.f32.mrf.mxu0
      %1270 = vdwg.mxu0
      %s1271 = scalar_lea.vmem %s165, 16
      %1272 = vst.msk [vmem:[%s1271] sm:$0xff] %vm923, %v1268
      %v1273 = vld [vmem:[%s932] sm:$0xf]
      %v1274 = vld [vmem:[%s932 + $0x4] sm:$0x1]
      %v1275 = vld [vmem:[%s1106] sm:$0xf]
      %v1276 = vld [vmem:[%s1106 + $0x4] sm:$0x1]
      %s1277 = sadd.s32 %s311, 5
      %s1278 = smul.u32 %s1277, 2
      %s1279 = smul.addr %s1278, 4
      %s1280 = scalar_lea.vmem %s156, %s1279
      %v1281 = vld [vmem:[%s1280] sm:$0xf]
      %v1282 = vld [vmem:[%s1280 + $0x4] sm:$0x1]
      %v1285 = vunpack.c.l.b16 %v1273
      %v1286 = vunpack.c.l.b16 %v1274
      %v1287 = vpack.c.b16 %v1286, %v1285
      %v1289 = vshrl.u32 %v1287, 16
      %v1291 = vshll.u32 %v1287, 16
      %v1293 = vrot.slane %v1291, 1
      %v1294 = vor.u32 %v1289, %v1293
      %v1296 = vrot.slane %v1287, 1
      %v1300 = vunpack.c.l.b16 %v1275
      %v1301 = vunpack.c.l.b16 %v1276
      %v1302 = vpack.c.b16 %v1301, %v1300
      %v1304 = vshrl.u32 %v1302, 16
      %v1306 = vshll.u32 %v1302, 16
      %v1308 = vrot.slane %v1306, 1
      %v1309 = vor.u32 %v1304, %v1308
      %v1311 = vrot.slane %v1302, 1
      %v1315 = vunpack.c.l.b16 %v1281
      %v1316 = vunpack.c.l.b16 %v1282
      %v1317 = vpack.c.b16 %v1316, %v1315
      %v1319 = vshrl.u32 %v1317, 16
      %v1321 = vshll.u32 %v1317, 16
      %v1323 = vrot.slane %v1321, 1
      %v1324 = vor.u32 %v1319, %v1323
      %v1326 = vrot.slane %v1317, 1
      %1328 = vmatpush.bf16.msra.mxu0 %v669
      %1329 = vmatpush.bf16.msra.mxu0 %v668
      %1330 = vmatpush.bf16.msra.mxu0 %v667
      %1331 = vmatpush.bf16.msra.mxu0 %v666
      %1332 = vmatpush.bf16.msra.mxu0 %v665
      %1333 = vmatpush.bf16.msra.mxu0 %v664
      %1334 = vmatpush.bf16.msra.mxu0 %v663
      %1335 = vmatpush.bf16.msra.mxu0 %v662
      %1336 = vmatmul.bf16.gmra.mxu0 %v1273
      %v1337 = vpop.f32.mrf.mxu0
      %v1338 = vadd.f32 0.0, %v1337
      %v1339 = vpop.f32.mrf.mxu0
      %1340 = vdwg.mxu0
      %1341 = vmatpush.bf16.msra.mxu0 %v677
      %1342 = vmatpush.bf16.msra.mxu0 %v676
      %1343 = vmatpush.bf16.msra.mxu0 %v675
      %1344 = vmatpush.bf16.msra.mxu0 %v674
      %1345 = vmatpush.bf16.msra.mxu0 %v673
      %1346 = vmatpush.bf16.msra.mxu0 %v672
      %1347 = vmatpush.bf16.msra.mxu0 %v671
      %1348 = vmatpush.bf16.msra.mxu0 %v670
      %1349 = vmatmul.bf16.gmra.mxu0 %v1294
      %v1350 = vpop.f32.mrf.mxu0
      %v1351 = vadd.f32 %v1338, %v1350
      %v1352 = vpop.f32.mrf.mxu0
      %1353 = vdwg.mxu0
      %1354 = vmatpush.bf16.msra.mxu0 %v685
      %1355 = vmatpush.bf16.msra.mxu0 %v684
      %1356 = vmatpush.bf16.msra.mxu0 %v683
      %1357 = vmatpush.bf16.msra.mxu0 %v682
      %1358 = vmatpush.bf16.msra.mxu0 %v681
      %1359 = vmatpush.bf16.msra.mxu0 %v680
      %1360 = vmatpush.bf16.msra.mxu0 %v679
      %1361 = vmatpush.bf16.msra.mxu0 %v678
      %1362 = vmatmul.bf16.gmra.mxu0 %v1296
      %v1363 = vpop.f32.mrf.mxu0
      %v1364 = vadd.f32 %v1351, %v1363
      %v1365 = vpop.f32.mrf.mxu0
      %1366 = vdwg.mxu0
      %1367 = vmatpush.bf16.msra.mxu0 %v693
      %1368 = vmatpush.bf16.msra.mxu0 %v692
      %1369 = vmatpush.bf16.msra.mxu0 %v691
      %1370 = vmatpush.bf16.msra.mxu0 %v690
      %1371 = vmatpush.bf16.msra.mxu0 %v689
      %1372 = vmatpush.bf16.msra.mxu0 %v688
      %1373 = vmatpush.bf16.msra.mxu0 %v687
      %1374 = vmatpush.bf16.msra.mxu0 %v686
      %1375 = vmatmul.bf16.gmra.mxu0 %v1275
      %v1376 = vpop.f32.mrf.mxu0
      %v1377 = vadd.f32 %v1364, %v1376
      %v1378 = vpop.f32.mrf.mxu0
      %1379 = vdwg.mxu0
      %1380 = vmatpush.bf16.msra.mxu0 %v701
      %1381 = vmatpush.bf16.msra.mxu0 %v700
      %1382 = vmatpush.bf16.msra.mxu0 %v699
      %1383 = vmatpush.bf16.msra.mxu0 %v698
      %1384 = vmatpush.bf16.msra.mxu0 %v697
      %1385 = vmatpush.bf16.msra.mxu0 %v696
      %1386 = vmatpush.bf16.msra.mxu0 %v695
      %1387 = vmatpush.bf16.msra.mxu0 %v694
      %1388 = vmatmul.bf16.gmra.mxu0 %v1309
      %v1389 = vpop.f32.mrf.mxu0
      %v1390 = vadd.f32 %v1377, %v1389
      %v1391 = vpop.f32.mrf.mxu0
      %1392 = vdwg.mxu0
      %1393 = vmatpush.bf16.msra.mxu0 %v709
      %1394 = vmatpush.bf16.msra.mxu0 %v708
      %1395 = vmatpush.bf16.msra.mxu0 %v707
      %1396 = vmatpush.bf16.msra.mxu0 %v706
      %1397 = vmatpush.bf16.msra.mxu0 %v705
      %1398 = vmatpush.bf16.msra.mxu0 %v704
      %1399 = vmatpush.bf16.msra.mxu0 %v703
      %1400 = vmatpush.bf16.msra.mxu0 %v702
      %1401 = vmatmul.bf16.gmra.mxu0 %v1311
      %v1402 = vpop.f32.mrf.mxu0
      %v1403 = vadd.f32 %v1390, %v1402
      %v1404 = vpop.f32.mrf.mxu0
      %1405 = vdwg.mxu0
      %1406 = vmatpush.bf16.msra.mxu0 %v717
      %1407 = vmatpush.bf16.msra.mxu0 %v716
      %1408 = vmatpush.bf16.msra.mxu0 %v715
      %1409 = vmatpush.bf16.msra.mxu0 %v714
      %1410 = vmatpush.bf16.msra.mxu0 %v713
      %1411 = vmatpush.bf16.msra.mxu0 %v712
      %1412 = vmatpush.bf16.msra.mxu0 %v711
      %1413 = vmatpush.bf16.msra.mxu0 %v710
      %1414 = vmatmul.bf16.gmra.mxu0 %v1281
      %v1415 = vpop.f32.mrf.mxu0
      %v1416 = vadd.f32 %v1403, %v1415
      %v1417 = vpop.f32.mrf.mxu0
      %1418 = vdwg.mxu0
      %1419 = vmatpush.bf16.msra.mxu0 %v725
      %1420 = vmatpush.bf16.msra.mxu0 %v724
      %1421 = vmatpush.bf16.msra.mxu0 %v723
      %1422 = vmatpush.bf16.msra.mxu0 %v722
      %1423 = vmatpush.bf16.msra.mxu0 %v721
      %1424 = vmatpush.bf16.msra.mxu0 %v720
      %1425 = vmatpush.bf16.msra.mxu0 %v719
      %1426 = vmatpush.bf16.msra.mxu0 %v718
      %1427 = vmatmul.bf16.gmra.mxu0 %v1324
      %v1428 = vpop.f32.mrf.mxu0
      %v1429 = vadd.f32 %v1416, %v1428
      %v1430 = vpop.f32.mrf.mxu0
      %1431 = vdwg.mxu0
      %1432 = vmatpush.bf16.msra.mxu0 %v733
      %1433 = vmatpush.bf16.msra.mxu0 %v732
      %1434 = vmatpush.bf16.msra.mxu0 %v731
      %1435 = vmatpush.bf16.msra.mxu0 %v730
      %1436 = vmatpush.bf16.msra.mxu0 %v729
      %1437 = vmatpush.bf16.msra.mxu0 %v728
      %1438 = vmatpush.bf16.msra.mxu0 %v727
      %1439 = vmatpush.bf16.msra.mxu0 %v726
      %1440 = vmatmul.bf16.gmra.mxu0 %v1326
      %v1441 = vpop.f32.mrf.mxu0
      %v1442 = vadd.f32 %v1429, %v1441
      %v1443 = vpop.f32.mrf.mxu0
      %1444 = vdwg.mxu0
      %s1445 = scalar_lea.vmem %s165, 24
      %1446 = vst.msk [vmem:[%s1445] sm:$0xff] %vm923, %v1442
      %v1447 = vld [vmem:[%s1106] sm:$0xf]
      %v1448 = vld [vmem:[%s1106 + $0x4] sm:$0x1]
      %v1449 = vld [vmem:[%s1280] sm:$0xf]
      %v1450 = vld [vmem:[%s1280 + $0x4] sm:$0x1]
      %s1451 = sadd.s32 %s311, 6
      %s1452 = smul.u32 %s1451, 2
      %s1453 = smul.addr %s1452, 4
      %s1454 = scalar_lea.vmem %s156, %s1453
      %v1455 = vld [vmem:[%s1454] sm:$0xf]
      %v1456 = vld [vmem:[%s1454 + $0x4] sm:$0x1]
      %v1459 = vunpack.c.l.b16 %v1447
      %v1460 = vunpack.c.l.b16 %v1448
      %v1461 = vpack.c.b16 %v1460, %v1459
      %v1463 = vshrl.u32 %v1461, 16
      %v1465 = vshll.u32 %v1461, 16
      %v1467 = vrot.slane %v1465, 1
      %v1468 = vor.u32 %v1463, %v1467
      %v1470 = vrot.slane %v1461, 1
      %v1474 = vunpack.c.l.b16 %v1449
      %v1475 = vunpack.c.l.b16 %v1450
      %v1476 = vpack.c.b16 %v1475, %v1474
      %v1478 = vshrl.u32 %v1476, 16
      %v1480 = vshll.u32 %v1476, 16
      %v1482 = vrot.slane %v1480, 1
      %v1483 = vor.u32 %v1478, %v1482
      %v1485 = vrot.slane %v1476, 1
      %v1489 = vunpack.c.l.b16 %v1455
      %v1490 = vunpack.c.l.b16 %v1456
      %v1491 = vpack.c.b16 %v1490, %v1489
      %v1493 = vshrl.u32 %v1491, 16
      %v1495 = vshll.u32 %v1491, 16
      %v1497 = vrot.slane %v1495, 1
      %v1498 = vor.u32 %v1493, %v1497
      %v1500 = vrot.slane %v1491, 1
      %1502 = vmatpush.bf16.msra.mxu0 %v669
      %1503 = vmatpush.bf16.msra.mxu0 %v668
      %1504 = vmatpush.bf16.msra.mxu0 %v667
      %1505 = vmatpush.bf16.msra.mxu0 %v666
      %1506 = vmatpush.bf16.msra.mxu0 %v665
      %1507 = vmatpush.bf16.msra.mxu0 %v664
      %1508 = vmatpush.bf16.msra.mxu0 %v663
      %1509 = vmatpush.bf16.msra.mxu0 %v662
      %1510 = vmatmul.bf16.gmra.mxu0 %v1447
      %v1511 = vpop.f32.mrf.mxu0
      %v1512 = vadd.f32 0.0, %v1511
      %v1513 = vpop.f32.mrf.mxu0
      %1514 = vdwg.mxu0
      %1515 = vmatpush.bf16.msra.mxu0 %v677
      %1516 = vmatpush.bf16.msra.mxu0 %v676
      %1517 = vmatpush.bf16.msra.mxu0 %v675
      %1518 = vmatpush.bf16.msra.mxu0 %v674
      %1519 = vmatpush.bf16.msra.mxu0 %v673
      %1520 = vmatpush.bf16.msra.mxu0 %v672
      %1521 = vmatpush.bf16.msra.mxu0 %v671
      %1522 = vmatpush.bf16.msra.mxu0 %v670
      %1523 = vmatmul.bf16.gmra.mxu0 %v1468
      %v1524 = vpop.f32.mrf.mxu0
      %v1525 = vadd.f32 %v1512, %v1524
      %v1526 = vpop.f32.mrf.mxu0
      %1527 = vdwg.mxu0
      %1528 = vmatpush.bf16.msra.mxu0 %v685
      %1529 = vmatpush.bf16.msra.mxu0 %v684
      %1530 = vmatpush.bf16.msra.mxu0 %v683
      %1531 = vmatpush.bf16.msra.mxu0 %v682
      %1532 = vmatpush.bf16.msra.mxu0 %v681
      %1533 = vmatpush.bf16.msra.mxu0 %v680
      %1534 = vmatpush.bf16.msra.mxu0 %v679
      %1535 = vmatpush.bf16.msra.mxu0 %v678
      %1536 = vmatmul.bf16.gmra.mxu0 %v1470
      %v1537 = vpop.f32.mrf.mxu0
      %v1538 = vadd.f32 %v1525, %v1537
      %v1539 = vpop.f32.mrf.mxu0
      %1540 = vdwg.mxu0
      %1541 = vmatpush.bf16.msra.mxu0 %v693
      %1542 = vmatpush.bf16.msra.mxu0 %v692
      %1543 = vmatpush.bf16.msra.mxu0 %v691
      %1544 = vmatpush.bf16.msra.mxu0 %v690
      %1545 = vmatpush.bf16.msra.mxu0 %v689
      %1546 = vmatpush.bf16.msra.mxu0 %v688
      %1547 = vmatpush.bf16.msra.mxu0 %v687
      %1548 = vmatpush.bf16.msra.mxu0 %v686
      %1549 = vmatmul.bf16.gmra.mxu0 %v1449
      %v1550 = vpop.f32.mrf.mxu0
      %v1551 = vadd.f32 %v1538, %v1550
      %v1552 = vpop.f32.mrf.mxu0
      %1553 = vdwg.mxu0
      %1554 = vmatpush.bf16.msra.mxu0 %v701
      %1555 = vmatpush.bf16.msra.mxu0 %v700
      %1556 = vmatpush.bf16.msra.mxu0 %v699
      %1557 = vmatpush.bf16.msra.mxu0 %v698
      %1558 = vmatpush.bf16.msra.mxu0 %v697
      %1559 = vmatpush.bf16.msra.mxu0 %v696
      %1560 = vmatpush.bf16.msra.mxu0 %v695
      %1561 = vmatpush.bf16.msra.mxu0 %v694
      %1562 = vmatmul.bf16.gmra.mxu0 %v1483
      %v1563 = vpop.f32.mrf.mxu0
      %v1564 = vadd.f32 %v1551, %v1563
      %v1565 = vpop.f32.mrf.mxu0
      %1566 = vdwg.mxu0
      %1567 = vmatpush.bf16.msra.mxu0 %v709
      %1568 = vmatpush.bf16.msra.mxu0 %v708
      %1569 = vmatpush.bf16.msra.mxu0 %v707
      %1570 = vmatpush.bf16.msra.mxu0 %v706
      %1571 = vmatpush.bf16.msra.mxu0 %v705
      %1572 = vmatpush.bf16.msra.mxu0 %v704
      %1573 = vmatpush.bf16.msra.mxu0 %v703
      %1574 = vmatpush.bf16.msra.mxu0 %v702
      %1575 = vmatmul.bf16.gmra.mxu0 %v1485
      %v1576 = vpop.f32.mrf.mxu0
      %v1577 = vadd.f32 %v1564, %v1576
      %v1578 = vpop.f32.mrf.mxu0
      %1579 = vdwg.mxu0
      %1580 = vmatpush.bf16.msra.mxu0 %v717
      %1581 = vmatpush.bf16.msra.mxu0 %v716
      %1582 = vmatpush.bf16.msra.mxu0 %v715
      %1583 = vmatpush.bf16.msra.mxu0 %v714
      %1584 = vmatpush.bf16.msra.mxu0 %v713
      %1585 = vmatpush.bf16.msra.mxu0 %v712
      %1586 = vmatpush.bf16.msra.mxu0 %v711
      %1587 = vmatpush.bf16.msra.mxu0 %v710
      %1588 = vmatmul.bf16.gmra.mxu0 %v1455
      %v1589 = vpop.f32.mrf.mxu0
      %v1590 = vadd.f32 %v1577, %v1589
      %v1591 = vpop.f32.mrf.mxu0
      %1592 = vdwg.mxu0
      %1593 = vmatpush.bf16.msra.mxu0 %v725
      %1594 = vmatpush.bf16.msra.mxu0 %v724
      %1595 = vmatpush.bf16.msra.mxu0 %v723
      %1596 = vmatpush.bf16.msra.mxu0 %v722
      %1597 = vmatpush.bf16.msra.mxu0 %v721
      %1598 = vmatpush.bf16.msra.mxu0 %v720
      %1599 = vmatpush.bf16.msra.mxu0 %v719
      %1600 = vmatpush.bf16.msra.mxu0 %v718
      %1601 = vmatmul.bf16.gmra.mxu0 %v1498
      %v1602 = vpop.f32.mrf.mxu0
      %v1603 = vadd.f32 %v1590, %v1602
      %v1604 = vpop.f32.mrf.mxu0
      %1605 = vdwg.mxu0
      %1606 = vmatpush.bf16.msra.mxu0 %v733
      %1607 = vmatpush.bf16.msra.mxu0 %v732
      %1608 = vmatpush.bf16.msra.mxu0 %v731
      %1609 = vmatpush.bf16.msra.mxu0 %v730
      %1610 = vmatpush.bf16.msra.mxu0 %v729
      %1611 = vmatpush.bf16.msra.mxu0 %v728
      %1612 = vmatpush.bf16.msra.mxu0 %v727
      %1613 = vmatpush.bf16.msra.mxu0 %v726
      %1614 = vmatmul.bf16.gmra.mxu0 %v1500
      %v1615 = vpop.f32.mrf.mxu0
      %v1616 = vadd.f32 %v1603, %v1615
      %v1617 = vpop.f32.mrf.mxu0
      %1618 = vdwg.mxu0
      %s1619 = scalar_lea.vmem %s165, 32
      %1620 = vst.msk [vmem:[%s1619] sm:$0xff] %vm923, %v1616
      %v1621 = vld [vmem:[%s1280] sm:$0xf]
      %v1622 = vld [vmem:[%s1280 + $0x4] sm:$0x1]
      %v1623 = vld [vmem:[%s1454] sm:$0xf]
      %v1624 = vld [vmem:[%s1454 + $0x4] sm:$0x1]
      %s1625 = sadd.s32 %s311, 7
      %s1626 = smul.u32 %s1625, 2
      %s1627 = smul.addr %s1626, 4
      %s1628 = scalar_lea.vmem %s156, %s1627
      %v1629 = vld [vmem:[%s1628] sm:$0xf]
      %v1630 = vld [vmem:[%s1628 + $0x4] sm:$0x1]
      %v1633 = vunpack.c.l.b16 %v1621
      %v1634 = vunpack.c.l.b16 %v1622
      %v1635 = vpack.c.b16 %v1634, %v1633
      %v1637 = vshrl.u32 %v1635, 16
      %v1639 = vshll.u32 %v1635, 16
      %v1641 = vrot.slane %v1639, 1
      %v1642 = vor.u32 %v1637, %v1641
      %v1644 = vrot.slane %v1635, 1
      %v1648 = vunpack.c.l.b16 %v1623
      %v1649 = vunpack.c.l.b16 %v1624
      %v1650 = vpack.c.b16 %v1649, %v1648
      %v1652 = vshrl.u32 %v1650, 16
      %v1654 = vshll.u32 %v1650, 16
      %v1656 = vrot.slane %v1654, 1
      %v1657 = vor.u32 %v1652, %v1656
      %v1659 = vrot.slane %v1650, 1
      %v1663 = vunpack.c.l.b16 %v1629
      %v1664 = vunpack.c.l.b16 %v1630
      %v1665 = vpack.c.b16 %v1664, %v1663
      %v1667 = vshrl.u32 %v1665, 16
      %v1669 = vshll.u32 %v1665, 16
      %v1671 = vrot.slane %v1669, 1
      %v1672 = vor.u32 %v1667, %v1671
      %v1674 = vrot.slane %v1665, 1
      %1676 = vmatpush.bf16.msra.mxu0 %v669
      %1677 = vmatpush.bf16.msra.mxu0 %v668
      %1678 = vmatpush.bf16.msra.mxu0 %v667
      %1679 = vmatpush.bf16.msra.mxu0 %v666
      %1680 = vmatpush.bf16.msra.mxu0 %v665
      %1681 = vmatpush.bf16.msra.mxu0 %v664
      %1682 = vmatpush.bf16.msra.mxu0 %v663
      %1683 = vmatpush.bf16.msra.mxu0 %v662
      %1684 = vmatmul.bf16.gmra.mxu0 %v1621
      %v1685 = vpop.f32.mrf.mxu0
      %v1686 = vadd.f32 0.0, %v1685
      %v1687 = vpop.f32.mrf.mxu0
      %1688 = vdwg.mxu0
      %1689 = vmatpush.bf16.msra.mxu0 %v677
      %1690 = vmatpush.bf16.msra.mxu0 %v676
      %1691 = vmatpush.bf16.msra.mxu0 %v675
      %1692 = vmatpush.bf16.msra.mxu0 %v674
      %1693 = vmatpush.bf16.msra.mxu0 %v673
      %1694 = vmatpush.bf16.msra.mxu0 %v672
      %1695 = vmatpush.bf16.msra.mxu0 %v671
      %1696 = vmatpush.bf16.msra.mxu0 %v670
      %1697 = vmatmul.bf16.gmra.mxu0 %v1642
      %v1698 = vpop.f32.mrf.mxu0
      %v1699 = vadd.f32 %v1686, %v1698
      %v1700 = vpop.f32.mrf.mxu0
      %1701 = vdwg.mxu0
      %1702 = vmatpush.bf16.msra.mxu0 %v685
      %1703 = vmatpush.bf16.msra.mxu0 %v684
      %1704 = vmatpush.bf16.msra.mxu0 %v683
      %1705 = vmatpush.bf16.msra.mxu0 %v682
      %1706 = vmatpush.bf16.msra.mxu0 %v681
      %1707 = vmatpush.bf16.msra.mxu0 %v680
      %1708 = vmatpush.bf16.msra.mxu0 %v679
      %1709 = vmatpush.bf16.msra.mxu0 %v678
      %1710 = vmatmul.bf16.gmra.mxu0 %v1644
      %v1711 = vpop.f32.mrf.mxu0
      %v1712 = vadd.f32 %v1699, %v1711
      %v1713 = vpop.f32.mrf.mxu0
      %1714 = vdwg.mxu0
      %1715 = vmatpush.bf16.msra.mxu0 %v693
      %1716 = vmatpush.bf16.msra.mxu0 %v692
      %1717 = vmatpush.bf16.msra.mxu0 %v691
      %1718 = vmatpush.bf16.msra.mxu0 %v690
      %1719 = vmatpush.bf16.msra.mxu0 %v689
      %1720 = vmatpush.bf16.msra.mxu0 %v688
      %1721 = vmatpush.bf16.msra.mxu0 %v687
      %1722 = vmatpush.bf16.msra.mxu0 %v686
      %1723 = vmatmul.bf16.gmra.mxu0 %v1623
      %v1724 = vpop.f32.mrf.mxu0
      %v1725 = vadd.f32 %v1712, %v1724
      %v1726 = vpop.f32.mrf.mxu0
      %1727 = vdwg.mxu0
      %1728 = vmatpush.bf16.msra.mxu0 %v701
      %1729 = vmatpush.bf16.msra.mxu0 %v700
      %1730 = vmatpush.bf16.msra.mxu0 %v699
      %1731 = vmatpush.bf16.msra.mxu0 %v698
      %1732 = vmatpush.bf16.msra.mxu0 %v697
      %1733 = vmatpush.bf16.msra.mxu0 %v696
      %1734 = vmatpush.bf16.msra.mxu0 %v695
      %1735 = vmatpush.bf16.msra.mxu0 %v694
      %1736 = vmatmul.bf16.gmra.mxu0 %v1657
      %v1737 = vpop.f32.mrf.mxu0
      %v1738 = vadd.f32 %v1725, %v1737
      %v1739 = vpop.f32.mrf.mxu0
      %1740 = vdwg.mxu0
      %1741 = vmatpush.bf16.msra.mxu0 %v709
      %1742 = vmatpush.bf16.msra.mxu0 %v708
      %1743 = vmatpush.bf16.msra.mxu0 %v707
      %1744 = vmatpush.bf16.msra.mxu0 %v706
      %1745 = vmatpush.bf16.msra.mxu0 %v705
      %1746 = vmatpush.bf16.msra.mxu0 %v704
      %1747 = vmatpush.bf16.msra.mxu0 %v703
      %1748 = vmatpush.bf16.msra.mxu0 %v702
      %1749 = vmatmul.bf16.gmra.mxu0 %v1659
      %v1750 = vpop.f32.mrf.mxu0
      %v1751 = vadd.f32 %v1738, %v1750
      %v1752 = vpop.f32.mrf.mxu0
      %1753 = vdwg.mxu0
      %1754 = vmatpush.bf16.msra.mxu0 %v717
      %1755 = vmatpush.bf16.msra.mxu0 %v716
      %1756 = vmatpush.bf16.msra.mxu0 %v715
      %1757 = vmatpush.bf16.msra.mxu0 %v714
      %1758 = vmatpush.bf16.msra.mxu0 %v713
      %1759 = vmatpush.bf16.msra.mxu0 %v712
      %1760 = vmatpush.bf16.msra.mxu0 %v711
      %1761 = vmatpush.bf16.msra.mxu0 %v710
      %1762 = vmatmul.bf16.gmra.mxu0 %v1629
      %v1763 = vpop.f32.mrf.mxu0
      %v1764 = vadd.f32 %v1751, %v1763
      %v1765 = vpop.f32.mrf.mxu0
      %1766 = vdwg.mxu0
      %1767 = vmatpush.bf16.msra.mxu0 %v725
      %1768 = vmatpush.bf16.msra.mxu0 %v724
      %1769 = vmatpush.bf16.msra.mxu0 %v723
      %1770 = vmatpush.bf16.msra.mxu0 %v722
      %1771 = vmatpush.bf16.msra.mxu0 %v721
      %1772 = vmatpush.bf16.msra.mxu0 %v720
      %1773 = vmatpush.bf16.msra.mxu0 %v719
      %1774 = vmatpush.bf16.msra.mxu0 %v718
      %1775 = vmatmul.bf16.gmra.mxu0 %v1672
      %v1776 = vpop.f32.mrf.mxu0
      %v1777 = vadd.f32 %v1764, %v1776
      %v1778 = vpop.f32.mrf.mxu0
      %1779 = vdwg.mxu0
      %1780 = vmatpush.bf16.msra.mxu0 %v733
      %1781 = vmatpush.bf16.msra.mxu0 %v732
      %1782 = vmatpush.bf16.msra.mxu0 %v731
      %1783 = vmatpush.bf16.msra.mxu0 %v730
      %1784 = vmatpush.bf16.msra.mxu0 %v729
      %1785 = vmatpush.bf16.msra.mxu0 %v728
      %1786 = vmatpush.bf16.msra.mxu0 %v727
      %1787 = vmatpush.bf16.msra.mxu0 %v726
      %1788 = vmatmul.bf16.gmra.mxu0 %v1674
      %v1789 = vpop.f32.mrf.mxu0
      %v1790 = vadd.f32 %v1777, %v1789
      %v1791 = vpop.f32.mrf.mxu0
      %1792 = vdwg.mxu0
      %s1793 = scalar_lea.vmem %s165, 40
      %1794 = vst.msk [vmem:[%s1793] sm:$0xff] %vm923, %v1790
      %v1795 = vld [vmem:[%s1454] sm:$0xf]
      %v1796 = vld [vmem:[%s1454 + $0x4] sm:$0x1]
      %v1797 = vld [vmem:[%s1628] sm:$0xf]
      %v1798 = vld [vmem:[%s1628 + $0x4] sm:$0x1]
      %s1799 = sadd.s32 %s311, 8
      %s1800 = smul.u32 %s1799, 2
      %s1801 = smul.addr %s1800, 4
      %s1802 = scalar_lea.vmem %s156, %s1801
      %v1803 = vld [vmem:[%s1802] sm:$0xf]
      %v1804 = vld [vmem:[%s1802 + $0x4] sm:$0x1]
      %v1807 = vunpack.c.l.b16 %v1795
      %v1808 = vunpack.c.l.b16 %v1796
      %v1809 = vpack.c.b16 %v1808, %v1807
      %v1811 = vshrl.u32 %v1809, 16
      %v1813 = vshll.u32 %v1809, 16
      %v1815 = vrot.slane %v1813, 1
      %v1816 = vor.u32 %v1811, %v1815
      %v1818 = vrot.slane %v1809, 1
      %v1822 = vunpack.c.l.b16 %v1797
      %v1823 = vunpack.c.l.b16 %v1798
      %v1824 = vpack.c.b16 %v1823, %v1822
      %v1826 = vshrl.u32 %v1824, 16
      %v1828 = vshll.u32 %v1824, 16
      %v1830 = vrot.slane %v1828, 1
      %v1831 = vor.u32 %v1826, %v1830
      %v1833 = vrot.slane %v1824, 1
      %v1837 = vunpack.c.l.b16 %v1803
      %v1838 = vunpack.c.l.b16 %v1804
      %v1839 = vpack.c.b16 %v1838, %v1837
      %v1841 = vshrl.u32 %v1839, 16
      %v1843 = vshll.u32 %v1839, 16
      %v1845 = vrot.slane %v1843, 1
      %v1846 = vor.u32 %v1841, %v1845
      %v1848 = vrot.slane %v1839, 1
      %1850 = vmatpush.bf16.msra.mxu0 %v669
      %1851 = vmatpush.bf16.msra.mxu0 %v668
      %1852 = vmatpush.bf16.msra.mxu0 %v667
      %1853 = vmatpush.bf16.msra.mxu0 %v666
      %1854 = vmatpush.bf16.msra.mxu0 %v665
      %1855 = vmatpush.bf16.msra.mxu0 %v664
      %1856 = vmatpush.bf16.msra.mxu0 %v663
      %1857 = vmatpush.bf16.msra.mxu0 %v662
      %1858 = vmatmul.bf16.gmra.mxu0 %v1795
      %v1859 = vpop.f32.mrf.mxu0
      %v1860 = vadd.f32 0.0, %v1859
      %v1861 = vpop.f32.mrf.mxu0
      %1862 = vdwg.mxu0
      %1863 = vmatpush.bf16.msra.mxu0 %v677
      %1864 = vmatpush.bf16.msra.mxu0 %v676
      %1865 = vmatpush.bf16.msra.mxu0 %v675
      %1866 = vmatpush.bf16.msra.mxu0 %v674
      %1867 = vmatpush.bf16.msra.mxu0 %v673
      %1868 = vmatpush.bf16.msra.mxu0 %v672
      %1869 = vmatpush.bf16.msra.mxu0 %v671
      %1870 = vmatpush.bf16.msra.mxu0 %v670
      %1871 = vmatmul.bf16.gmra.mxu0 %v1816
      %v1872 = vpop.f32.mrf.mxu0
      %v1873 = vadd.f32 %v1860, %v1872
      %v1874 = vpop.f32.mrf.mxu0
      %1875 = vdwg.mxu0
      %1876 = vmatpush.bf16.msra.mxu0 %v685
      %1877 = vmatpush.bf16.msra.mxu0 %v684
      %1878 = vmatpush.bf16.msra.mxu0 %v683
      %1879 = vmatpush.bf16.msra.mxu0 %v682
      %1880 = vmatpush.bf16.msra.mxu0 %v681
      %1881 = vmatpush.bf16.msra.mxu0 %v680
      %1882 = vmatpush.bf16.msra.mxu0 %v679
      %1883 = vmatpush.bf16.msra.mxu0 %v678
      %1884 = vmatmul.bf16.gmra.mxu0 %v1818
      %v1885 = vpop.f32.mrf.mxu0
      %v1886 = vadd.f32 %v1873, %v1885
      %v1887 = vpop.f32.mrf.mxu0
      %1888 = vdwg.mxu0
      %1889 = vmatpush.bf16.msra.mxu0 %v693
      %1890 = vmatpush.bf16.msra.mxu0 %v692
      %1891 = vmatpush.bf16.msra.mxu0 %v691
      %1892 = vmatpush.bf16.msra.mxu0 %v690
      %1893 = vmatpush.bf16.msra.mxu0 %v689
      %1894 = vmatpush.bf16.msra.mxu0 %v688
      %1895 = vmatpush.bf16.msra.mxu0 %v687
      %1896 = vmatpush.bf16.msra.mxu0 %v686
      %1897 = vmatmul.bf16.gmra.mxu0 %v1797
      %v1898 = vpop.f32.mrf.mxu0
      %v1899 = vadd.f32 %v1886, %v1898
      %v1900 = vpop.f32.mrf.mxu0
      %1901 = vdwg.mxu0
      %1902 = vmatpush.bf16.msra.mxu0 %v701
      %1903 = vmatpush.bf16.msra.mxu0 %v700
      %1904 = vmatpush.bf16.msra.mxu0 %v699
      %1905 = vmatpush.bf16.msra.mxu0 %v698
      %1906 = vmatpush.bf16.msra.mxu0 %v697
      %1907 = vmatpush.bf16.msra.mxu0 %v696
      %1908 = vmatpush.bf16.msra.mxu0 %v695
      %1909 = vmatpush.bf16.msra.mxu0 %v694
      %1910 = vmatmul.bf16.gmra.mxu0 %v1831
      %v1911 = vpop.f32.mrf.mxu0
      %v1912 = vadd.f32 %v1899, %v1911
      %v1913 = vpop.f32.mrf.mxu0
      %1914 = vdwg.mxu0
      %1915 = vmatpush.bf16.msra.mxu0 %v709
      %1916 = vmatpush.bf16.msra.mxu0 %v708
      %1917 = vmatpush.bf16.msra.mxu0 %v707
      %1918 = vmatpush.bf16.msra.mxu0 %v706
      %1919 = vmatpush.bf16.msra.mxu0 %v705
      %1920 = vmatpush.bf16.msra.mxu0 %v704
      %1921 = vmatpush.bf16.msra.mxu0 %v703
      %1922 = vmatpush.bf16.msra.mxu0 %v702
      %1923 = vmatmul.bf16.gmra.mxu0 %v1833
      %v1924 = vpop.f32.mrf.mxu0
      %v1925 = vadd.f32 %v1912, %v1924
      %v1926 = vpop.f32.mrf.mxu0
      %1927 = vdwg.mxu0
      %1928 = vmatpush.bf16.msra.mxu0 %v717
      %1929 = vmatpush.bf16.msra.mxu0 %v716
      %1930 = vmatpush.bf16.msra.mxu0 %v715
      %1931 = vmatpush.bf16.msra.mxu0 %v714
      %1932 = vmatpush.bf16.msra.mxu0 %v713
      %1933 = vmatpush.bf16.msra.mxu0 %v712
      %1934 = vmatpush.bf16.msra.mxu0 %v711
      %1935 = vmatpush.bf16.msra.mxu0 %v710
      %1936 = vmatmul.bf16.gmra.mxu0 %v1803
      %v1937 = vpop.f32.mrf.mxu0
      %v1938 = vadd.f32 %v1925, %v1937
      %v1939 = vpop.f32.mrf.mxu0
      %1940 = vdwg.mxu0
      %1941 = vmatpush.bf16.msra.mxu0 %v725
      %1942 = vmatpush.bf16.msra.mxu0 %v724
      %1943 = vmatpush.bf16.msra.mxu0 %v723
      %1944 = vmatpush.bf16.msra.mxu0 %v722
      %1945 = vmatpush.bf16.msra.mxu0 %v721
      %1946 = vmatpush.bf16.msra.mxu0 %v720
      %1947 = vmatpush.bf16.msra.mxu0 %v719
      %1948 = vmatpush.bf16.msra.mxu0 %v718
      %1949 = vmatmul.bf16.gmra.mxu0 %v1846
      %v1950 = vpop.f32.mrf.mxu0
      %v1951 = vadd.f32 %v1938, %v1950
      %v1952 = vpop.f32.mrf.mxu0
      %1953 = vdwg.mxu0
      %1954 = vmatpush.bf16.msra.mxu0 %v733
      %1955 = vmatpush.bf16.msra.mxu0 %v732
      %1956 = vmatpush.bf16.msra.mxu0 %v731
      %1957 = vmatpush.bf16.msra.mxu0 %v730
      %1958 = vmatpush.bf16.msra.mxu0 %v729
      %1959 = vmatpush.bf16.msra.mxu0 %v728
      %1960 = vmatpush.bf16.msra.mxu0 %v727
      %1961 = vmatpush.bf16.msra.mxu0 %v726
      %1962 = vmatmul.bf16.gmra.mxu0 %v1848
      %v1963 = vpop.f32.mrf.mxu0
      %v1964 = vadd.f32 %v1951, %v1963
      %v1965 = vpop.f32.mrf.mxu0
      %1966 = vdwg.mxu0
      %s1967 = scalar_lea.vmem %s165, 48
      %1968 = vst.msk [vmem:[%s1967] sm:$0xff] %vm923, %v1964
      %v1969 = vld [vmem:[%s1628] sm:$0xf]
      %v1970 = vld [vmem:[%s1628 + $0x4] sm:$0x1]
      %v1971 = vld [vmem:[%s1802] sm:$0xf]
      %v1972 = vld [vmem:[%s1802 + $0x4] sm:$0x1]
      %s1973 = sadd.s32 %s311, 9
      %s1974 = smul.u32 %s1973, 2
      %s1975 = smul.addr %s1974, 4
      %s1976 = scalar_lea.vmem %s156, %s1975
      %v1977 = vld [vmem:[%s1976] sm:$0xf]
      %v1978 = vld [vmem:[%s1976 + $0x4] sm:$0x1]
      %v1981 = vunpack.c.l.b16 %v1969
      %v1982 = vunpack.c.l.b16 %v1970
      %v1983 = vpack.c.b16 %v1982, %v1981
      %v1985 = vshrl.u32 %v1983, 16
      %v1987 = vshll.u32 %v1983, 16
      %v1989 = vrot.slane %v1987, 1
      %v1990 = vor.u32 %v1985, %v1989
      %v1992 = vrot.slane %v1983, 1
      %v1996 = vunpack.c.l.b16 %v1971
      %v1997 = vunpack.c.l.b16 %v1972
      %v1998 = vpack.c.b16 %v1997, %v1996
      %v2000 = vshrl.u32 %v1998, 16
      %v2002 = vshll.u32 %v1998, 16
      %v2004 = vrot.slane %v2002, 1
      %v2005 = vor.u32 %v2000, %v2004
      %v2007 = vrot.slane %v1998, 1
      %v2011 = vunpack.c.l.b16 %v1977
      %v2012 = vunpack.c.l.b16 %v1978
      %v2013 = vpack.c.b16 %v2012, %v2011
      %v2015 = vshrl.u32 %v2013, 16
      %v2017 = vshll.u32 %v2013, 16
      %v2019 = vrot.slane %v2017, 1
      %v2020 = vor.u32 %v2015, %v2019
      %v2022 = vrot.slane %v2013, 1
      %2024 = vmatpush.bf16.msra.mxu0 %v669
      %2025 = vmatpush.bf16.msra.mxu0 %v668
      %2026 = vmatpush.bf16.msra.mxu0 %v667
      %2027 = vmatpush.bf16.msra.mxu0 %v666
      %2028 = vmatpush.bf16.msra.mxu0 %v665
      %2029 = vmatpush.bf16.msra.mxu0 %v664
      %2030 = vmatpush.bf16.msra.mxu0 %v663
      %2031 = vmatpush.bf16.msra.mxu0 %v662
      %2032 = vmatmul.bf16.gmra.mxu0 %v1969
      %v2033 = vpop.f32.mrf.mxu0
      %v2034 = vadd.f32 0.0, %v2033
      %v2035 = vpop.f32.mrf.mxu0
      %2036 = vdwg.mxu0
      %2037 = vmatpush.bf16.msra.mxu0 %v677
      %2038 = vmatpush.bf16.msra.mxu0 %v676
      %2039 = vmatpush.bf16.msra.mxu0 %v675
      %2040 = vmatpush.bf16.msra.mxu0 %v674
      %2041 = vmatpush.bf16.msra.mxu0 %v673
      %2042 = vmatpush.bf16.msra.mxu0 %v672
      %2043 = vmatpush.bf16.msra.mxu0 %v671
      %2044 = vmatpush.bf16.msra.mxu0 %v670
      %2045 = vmatmul.bf16.gmra.mxu0 %v1990
      %v2046 = vpop.f32.mrf.mxu0
      %v2047 = vadd.f32 %v2034, %v2046
      %v2048 = vpop.f32.mrf.mxu0
      %2049 = vdwg.mxu0
      %2050 = vmatpush.bf16.msra.mxu0 %v685
      %2051 = vmatpush.bf16.msra.mxu0 %v684
      %2052 = vmatpush.bf16.msra.mxu0 %v683
      %2053 = vmatpush.bf16.msra.mxu0 %v682
      %2054 = vmatpush.bf16.msra.mxu0 %v681
      %2055 = vmatpush.bf16.msra.mxu0 %v680
      %2056 = vmatpush.bf16.msra.mxu0 %v679
      %2057 = vmatpush.bf16.msra.mxu0 %v678
      %2058 = vmatmul.bf16.gmra.mxu0 %v1992
      %v2059 = vpop.f32.mrf.mxu0
      %v2060 = vadd.f32 %v2047, %v2059
      %v2061 = vpop.f32.mrf.mxu0
      %2062 = vdwg.mxu0
      %2063 = vmatpush.bf16.msra.mxu0 %v693
      %2064 = vmatpush.bf16.msra.mxu0 %v692
      %2065 = vmatpush.bf16.msra.mxu0 %v691
      %2066 = vmatpush.bf16.msra.mxu0 %v690
      %2067 = vmatpush.bf16.msra.mxu0 %v689
      %2068 = vmatpush.bf16.msra.mxu0 %v688
      %2069 = vmatpush.bf16.msra.mxu0 %v687
      %2070 = vmatpush.bf16.msra.mxu0 %v686
      %2071 = vmatmul.bf16.gmra.mxu0 %v1971
      %v2072 = vpop.f32.mrf.mxu0
      %v2073 = vadd.f32 %v2060, %v2072
      %v2074 = vpop.f32.mrf.mxu0
      %2075 = vdwg.mxu0
      %2076 = vmatpush.bf16.msra.mxu0 %v701
      %2077 = vmatpush.bf16.msra.mxu0 %v700
      %2078 = vmatpush.bf16.msra.mxu0 %v699
      %2079 = vmatpush.bf16.msra.mxu0 %v698
      %2080 = vmatpush.bf16.msra.mxu0 %v697
      %2081 = vmatpush.bf16.msra.mxu0 %v696
      %2082 = vmatpush.bf16.msra.mxu0 %v695
      %2083 = vmatpush.bf16.msra.mxu0 %v694
      %2084 = vmatmul.bf16.gmra.mxu0 %v2005
      %v2085 = vpop.f32.mrf.mxu0
      %v2086 = vadd.f32 %v2073, %v2085
      %v2087 = vpop.f32.mrf.mxu0
      %2088 = vdwg.mxu0
      %2089 = vmatpush.bf16.msra.mxu0 %v709
      %2090 = vmatpush.bf16.msra.mxu0 %v708
      %2091 = vmatpush.bf16.msra.mxu0 %v707
      %2092 = vmatpush.bf16.msra.mxu0 %v706
      %2093 = vmatpush.bf16.msra.mxu0 %v705
      %2094 = vmatpush.bf16.msra.mxu0 %v704
      %2095 = vmatpush.bf16.msra.mxu0 %v703
      %2096 = vmatpush.bf16.msra.mxu0 %v702
      %2097 = vmatmul.bf16.gmra.mxu0 %v2007
      %v2098 = vpop.f32.mrf.mxu0
      %v2099 = vadd.f32 %v2086, %v2098
      %v2100 = vpop.f32.mrf.mxu0
      %2101 = vdwg.mxu0
      %2102 = vmatpush.bf16.msra.mxu0 %v717
      %2103 = vmatpush.bf16.msra.mxu0 %v716
      %2104 = vmatpush.bf16.msra.mxu0 %v715
      %2105 = vmatpush.bf16.msra.mxu0 %v714
      %2106 = vmatpush.bf16.msra.mxu0 %v713
      %2107 = vmatpush.bf16.msra.mxu0 %v712
      %2108 = vmatpush.bf16.msra.mxu0 %v711
      %2109 = vmatpush.bf16.msra.mxu0 %v710
      %2110 = vmatmul.bf16.gmra.mxu0 %v1977
      %v2111 = vpop.f32.mrf.mxu0
      %v2112 = vadd.f32 %v2099, %v2111
      %v2113 = vpop.f32.mrf.mxu0
      %2114 = vdwg.mxu0
      %2115 = vmatpush.bf16.msra.mxu0 %v725
      %2116 = vmatpush.bf16.msra.mxu0 %v724
      %2117 = vmatpush.bf16.msra.mxu0 %v723
      %2118 = vmatpush.bf16.msra.mxu0 %v722
      %2119 = vmatpush.bf16.msra.mxu0 %v721
      %2120 = vmatpush.bf16.msra.mxu0 %v720
      %2121 = vmatpush.bf16.msra.mxu0 %v719
      %2122 = vmatpush.bf16.msra.mxu0 %v718
      %2123 = vmatmul.bf16.gmra.mxu0 %v2020
      %v2124 = vpop.f32.mrf.mxu0
      %v2125 = vadd.f32 %v2112, %v2124
      %v2126 = vpop.f32.mrf.mxu0
      %2127 = vdwg.mxu0
      %2128 = vmatpush.bf16.msra.mxu0 %v733
      %2129 = vmatpush.bf16.msra.mxu0 %v732
      %2130 = vmatpush.bf16.msra.mxu0 %v731
      %2131 = vmatpush.bf16.msra.mxu0 %v730
      %2132 = vmatpush.bf16.msra.mxu0 %v729
      %2133 = vmatpush.bf16.msra.mxu0 %v728
      %2134 = vmatpush.bf16.msra.mxu0 %v727
      %2135 = vmatpush.bf16.msra.mxu0 %v726
      %2136 = vmatmul.bf16.gmra.mxu0 %v2022
      %v2137 = vpop.f32.mrf.mxu0
      %v2138 = vadd.f32 %v2125, %v2137
      %v2139 = vpop.f32.mrf.mxu0
      %2140 = vdwg.mxu0
      %s2141 = scalar_lea.vmem %s165, 56
      %2142 = vst.msk [vmem:[%s2141] sm:$0xff] %vm923, %v2138
      %s2143 = smul.u32 8, %s18
      %p2144 = scmp.lt.s32.totalorder %s17, 1
      %s2145 = scalar_select %p2144, %s17, 1
      %p2146 = scmp.lt.s32.totalorder %s2143, 7
      %s2147 = scalar_select %p2146, %s2143, 7
      %s2148 = smul.addr %s2145, 8
      %s2149 = sadd.s32 %s2147, %s2148
      %s2150 = smul.addr %s2149, 8
      %s2151 = scalar_lea.vmem %s2, %s2150
      // Predicated region
      $region29: #{densenet_container_forward.17} parent=27 // pred_check
        %p2152 = pneg %p92
      $region30: #{densenet_container_forward.17} parent=27 // pred_check_branch
        %2154 = sbr.rel (%p2152) target = $region32
      $region31: #{densenet_container_forward.17} parent=27 // pred_region
        %s2155 = smul.u32 8, %s18
      $region32: #{densenet_container_forward.17} parent=27 // pred_fallthru
        _
    $region28: #{densenet_container_forward.17} parent=5 // pred_fallthru
      _
    %p2156 = scmp.le.s32.totalorder 2, %s8
    // Predicated region
    $region33: #{densenet_container_forward.17} parent=5 // pred_check
      %p2157 = pneg %p2156
    $region34: #{densenet_container_forward.17} parent=5 // pred_check_branch
      %2159 = sbr.rel (%p2157) target = $region36
    $region35: #{densenet_container_forward.17} parent=5 // pred_region
      %s2160 = ssub.s32 %s8, 2
      // Predicated region
      $region37: #{densenet_container_forward.17} parent=35 // pred_check
        %p2161 = pneg %p98
      $region38: #{densenet_container_forward.17} parent=35 // pred_check_branch
        %2163 = sbr.rel (%p2161) target = $region40
      $region39: #{densenet_container_forward.17} parent=35 // pred_region
        %s2164 = smul.u32 8, %s20
        %p2165 = scmp.lt.s32.totalorder %s19, 1
        %s2166 = scalar_select %p2165, %s19, 1
        %p2167 = scmp.lt.s32.totalorder %s2164, 7
        %s2168 = scalar_select %p2167, %s2164, 7
        %s2169 = smul.addr %s2166, 8
        %s2170 = sadd.s32 %s2168, %s2169
        %s2171 = smul.addr %s2170, 8
        %s2172 = scalar_lea.vmem %s2, %s2171
      $region40: #{densenet_container_forward.17} parent=35 // pred_fallthru
        _
    $region36: #{densenet_container_forward.17} parent=5 // pred_fallthru
      _
  $region6: #{densenet_container_forward.17} parent=0 // loop_footer
    %s12 = sadd.s32 1, %s8
  $region7: #{densenet_container_forward.17} parent=0 // loop_footer_branch
    %7 = sbr.rel target = $region3
  $region8: #{densenet_container_forward.17} parent=0 // loop_exit
    _

// kernel: densenet_container_forward.24
$region0: #{densenet_container_forward.24}
  #allocation0 [shape = 'u32[]', space=smem, size = 0x4, offset = 0x4, fixed_abs, tag = 'smem constant byte address 0x4 - core index']
  #allocation1 [shape = 'u32[72,128]{1,0:T(1,128)}', space=vmem, size = 0x9000, scoped, tag = 'internal scratch']
  %s0 = inlined_call_operand.vmem [shape: f32[32,72], index: 0, kind: input, shape index: {}]
  %s1 = inlined_call_operand.vmem [shape: bf16[72,128], index: 1, kind: input, shape index: {}]
  %s2 = inlined_call_operand.vmem [shape: f32[1,72], index: 2, kind: input, shape index: {}]
  %s3 = inlined_call_operand.vmem [shape: f32[1,72], index: 3, kind: input, shape index: {}]
  %s4 = inlined_call_operand.vmem [shape: f32[1,128], index: 4, kind: input, shape index: {}]
  %s5 = inlined_call_operand.vmem [shape: f32[1,128], index: 5, kind: input, shape index: {}]
  %s6 = inlined_call_operand.vmem [shape: bf16[32,128], index: 6, kind: output, shape index: {}]
  %s7 = sld [smem:[#allocation0]]
  $region34: #{densenet_container_forward.24} parent=0
    _
  %s9 = ssub.s32 1, %s7
  %s10 = scalar_select 0, %s9, %s7
  // Predicated region
  $region2: #{densenet_container_forward.24} parent=0 // pred_check
    _
  $region3: #{densenet_container_forward.24} parent=0 // pred_check_branch
    %12 = sbr.rel (0) target = $region5
  $region4: #{densenet_container_forward.24} parent=0 // pred_region
    _
  $region5: #{densenet_container_forward.24} parent=0 // pred_fallthru
    _
  // Predicated region
  $region6: #{densenet_container_forward.24} parent=0 // pred_check
    _
  $region7: #{densenet_container_forward.24} parent=0 // pred_check_branch
    %14 = sbr.rel (0) target = $region9
  $region8: #{densenet_container_forward.24} parent=0 // pred_region
    _
  $region9: #{densenet_container_forward.24} parent=0 // pred_fallthru
    _
  // Predicated region
  $region10: #{densenet_container_forward.24} parent=0 // pred_check
    _
  $region11: #{densenet_container_forward.24} parent=0 // pred_check_branch
    %16 = sbr.rel (0) target = $region13
  $region12: #{densenet_container_forward.24} parent=0 // pred_region
    _
  $region13: #{densenet_container_forward.24} parent=0 // pred_fallthru
    _
  // Predicated region
  $region14: #{densenet_container_forward.24} parent=0 // pred_check
    _
  $region15: #{densenet_container_forward.24} parent=0 // pred_check_branch
    %18 = sbr.rel (0) target = $region17
  $region16: #{densenet_container_forward.24} parent=0 // pred_region
    _
  $region17: #{densenet_container_forward.24} parent=0 // pred_fallthru
    _
  // Predicated region
  $region18: #{densenet_container_forward.24} parent=0 // pred_check
    _
  $region19: #{densenet_container_forward.24} parent=0 // pred_check_branch
    %20 = sbr.rel (0) target = $region21
  $region20: #{densenet_container_forward.24} parent=0 // pred_region
    _
  $region21: #{densenet_container_forward.24} parent=0 // pred_fallthru
    _
  // Predicated region
  $region22: #{densenet_container_forward.24} parent=0 // pred_check
    _
  $region23: #{densenet_container_forward.24} parent=0 // pred_check_branch
    %22 = sbr.rel (0) target = $region25
  $region24: #{densenet_container_forward.24} parent=0 // pred_region
    _
  $region25: #{densenet_container_forward.24} parent=0 // pred_fallthru
    _
  %v24 = vld [vmem:[%s0] sm:$0xff]
  %v25 = vld [vmem:[%s0 + $0x8] sm:$0xff]
  %v26 = vld [vmem:[%s0 + $0x10] sm:$0xff]
  %v27 = vld [vmem:[%s0 + $0x18] sm:$0xff]
  %v28 = vld [vmem:[%s2] sm:$0x1]
  %v30 = vperm.slane %v28, 0
  %v32 = vmul.f32 %v24, %v30
  %v33 = vmul.f32 %v25, %v30
  %v34 = vmul.f32 %v26, %v30
  %v35 = vmul.f32 %v27, %v30
  %v36 = vld [vmem:[%s3] sm:$0x1]
  %v38 = vperm.slane %v36, 0
  %v40 = vadd.f32 %v32, %v38
  %v41 = vadd.f32 %v33, %v38
  %v42 = vadd.f32 %v34, %v38
  %v43 = vadd.f32 %v35, %v38
  %v44 = vmax.f32 %v40, 0.0
  %v45 = vmax.f32 %v41, 0.0
  %v46 = vmax.f32 %v42, 0.0
  %v47 = vmax.f32 %v43, 0.0
  %v48 = vpack.c.bf16 %v45, %v44
  %v49 = vpack.c.bf16 %v47, %v46
  %v50 = vld [vmem:[%s1] sm:$0xf]
  %v51 = vld [vmem:[%s1 + $0x4] sm:$0xf]
  %v52 = vld [vmem:[%s1 + $0x8] sm:$0xf]
  %v53 = vld [vmem:[%s1 + $0xc] sm:$0xf]
  %v54 = vld [vmem:[%s1 + $0x10] sm:$0xf]
  %v55 = vld [vmem:[%s1 + $0x14] sm:$0xf]
  %v56 = vld [vmem:[%s1 + $0x18] sm:$0xf]
  %v57 = vld [vmem:[%s1 + $0x1c] sm:$0xf]
  %v58 = vld [vmem:[%s1 + $0x20] sm:$0xf]
  %v68 = vunpack.c.l.b16 %v50
  %v69 = vunpack.c.l.b16 %v51
  %v70 = vunpack.c.l.b16 %v52
  %v71 = vunpack.c.l.b16 %v53
  %v72 = vunpack.c.l.b16 %v54
  %v73 = vunpack.c.l.b16 %v55
  %v74 = vunpack.c.l.b16 %v56
  %v75 = vunpack.c.l.b16 %v57
  %v76 = vunpack.c.l.b16 %v58
  %v77 = vpack.c.b16 %v69, %v68
  %v78 = vpack.c.b16 %v71, %v70
  %v79 = vpack.c.b16 %v73, %v72
  %v80 = vpack.c.b16 %v75, %v74
  %v81 = vpack.c.b16 %v76, %v76
  %vm86 = vcmask 588800
  %v88 = vsel %vm86, %v48, 0
  %v91 = vsel %vm86, %v49, 0
  %vm93 = vcmask 1043456
  %v95 = vsel %vm93, %v81, 0
  %97 = vmatpush.bf16.msra.mxu0 0
  %98 = vmatpush.bf16.msra.mxu0 0
  %99 = vmatpush.bf16.msra.mxu0 0
  %100 = vmatpush.bf16.msra.mxu0 %v95
  %101 = vmatpush.bf16.msra.mxu0 %v80
  %102 = vmatpush.bf16.msra.mxu0 %v79
  %103 = vmatpush.bf16.msra.mxu0 %v78
  %104 = vmatpush.bf16.msra.mxu0 %v77
  %105 = vmatmul.bf16.gmra.mxu0 %v88
  %v106 = vpop.f32.mrf.mxu0
  %v107 = vadd.f32 0.0, %v106
  %v108 = vpop.f32.mrf.mxu0
  %v109 = vadd.f32 0.0, %v108
  %110 = vmatmul.bf16.gmra.mxu0 %v91
  %v111 = vpop.f32.mrf.mxu0
  %v112 = vadd.f32 0.0, %v111
  %v113 = vpop.f32.mrf.mxu0
  %v114 = vadd.f32 0.0, %v113
  %115 = vdwg.mxu0
  %v116 = vld [vmem:[%s4] sm:$0x1]
  %v118 = vperm.slane %v116, 0
  %v120 = vmul.f32 %v107, %v118
  %v121 = vmul.f32 %v109, %v118
  %v122 = vmul.f32 %v112, %v118
  %v123 = vmul.f32 %v114, %v118
  %v124 = vld [vmem:[%s5] sm:$0x1]
  %v126 = vperm.slane %v124, 0
  %v128 = vadd.f32 %v120, %v126
  %v129 = vadd.f32 %v121, %v126
  %v130 = vadd.f32 %v122, %v126
  %v131 = vadd.f32 %v123, %v126
  %v132 = vmax.f32 %v128, 0.0
  %v133 = vmax.f32 %v129, 0.0
  %v134 = vmax.f32 %v130, 0.0
  %v135 = vmax.f32 %v131, 0.0
  %v136 = vpack.c.bf16 %v132, %v132
  %v137 = vpack.c.bf16 %v133, %v133
  %v138 = vpack.c.bf16 %v134, %v134
  %v139 = vpack.c.bf16 %v135, %v135
  %140 = vst [vmem:[%s6] sm:$0xf] %v136
  %141 = vst [vmem:[%s6 + $0x4] sm:$0xf] %v137
  %142 = vst [vmem:[%s6 + $0x8] sm:$0xf] %v138
  %143 = vst [vmem:[%s6 + $0xc] sm:$0xf] %v139
  // Predicated region
  $region26: #{densenet_container_forward.24} parent=0 // pred_check
    _
  $region27: #{densenet_container_forward.24} parent=0 // pred_check_branch
    %145 = sbr.rel (0) target = $region29
  $region28: #{densenet_container_forward.24} parent=0 // pred_region
    _
  $region29: #{densenet_container_forward.24} parent=0 // pred_fallthru
    _
  // Predicated region
  $region30: #{densenet_container_forward.24} parent=0 // pred_check
    _
  $region31: #{densenet_container_forward.24} parent=0 // pred_check_branch
    %147 = sbr.rel (0) target = $region33
  $region32: #{densenet_container_forward.24} parent=0 // pred_region
    _
  $region33: #{densenet_container_forward.24} parent=0 // pred_fallthru
    _

// kernel: densenet_container_forward.26
$region0: #{densenet_container_forward.26}
  #allocation0 [shape = 'u32[]', space=smem, size = 0x4, offset = 0x4, fixed_abs, tag = 'smem constant byte address 0x4 - core index']
  #allocation1 [shape = 'u32[72,128]{1,0:T(1,128)}', space=vmem, size = 0x9000, scoped, tag = 'internal scratch']
  %s0 = inlined_call_operand.vmem [shape: f32[2,16,104], index: 0, kind: input, shape index: {}]
  %s1 = inlined_call_operand.vmem [shape: f32[1,104], index: 1, kind: input, shape index: {}]
  %s2 = inlined_call_operand.vmem [shape: f32[1,104], index: 2, kind: input, shape index: {}]
  %s3 = inlined_call_operand.vmem [shape: f32[2,1,104], index: 3, kind: output, shape index: {}]
  %s4 = sld [smem:[#allocation0]]
  $region45: #{densenet_container_forward.26} parent=0
    _
  %s6 = ssub.s32 1, %s4
  %s7 = scalar_select 0, %s6, %s4
  loop: start=0, step=1, limit=4
  $region2: #{densenet_container_forward.26} parent=0 // loop_pre_header
    _
  $region3: #{densenet_container_forward.26} parent=0 // loop_header
    %s9 = sphi 0, %s13
    %p10 = scmp.ge.s32.totalorder %s9, 4
    %s19 = sphi 0, %s21
    %s22 = sphi 0, %s19
    %s23 = sphi 0, %s22
    %s39 = sphi 0, %s23
    %s43 = sphi 0, %s43
    %s45 = sphi 0, %s43
    %s46 = sphi 0, %s45
    %s60 = sphi 0, %s46
    %s64 = sphi 0, %s64
    %s66 = sphi 0, %s64
    %s67 = sphi 0, %s66
    %s81 = sphi 0, %s67
    %s87 = sphi 0, %s89
    %s90 = sphi 0, %s87
    %s91 = sphi 0, %s90
    %s107 = sphi 0, %s91
  $region4: #{densenet_container_forward.26} parent=0 // loop_header_branch
    %12 = sbr.rel (%p10) target = $region8
  $region5: #{densenet_container_forward.26} parent=0 // loop_body
    %s14 = ssub.s32 %s9, 1
    %s15 = ssub.s32 %s9, 2
    %s16 = sadd.s32 %s9, 1
    %s17 = ssub.s32 %s9, %s16
    %p18 = scmp.eq.s32.totalorder %s17, 0
    %s20 = sadd.s32 %s19, 1
    %s21 = scalar_select %p18, %s19, %s20
    %p24 = pneg %p18
    %p25 = scmp.eq.s32.totalorder %s9, 1
    %p26 = por %p24, %p25
    %p27 = scmp.ne.s32.totalorder %s19, %s22
    %p28 = scmp.eq.s32.totalorder %s9, 0
    %p29 = por %p27, %p28
    %p30 = scmp.ne.s32.totalorder %s19, %s22
    %p31 = scmp.eq.s32.totalorder %s14, 1
    %p32 = por %p30, %p31
    %p33 = scmp.ne.s32.totalorder %s22, %s23
    %p34 = scmp.eq.s32.totalorder %s14, 0
    %p35 = por %p33, %p34
    %p36 = scmp.ne.s32.totalorder %s22, %s23
    %p37 = scmp.eq.s32.totalorder %s15, 1
    %p38 = por %p36, %p37
    %p40 = scmp.ne.s32.totalorder %s23, %s39
    %p41 = scmp.eq.s32.totalorder %s15, 0
    %p42 = por %p40, %p41
    %s44 = sadd.s32 %s43, 1
    %p47 = scmp.eq.s32.totalorder %s9, 1
    %p48 = scmp.ne.s32.totalorder %s43, %s45
    %p49 = scmp.eq.s32.totalorder %s9, 0
    %p50 = por %p48, %p49
    %p51 = scmp.ne.s32.totalorder %s43, %s45
    %p52 = scmp.eq.s32.totalorder %s14, 1
    %p53 = por %p51, %p52
    %p54 = scmp.ne.s32.totalorder %s45, %s46
    %p55 = scmp.eq.s32.totalorder %s14, 0
    %p56 = por %p54, %p55
    %p57 = scmp.ne.s32.totalorder %s45, %s46
    %p58 = scmp.eq.s32.totalorder %s15, 1
    %p59 = por %p57, %p58
    %p61 = scmp.ne.s32.totalorder %s46, %s60
    %p62 = scmp.eq.s32.totalorder %s15, 0
    %p63 = por %p61, %p62
    %s65 = sadd.s32 %s64, 1
    %p68 = scmp.eq.s32.totalorder %s9, 1
    %p69 = scmp.ne.s32.totalorder %s64, %s66
    %p70 = scmp.eq.s32.totalorder %s9, 0
    %p71 = por %p69, %p70
    %p72 = scmp.ne.s32.totalorder %s64, %s66
    %p73 = scmp.eq.s32.totalorder %s14, 1
    %p74 = por %p72, %p73
    %p75 = scmp.ne.s32.totalorder %s66, %s67
    %p76 = scmp.eq.s32.totalorder %s14, 0
    %p77 = por %p75, %p76
    %p78 = scmp.ne.s32.totalorder %s66, %s67
    %p79 = scmp.eq.s32.totalorder %s15, 1
    %p80 = por %p78, %p79
    %p82 = scmp.ne.s32.totalorder %s67, %s81
    %p83 = scmp.eq.s32.totalorder %s15, 0
    %p84 = por %p82, %p83
    %s85 = ssub.s32 %s9, %s16
    %p86 = scmp.eq.s32.totalorder %s85, 0
    %s88 = sadd.s32 %s87, 1
    %s89 = scalar_select %p86, %s87, %s88
    %p92 = pneg %p86
    %p93 = scmp.eq.s32.totalorder %s9, 1
    %p94 = por %p92, %p93
    %p95 = scmp.ne.s32.totalorder %s87, %s90
    %p96 = scmp.eq.s32.totalorder %s9, 0
    %p97 = por %p95, %p96
    %p98 = scmp.ne.s32.totalorder %s87, %s90
    %p99 = scmp.eq.s32.totalorder %s14, 1
    %p100 = por %p98, %p99
    %p101 = scmp.ne.s32.totalorder %s90, %s91
    %p102 = scmp.eq.s32.totalorder %s14, 0
    %p103 = por %p101, %p102
    %p104 = scmp.ne.s32.totalorder %s90, %s91
    %p105 = scmp.eq.s32.totalorder %s15, 1
    %p106 = por %p104, %p105
    %p108 = scmp.ne.s32.totalorder %s91, %s107
    %p109 = scmp.eq.s32.totalorder %s15, 0
    %p110 = por %p108, %p109
    %p111 = scmp.le.s32.totalorder 1, %s9
    %p112 = scmp.lt.s32.totalorder %s9, 3
    %p113 = pnand %p111, %p112
    %p114 = pneg %p113
    // Predicated region
    $region9: #{densenet_container_forward.26} parent=5 // pred_check
      _
    $region10: #{densenet_container_forward.26} parent=5 // pred_check_branch
      %116 = sbr.rel (%p113) target = $region12
    $region11: #{densenet_container_forward.26} parent=5 // pred_region
      %s117 = ssub.s32 %s9, 1
      // Predicated region
      $region13: #{densenet_container_forward.26} parent=11 // pred_check
        %p118 = pneg %p56
      $region14: #{densenet_container_forward.26} parent=11 // pred_check_branch
        %120 = sbr.rel (%p118) target = $region16
      $region15: #{densenet_container_forward.26} parent=11 // pred_region
        _
      $region16: #{densenet_container_forward.26} parent=11 // pred_fallthru
        _
      // Predicated region
      $region17: #{densenet_container_forward.26} parent=11 // pred_check
        %p121 = pneg %p77
      $region18: #{densenet_container_forward.26} parent=11 // pred_check_branch
        %123 = sbr.rel (%p121) target = $region20
      $region19: #{densenet_container_forward.26} parent=11 // pred_region
        _
      $region20: #{densenet_container_forward.26} parent=11 // pred_fallthru
        _
    $region12: #{densenet_container_forward.26} parent=5 // pred_fallthru
      _
    %p124 = scmp.lt.s32.totalorder %s9, 2
    // Predicated region
    $region21: #{densenet_container_forward.26} parent=5 // pred_check
      %p125 = pneg %p124
    $region22: #{densenet_container_forward.26} parent=5 // pred_check_branch
      %127 = sbr.rel (%p125) target = $region24
    $region23: #{densenet_container_forward.26} parent=5 // pred_region
      // Predicated region
      $region25: #{densenet_container_forward.26} parent=23 // pred_check
        %p128 = pneg %p29
      $region26: #{densenet_container_forward.26} parent=23 // pred_check_branch
        %130 = sbr.rel (%p128) target = $region28
      $region27: #{densenet_container_forward.26} parent=23 // pred_region
        %p131 = scmp.lt.s32.totalorder %s9, 1
        %s132 = scalar_select %p131, %s9, 1
        %s133 = smul.addr %s132, 2
        %s134 = smul.addr %s133, 8
        %s135 = scalar_lea.vmem %s0, %s134
      $region28: #{densenet_container_forward.26} parent=23 // pred_fallthru
        _
    $region24: #{densenet_container_forward.26} parent=5 // pred_fallthru
      _
    %p136 = scmp.le.s32.totalorder 1, %s9
    %p137 = scmp.lt.s32.totalorder %s9, 3
    %p138 = pnand %p136, %p137
    %p139 = pneg %p138
    // Predicated region
    $region29: #{densenet_container_forward.26} parent=5 // pred_check
      _
    $region30: #{densenet_container_forward.26} parent=5 // pred_check_branch
      %141 = sbr.rel (%p138) target = $region32
    $region31: #{densenet_container_forward.26} parent=5 // pred_region
      %s142 = ssub.s32 %s9, 1
      %p143 = scmp.lt.s32.totalorder %s14, 1
      %s144 = scalar_select %p143, %s14, 1
      %s145 = smul.addr %s144, 2
      %s146 = smul.addr %s145, 8
      %s147 = scalar_lea.vmem %s0, %s146
      %p148 = pneg %p35
      %p149 = pneg %p32
      %p150 = pneg %p56
      %p151 = pneg %p53
      %p152 = pneg %p77
      %p153 = pneg %p74
      %p154 = pneg %p103
      %p155 = pneg %p100
      %p156 = scmp.lt.s32.totalorder %s14, 1
      %s157 = scalar_select %p156, %s14, 1
      %s158 = scalar_lea.vmem %s3, %s157
      %p159 = scmp.lt.s32.totalorder %s14, 1
      %s160 = scalar_select %p159, %s14, 1
      %s161 = smul.addr %s160, 2
      %s162 = smul.addr %s161, 8
      %s163 = scalar_lea.vmem %s0, %s162
      %p164 = scmp.lt.s32.totalorder %s14, 1
      %s165 = scalar_select %p164, %s14, 1
      %s166 = scalar_lea.vmem %s3, %s165
      %v167 = vld [vmem:[%s163] sm:$0xff]
      %v168 = vld [vmem:[%s163 + $0x8] sm:$0xff]
      %v169 = vld [vmem:[%s1] sm:$0x1]
      %v171 = vperm.slane %v169, 0
      %v173 = vmul.f32 %v167, %v171
      %v174 = vmul.f32 %v168, %v171
      %v175 = vld [vmem:[%s2] sm:$0x1]
      %v177 = vperm.slane %v175, 0
      %v179 = vadd.f32 %v173, %v177
      %v180 = vadd.f32 %v174, %v177
      %v181 = vmax.f32 %v179, 0.0
      %v182 = vmax.f32 %v180, 0.0
      %vm183 = vcmask 850944
      %v184 = vsel %vm183, %v181, 0.0
      %v185 = vsel %vm183, %v182, 0.0
      %v186 = vadd.f32 %v184, %v185
      %v187 = vrot.slane %v186, 4
      %v188 = vadd.f32 %v186, %v187
      %v189 = vrot.slane %v188, 2
      %v190 = vadd.f32 %v188, %v189
      %v191 = vrot.slane %v190, 1
      %v192 = vadd.f32 %v190, %v191
      %v193 = vrcp.pop 16.0
      %v194 = vmul.f32 16.0, %v193
      %v195 = vsub.f32 1.0, %v194
      %v196 = vmul.f32 %v193, %v195
      %v197 = vadd.f32 %v193, %v196
      %vm198 = vweird.f32 %v193
      %v199 = vsel %vm198, %v193, %v197
      %v200 = vmul.f32 %v192, %v199
      %vm201 = vcmask 843776
      %202 = vst.msk [vmem:[%s166] sm:$0x1] %vm201, %v200
      %p203 = scmp.lt.s32.totalorder %s14, 1
      %s204 = scalar_select %p203, %s14, 1
      %s205 = scalar_lea.vmem %s3, %s204
      // Predicated region
      $region33: #{densenet_container_forward.26} parent=31 // pred_check
        %p206 = pneg %p100
      $region34: #{densenet_container_forward.26} parent=31 // pred_check_branch
        %208 = sbr.rel (%p206) target = $region36
      $region35: #{densenet_container_forward.26} parent=31 // pred_region
        _
      $region36: #{densenet_container_forward.26} parent=31 // pred_fallthru
        _
    $region32: #{densenet_container_forward.26} parent=5 // pred_fallthru
      _
    %p209 = scmp.le.s32.totalorder 2, %s9
    // Predicated region
    $region37: #{densenet_container_forward.26} parent=5 // pred_check
      %p210 = pneg %p209
    $region38: #{densenet_container_forward.26} parent=5 // pred_check_branch
      %212 = sbr.rel (%p210) target = $region40
    $region39: #{densenet_container_forward.26} parent=5 // pred_region
      %s213 = ssub.s32 %s9, 2
      // Predicated region
      $region41: #{densenet_container_forward.26} parent=39 // pred_check
        %p214 = pneg %p106
      $region42: #{densenet_container_forward.26} parent=39 // pred_check_branch
        %216 = sbr.rel (%p214) target = $region44
      $region43: #{densenet_container_forward.26} parent=39 // pred_region
        %p217 = scmp.lt.s32.totalorder %s15, 1
        %s218 = scalar_select %p217, %s15, 1
        %s219 = scalar_lea.vmem %s3, %s218
      $region44: #{densenet_container_forward.26} parent=39 // pred_fallthru
        _
    $region40: #{densenet_container_forward.26} parent=5 // pred_fallthru
      _
  $region6: #{densenet_container_forward.26} parent=0 // loop_footer
    %s13 = sadd.s32 1, %s9
  $region7: #{densenet_container_forward.26} parent=0 // loop_footer_branch
    %8 = sbr.rel target = $region3
  $region8: #{densenet_container_forward.26} parent=0 // loop_exit
    _

// kernel: densenet_container_forward.23
$region0: #{densenet_container_forward.23}
  #allocation0 [shape = 'u32[]', space=smem, size = 0x4, offset = 0x4, fixed_abs, tag = 'smem constant byte address 0x4 - core index']
  #allocation1 [shape = 'u32[72,128]{1,0:T(1,128)}', space=vmem, size = 0x9000, scoped, tag = 'internal scratch']
  %s0 = inlined_call_operand.vmem [shape: bf16[2,6,6,128], index: 0, kind: input, shape index: {}]
  %s1 = inlined_call_operand.vmem [shape: bf16[1152,32], index: 1, kind: input, shape index: {}]
  %s2 = inlined_call_operand.vmem [shape: f32[2,4,4,32], index: 2, kind: output, shape index: {}]
  %s3 = sld [smem:[#allocation0]]
  $region41: #{densenet_container_forward.23} parent=0
    _
  %s5 = ssub.s32 1, %s3
  %s6 = scalar_select 0, %s5, %s3
  loop: start=0, step=1, limit=4
  $region2: #{densenet_container_forward.23} parent=0 // loop_pre_header
    _
  $region3: #{densenet_container_forward.23} parent=0 // loop_header
    %s8 = sphi 0, %s12
    %p9 = scmp.ge.s32.totalorder %s8, 4
    %s15 = sphi 0, %s27
    %s16 = sphi 0, %s23
    %s17 = sphi 0, %s15
    %s18 = sphi 0, %s16
    %s19 = sphi 0, %s17
    %s20 = sphi 0, %s18
    %s30 = sphi 0, %s32
    %s33 = sphi 0, %s30
    %s34 = sphi 0, %s33
    %s50 = sphi 0, %s34
    %s54 = sphi 0, %s54
    %s56 = sphi 0, %s54
    %s57 = sphi 0, %s56
    %s71 = sphi 0, %s57
    %s79 = sphi 0, %s81
    %s82 = sphi 0, %s79
    %s83 = sphi 0, %s82
    %s99 = sphi 0, %s83
  $region4: #{densenet_container_forward.23} parent=0 // loop_header_branch
    %11 = sbr.rel (%p9) target = $region8
  $region5: #{densenet_container_forward.23} parent=0 // loop_body
    %s13 = ssub.s32 %s8, 1
    %s14 = ssub.s32 %s8, 2
    %s21 = sadd.s32 1, %s16
    %p22 = scmp.ge.s32.totalorder %s21, 1
    %s23 = scalar_select %p22, 0, %s21
    %s24 = sadd.s32 1, %s15
    %s25 = scalar_select %p22, %s24, %s15
    %p26 = scmp.ge.s32.totalorder %s25, 2
    %s27 = scalar_select %p26, 0, %s25
    %s28 = ssub.s32 %s15, %s27
    %p29 = scmp.eq.s32.totalorder %s28, 0
    %s31 = sadd.s32 %s30, 1
    %s32 = scalar_select %p29, %s30, %s31
    %p35 = pneg %p29
    %p36 = scmp.eq.s32.totalorder %s8, 1
    %p37 = por %p35, %p36
    %p38 = scmp.ne.s32.totalorder %s30, %s33
    %p39 = scmp.eq.s32.totalorder %s8, 0
    %p40 = por %p38, %p39
    %p41 = scmp.ne.s32.totalorder %s30, %s33
    %p42 = scmp.eq.s32.totalorder %s13, 1
    %p43 = por %p41, %p42
    %p44 = scmp.ne.s32.totalorder %s33, %s34
    %p45 = scmp.eq.s32.totalorder %s13, 0
    %p46 = por %p44, %p45
    %p47 = scmp.ne.s32.totalorder %s33, %s34
    %p48 = scmp.eq.s32.totalorder %s14, 1
    %p49 = por %p47, %p48
    %p51 = scmp.ne.s32.totalorder %s34, %s50
    %p52 = scmp.eq.s32.totalorder %s14, 0
    %p53 = por %p51, %p52
    %s55 = sadd.s32 %s54, 1
    %p58 = scmp.eq.s32.totalorder %s8, 1
    %p59 = scmp.ne.s32.totalorder %s54, %s56
    %p60 = scmp.eq.s32.totalorder %s8, 0
    %p61 = por %p59, %p60
    %p62 = scmp.ne.s32.totalorder %s54, %s56
    %p63 = scmp.eq.s32.totalorder %s13, 1
    %p64 = por %p62, %p63
    %p65 = scmp.ne.s32.totalorder %s56, %s57
    %p66 = scmp.eq.s32.totalorder %s13, 0
    %p67 = por %p65, %p66
    %p68 = scmp.ne.s32.totalorder %s56, %s57
    %p69 = scmp.eq.s32.totalorder %s14, 1
    %p70 = por %p68, %p69
    %p72 = scmp.ne.s32.totalorder %s57, %s71
    %p73 = scmp.eq.s32.totalorder %s14, 0
    %p74 = por %p72, %p73
    %s75 = ssub.s32 %s15, %s27
    %s76 = ssub.s32 %s16, %s23
    %s77 = sor.u32 %s75, %s76
    %p78 = scmp.eq.s32.totalorder %s77, 0
    %s80 = sadd.s32 %s79, 1
    %s81 = scalar_select %p78, %s79, %s80
    %p84 = pneg %p78
    %p85 = scmp.eq.s32.totalorder %s8, 1
    %p86 = por %p84, %p85
    %p87 = scmp.ne.s32.totalorder %s79, %s82
    %p88 = scmp.eq.s32.totalorder %s8, 0
    %p89 = por %p87, %p88
    %p90 = scmp.ne.s32.totalorder %s79, %s82
    %p91 = scmp.eq.s32.totalorder %s13, 1
    %p92 = por %p90, %p91
    %p93 = scmp.ne.s32.totalorder %s82, %s83
    %p94 = scmp.eq.s32.totalorder %s13, 0
    %p95 = por %p93, %p94
    %p96 = scmp.ne.s32.totalorder %s82, %s83
    %p97 = scmp.eq.s32.totalorder %s14, 1
    %p98 = por %p96, %p97
    %p100 = scmp.ne.s32.totalorder %s83, %s99
    %p101 = scmp.eq.s32.totalorder %s14, 0
    %p102 = por %p100, %p101
    %p103 = scmp.le.s32.totalorder 1, %s8
    %p104 = scmp.lt.s32.totalorder %s8, 3
    %p105 = pnand %p103, %p104
    %p106 = pneg %p105
    // Predicated region
    $region9: #{densenet_container_forward.23} parent=5 // pred_check
      _
    $region10: #{densenet_container_forward.23} parent=5 // pred_check_branch
      %108 = sbr.rel (%p105) target = $region12
    $region11: #{densenet_container_forward.23} parent=5 // pred_region
      %s109 = ssub.s32 %s8, 1
      // Predicated region
      $region13: #{densenet_container_forward.23} parent=11 // pred_check
        %p110 = pneg %p67
      $region14: #{densenet_container_forward.23} parent=11 // pred_check_branch
        %112 = sbr.rel (%p110) target = $region16
      $region15: #{densenet_container_forward.23} parent=11 // pred_region
        _
      $region16: #{densenet_container_forward.23} parent=11 // pred_fallthru
        _
    $region12: #{densenet_container_forward.23} parent=5 // pred_fallthru
      _
    %p113 = scmp.lt.s32.totalorder %s8, 2
    // Predicated region
    $region17: #{densenet_container_forward.23} parent=5 // pred_check
      %p114 = pneg %p113
    $region18: #{densenet_container_forward.23} parent=5 // pred_check_branch
      %116 = sbr.rel (%p114) target = $region20
    $region19: #{densenet_container_forward.23} parent=5 // pred_region
      // Predicated region
      $region21: #{densenet_container_forward.23} parent=19 // pred_check
        %p117 = pneg %p40
      $region22: #{densenet_container_forward.23} parent=19 // pred_check_branch
        %119 = sbr.rel (%p117) target = $region24
      $region23: #{densenet_container_forward.23} parent=19 // pred_region
        %p120 = scmp.lt.s32.totalorder %s15, 1
        %s121 = scalar_select %p120, %s15, 1
        %s122 = smul.addr %s121, 6
        %s123 = smul.addr %s122, 4
        %s124 = scalar_lea.vmem %s0, %s123
      $region24: #{densenet_container_forward.23} parent=19 // pred_fallthru
        _
    $region20: #{densenet_container_forward.23} parent=5 // pred_fallthru
      _
    %p125 = scmp.le.s32.totalorder 1, %s8
    %p126 = scmp.lt.s32.totalorder %s8, 3
    %p127 = pnand %p125, %p126
    %p128 = pneg %p127
    // Predicated region
    $region25: #{densenet_container_forward.23} parent=5 // pred_check
      _
    $region26: #{densenet_container_forward.23} parent=5 // pred_check_branch
      %130 = sbr.rel (%p127) target = $region28
    $region27: #{densenet_container_forward.23} parent=5 // pred_region
      %s131 = ssub.s32 %s8, 1
      %p132 = scmp.lt.s32.totalorder %s17, 1
      %s133 = scalar_select %p132, %s17, 1
      %s134 = smul.addr %s133, 6
      %s135 = smul.addr %s134, 4
      %s136 = scalar_lea.vmem %s0, %s135
      %p137 = pneg %p46
      %p138 = pneg %p43
      %p139 = pneg %p67
      %p140 = pneg %p64
      %p141 = pneg %p95
      %p142 = pneg %p92
      %s143 = smul.u32 4, %s18
      %p144 = scmp.lt.s32.totalorder %s17, 1
      %s145 = scalar_select %p144, %s17, 1
      %p146 = scmp.lt.s32.totalorder %s143, 3
      %s147 = scalar_select %p146, %s143, 3
      %s148 = smul.addr %s145, 4
      %s149 = sadd.s32 %s147, %s148
      %s150 = smul.addr %s149, 4
      %s151 = scalar_lea.vmem %s2, %s150
      %p152 = scmp.lt.s32.totalorder %s17, 1
      %s153 = scalar_select %p152, %s17, 1
      %s154 = smul.addr %s153, 6
      %s155 = smul.addr %s154, 4
      %s156 = scalar_lea.vmem %s0, %s155
      %s157 = smul.u32 4, %s18
      %p158 = scmp.lt.s32.totalorder %s17, 1
      %s159 = scalar_select %p158, %s17, 1
      %p160 = scmp.lt.s32.totalorder %s157, 3
      %s161 = scalar_select %p160, %s157, 3
      %s162 = smul.addr %s159, 4
      %s163 = sadd.s32 %s161, %s162
      %s164 = smul.addr %s163, 4
      %s165 = scalar_lea.vmem %s2, %s164
      %s166 = smul.u32 4, %s18
      %v167 = vld [vmem:[%s1] sm:$0xf]
      %v168 = vld [vmem:[%s1 + $0x4] sm:$0xf]
      %v169 = vld [vmem:[%s1 + $0x8] sm:$0xf]
      %v170 = vld [vmem:[%s1 + $0xc] sm:$0xf]
      %v171 = vld [vmem:[%s1 + $0x10] sm:$0xf]
      %v172 = vld [vmem:[%s1 + $0x14] sm:$0xf]
      %v173 = vld [vmem:[%s1 + $0x18] sm:$0xf]
      %v174 = vld [vmem:[%s1 + $0x1c] sm:$0xf]
      %v175 = vld [vmem:[%s1 + $0x20] sm:$0xf]
      %v176 = vld [vmem:[%s1 + $0x24] sm:$0xf]
      %v177 = vld [vmem:[%s1 + $0x28] sm:$0xf]
      %v178 = vld [vmem:[%s1 + $0x2c] sm:$0xf]
      %v179 = vld [vmem:[%s1 + $0x30] sm:$0xf]
      %v180 = vld [vmem:[%s1 + $0x34] sm:$0xf]
      %v181 = vld [vmem:[%s1 + $0x38] sm:$0xf]
      %v182 = vld [vmem:[%s1 + $0x3c] sm:$0xf]
      %v183 = vld [vmem:[%s1 + $0x40] sm:$0xf]
      %v184 = vld [vmem:[%s1 + $0x44] sm:$0xf]
      %v185 = vld [vmem:[%s1 + $0x48] sm:$0xf]
      %v186 = vld [vmem:[%s1 + $0x4c] sm:$0xf]
      %v187 = vld [vmem:[%s1 + $0x50] sm:$0xf]
      %v188 = vld [vmem:[%s1 + $0x54] sm:$0xf]
      %v189 = vld [vmem:[%s1 + $0x58] sm:$0xf]
      %v190 = vld [vmem:[%s1 + $0x5c] sm:$0xf]
      %v191 = vld [vmem:[%s1 + $0x60] sm:$0xf]
      %v192 = vld [vmem:[%s1 + $0x64] sm:$0xf]
      %v193 = vld [vmem:[%s1 + $0x68] sm:$0xf]
      %v194 = vld [vmem:[%s1 + $0x6c] sm:$0xf]
      %v195 = vld [vmem:[%s1 + $0x70] sm:$0xf]
      %v196 = vld [vmem:[%s1 + $0x74] sm:$0xf]
      %v197 = vld [vmem:[%s1 + $0x78] sm:$0xf]
      %v198 = vld [vmem:[%s1 + $0x7c] sm:$0xf]
      %v199 = vld [vmem:[%s1 + $0x80] sm:$0xf]
      %v200 = vld [vmem:[%s1 + $0x84] sm:$0xf]
      %v201 = vld [vmem:[%s1 + $0x88] sm:$0xf]
      %v202 = vld [vmem:[%s1 + $0x8c] sm:$0xf]
      %v203 = vld [vmem:[%s1 + $0x90] sm:$0xf]
      %v204 = vld [vmem:[%s1 + $0x94] sm:$0xf]
      %v205 = vld [vmem:[%s1 + $0x98] sm:$0xf]
      %v206 = vld [vmem:[%s1 + $0x9c] sm:$0xf]
      %v207 = vld [vmem:[%s1 + $0xa0] sm:$0xf]
      %v208 = vld [vmem:[%s1 + $0xa4] sm:$0xf]
      %v209 = vld [vmem:[%s1 + $0xa8] sm:$0xf]
      %v210 = vld [vmem:[%s1 + $0xac] sm:$0xf]
      %v211 = vld [vmem:[%s1 + $0xb0] sm:$0xf]
      %v212 = vld [vmem:[%s1 + $0xb4] sm:$0xf]
      %v213 = vld [vmem:[%s1 + $0xb8] sm:$0xf]
      %v214 = vld [vmem:[%s1 + $0xbc] sm:$0xf]
      %v215 = vld [vmem:[%s1 + $0xc0] sm:$0xf]
      %v216 = vld [vmem:[%s1 + $0xc4] sm:$0xf]
      %v217 = vld [vmem:[%s1 + $0xc8] sm:$0xf]
      %v218 = vld [vmem:[%s1 + $0xcc] sm:$0xf]
      %v219 = vld [vmem:[%s1 + $0xd0] sm:$0xf]
      %v220 = vld [vmem:[%s1 + $0xd4] sm:$0xf]
      %v221 = vld [vmem:[%s1 + $0xd8] sm:$0xf]
      %v222 = vld [vmem:[%s1 + $0xdc] sm:$0xf]
      %v223 = vld [vmem:[%s1 + $0xe0] sm:$0xf]
      %v224 = vld [vmem:[%s1 + $0xe4] sm:$0xf]
      %v225 = vld [vmem:[%s1 + $0xe8] sm:$0xf]
      %v226 = vld [vmem:[%s1 + $0xec] sm:$0xf]
      %v227 = vld [vmem:[%s1 + $0xf0] sm:$0xf]
      %v228 = vld [vmem:[%s1 + $0xf4] sm:$0xf]
      %v229 = vld [vmem:[%s1 + $0xf8] sm:$0xf]
      %v230 = vld [vmem:[%s1 + $0xfc] sm:$0xf]
      %v231 = vld [vmem:[%s1 + $0x100] sm:$0xf]
      %v232 = vld [vmem:[%s1 + $0x104] sm:$0xf]
      %v233 = vld [vmem:[%s1 + $0x108] sm:$0xf]
      %v234 = vld [vmem:[%s1 + $0x10c] sm:$0xf]
      %v235 = vld [vmem:[%s1 + $0x110] sm:$0xf]
      %v236 = vld [vmem:[%s1 + $0x114] sm:$0xf]
      %v237 = vld [vmem:[%s1 + $0x118] sm:$0xf]
      %v238 = vld [vmem:[%s1 + $0x11c] sm:$0xf]
      %v239 = vld [vmem:[%s1 + $0x120] sm:$0xf]
      %v240 = vld [vmem:[%s1 + $0x124] sm:$0xf]
      %v241 = vld [vmem:[%s1 + $0x128] sm:$0xf]
      %v242 = vld [vmem:[%s1 + $0x12c] sm:$0xf]
      %v243 = vld [vmem:[%s1 + $0x130] sm:$0xf]
      %v244 = vld [vmem:[%s1 + $0x134] sm:$0xf]
      %v245 = vld [vmem:[%s1 + $0x138] sm:$0xf]
      %v246 = vld [vmem:[%s1 + $0x13c] sm:$0xf]
      %v247 = vld [vmem:[%s1 + $0x140] sm:$0xf]
      %v248 = vld [vmem:[%s1 + $0x144] sm:$0xf]
      %v249 = vld [vmem:[%s1 + $0x148] sm:$0xf]
      %v250 = vld [vmem:[%s1 + $0x14c] sm:$0xf]
      %v251 = vld [vmem:[%s1 + $0x150] sm:$0xf]
      %v252 = vld [vmem:[%s1 + $0x154] sm:$0xf]
      %v253 = vld [vmem:[%s1 + $0x158] sm:$0xf]
      %v254 = vld [vmem:[%s1 + $0x15c] sm:$0xf]
      %v255 = vld [vmem:[%s1 + $0x160] sm:$0xf]
      %v256 = vld [vmem:[%s1 + $0x164] sm:$0xf]
      %v257 = vld [vmem:[%s1 + $0x168] sm:$0xf]
      %v258 = vld [vmem:[%s1 + $0x16c] sm:$0xf]
      %v259 = vld [vmem:[%s1 + $0x170] sm:$0xf]
      %v260 = vld [vmem:[%s1 + $0x174] sm:$0xf]
      %v261 = vld [vmem:[%s1 + $0x178] sm:$0xf]
      %v262 = vld [vmem:[%s1 + $0x17c] sm:$0xf]
      %v263 = vld [vmem:[%s1 + $0x180] sm:$0xf]
      %v264 = vld [vmem:[%s1 + $0x184] sm:$0xf]
      %v265 = vld [vmem:[%s1 + $0x188] sm:$0xf]
      %v266 = vld [vmem:[%s1 + $0x18c] sm:$0xf]
      %v267 = vld [vmem:[%s1 + $0x190] sm:$0xf]
      %v268 = vld [vmem:[%s1 + $0x194] sm:$0xf]
      %v269 = vld [vmem:[%s1 + $0x198] sm:$0xf]
      %v270 = vld [vmem:[%s1 + $0x19c] sm:$0xf]
      %v271 = vld [vmem:[%s1 + $0x1a0] sm:$0xf]
      %v272 = vld [vmem:[%s1 + $0x1a4] sm:$0xf]
      %v273 = vld [vmem:[%s1 + $0x1a8] sm:$0xf]
      %v274 = vld [vmem:[%s1 + $0x1ac] sm:$0xf]
      %v275 = vld [vmem:[%s1 + $0x1b0] sm:$0xf]
      %v276 = vld [vmem:[%s1 + $0x1b4] sm:$0xf]
      %v277 = vld [vmem:[%s1 + $0x1b8] sm:$0xf]
      %v278 = vld [vmem:[%s1 + $0x1bc] sm:$0xf]
      %v279 = vld [vmem:[%s1 + $0x1c0] sm:$0xf]
      %v280 = vld [vmem:[%s1 + $0x1c4] sm:$0xf]
      %v281 = vld [vmem:[%s1 + $0x1c8] sm:$0xf]
      %v282 = vld [vmem:[%s1 + $0x1cc] sm:$0xf]
      %v283 = vld [vmem:[%s1 + $0x1d0] sm:$0xf]
      %v284 = vld [vmem:[%s1 + $0x1d4] sm:$0xf]
      %v285 = vld [vmem:[%s1 + $0x1d8] sm:$0xf]
      %v286 = vld [vmem:[%s1 + $0x1dc] sm:$0xf]
      %v287 = vld [vmem:[%s1 + $0x1e0] sm:$0xf]
      %v288 = vld [vmem:[%s1 + $0x1e4] sm:$0xf]
      %v289 = vld [vmem:[%s1 + $0x1e8] sm:$0xf]
      %v290 = vld [vmem:[%s1 + $0x1ec] sm:$0xf]
      %v291 = vld [vmem:[%s1 + $0x1f0] sm:$0xf]
      %v292 = vld [vmem:[%s1 + $0x1f4] sm:$0xf]
      %v293 = vld [vmem:[%s1 + $0x1f8] sm:$0xf]
      %v294 = vld [vmem:[%s1 + $0x1fc] sm:$0xf]
      %v295 = vld [vmem:[%s1 + $0x200] sm:$0xf]
      %v296 = vld [vmem:[%s1 + $0x204] sm:$0xf]
      %v297 = vld [vmem:[%s1 + $0x208] sm:$0xf]
      %v298 = vld [vmem:[%s1 + $0x20c] sm:$0xf]
      %v299 = vld [vmem:[%s1 + $0x210] sm:$0xf]
      %v300 = vld [vmem:[%s1 + $0x214] sm:$0xf]
      %v301 = vld [vmem:[%s1 + $0x218] sm:$0xf]
      %v302 = vld [vmem:[%s1 + $0x21c] sm:$0xf]
      %v303 = vld [vmem:[%s1 + $0x220] sm:$0xf]
      %v304 = vld [vmem:[%s1 + $0x224] sm:$0xf]
      %v305 = vld [vmem:[%s1 + $0x228] sm:$0xf]
      %v306 = vld [vmem:[%s1 + $0x22c] sm:$0xf]
      %v307 = vld [vmem:[%s1 + $0x230] sm:$0xf]
      %v308 = vld [vmem:[%s1 + $0x234] sm:$0xf]
      %v309 = vld [vmem:[%s1 + $0x238] sm:$0xf]
      %v310 = vld [vmem:[%s1 + $0x23c] sm:$0xf]
      %s311 = smul.u32 %s18, 4
      %s312 = smul.addr %s311, 4
      %s313 = scalar_lea.vmem %s156, %s312
      %v314 = vld [vmem:[%s313] sm:$0x7]
      %s315 = sadd.s32 %s311, 1
      %s316 = smul.addr %s315, 4
      %s317 = scalar_lea.vmem %s156, %s316
      %v318 = vld [vmem:[%s317] sm:$0x7]
      %s319 = sadd.s32 %s311, 2
      %s320 = smul.addr %s319, 4
      %s321 = scalar_lea.vmem %s156, %s320
      %v322 = vld [vmem:[%s321] sm:$0x7]
      %v324 = vunpack.c.l.b16 %v314
      %v325 = vpack.c.b16 %v324, %v324
      %v327 = vshrl.u32 %v325, 16
      %v329 = vshll.u32 %v325, 16
      %v331 = vrot.slane %v329, 1
      %v332 = vor.u32 %v327, %v331
      %v334 = vrot.slane %v325, 1
      %v337 = vunpack.c.l.b16 %v318
      %v338 = vpack.c.b16 %v337, %v337
      %v340 = vshrl.u32 %v338, 16
      %v342 = vshll.u32 %v338, 16
      %v344 = vrot.slane %v342, 1
      %v345 = vor.u32 %v340, %v344
      %v347 = vrot.slane %v338, 1
      %v350 = vunpack.c.l.b16 %v322
      %v351 = vpack.c.b16 %v350, %v350
      %v353 = vshrl.u32 %v351, 16
      %v355 = vshll.u32 %v351, 16
      %v357 = vrot.slane %v355, 1
      %v358 = vor.u32 %v353, %v357
      %v360 = vrot.slane %v351, 1
      %v506 = vunpack.c.l.b16 %v167
      %v507 = vunpack.c.l.b16 %v168
      %v508 = vunpack.c.l.b16 %v169
      %v509 = vunpack.c.l.b16 %v170
      %v510 = vunpack.c.l.b16 %v171
      %v511 = vunpack.c.l.b16 %v172
      %v512 = vunpack.c.l.b16 %v173
      %v513 = vunpack.c.l.b16 %v174
      %v514 = vunpack.c.l.b16 %v175
      %v515 = vunpack.c.l.b16 %v176
      %v516 = vunpack.c.l.b16 %v177
      %v517 = vunpack.c.l.b16 %v178
      %v518 = vunpack.c.l.b16 %v179
      %v519 = vunpack.c.l.b16 %v180
      %v520 = vunpack.c.l.b16 %v181
      %v521 = vunpack.c.l.b16 %v182
      %v522 = vunpack.c.l.b16 %v183
      %v523 = vunpack.c.l.b16 %v184
      %v524 = vunpack.c.l.b16 %v185
      %v525 = vunpack.c.l.b16 %v186
      %v526 = vunpack.c.l.b16 %v187
      %v527 = vunpack.c.l.b16 %v188
      %v528 = vunpack.c.l.b16 %v189
      %v529 = vunpack.c.l.b16 %v190
      %v530 = vunpack.c.l.b16 %v191
      %v531 = vunpack.c.l.b16 %v192
      %v532 = vunpack.c.l.b16 %v193
      %v533 = vunpack.c.l.b16 %v194
      %v534 = vunpack.c.l.b16 %v195
      %v535 = vunpack.c.l.b16 %v196
      %v536 = vunpack.c.l.b16 %v197
      %v537 = vunpack.c.l.b16 %v198
      %v538 = vunpack.c.l.b16 %v199
      %v539 = vunpack.c.l.b16 %v200
      %v540 = vunpack.c.l.b16 %v201
      %v541 = vunpack.c.l.b16 %v202
      %v542 = vunpack.c.l.b16 %v203
      %v543 = vunpack.c.l.b16 %v204
      %v544 = vunpack.c.l.b16 %v205
      %v545 = vunpack.c.l.b16 %v206
      %v546 = vunpack.c.l.b16 %v207
      %v547 = vunpack.c.l.b16 %v208
      %v548 = vunpack.c.l.b16 %v209
      %v549 = vunpack.c.l.b16 %v210
      %v550 = vunpack.c.l.b16 %v211
      %v551 = vunpack.c.l.b16 %v212
      %v552 = vunpack.c.l.b16 %v213
      %v553 = vunpack.c.l.b16 %v214
      %v554 = vunpack.c.l.b16 %v215
      %v555 = vunpack.c.l.b16 %v216
      %v556 = vunpack.c.l.b16 %v217
      %v557 = vunpack.c.l.b16 %v218
      %v558 = vunpack.c.l.b16 %v219
      %v559 = vunpack.c.l.b16 %v220
      %v560 = vunpack.c.l.b16 %v221
      %v561 = vunpack.c.l.b16 %v222
      %v562 = vunpack.c.l.b16 %v223
      %v563 = vunpack.c.l.b16 %v224
      %v564 = vunpack.c.l.b16 %v225
      %v565 = vunpack.c.l.b16 %v226
      %v566 = vunpack.c.l.b16 %v227
      %v567 = vunpack.c.l.b16 %v228
      %v568 = vunpack.c.l.b16 %v229
      %v569 = vunpack.c.l.b16 %v230
      %v570 = vunpack.c.l.b16 %v231
      %v571 = vunpack.c.l.b16 %v232
      %v572 = vunpack.c.l.b16 %v233
      %v573 = vunpack.c.l.b16 %v234
      %v574 = vunpack.c.l.b16 %v235
      %v575 = vunpack.c.l.b16 %v236
      %v576 = vunpack.c.l.b16 %v237
      %v577 = vunpack.c.l.b16 %v238
      %v578 = vunpack.c.l.b16 %v239
      %v579 = vunpack.c.l.b16 %v240
      %v580 = vunpack.c.l.b16 %v241
      %v581 = vunpack.c.l.b16 %v242
      %v582 = vunpack.c.l.b16 %v243
      %v583 = vunpack.c.l.b16 %v244
      %v584 = vunpack.c.l.b16 %v245
      %v585 = vunpack.c.l.b16 %v246
      %v586 = vunpack.c.l.b16 %v247
      %v587 = vunpack.c.l.b16 %v248
      %v588 = vunpack.c.l.b16 %v249
      %v589 = vunpack.c.l.b16 %v250
      %v590 = vunpack.c.l.b16 %v251
      %v591 = vunpack.c.l.b16 %v252
      %v592 = vunpack.c.l.b16 %v253
      %v593 = vunpack.c.l.b16 %v254
      %v594 = vunpack.c.l.b16 %v255
      %v595 = vunpack.c.l.b16 %v256
      %v596 = vunpack.c.l.b16 %v257
      %v597 = vunpack.c.l.b16 %v258
      %v598 = vunpack.c.l.b16 %v259
      %v599 = vunpack.c.l.b16 %v260
      %v600 = vunpack.c.l.b16 %v261
      %v601 = vunpack.c.l.b16 %v262
      %v602 = vunpack.c.l.b16 %v263
      %v603 = vunpack.c.l.b16 %v264
      %v604 = vunpack.c.l.b16 %v265
      %v605 = vunpack.c.l.b16 %v266
      %v606 = vunpack.c.l.b16 %v267
      %v607 = vunpack.c.l.b16 %v268
      %v608 = vunpack.c.l.b16 %v269
      %v609 = vunpack.c.l.b16 %v270
      %v610 = vunpack.c.l.b16 %v271
      %v611 = vunpack.c.l.b16 %v272
      %v612 = vunpack.c.l.b16 %v273
      %v613 = vunpack.c.l.b16 %v274
      %v614 = vunpack.c.l.b16 %v275
      %v615 = vunpack.c.l.b16 %v276
      %v616 = vunpack.c.l.b16 %v277
      %v617 = vunpack.c.l.b16 %v278
      %v618 = vunpack.c.l.b16 %v279
      %v619 = vunpack.c.l.b16 %v280
      %v620 = vunpack.c.l.b16 %v281
      %v621 = vunpack.c.l.b16 %v282
      %v622 = vunpack.c.l.b16 %v283
      %v623 = vunpack.c.l.b16 %v284
      %v624 = vunpack.c.l.b16 %v285
      %v625 = vunpack.c.l.b16 %v286
      %v626 = vunpack.c.l.b16 %v287
      %v627 = vunpack.c.l.b16 %v288
      %v628 = vunpack.c.l.b16 %v289
      %v629 = vunpack.c.l.b16 %v290
      %v630 = vunpack.c.l.b16 %v291
      %v631 = vunpack.c.l.b16 %v292
      %v632 = vunpack.c.l.b16 %v293
      %v633 = vunpack.c.l.b16 %v294
      %v634 = vunpack.c.l.b16 %v295
      %v635 = vunpack.c.l.b16 %v296
      %v636 = vunpack.c.l.b16 %v297
      %v637 = vunpack.c.l.b16 %v298
      %v638 = vunpack.c.l.b16 %v299
      %v639 = vunpack.c.l.b16 %v300
      %v640 = vunpack.c.l.b16 %v301
      %v641 = vunpack.c.l.b16 %v302
      %v642 = vunpack.c.l.b16 %v303
      %v643 = vunpack.c.l.b16 %v304
      %v644 = vunpack.c.l.b16 %v305
      %v645 = vunpack.c.l.b16 %v306
      %v646 = vunpack.c.l.b16 %v307
      %v647 = vunpack.c.l.b16 %v308
      %v648 = vunpack.c.l.b16 %v309
      %v649 = vunpack.c.l.b16 %v310
      %v650 = vpack.c.b16 %v507, %v506
      %v651 = vpack.c.b16 %v509, %v508
      %v652 = vpack.c.b16 %v511, %v510
      %v653 = vpack.c.b16 %v513, %v512
      %v654 = vpack.c.b16 %v515, %v514
      %v655 = vpack.c.b16 %v517, %v516
      %v656 = vpack.c.b16 %v519, %v518
      %v657 = vpack.c.b16 %v521, %v520
      %v658 = vpack.c.b16 %v523, %v522
      %v659 = vpack.c.b16 %v525, %v524
      %v660 = vpack.c.b16 %v527, %v526
      %v661 = vpack.c.b16 %v529, %v528
      %v662 = vpack.c.b16 %v531, %v530
      %v663 = vpack.c.b16 %v533, %v532
      %v664 = vpack.c.b16 %v535, %v534
      %v665 = vpack.c.b16 %v537, %v536
      %v666 = vpack.c.b16 %v539, %v538
      %v667 = vpack.c.b16 %v541, %v540
      %v668 = vpack.c.b16 %v543, %v542
      %v669 = vpack.c.b16 %v545, %v544
      %v670 = vpack.c.b16 %v547, %v546
      %v671 = vpack.c.b16 %v549, %v548
      %v672 = vpack.c.b16 %v551, %v550
      %v673 = vpack.c.b16 %v553, %v552
      %v674 = vpack.c.b16 %v555, %v554
      %v675 = vpack.c.b16 %v557, %v556
      %v676 = vpack.c.b16 %v559, %v558
      %v677 = vpack.c.b16 %v561, %v560
      %v678 = vpack.c.b16 %v563, %v562
      %v679 = vpack.c.b16 %v565, %v564
      %v680 = vpack.c.b16 %v567, %v566
      %v681 = vpack.c.b16 %v569, %v568
      %v682 = vpack.c.b16 %v571, %v570
      %v683 = vpack.c.b16 %v573, %v572
      %v684 = vpack.c.b16 %v575, %v574
      %v685 = vpack.c.b16 %v577, %v576
      %v686 = vpack.c.b16 %v579, %v578
      %v687 = vpack.c.b16 %v581, %v580
      %v688 = vpack.c.b16 %v583, %v582
      %v689 = vpack.c.b16 %v585, %v584
      %v690 = vpack.c.b16 %v587, %v586
      %v691 = vpack.c.b16 %v589, %v588
      %v692 = vpack.c.b16 %v591, %v590
      %v693 = vpack.c.b16 %v593, %v592
      %v694 = vpack.c.b16 %v595, %v594
      %v695 = vpack.c.b16 %v597, %v596
      %v696 = vpack.c.b16 %v599, %v598
      %v697 = vpack.c.b16 %v601, %v600
      %v698 = vpack.c.b16 %v603, %v602
      %v699 = vpack.c.b16 %v605, %v604
      %v700 = vpack.c.b16 %v607, %v606
      %v701 = vpack.c.b16 %v609, %v608
      %v702 = vpack.c.b16 %v611, %v610
      %v703 = vpack.c.b16 %v613, %v612
      %v704 = vpack.c.b16 %v615, %v614
      %v705 = vpack.c.b16 %v617, %v616
      %v706 = vpack.c.b16 %v619, %v618
      %v707 = vpack.c.b16 %v621, %v620
      %v708 = vpack.c.b16 %v623, %v622
      %v709 = vpack.c.b16 %v625, %v624
      %v710 = vpack.c.b16 %v627, %v626
      %v711 = vpack.c.b16 %v629, %v628
      %v712 = vpack.c.b16 %v631, %v630
      %v713 = vpack.c.b16 %v633, %v632
      %v714 = vpack.c.b16 %v635, %v634
      %v715 = vpack.c.b16 %v637, %v636
      %v716 = vpack.c.b16 %v639, %v638
      %v717 = vpack.c.b16 %v641, %v640
      %v718 = vpack.c.b16 %v643, %v642
      %v719 = vpack.c.b16 %v645, %v644
      %v720 = vpack.c.b16 %v647, %v646
      %v721 = vpack.c.b16 %v649, %v648
      %794 = vmatpush.bf16.msra.mxu0 %v657
      %795 = vmatpush.bf16.msra.mxu0 %v656
      %796 = vmatpush.bf16.msra.mxu0 %v655
      %797 = vmatpush.bf16.msra.mxu0 %v654
      %798 = vmatpush.bf16.msra.mxu0 %v653
      %799 = vmatpush.bf16.msra.mxu0 %v652
      %800 = vmatpush.bf16.msra.mxu0 %v651
      %801 = vmatpush.bf16.msra.mxu0 %v650
      %802 = vmatmul.bf16.gmra.mxu0 %v314
      %v803 = vpop.f32.mrf.mxu0
      %v804 = vadd.f32 0.0, %v803
      %v805 = vpop.f32.mrf.mxu0
      %806 = vdwg.mxu0
      %807 = vmatpush.bf16.msra.mxu0 %v665
      %808 = vmatpush.bf16.msra.mxu0 %v664
      %809 = vmatpush.bf16.msra.mxu0 %v663
      %810 = vmatpush.bf16.msra.mxu0 %v662
      %811 = vmatpush.bf16.msra.mxu0 %v661
      %812 = vmatpush.bf16.msra.mxu0 %v660
      %813 = vmatpush.bf16.msra.mxu0 %v659
      %814 = vmatpush.bf16.msra.mxu0 %v658
      %815 = vmatmul.bf16.gmra.mxu0 %v332
      %v816 = vpop.f32.mrf.mxu0
      %v817 = vadd.f32 %v804, %v816
      %v818 = vpop.f32.mrf.mxu0
      %819 = vdwg.mxu0
      %820 = vmatpush.bf16.msra.mxu0 %v673
      %821 = vmatpush.bf16.msra.mxu0 %v672
      %822 = vmatpush.bf16.msra.mxu0 %v671
      %823 = vmatpush.bf16.msra.mxu0 %v670
      %824 = vmatpush.bf16.msra.mxu0 %v669
      %825 = vmatpush.bf16.msra.mxu0 %v668
      %826 = vmatpush.bf16.msra.mxu0 %v667
      %827 = vmatpush.bf16.msra.mxu0 %v666
      %828 = vmatmul.bf16.gmra.mxu0 %v334
      %v829 = vpop.f32.mrf.mxu0
      %v830 = vadd.f32 %v817, %v829
      %v831 = vpop.f32.mrf.mxu0
      %832 = vdwg.mxu0
      %833 = vmatpush.bf16.msra.mxu0 %v681
      %834 = vmatpush.bf16.msra.mxu0 %v680
      %835 = vmatpush.bf16.msra.mxu0 %v679
      %836 = vmatpush.bf16.msra.mxu0 %v678
      %837 = vmatpush.bf16.msra.mxu0 %v677
      %838 = vmatpush.bf16.msra.mxu0 %v676
      %839 = vmatpush.bf16.msra.mxu0 %v675
      %840 = vmatpush.bf16.msra.mxu0 %v674
      %841 = vmatmul.bf16.gmra.mxu0 %v318
      %v842 = vpop.f32.mrf.mxu0
      %v843 = vadd.f32 %v830, %v842
      %v844 = vpop.f32.mrf.mxu0
      %845 = vdwg.mxu0
      %846 = vmatpush.bf16.msra.mxu0 %v689
      %847 = vmatpush.bf16.msra.mxu0 %v688
      %848 = vmatpush.bf16.msra.mxu0 %v687
      %849 = vmatpush.bf16.msra.mxu0 %v686
      %850 = vmatpush.bf16.msra.mxu0 %v685
      %851 = vmatpush.bf16.msra.mxu0 %v684
      %852 = vmatpush.bf16.msra.mxu0 %v683
      %853 = vmatpush.bf16.msra.mxu0 %v682
      %854 = vmatmul.bf16.gmra.mxu0 %v345
      %v855 = vpop.f32.mrf.mxu0
      %v856 = vadd.f32 %v843, %v855
      %v857 = vpop.f32.mrf.mxu0
      %858 = vdwg.mxu0
      %859 = vmatpush.bf16.msra.mxu0 %v697
      %860 = vmatpush.bf16.msra.mxu0 %v696
      %861 = vmatpush.bf16.msra.mxu0 %v695
      %862 = vmatpush.bf16.msra.mxu0 %v694
      %863 = vmatpush.bf16.msra.mxu0 %v693
      %864 = vmatpush.bf16.msra.mxu0 %v692
      %865 = vmatpush.bf16.msra.mxu0 %v691
      %866 = vmatpush.bf16.msra.mxu0 %v690
      %867 = vmatmul.bf16.gmra.mxu0 %v347
      %v868 = vpop.f32.mrf.mxu0
      %v869 = vadd.f32 %v856, %v868
      %v870 = vpop.f32.mrf.mxu0
      %871 = vdwg.mxu0
      %872 = vmatpush.bf16.msra.mxu0 %v705
      %873 = vmatpush.bf16.msra.mxu0 %v704
      %874 = vmatpush.bf16.msra.mxu0 %v703
      %875 = vmatpush.bf16.msra.mxu0 %v702
      %876 = vmatpush.bf16.msra.mxu0 %v701
      %877 = vmatpush.bf16.msra.mxu0 %v700
      %878 = vmatpush.bf16.msra.mxu0 %v699
      %879 = vmatpush.bf16.msra.mxu0 %v698
      %880 = vmatmul.bf16.gmra.mxu0 %v322
      %v881 = vpop.f32.mrf.mxu0
      %v882 = vadd.f32 %v869, %v881
      %v883 = vpop.f32.mrf.mxu0
      %884 = vdwg.mxu0
      %885 = vmatpush.bf16.msra.mxu0 %v713
      %886 = vmatpush.bf16.msra.mxu0 %v712
      %887 = vmatpush.bf16.msra.mxu0 %v711
      %888 = vmatpush.bf16.msra.mxu0 %v710
      %889 = vmatpush.bf16.msra.mxu0 %v709
      %890 = vmatpush.bf16.msra.mxu0 %v708
      %891 = vmatpush.bf16.msra.mxu0 %v707
      %892 = vmatpush.bf16.msra.mxu0 %v706
      %893 = vmatmul.bf16.gmra.mxu0 %v358
      %v894 = vpop.f32.mrf.mxu0
      %v895 = vadd.f32 %v882, %v894
      %v896 = vpop.f32.mrf.mxu0
      %897 = vdwg.mxu0
      %898 = vmatpush.bf16.msra.mxu0 %v721
      %899 = vmatpush.bf16.msra.mxu0 %v720
      %900 = vmatpush.bf16.msra.mxu0 %v719
      %901 = vmatpush.bf16.msra.mxu0 %v718
      %902 = vmatpush.bf16.msra.mxu0 %v717
      %903 = vmatpush.bf16.msra.mxu0 %v716
      %904 = vmatpush.bf16.msra.mxu0 %v715
      %905 = vmatpush.bf16.msra.mxu0 %v714
      %906 = vmatmul.bf16.gmra.mxu0 %v360
      %v907 = vpop.f32.mrf.mxu0
      %v908 = vadd.f32 %v895, %v907
      %v909 = vpop.f32.mrf.mxu0
      %910 = vdwg.mxu0
      %vm911 = vcmask 257024
      %912 = vst.msk [vmem:[%s165] sm:$0xf] %vm911, %v908
      %v913 = vld [vmem:[%s317] sm:$0x7]
      %v914 = vld [vmem:[%s321] sm:$0x7]
      %s915 = sadd.s32 %s311, 3
      %s916 = smul.addr %s915, 4
      %s917 = scalar_lea.vmem %s156, %s916
      %v918 = vld [vmem:[%s917] sm:$0x7]
      %v920 = vunpack.c.l.b16 %v913
      %v921 = vpack.c.b16 %v920, %v920
      %v923 = vshrl.u32 %v921, 16
      %v925 = vshll.u32 %v921, 16
      %v927 = vrot.slane %v925, 1
      %v928 = vor.u32 %v923, %v927
      %v930 = vrot.slane %v921, 1
      %v933 = vunpack.c.l.b16 %v914
      %v934 = vpack.c.b16 %v933, %v933
      %v936 = vshrl.u32 %v934, 16
      %v938 = vshll.u32 %v934, 16
      %v940 = vrot.slane %v938, 1
      %v941 = vor.u32 %v936, %v940
      %v943 = vrot.slane %v934, 1
      %v946 = vunpack.c.l.b16 %v918
      %v947 = vpack.c.b16 %v946, %v946
      %v949 = vshrl.u32 %v947, 16
      %v951 = vshll.u32 %v947, 16
      %v953 = vrot.slane %v951, 1
      %v954 = vor.u32 %v949, %v953
      %v956 = vrot.slane %v947, 1
      %958 = vmatpush.bf16.msra.mxu0 %v657
      %959 = vmatpush.bf16.msra.mxu0 %v656
      %960 = vmatpush.bf16.msra.mxu0 %v655
      %961 = vmatpush.bf16.msra.mxu0 %v654
      %962 = vmatpush.bf16.msra.mxu0 %v653
      %963 = vmatpush.bf16.msra.mxu0 %v652
      %964 = vmatpush.bf16.msra.mxu0 %v651
      %965 = vmatpush.bf16.msra.mxu0 %v650
      %966 = vmatmul.bf16.gmra.mxu0 %v913
      %v967 = vpop.f32.mrf.mxu0
      %v968 = vadd.f32 0.0, %v967
      %v969 = vpop.f32.mrf.mxu0
      %970 = vdwg.mxu0
      %971 = vmatpush.bf16.msra.mxu0 %v665
      %972 = vmatpush.bf16.msra.mxu0 %v664
      %973 = vmatpush.bf16.msra.mxu0 %v663
      %974 = vmatpush.bf16.msra.mxu0 %v662
      %975 = vmatpush.bf16.msra.mxu0 %v661
      %976 = vmatpush.bf16.msra.mxu0 %v660
      %977 = vmatpush.bf16.msra.mxu0 %v659
      %978 = vmatpush.bf16.msra.mxu0 %v658
      %979 = vmatmul.bf16.gmra.mxu0 %v928
      %v980 = vpop.f32.mrf.mxu0
      %v981 = vadd.f32 %v968, %v980
      %v982 = vpop.f32.mrf.mxu0
      %983 = vdwg.mxu0
      %984 = vmatpush.bf16.msra.mxu0 %v673
      %985 = vmatpush.bf16.msra.mxu0 %v672
      %986 = vmatpush.bf16.msra.mxu0 %v671
      %987 = vmatpush.bf16.msra.mxu0 %v670
      %988 = vmatpush.bf16.msra.mxu0 %v669
      %989 = vmatpush.bf16.msra.mxu0 %v668
      %990 = vmatpush.bf16.msra.mxu0 %v667
      %991 = vmatpush.bf16.msra.mxu0 %v666
      %992 = vmatmul.bf16.gmra.mxu0 %v930
      %v993 = vpop.f32.mrf.mxu0
      %v994 = vadd.f32 %v981, %v993
      %v995 = vpop.f32.mrf.mxu0
      %996 = vdwg.mxu0
      %997 = vmatpush.bf16.msra.mxu0 %v681
      %998 = vmatpush.bf16.msra.mxu0 %v680
      %999 = vmatpush.bf16.msra.mxu0 %v679
      %1000 = vmatpush.bf16.msra.mxu0 %v678
      %1001 = vmatpush.bf16.msra.mxu0 %v677
      %1002 = vmatpush.bf16.msra.mxu0 %v676
      %1003 = vmatpush.bf16.msra.mxu0 %v675
      %1004 = vmatpush.bf16.msra.mxu0 %v674
      %1005 = vmatmul.bf16.gmra.mxu0 %v914
      %v1006 = vpop.f32.mrf.mxu0
      %v1007 = vadd.f32 %v994, %v1006
      %v1008 = vpop.f32.mrf.mxu0
      %1009 = vdwg.mxu0
      %1010 = vmatpush.bf16.msra.mxu0 %v689
      %1011 = vmatpush.bf16.msra.mxu0 %v688
      %1012 = vmatpush.bf16.msra.mxu0 %v687
      %1013 = vmatpush.bf16.msra.mxu0 %v686
      %1014 = vmatpush.bf16.msra.mxu0 %v685
      %1015 = vmatpush.bf16.msra.mxu0 %v684
      %1016 = vmatpush.bf16.msra.mxu0 %v683
      %1017 = vmatpush.bf16.msra.mxu0 %v682
      %1018 = vmatmul.bf16.gmra.mxu0 %v941
      %v1019 = vpop.f32.mrf.mxu0
      %v1020 = vadd.f32 %v1007, %v1019
      %v1021 = vpop.f32.mrf.mxu0
      %1022 = vdwg.mxu0
      %1023 = vmatpush.bf16.msra.mxu0 %v697
      %1024 = vmatpush.bf16.msra.mxu0 %v696
      %1025 = vmatpush.bf16.msra.mxu0 %v695
      %1026 = vmatpush.bf16.msra.mxu0 %v694
      %1027 = vmatpush.bf16.msra.mxu0 %v693
      %1028 = vmatpush.bf16.msra.mxu0 %v692
      %1029 = vmatpush.bf16.msra.mxu0 %v691
      %1030 = vmatpush.bf16.msra.mxu0 %v690
      %1031 = vmatmul.bf16.gmra.mxu0 %v943
      %v1032 = vpop.f32.mrf.mxu0
      %v1033 = vadd.f32 %v1020, %v1032
      %v1034 = vpop.f32.mrf.mxu0
      %1035 = vdwg.mxu0
      %1036 = vmatpush.bf16.msra.mxu0 %v705
      %1037 = vmatpush.bf16.msra.mxu0 %v704
      %1038 = vmatpush.bf16.msra.mxu0 %v703
      %1039 = vmatpush.bf16.msra.mxu0 %v702
      %1040 = vmatpush.bf16.msra.mxu0 %v701
      %1041 = vmatpush.bf16.msra.mxu0 %v700
      %1042 = vmatpush.bf16.msra.mxu0 %v699
      %1043 = vmatpush.bf16.msra.mxu0 %v698
      %1044 = vmatmul.bf16.gmra.mxu0 %v918
      %v1045 = vpop.f32.mrf.mxu0
      %v1046 = vadd.f32 %v1033, %v1045
      %v1047 = vpop.f32.mrf.mxu0
      %1048 = vdwg.mxu0
      %1049 = vmatpush.bf16.msra.mxu0 %v713
      %1050 = vmatpush.bf16.msra.mxu0 %v712
      %1051 = vmatpush.bf16.msra.mxu0 %v711
      %1052 = vmatpush.bf16.msra.mxu0 %v710
      %1053 = vmatpush.bf16.msra.mxu0 %v709
      %1054 = vmatpush.bf16.msra.mxu0 %v708
      %1055 = vmatpush.bf16.msra.mxu0 %v707
      %1056 = vmatpush.bf16.msra.mxu0 %v706
      %1057 = vmatmul.bf16.gmra.mxu0 %v954
      %v1058 = vpop.f32.mrf.mxu0
      %v1059 = vadd.f32 %v1046, %v1058
      %v1060 = vpop.f32.mrf.mxu0
      %1061 = vdwg.mxu0
      %1062 = vmatpush.bf16.msra.mxu0 %v721
      %1063 = vmatpush.bf16.msra.mxu0 %v720
      %1064 = vmatpush.bf16.msra.mxu0 %v719
      %1065 = vmatpush.bf16.msra.mxu0 %v718
      %1066 = vmatpush.bf16.msra.mxu0 %v717
      %1067 = vmatpush.bf16.msra.mxu0 %v716
      %1068 = vmatpush.bf16.msra.mxu0 %v715
      %1069 = vmatpush.bf16.msra.mxu0 %v714
      %1070 = vmatmul.bf16.gmra.mxu0 %v956
      %v1071 = vpop.f32.mrf.mxu0
      %v1072 = vadd.f32 %v1059, %v1071
      %v1073 = vpop.f32.mrf.mxu0
      %1074 = vdwg.mxu0
      %s1075 = scalar_lea.vmem %s165, 4
      %1076 = vst.msk [vmem:[%s1075] sm:$0xf] %vm911, %v1072
      %v1077 = vld [vmem:[%s321] sm:$0x7]
      %v1078 = vld [vmem:[%s917] sm:$0x7]
      %s1079 = sadd.s32 %s311, 4
      %s1080 = smul.addr %s1079, 4
      %s1081 = scalar_lea.vmem %s156, %s1080
      %v1082 = vld [vmem:[%s1081] sm:$0x7]
      %v1084 = vunpack.c.l.b16 %v1077
      %v1085 = vpack.c.b16 %v1084, %v1084
      %v1087 = vshrl.u32 %v1085, 16
      %v1089 = vshll.u32 %v1085, 16
      %v1091 = vrot.slane %v1089, 1
      %v1092 = vor.u32 %v1087, %v1091
      %v1094 = vrot.slane %v1085, 1
      %v1097 = vunpack.c.l.b16 %v1078
      %v1098 = vpack.c.b16 %v1097, %v1097
      %v1100 = vshrl.u32 %v1098, 16
      %v1102 = vshll.u32 %v1098, 16
      %v1104 = vrot.slane %v1102, 1
      %v1105 = vor.u32 %v1100, %v1104
      %v1107 = vrot.slane %v1098, 1
      %v1110 = vunpack.c.l.b16 %v1082
      %v1111 = vpack.c.b16 %v1110, %v1110
      %v1113 = vshrl.u32 %v1111, 16
      %v1115 = vshll.u32 %v1111, 16
      %v1117 = vrot.slane %v1115, 1
      %v1118 = vor.u32 %v1113, %v1117
      %v1120 = vrot.slane %v1111, 1
      %1122 = vmatpush.bf16.msra.mxu0 %v657
      %1123 = vmatpush.bf16.msra.mxu0 %v656
      %1124 = vmatpush.bf16.msra.mxu0 %v655
      %1125 = vmatpush.bf16.msra.mxu0 %v654
      %1126 = vmatpush.bf16.msra.mxu0 %v653
      %1127 = vmatpush.bf16.msra.mxu0 %v652
      %1128 = vmatpush.bf16.msra.mxu0 %v651
      %1129 = vmatpush.bf16.msra.mxu0 %v650
      %1130 = vmatmul.bf16.gmra.mxu0 %v1077
      %v1131 = vpop.f32.mrf.mxu0
      %v1132 = vadd.f32 0.0, %v1131
      %v1133 = vpop.f32.mrf.mxu0
      %1134 = vdwg.mxu0
      %1135 = vmatpush.bf16.msra.mxu0 %v665
      %1136 = vmatpush.bf16.msra.mxu0 %v664
      %1137 = vmatpush.bf16.msra.mxu0 %v663
      %1138 = vmatpush.bf16.msra.mxu0 %v662
      %1139 = vmatpush.bf16.msra.mxu0 %v661
      %1140 = vmatpush.bf16.msra.mxu0 %v660
      %1141 = vmatpush.bf16.msra.mxu0 %v659
      %1142 = vmatpush.bf16.msra.mxu0 %v658
      %1143 = vmatmul.bf16.gmra.mxu0 %v1092
      %v1144 = vpop.f32.mrf.mxu0
      %v1145 = vadd.f32 %v1132, %v1144
      %v1146 = vpop.f32.mrf.mxu0
      %1147 = vdwg.mxu0
      %1148 = vmatpush.bf16.msra.mxu0 %v673
      %1149 = vmatpush.bf16.msra.mxu0 %v672
      %1150 = vmatpush.bf16.msra.mxu0 %v671
      %1151 = vmatpush.bf16.msra.mxu0 %v670
      %1152 = vmatpush.bf16.msra.mxu0 %v669
      %1153 = vmatpush.bf16.msra.mxu0 %v668
      %1154 = vmatpush.bf16.msra.mxu0 %v667
      %1155 = vmatpush.bf16.msra.mxu0 %v666
      %1156 = vmatmul.bf16.gmra.mxu0 %v1094
      %v1157 = vpop.f32.mrf.mxu0
      %v1158 = vadd.f32 %v1145, %v1157
      %v1159 = vpop.f32.mrf.mxu0
      %1160 = vdwg.mxu0
      %1161 = vmatpush.bf16.msra.mxu0 %v681
      %1162 = vmatpush.bf16.msra.mxu0 %v680
      %1163 = vmatpush.bf16.msra.mxu0 %v679
      %1164 = vmatpush.bf16.msra.mxu0 %v678
      %1165 = vmatpush.bf16.msra.mxu0 %v677
      %1166 = vmatpush.bf16.msra.mxu0 %v676
      %1167 = vmatpush.bf16.msra.mxu0 %v675
      %1168 = vmatpush.bf16.msra.mxu0 %v674
      %1169 = vmatmul.bf16.gmra.mxu0 %v1078
      %v1170 = vpop.f32.mrf.mxu0
      %v1171 = vadd.f32 %v1158, %v1170
      %v1172 = vpop.f32.mrf.mxu0
      %1173 = vdwg.mxu0
      %1174 = vmatpush.bf16.msra.mxu0 %v689
      %1175 = vmatpush.bf16.msra.mxu0 %v688
      %1176 = vmatpush.bf16.msra.mxu0 %v687
      %1177 = vmatpush.bf16.msra.mxu0 %v686
      %1178 = vmatpush.bf16.msra.mxu0 %v685
      %1179 = vmatpush.bf16.msra.mxu0 %v684
      %1180 = vmatpush.bf16.msra.mxu0 %v683
      %1181 = vmatpush.bf16.msra.mxu0 %v682
      %1182 = vmatmul.bf16.gmra.mxu0 %v1105
      %v1183 = vpop.f32.mrf.mxu0
      %v1184 = vadd.f32 %v1171, %v1183
      %v1185 = vpop.f32.mrf.mxu0
      %1186 = vdwg.mxu0
      %1187 = vmatpush.bf16.msra.mxu0 %v697
      %1188 = vmatpush.bf16.msra.mxu0 %v696
      %1189 = vmatpush.bf16.msra.mxu0 %v695
      %1190 = vmatpush.bf16.msra.mxu0 %v694
      %1191 = vmatpush.bf16.msra.mxu0 %v693
      %1192 = vmatpush.bf16.msra.mxu0 %v692
      %1193 = vmatpush.bf16.msra.mxu0 %v691
      %1194 = vmatpush.bf16.msra.mxu0 %v690
      %1195 = vmatmul.bf16.gmra.mxu0 %v1107
      %v1196 = vpop.f32.mrf.mxu0
      %v1197 = vadd.f32 %v1184, %v1196
      %v1198 = vpop.f32.mrf.mxu0
      %1199 = vdwg.mxu0
      %1200 = vmatpush.bf16.msra.mxu0 %v705
      %1201 = vmatpush.bf16.msra.mxu0 %v704
      %1202 = vmatpush.bf16.msra.mxu0 %v703
      %1203 = vmatpush.bf16.msra.mxu0 %v702
      %1204 = vmatpush.bf16.msra.mxu0 %v701
      %1205 = vmatpush.bf16.msra.mxu0 %v700
      %1206 = vmatpush.bf16.msra.mxu0 %v699
      %1207 = vmatpush.bf16.msra.mxu0 %v698
      %1208 = vmatmul.bf16.gmra.mxu0 %v1082
      %v1209 = vpop.f32.mrf.mxu0
      %v1210 = vadd.f32 %v1197, %v1209
      %v1211 = vpop.f32.mrf.mxu0
      %1212 = vdwg.mxu0
      %1213 = vmatpush.bf16.msra.mxu0 %v713
      %1214 = vmatpush.bf16.msra.mxu0 %v712
      %1215 = vmatpush.bf16.msra.mxu0 %v711
      %1216 = vmatpush.bf16.msra.mxu0 %v710
      %1217 = vmatpush.bf16.msra.mxu0 %v709
      %1218 = vmatpush.bf16.msra.mxu0 %v708
      %1219 = vmatpush.bf16.msra.mxu0 %v707
      %1220 = vmatpush.bf16.msra.mxu0 %v706
      %1221 = vmatmul.bf16.gmra.mxu0 %v1118
      %v1222 = vpop.f32.mrf.mxu0
      %v1223 = vadd.f32 %v1210, %v1222
      %v1224 = vpop.f32.mrf.mxu0
      %1225 = vdwg.mxu0
      %1226 = vmatpush.bf16.msra.mxu0 %v721
      %1227 = vmatpush.bf16.msra.mxu0 %v720
      %1228 = vmatpush.bf16.msra.mxu0 %v719
      %1229 = vmatpush.bf16.msra.mxu0 %v718
      %1230 = vmatpush.bf16.msra.mxu0 %v717
      %1231 = vmatpush.bf16.msra.mxu0 %v716
      %1232 = vmatpush.bf16.msra.mxu0 %v715
      %1233 = vmatpush.bf16.msra.mxu0 %v714
      %1234 = vmatmul.bf16.gmra.mxu0 %v1120
      %v1235 = vpop.f32.mrf.mxu0
      %v1236 = vadd.f32 %v1223, %v1235
      %v1237 = vpop.f32.mrf.mxu0
      %1238 = vdwg.mxu0
      %s1239 = scalar_lea.vmem %s165, 8
      %1240 = vst.msk [vmem:[%s1239] sm:$0xf] %vm911, %v1236
      %v1241 = vld [vmem:[%s917] sm:$0x7]
      %v1242 = vld [vmem:[%s1081] sm:$0x7]
      %s1243 = sadd.s32 %s311, 5
      %s1244 = smul.addr %s1243, 4
      %s1245 = scalar_lea.vmem %s156, %s1244
      %v1246 = vld [vmem:[%s1245] sm:$0x7]
      %v1248 = vunpack.c.l.b16 %v1241
      %v1249 = vpack.c.b16 %v1248, %v1248
      %v1251 = vshrl.u32 %v1249, 16
      %v1253 = vshll.u32 %v1249, 16
      %v1255 = vrot.slane %v1253, 1
      %v1256 = vor.u32 %v1251, %v1255
      %v1258 = vrot.slane %v1249, 1
      %v1261 = vunpack.c.l.b16 %v1242
      %v1262 = vpack.c.b16 %v1261, %v1261
      %v1264 = vshrl.u32 %v1262, 16
      %v1266 = vshll.u32 %v1262, 16
      %v1268 = vrot.slane %v1266, 1
      %v1269 = vor.u32 %v1264, %v1268
      %v1271 = vrot.slane %v1262, 1
      %v1274 = vunpack.c.l.b16 %v1246
      %v1275 = vpack.c.b16 %v1274, %v1274
      %v1277 = vshrl.u32 %v1275, 16
      %v1279 = vshll.u32 %v1275, 16
      %v1281 = vrot.slane %v1279, 1
      %v1282 = vor.u32 %v1277, %v1281
      %v1284 = vrot.slane %v1275, 1
      %1286 = vmatpush.bf16.msra.mxu0 %v657
      %1287 = vmatpush.bf16.msra.mxu0 %v656
      %1288 = vmatpush.bf16.msra.mxu0 %v655
      %1289 = vmatpush.bf16.msra.mxu0 %v654
      %1290 = vmatpush.bf16.msra.mxu0 %v653
      %1291 = vmatpush.bf16.msra.mxu0 %v652
      %1292 = vmatpush.bf16.msra.mxu0 %v651
      %1293 = vmatpush.bf16.msra.mxu0 %v650
      %1294 = vmatmul.bf16.gmra.mxu0 %v1241
      %v1295 = vpop.f32.mrf.mxu0
      %v1296 = vadd.f32 0.0, %v1295
      %v1297 = vpop.f32.mrf.mxu0
      %1298 = vdwg.mxu0
      %1299 = vmatpush.bf16.msra.mxu0 %v665
      %1300 = vmatpush.bf16.msra.mxu0 %v664
      %1301 = vmatpush.bf16.msra.mxu0 %v663
      %1302 = vmatpush.bf16.msra.mxu0 %v662
      %1303 = vmatpush.bf16.msra.mxu0 %v661
      %1304 = vmatpush.bf16.msra.mxu0 %v660
      %1305 = vmatpush.bf16.msra.mxu0 %v659
      %1306 = vmatpush.bf16.msra.mxu0 %v658
      %1307 = vmatmul.bf16.gmra.mxu0 %v1256
      %v1308 = vpop.f32.mrf.mxu0
      %v1309 = vadd.f32 %v1296, %v1308
      %v1310 = vpop.f32.mrf.mxu0
      %1311 = vdwg.mxu0
      %1312 = vmatpush.bf16.msra.mxu0 %v673
      %1313 = vmatpush.bf16.msra.mxu0 %v672
      %1314 = vmatpush.bf16.msra.mxu0 %v671
      %1315 = vmatpush.bf16.msra.mxu0 %v670
      %1316 = vmatpush.bf16.msra.mxu0 %v669
      %1317 = vmatpush.bf16.msra.mxu0 %v668
      %1318 = vmatpush.bf16.msra.mxu0 %v667
      %1319 = vmatpush.bf16.msra.mxu0 %v666
      %1320 = vmatmul.bf16.gmra.mxu0 %v1258
      %v1321 = vpop.f32.mrf.mxu0
      %v1322 = vadd.f32 %v1309, %v1321
      %v1323 = vpop.f32.mrf.mxu0
      %1324 = vdwg.mxu0
      %1325 = vmatpush.bf16.msra.mxu0 %v681
      %1326 = vmatpush.bf16.msra.mxu0 %v680
      %1327 = vmatpush.bf16.msra.mxu0 %v679
      %1328 = vmatpush.bf16.msra.mxu0 %v678
      %1329 = vmatpush.bf16.msra.mxu0 %v677
      %1330 = vmatpush.bf16.msra.mxu0 %v676
      %1331 = vmatpush.bf16.msra.mxu0 %v675
      %1332 = vmatpush.bf16.msra.mxu0 %v674
      %1333 = vmatmul.bf16.gmra.mxu0 %v1242
      %v1334 = vpop.f32.mrf.mxu0
      %v1335 = vadd.f32 %v1322, %v1334
      %v1336 = vpop.f32.mrf.mxu0
      %1337 = vdwg.mxu0
      %1338 = vmatpush.bf16.msra.mxu0 %v689
      %1339 = vmatpush.bf16.msra.mxu0 %v688
      %1340 = vmatpush.bf16.msra.mxu0 %v687
      %1341 = vmatpush.bf16.msra.mxu0 %v686
      %1342 = vmatpush.bf16.msra.mxu0 %v685
      %1343 = vmatpush.bf16.msra.mxu0 %v684
      %1344 = vmatpush.bf16.msra.mxu0 %v683
      %1345 = vmatpush.bf16.msra.mxu0 %v682
      %1346 = vmatmul.bf16.gmra.mxu0 %v1269
      %v1347 = vpop.f32.mrf.mxu0
      %v1348 = vadd.f32 %v1335, %v1347
      %v1349 = vpop.f32.mrf.mxu0
      %1350 = vdwg.mxu0
      %1351 = vmatpush.bf16.msra.mxu0 %v697
      %1352 = vmatpush.bf16.msra.mxu0 %v696
      %1353 = vmatpush.bf16.msra.mxu0 %v695
      %1354 = vmatpush.bf16.msra.mxu0 %v694
      %1355 = vmatpush.bf16.msra.mxu0 %v693
      %1356 = vmatpush.bf16.msra.mxu0 %v692
      %1357 = vmatpush.bf16.msra.mxu0 %v691
      %1358 = vmatpush.bf16.msra.mxu0 %v690
      %1359 = vmatmul.bf16.gmra.mxu0 %v1271
      %v1360 = vpop.f32.mrf.mxu0
      %v1361 = vadd.f32 %v1348, %v1360
      %v1362 = vpop.f32.mrf.mxu0
      %1363 = vdwg.mxu0
      %1364 = vmatpush.bf16.msra.mxu0 %v705
      %1365 = vmatpush.bf16.msra.mxu0 %v704
      %1366 = vmatpush.bf16.msra.mxu0 %v703
      %1367 = vmatpush.bf16.msra.mxu0 %v702
      %1368 = vmatpush.bf16.msra.mxu0 %v701
      %1369 = vmatpush.bf16.msra.mxu0 %v700
      %1370 = vmatpush.bf16.msra.mxu0 %v699
      %1371 = vmatpush.bf16.msra.mxu0 %v698
      %1372 = vmatmul.bf16.gmra.mxu0 %v1246
      %v1373 = vpop.f32.mrf.mxu0
      %v1374 = vadd.f32 %v1361, %v1373
      %v1375 = vpop.f32.mrf.mxu0
      %1376 = vdwg.mxu0
      %1377 = vmatpush.bf16.msra.mxu0 %v713
      %1378 = vmatpush.bf16.msra.mxu0 %v712
      %1379 = vmatpush.bf16.msra.mxu0 %v711
      %1380 = vmatpush.bf16.msra.mxu0 %v710
      %1381 = vmatpush.bf16.msra.mxu0 %v709
      %1382 = vmatpush.bf16.msra.mxu0 %v708
      %1383 = vmatpush.bf16.msra.mxu0 %v707
      %1384 = vmatpush.bf16.msra.mxu0 %v706
      %1385 = vmatmul.bf16.gmra.mxu0 %v1282
      %v1386 = vpop.f32.mrf.mxu0
      %v1387 = vadd.f32 %v1374, %v1386
      %v1388 = vpop.f32.mrf.mxu0
      %1389 = vdwg.mxu0
      %1390 = vmatpush.bf16.msra.mxu0 %v721
      %1391 = vmatpush.bf16.msra.mxu0 %v720
      %1392 = vmatpush.bf16.msra.mxu0 %v719
      %1393 = vmatpush.bf16.msra.mxu0 %v718
      %1394 = vmatpush.bf16.msra.mxu0 %v717
      %1395 = vmatpush.bf16.msra.mxu0 %v716
      %1396 = vmatpush.bf16.msra.mxu0 %v715
      %1397 = vmatpush.bf16.msra.mxu0 %v714
      %1398 = vmatmul.bf16.gmra.mxu0 %v1284
      %v1399 = vpop.f32.mrf.mxu0
      %v1400 = vadd.f32 %v1387, %v1399
      %v1401 = vpop.f32.mrf.mxu0
      %1402 = vdwg.mxu0
      %s1403 = scalar_lea.vmem %s165, 12
      %1404 = vst.msk [vmem:[%s1403] sm:$0xf] %vm911, %v1400
      %s1405 = smul.u32 4, %s18
      %p1406 = scmp.lt.s32.totalorder %s17, 1
      %s1407 = scalar_select %p1406, %s17, 1
      %p1408 = scmp.lt.s32.totalorder %s1405, 3
      %s1409 = scalar_select %p1408, %s1405, 3
      %s1410 = smul.addr %s1407, 4
      %s1411 = sadd.s32 %s1409, %s1410
      %s1412 = smul.addr %s1411, 4
      %s1413 = scalar_lea.vmem %s2, %s1412
      // Predicated region
      $region29: #{densenet_container_forward.23} parent=27 // pred_check
        %p1414 = pneg %p92
      $region30: #{densenet_container_forward.23} parent=27 // pred_check_branch
        %1416 = sbr.rel (%p1414) target = $region32
      $region31: #{densenet_container_forward.23} parent=27 // pred_region
        %s1417 = smul.u32 4, %s18
      $region32: #{densenet_container_forward.23} parent=27 // pred_fallthru
        _
    $region28: #{densenet_container_forward.23} parent=5 // pred_fallthru
      _
    %p1418 = scmp.le.s32.totalorder 2, %s8
    // Predicated region
    $region33: #{densenet_container_forward.23} parent=5 // pred_check
      %p1419 = pneg %p1418
    $region34: #{densenet_container_forward.23} parent=5 // pred_check_branch
      %1421 = sbr.rel (%p1419) target = $region36
    $region35: #{densenet_container_forward.23} parent=5 // pred_region
      %s1422 = ssub.s32 %s8, 2
      // Predicated region
      $region37: #{densenet_container_forward.23} parent=35 // pred_check
        %p1423 = pneg %p98
      $region38: #{densenet_container_forward.23} parent=35 // pred_check_branch
        %1425 = sbr.rel (%p1423) target = $region40
      $region39: #{densenet_container_forward.23} parent=35 // pred_region
        %s1426 = smul.u32 4, %s20
        %p1427 = scmp.lt.s32.totalorder %s19, 1
        %s1428 = scalar_select %p1427, %s19, 1
        %p1429 = scmp.lt.s32.totalorder %s1426, 3
        %s1430 = scalar_select %p1429, %s1426, 3
        %s1431 = smul.addr %s1428, 4
        %s1432 = sadd.s32 %s1430, %s1431
        %s1433 = smul.addr %s1432, 4
        %s1434 = scalar_lea.vmem %s2, %s1433
      $region40: #{densenet_container_forward.23} parent=35 // pred_fallthru
        _
    $region36: #{densenet_container_forward.23} parent=5 // pred_fallthru
      _
  $region6: #{densenet_container_forward.23} parent=0 // loop_footer
    %s12 = sadd.s32 1, %s8
  $region7: #{densenet_container_forward.23} parent=0 // loop_footer_branch
    %7 = sbr.rel target = $region3
  $region8: #{densenet_container_forward.23} parent=0 // loop_exit
    _

// kernel: densenet_container_forward.27
$region0: #{densenet_container_forward.27}
  #allocation0 [shape = 'u32[]', space=smem, size = 0x4, offset = 0x4, fixed_abs, tag = 'smem constant byte address 0x4 - core index']
  #allocation1 [shape = 'u32[72,128]{1,0:T(1,128)}', space=vmem, size = 0x9000, scoped, tag = 'internal scratch']
  %s0 = inlined_call_operand.vmem [shape: f32[2,104], index: 0, kind: input, shape index: {}]
  %s1 = inlined_call_operand.vmem [shape: bf16[104,14], index: 1, kind: input, shape index: {}]
  %s2 = inlined_call_operand.vmem [shape: f32[1,14], index: 2, kind: input, shape index: {}]
  %s3 = inlined_call_operand.vmem [shape: f32[1,14], index: 3, kind: input, shape index: {}]
  %s4 = inlined_call_operand.hbm [shape: f32[2,14], index: 4, kind: output, shape index: {}]
  %s5 = sld [smem:[#allocation0]]
  $region26: #{densenet_container_forward.27} parent=0
    _
  %s7 = ssub.s32 1, %s5
  %s8 = scalar_select 0, %s7, %s5
  $region1: #{densenet_container_forward.27} parent=0
    #allocation2 [shape = 'u8[4096]{0}', space=vmem, size = 0x1000, scoped, tag = 'output window, operand 0, single buffered']
    #allocation3 [shape = 's32[1]{0}', space=sflag, size = 0x4, scoped, tag = 'scoped memory for densenet_container_forward.27']
    %9 = vsyncpa [#allocation3], 0
    // Predicated region
    $region2: #{densenet_container_forward.27} parent=1 // pred_check
      _
    $region3: #{densenet_container_forward.27} parent=1 // pred_check_branch
      %11 = sbr.rel (0) target = $region5
    $region4: #{densenet_container_forward.27} parent=1 // pred_region
      _
    $region5: #{densenet_container_forward.27} parent=1 // pred_fallthru
      _
    // Predicated region
    $region6: #{densenet_container_forward.27} parent=1 // pred_check
      _
    $region7: #{densenet_container_forward.27} parent=1 // pred_check_branch
      %13 = sbr.rel (0) target = $region9
    $region8: #{densenet_container_forward.27} parent=1 // pred_region
      _
    $region9: #{densenet_container_forward.27} parent=1 // pred_fallthru
      _
    // Predicated region
    $region10: #{densenet_container_forward.27} parent=1 // pred_check
      _
    $region11: #{densenet_container_forward.27} parent=1 // pred_check_branch
      %15 = sbr.rel (0) target = $region13
    $region12: #{densenet_container_forward.27} parent=1 // pred_region
      _
    $region13: #{densenet_container_forward.27} parent=1 // pred_fallthru
      _
    // Predicated region
    $region14: #{densenet_container_forward.27} parent=1 // pred_check
      _
    $region15: #{densenet_container_forward.27} parent=1 // pred_check_branch
      %17 = sbr.rel (0) target = $region17
    $region16: #{densenet_container_forward.27} parent=1 // pred_region
      _
    $region17: #{densenet_container_forward.27} parent=1 // pred_fallthru
      _
    %v19 = vld [vmem:[%s0] sm:$0xff]
    %v20 = vpack.c.bf16 %v19, %v19
    %v21 = vld [vmem:[%s1] sm:$0xf]
    %v22 = vld [vmem:[%s1 + $0x4] sm:$0xf]
    %v23 = vld [vmem:[%s1 + $0x8] sm:$0xf]
    %v24 = vld [vmem:[%s1 + $0xc] sm:$0xf]
    %v25 = vld [vmem:[%s1 + $0x10] sm:$0xf]
    %v26 = vld [vmem:[%s1 + $0x14] sm:$0xf]
    %v27 = vld [vmem:[%s1 + $0x18] sm:$0xf]
    %v28 = vld [vmem:[%s1 + $0x1c] sm:$0xf]
    %v29 = vld [vmem:[%s1 + $0x20] sm:$0xf]
    %v30 = vld [vmem:[%s1 + $0x24] sm:$0xf]
    %v31 = vld [vmem:[%s1 + $0x28] sm:$0xf]
    %v32 = vld [vmem:[%s1 + $0x2c] sm:$0xf]
    %v33 = vld [vmem:[%s1 + $0x30] sm:$0xf]
    %v47 = vunpack.c.l.b16 %v21
    %v48 = vunpack.c.l.b16 %v22
    %v49 = vunpack.c.l.b16 %v23
    %v50 = vunpack.c.l.b16 %v24
    %v51 = vunpack.c.l.b16 %v25
    %v52 = vunpack.c.l.b16 %v26
    %v53 = vunpack.c.l.b16 %v27
    %v54 = vunpack.c.l.b16 %v28
    %v55 = vunpack.c.l.b16 %v29
    %v56 = vunpack.c.l.b16 %v30
    %v57 = vunpack.c.l.b16 %v31
    %v58 = vunpack.c.l.b16 %v32
    %v59 = vunpack.c.l.b16 %v33
    %v60 = vpack.c.b16 %v48, %v47
    %v61 = vpack.c.b16 %v50, %v49
    %v62 = vpack.c.b16 %v52, %v51
    %v63 = vpack.c.b16 %v54, %v53
    %v64 = vpack.c.b16 %v56, %v55
    %v65 = vpack.c.b16 %v58, %v57
    %v66 = vpack.c.b16 %v59, %v59
    %vm73 = vcmask 850944
    %v75 = vsel %vm73, %v20, 0
    %vm77 = vcmask 1043456
    %v79 = vsel %vm77, %v66, 0
    %81 = vmatpush.bf16.msra.mxu0 0
    %82 = vmatpush.bf16.msra.mxu0 %v79
    %83 = vmatpush.bf16.msra.mxu0 %v65
    %84 = vmatpush.bf16.msra.mxu0 %v64
    %85 = vmatpush.bf16.msra.mxu0 %v63
    %86 = vmatpush.bf16.msra.mxu0 %v62
    %87 = vmatpush.bf16.msra.mxu0 %v61
    %88 = vmatpush.bf16.msra.mxu0 %v60
    %89 = vmatmul.bf16.gmra.mxu0 %v75
    %v90 = vpop.f32.mrf.mxu0
    %v91 = vadd.f32 0.0, %v90
    %v92 = vpop.f32.mrf.mxu0
    %93 = vdwg.mxu0
    %v94 = vld [vmem:[%s2] sm:$0x1]
    %v96 = vperm.slane %v94, 0
    %v98 = vmul.f32 %v91, %v96
    %v99 = vld [vmem:[%s3] sm:$0x1]
    %v101 = vperm.slane %v99, 0
    %v103 = vadd.f32 %v98, %v101
    %vm104 = vcmask 113664
    %105 = vst.msk [vmem:[#allocation2] sm:$0xff] %vm104, %v103
    // Predicated region
    $region18: #{densenet_container_forward.27} parent=1 // pred_check
      _
    $region19: #{densenet_container_forward.27} parent=1 // pred_check_branch
      %107 = sbr.rel (0) target = $region21
    $region20: #{densenet_container_forward.27} parent=1 // pred_region
      %109 = vsyncadd [#allocation3], 96
      %s110 = sshll.u32 [#allocation2], 4
      %s111 = int_to_ptr.vmem [resolvable:$true] %s110
      %s112 = sshll.u32 %s4, 4
      %s113 = int_to_ptr.hbm [resolvable:$true] %s112
      %118 = dma.vmem_to_hbm [thread:$0]  %s111, 32, %s113, [#allocation3], 32, 32, 2
    $region21: #{densenet_container_forward.27} parent=1 // pred_fallthru
      _
    // Predicated region
    $region22: #{densenet_container_forward.27} parent=1 // pred_check
      _
    $region23: #{densenet_container_forward.27} parent=1 // pred_check_branch
      %120 = sbr.rel (0) target = $region25
    $region24: #{densenet_container_forward.27} parent=1 // pred_region
      %122 = dma.done [#allocation3], 128
    $region25: #{densenet_container_forward.27} parent=1 // pred_fallthru
      _
    %123 = vsyncpa [#allocation3], 1

</llo_original>
